<compile_context>
chip_gen: v7x
topology: tpu7x:2x2x1
jax: 0.10.0
libtpu: 0.0.40
codegen_flags: <defaults>
</compile_context>

<pallas_src>
import jax
import jax.numpy as jnp
from jax import lax
from jax.experimental import pallas as pl
from jax.experimental.pallas import tpu as pltpu  # noqa: F401  (kept for parity; no TPU-specific params needed)

SEQ = 8           # sequence length L
BATCH = 2         # batch N
EMBED = 12        # embed dim E (MultiheadAttention embed_dim=12, num_heads=1)
FF_HID = 32       # feed-forward hidden dim
HEAD_IN = 96      # final Linear(96, 8)
HEAD_OUT = 8
NUM_LAYERS = 3    # encoder layers per branch
NUM_BRANCH = 2    # actor, critic
LN_EPS = 1e-5
NEG_INF = -1e30

TOKENS = SEQ * BATCH                      # 16 rows, row p = n*SEQ + l (batch-major)
HEAD_ROWS = TOKENS * EMBED // HEAD_IN     # 2 rows after torch reshape(-1, 96)
HEAD_BLOCKS = HEAD_IN // EMBED            # 8 blocks of 12 weight rows
HEAD_LANES = HEAD_BLOCKS * HEAD_OUT       # 64

# --- packed encoder-weight layout: (NUM_BRANCH, NUM_LAYERS, ENC_ROWS, ENC_LANES) ---
ENC_LANES = 32
OFF_WQ, OFF_WK, OFF_WV, OFF_WO = 0, 16, 32, 48        # each (12,12), row-padded to 16
OFF_W1, OFF_W2, OFF_W3 = 64, 80, 112                  # (12,32), (32,32), (32,12)
OFF_VEC = 144   # one row each: bq, bk, bv, bo, g1, be1, b1, b2, b3, g2, be2
ENC_ROWS = 160

# --- packed constants layout: (CONST_ROWS, 64) ---
OFF_MASK_HEAD = 0    # rows 0:16   (16,64) : head block-selection 0/1 mask
OFF_MASK_ATTN = 16   # rows 16:32  (16,16) : block-diagonal additive attention mask (0 / -1e30)
OFF_R_HEAD = 32      # rows 32:96  (64, 8) : lane-block fold matrix
OFF_Q_HEAD = 96      # rows 96:98  (2, 16) : output-row selection matrix
CONST_ROWS = 104


# ---------------------------------------------------------------------------
# Shared math helper
# ---------------------------------------------------------------------------
def _layernorm(x, g, b):
    mu = jnp.mean(x, axis=-1, keepdims=True)
    xc = x - mu
    var = jnp.mean(xc * xc, axis=-1, keepdims=True)
    return xc * lax.rsqrt(var + LN_EPS) * g + b


# ---------------------------------------------------------------------------
# Fused kernel: both branches x 3 encoder layers + Linear(96,8)+Tanh head
# ---------------------------------------------------------------------------
def _fused_kernel(x_ref, enc_ref, head_ref, const_ref, o_ref):
    h0 = x_ref[...]                                                      # (16, 12)

    # Hoisted constants (read once; reused by both branches / all layers).
    m_head = const_ref[OFF_MASK_HEAD:OFF_MASK_HEAD + TOKENS, :]          # (16, 64)
    attn_mask = const_ref[OFF_MASK_ATTN:OFF_MASK_ATTN + TOKENS, 0:TOKENS]  # (16, 16)
    r_head = const_ref[OFF_R_HEAD:OFF_R_HEAD + HEAD_LANES, 0:HEAD_OUT]   # (64, 8)
    q_head = const_ref[OFF_Q_HEAD:OFF_Q_HEAD + HEAD_ROWS, 0:TOKENS]      # (2, 16)

    for br in range(NUM_BRANCH):                       # static unroll: actor, critic
        h = h0
        for ly in range(NUM_LAYERS):                   # static unroll: 3 encoder layers
            wq = enc_ref[br, ly, OFF_WQ:OFF_WQ + EMBED, 0:EMBED]
            wk = enc_ref[br, ly, OFF_WK:OFF_WK + EMBED, 0:EMBED]
            wv = enc_ref[br, ly, OFF_WV:OFF_WV + EMBED, 0:EMBED]
            wo = enc_ref[br, ly, OFF_WO:OFF_WO + EMBED, 0:EMBED]
            w1 = enc_ref[br, ly, OFF_W1:OFF_W1 + EMBED, :]               # (12, 32)
            w2 = enc_ref[br, ly, OFF_W2:OFF_W2 + FF_HID, :]              # (32, 32)
            w3 = enc_ref[br, ly, OFF_W3:OFF_W3 + FF_HID, 0:EMBED]        # (32, 12)
            bq = enc_ref[br, ly, OFF_VEC + 0:OFF_VEC + 1, 0:EMBED]
            bk = enc_ref[br, ly, OFF_VEC + 1:OFF_VEC + 2, 0:EMBED]
            bv = enc_ref[br, ly, OFF_VEC + 2:OFF_VEC + 3, 0:EMBED]
            bo = enc_ref[br, ly, OFF_VEC + 3:OFF_VEC + 4, 0:EMBED]
            g1 = enc_ref[br, ly, OFF_VEC + 4:OFF_VEC + 5, 0:EMBED]
            be1 = enc_ref[br, ly, OFF_VEC + 5:OFF_VEC + 6, 0:EMBED]
            b1 = enc_ref[br, ly, OFF_VEC + 6:OFF_VEC + 7, :]
            b2 = enc_ref[br, ly, OFF_VEC + 7:OFF_VEC + 8, :]
            b3 = enc_ref[br, ly, OFF_VEC + 8:OFF_VEC + 9, 0:EMBED]
            g2 = enc_ref[br, ly, OFF_VEC + 9:OFF_VEC + 10, 0:EMBED]
            be2 = enc_ref[br, ly, OFF_VEC + 10:OFF_VEC + 11, 0:EMBED]

            # Separate Q/K/V projections (results start at lane 0; 1/sqrt(E) folded into wq/bq).
            q = jnp.dot(h, wq, preferred_element_type=jnp.float32) + bq  # (16, 12)
            k = jnp.dot(h, wk, preferred_element_type=jnp.float32) + bk
            v = jnp.dot(h, wv, preferred_element_type=jnp.float32) + bv

            # Batch-fused attention: one masked (16,16) score matmul, one softmax, one context matmul.
            s = lax.dot_general(q, k, (((1,), (1,)), ((), ())),
                                preferred_element_type=jnp.float32) + attn_mask
            s = s - jnp.max(s, axis=-1, keepdims=True)
            p = jnp.exp(s)
            attn = p / jnp.sum(p, axis=-1, keepdims=True)                # exact divide
            ctx = jnp.dot(attn, v, preferred_element_type=jnp.float32)   # (16, 12)

            attn_out = jnp.dot(ctx, wo, preferred_element_type=jnp.float32) + bo
            h = _layernorm(h + attn_out, g1, be1)

            # Feed forward: Linear(12,32) Tanh Linear(32,32) Tanh Linear(32,12) Tanh
            f = jnp.tanh(jnp.dot(h, w1, preferred_element_type=jnp.float32) + b1)
            f = jnp.tanh(jnp.dot(f, w2, preferred_element_type=jnp.float32) + b2)
            f = jnp.tanh(jnp.dot(f, w3, preferred_element_type=jnp.float32) + b3)
            h = _layernorm(h + f, g2, be2)

        # Head: out = tanh( reshape(-1, 96) @ Wh + bh ), fused as:
        #   G  = h @ Wcat            (16, 64)   lanes [8b:8b+8] = h @ W_block(b)
        #   Gm = G * M               keep only the block each token actually feeds
        #   D  = Gm @ R              (16, 8)    fold the 8 lane-blocks onto 8 lanes
        #   out = Q @ D + bh         (2, 8)     sum the 8 tokens of each output row
        wcat = head_ref[br, 0:EMBED, :]                                   # (12, 64)
        bh = head_ref[br, EMBED:EMBED + 1, 0:HEAD_OUT]                    # (1, 8)
        g = jnp.dot(h, wcat, preferred_element_type=jnp.float32)          # (16, 64)
        d = jnp.dot(g * m_head, r_head, preferred_element_type=jnp.float32)  # (16, 8)
        out = jnp.dot(q_head, d, preferred_element_type=jnp.float32) + bh    # (2, 8)
        o_ref[br] = jnp.tanh(out)


# ---------------------------------------------------------------------------
# Wrapper-side packing (one-time parameter plumbing, not on the kernel hot path)
# ---------------------------------------------------------------------------
def _pad2(a, rows, lanes):
    return jnp.pad(a, ((0, rows - a.shape[0]), (0, lanes - a.shape[1])))


def _pack_layer(params):
    (wq, wk, wv, bq, bk, bv, wo, bo, g1, be1,
     w1, b1, w2, b2, w3, b3, g2, be2) = params
    scale = 1.0 / (float(EMBED) ** 0.5)
    pieces = [
        _pad2(wq * scale, 16, ENC_LANES), _pad2(wk, 16, ENC_LANES),
        _pad2(wv, 16, ENC_LANES), _pad2(wo, 16, ENC_LANES),
        _pad2(w1, 16, ENC_LANES), _pad2(w2, 32, ENC_LANES), _pad2(w3, 32, ENC_LANES),
        _pad2(bq * scale, 1, ENC_LANES), _pad2(bk, 1, ENC_LANES), _pad2(bv, 1, ENC_LANES),
        _pad2(bo, 1, ENC_LANES), _pad2(g1, 1, ENC_LANES), _pad2(be1, 1, ENC_LANES),
        _pad2(b1, 1, ENC_LANES), _pad2(b2, 1, ENC_LANES), _pad2(b3, 1, ENC_LANES),
        _pad2(g2, 1, ENC_LANES), _pad2(be2, 1, ENC_LANES),
    ]
    blk = jnp.concatenate(pieces, axis=0)                 # (155, 32)
    return jnp.pad(blk, ((0, ENC_ROWS - blk.shape[0]), (0, 0)))


def _pack_head(head):
    w, b = head                                           # (96, 8), (1, 8)
    # lanes [8b:8b+8] = W[12b:12b+12, :]
    wcat = w.reshape(HEAD_BLOCKS, EMBED, HEAD_OUT).transpose(1, 0, 2).reshape(EMBED, HEAD_LANES)
    blk = jnp.zeros((16, HEAD_LANES), jnp.float32)
    blk = blk.at[0:EMBED, :].set(wcat)
    blk = blk.at[EMBED:EMBED + 1, 0:HEAD_OUT].set(b)
    return blk


def _build_consts():
    p = jnp.arange(TOKENS)                                 # token row p = n*SEQ + l
    c = jnp.arange(HEAD_LANES)
    b_of_p = 2 * (p % 4) + (p // SEQ)                      # head weight block fed by token p
    r_of_p = (p % SEQ) // 4                                # head output row of token p
    m_head = (c[None, :] // HEAD_OUT == b_of_p[:, None]).astype(jnp.float32)          # (16, 64)
    q_head = (jnp.arange(HEAD_ROWS)[:, None] == r_of_p[None, :]).astype(jnp.float32)  # (2, 16)
    r_head = (c[:, None] % HEAD_OUT == jnp.arange(HEAD_OUT)[None, :]).astype(jnp.float32)  # (64, 8)
    grp = p // SEQ                                         # batch index of token p
    attn_mask = jnp.where(grp[:, None] == grp[None, :], 0.0, NEG_INF).astype(jnp.float32)  # (16, 16)

    const = jnp.zeros((CONST_ROWS, HEAD_LANES), jnp.float32)
    const = const.at[OFF_MASK_HEAD:OFF_MASK_HEAD + TOKENS, :].set(m_head)
    const = const.at[OFF_MASK_ATTN:OFF_MASK_ATTN + TOKENS, 0:TOKENS].set(attn_mask)
    const = const.at[OFF_R_HEAD:OFF_R_HEAD + HEAD_LANES, 0:HEAD_OUT].set(r_head)
    const = const.at[OFF_Q_HEAD:OFF_Q_HEAD + HEAD_ROWS, 0:TOKENS].set(q_head)
    return const


def self_attention_forward(x, actor_layers, actor_head, critic_layers, critic_head):
    """x: (L, N, E) as in the PyTorch module. Returns (pi, vf), each (2, 8)."""
    # Batch-major token layout: row p = n*SEQ + l.
    xk = jnp.transpose(x, (1, 0, 2)).reshape(TOKENS, EMBED).astype(jnp.float32)

    enc = jnp.stack([
        jnp.stack([_pack_layer(p) for p in actor_layers]),
        jnp.stack([_pack_layer(p) for p in critic_layers]),
    ])                                                      # (2, 3, 160, 32)
    head = jnp.stack([_pack_head(actor_head), _pack_head(critic_head)])   # (2, 16, 64)
    const = _build_consts()                                 # (104, 64)

    # No grid: one invocation, whole (tiny, <300 KiB) operands resident in VMEM.
    out = pl.pallas_call(
        _fused_kernel,
        out_shape=jax.ShapeDtypeStruct((NUM_BRANCH, HEAD_ROWS, HEAD_OUT), jnp.float32),
    )(xk, enc, head, const)
    return out[0], out[1]


# ---------------------------------------------------------------------------
# Pure-JAX reference (mirrors the PyTorch forward in (L, N, E) layout)
# ---------------------------------------------------------------------------
def reference_forward(x, layers, head):
    h = x.astype(jnp.float32)                               # (L, N, E)
    for (wq, wk, wv, bq, bk, bv, wo, bo, g1, be1,
         w1, b1, w2, b2, w3, b3, g2, be2) in layers:
        q = h @ wq + bq
        k = h @ wk + bk
        v = h @ wv + bv
        s = jnp.einsum('lne,mne->nlm', q, k) / (float(EMBED) ** 0.5)
        a = jax.nn.softmax(s, axis=-1)
        ctx = jnp.einsum('nlm,mne->lne', a, v)
        h = _layernorm(h + ctx @ wo + bo, g1, be1)
        f = jnp.tanh(h @ w1 + b1)
        f = jnp.tanh(f @ w2 + b2)
        f = jnp.tanh(f @ w3 + b3)
        h = _layernorm(h + f, g2, be2)
    w, b = head
    return jnp.tanh(h.reshape(-1, HEAD_IN) @ w + b)


# ---------------------------------------------------------------------------
# Deterministic parameter construction (synthetic; shapes follow the module)
# ---------------------------------------------------------------------------
def _rnd(key, shape, scale):
    return jax.random.normal(key, shape, jnp.float32) * scale


def init_encoder_params(key):
    ks = jax.random.split(key, 14)
    wq = _rnd(ks[0], (EMBED, EMBED), 0.3)
    wk = _rnd(ks[1], (EMBED, EMBED), 0.3)
    wv = _rnd(ks[2], (EMBED, EMBED), 0.3)
    bq = _rnd(ks[3], (1, EMBED), 0.05)
    bk = _rnd(ks[4], (1, EMBED), 0.05)
    bv = _rnd(ks[5], (1, EMBED), 0.05)
    wo = _rnd(ks[6], (EMBED, EMBED), 0.3)
    bo = _rnd(ks[7], (1, EMBED), 0.05)
    g1 = jnp.ones((1, EMBED), jnp.float32)
    be1 = jnp.zeros((1, EMBED), jnp.float32)
    w1 = _rnd(ks[8], (EMBED, FF_HID), 0.3)
    b1 = _rnd(ks[9], (1, FF_HID), 0.05)
    w2 = _rnd(ks[10], (FF_HID, FF_HID), 0.2)
    b2 = _rnd(ks[11], (1, FF_HID), 0.05)
    w3 = _rnd(ks[12], (FF_HID, EMBED), 0.2)
    b3 = _rnd(ks[13], (1, EMBED), 0.05)
    g2 = jnp.ones((1, EMBED), jnp.float32)
    be2 = jnp.zeros((1, EMBED), jnp.float32)
    return (wq, wk, wv, bq, bk, bv, wo, bo, g1, be1,
            w1, b1, w2, b2, w3, b3, g2, be2)


def init_head_params(key):
    k1, k2 = jax.random.split(key)
    w = _rnd(k1, (HEAD_IN, HEAD_OUT), 0.1)                  # Linear(96, 8), (in, out) layout
    b = _rnd(k2, (1, HEAD_OUT), 0.05)
    return (w, b)


# ---------------------------------------------------------------------------
if __name__ == "__main__":
    key = jax.random.PRNGKey(0)
    keys = jax.random.split(key, 9)

    # Input in the PyTorch layout: (seq=8, batch=2, embed=12)
    x = jax.random.normal(keys[0], (SEQ, BATCH, EMBED), jnp.float32)

    actor_layers = [init_encoder_params(keys[1 + i]) for i in range(NUM_LAYERS)]
    critic_layers = [init_encoder_params(keys[4 + i]) for i in range(NUM_LAYERS)]
    actor_head = init_head_params(keys[7])
    critic_head = init_head_params(keys[8])

    fwd = jax.jit(self_attention_forward)
    pi, vf = fwd(x, actor_layers, actor_head, critic_layers, critic_head)
    jax.block_until_ready((pi, vf))

    # Correctness check against a plain-JAX reference of the same forward pass.
    with jax.default_matmul_precision("float32"):
        pi_ref = reference_forward(x, actor_layers, actor_head)
        vf_ref = reference_forward(x, critic_layers, critic_head)

    assert pi.shape == (HEAD_ROWS, HEAD_OUT) and vf.shape == (HEAD_ROWS, HEAD_OUT)
    assert bool(jnp.all(jnp.isfinite(pi))) and bool(jnp.all(jnp.isfinite(vf)))
    assert bool(jnp.allclose(pi, pi_ref, atol=3e-3, rtol=3e-3))
    assert bool(jnp.allclose(vf, vf_ref, atol=3e-3, rtol=3e-3))
    print("KERNEL_OK")
</pallas_src>

<mosaic_0001>
module attributes {stable_mosaic.version = 11 : i64} {
  func.func @_fused_kernel(%arg0: memref<16x12xf32, #tpu.memory_space<vmem>>, %arg1: memref<2x3x160x32xf32, #tpu.memory_space<vmem>>, %arg2: memref<2x16x64xf32, #tpu.memory_space<vmem>>, %arg3: memref<104x64xf32, #tpu.memory_space<vmem>>, %arg4: memref<2x2x8xf32, #tpu.memory_space<vmem>>) attributes {dimension_semantics = [], scalar_prefetch = 0 : i64, scratch_operands = 0 : i64, tpu.core_type = #tpu.core_type<tc>} {
    %c0 = arith.constant 0 : index
    %c0_0 = arith.constant 0 : index
    %0 = vector.load %arg0[%c0, %c0_0] : memref<16x12xf32, #tpu.memory_space<vmem>>, vector<16x12xf32>
    %c0_1 = arith.constant 0 : index
    %c0_2 = arith.constant 0 : index
    %1 = vector.load %arg3[%c0_1, %c0_2] : memref<104x64xf32, #tpu.memory_space<vmem>>, vector<16x64xf32>
    %c16 = arith.constant 16 : index
    %c0_3 = arith.constant 0 : index
    %2 = vector.load %arg3[%c16, %c0_3] : memref<104x64xf32, #tpu.memory_space<vmem>>, vector<16x16xf32>
    %c32 = arith.constant 32 : index
    %c0_4 = arith.constant 0 : index
    %3 = vector.load %arg3[%c32, %c0_4] : memref<104x64xf32, #tpu.memory_space<vmem>>, vector<64x8xf32>
    %c96 = arith.constant 96 : index
    %c0_5 = arith.constant 0 : index
    %4 = vector.load %arg3[%c96, %c0_5] : memref<104x64xf32, #tpu.memory_space<vmem>>, vector<2x16xf32>
    %c0_6 = arith.constant 0 : index
    %c0_7 = arith.constant 0 : index
    %c0_8 = arith.constant 0 : index
    %c0_9 = arith.constant 0 : index
    %5 = vector.load %arg1[%c0_6, %c0_7, %c0_8, %c0_9] : memref<2x3x160x32xf32, #tpu.memory_space<vmem>>, vector<1x1x12x12xf32>
    %6 = vector.shape_cast %5 : vector<1x1x12x12xf32> to vector<12x12xf32>
    %c0_10 = arith.constant 0 : index
    %c0_11 = arith.constant 0 : index
    %c16_12 = arith.constant 16 : index
    %c0_13 = arith.constant 0 : index
    %7 = vector.load %arg1[%c0_10, %c0_11, %c16_12, %c0_13] : memref<2x3x160x32xf32, #tpu.memory_space<vmem>>, vector<1x1x12x12xf32>
    %8 = vector.shape_cast %7 : vector<1x1x12x12xf32> to vector<12x12xf32>
    %c0_14 = arith.constant 0 : index
    %c0_15 = arith.constant 0 : index
    %c32_16 = arith.constant 32 : index
    %c0_17 = arith.constant 0 : index
    %9 = vector.load %arg1[%c0_14, %c0_15, %c32_16, %c0_17] : memref<2x3x160x32xf32, #tpu.memory_space<vmem>>, vector<1x1x12x12xf32>
    %10 = vector.shape_cast %9 : vector<1x1x12x12xf32> to vector<12x12xf32>
    %c0_18 = arith.constant 0 : index
    %c0_19 = arith.constant 0 : index
    %c48 = arith.constant 48 : index
    %c0_20 = arith.constant 0 : index
    %11 = vector.load %arg1[%c0_18, %c0_19, %c48, %c0_20] : memref<2x3x160x32xf32, #tpu.memory_space<vmem>>, vector<1x1x12x12xf32>
    %12 = vector.shape_cast %11 : vector<1x1x12x12xf32> to vector<12x12xf32>
    %c0_21 = arith.constant 0 : index
    %c0_22 = arith.constant 0 : index
    %c64 = arith.constant 64 : index
    %c0_23 = arith.constant 0 : index
    %13 = vector.load %arg1[%c0_21, %c0_22, %c64, %c0_23] : memref<2x3x160x32xf32, #tpu.memory_space<vmem>>, vector<1x1x12x32xf32>
    %14 = vector.shape_cast %13 : vector<1x1x12x32xf32> to vector<12x32xf32>
    %c0_24 = arith.constant 0 : index
    %c0_25 = arith.constant 0 : index
    %c80 = arith.constant 80 : index
    %c0_26 = arith.constant 0 : index
    %15 = vector.load %arg1[%c0_24, %c0_25, %c80, %c0_26] : memref<2x3x160x32xf32, #tpu.memory_space<vmem>>, vector<1x1x32x32xf32>
    %16 = vector.shape_cast %15 : vector<1x1x32x32xf32> to vector<32x32xf32>
    %c0_27 = arith.constant 0 : index
    %c0_28 = arith.constant 0 : index
    %c112 = arith.constant 112 : index
    %c0_29 = arith.constant 0 : index
    %17 = vector.load %arg1[%c0_27, %c0_28, %c112, %c0_29] : memref<2x3x160x32xf32, #tpu.memory_space<vmem>>, vector<1x1x32x12xf32>
    %18 = vector.shape_cast %17 : vector<1x1x32x12xf32> to vector<32x12xf32>
    %c0_30 = arith.constant 0 : index
    %c0_31 = arith.constant 0 : index
    %c144 = arith.constant 144 : index
    %c0_32 = arith.constant 0 : index
    %19 = vector.load %arg1[%c0_30, %c0_31, %c144, %c0_32] : memref<2x3x160x32xf32, #tpu.memory_space<vmem>>, vector<1x1x1x12xf32>
    %20 = vector.shape_cast %19 : vector<1x1x1x12xf32> to vector<1x12xf32>
    %c0_33 = arith.constant 0 : index
    %c0_34 = arith.constant 0 : index
    %c145 = arith.constant 145 : index
    %c0_35 = arith.constant 0 : index
    %21 = vector.load %arg1[%c0_33, %c0_34, %c145, %c0_35] : memref<2x3x160x32xf32, #tpu.memory_space<vmem>>, vector<1x1x1x12xf32>
    %22 = vector.shape_cast %21 : vector<1x1x1x12xf32> to vector<1x12xf32>
    %c0_36 = arith.constant 0 : index
    %c0_37 = arith.constant 0 : index
    %c146 = arith.constant 146 : index
    %c0_38 = arith.constant 0 : index
    %23 = vector.load %arg1[%c0_36, %c0_37, %c146, %c0_38] : memref<2x3x160x32xf32, #tpu.memory_space<vmem>>, vector<1x1x1x12xf32>
    %24 = vector.shape_cast %23 : vector<1x1x1x12xf32> to vector<1x12xf32>
    %c0_39 = arith.constant 0 : index
    %c0_40 = arith.constant 0 : index
    %c147 = arith.constant 147 : index
    %c0_41 = arith.constant 0 : index
    %25 = vector.load %arg1[%c0_39, %c0_40, %c147, %c0_41] : memref<2x3x160x32xf32, #tpu.memory_space<vmem>>, vector<1x1x1x12xf32>
    %26 = vector.shape_cast %25 : vector<1x1x1x12xf32> to vector<1x12xf32>
    %c0_42 = arith.constant 0 : index
    %c0_43 = arith.constant 0 : index
    %c148 = arith.constant 148 : index
    %c0_44 = arith.constant 0 : index
    %27 = vector.load %arg1[%c0_42, %c0_43, %c148, %c0_44] : memref<2x3x160x32xf32, #tpu.memory_space<vmem>>, vector<1x1x1x12xf32>
    %28 = vector.shape_cast %27 : vector<1x1x1x12xf32> to vector<1x12xf32>
    %c0_45 = arith.constant 0 : index
    %c0_46 = arith.constant 0 : index
    %c149 = arith.constant 149 : index
    %c0_47 = arith.constant 0 : index
    %29 = vector.load %arg1[%c0_45, %c0_46, %c149, %c0_47] : memref<2x3x160x32xf32, #tpu.memory_space<vmem>>, vector<1x1x1x12xf32>
    %30 = vector.shape_cast %29 : vector<1x1x1x12xf32> to vector<1x12xf32>
    %c0_48 = arith.constant 0 : index
    %c0_49 = arith.constant 0 : index
    %c150 = arith.constant 150 : index
    %c0_50 = arith.constant 0 : index
    %31 = vector.load %arg1[%c0_48, %c0_49, %c150, %c0_50] : memref<2x3x160x32xf32, #tpu.memory_space<vmem>>, vector<1x1x1x32xf32>
    %32 = vector.shape_cast %31 : vector<1x1x1x32xf32> to vector<1x32xf32>
    %c0_51 = arith.constant 0 : index
    %c0_52 = arith.constant 0 : index
    %c151 = arith.constant 151 : index
    %c0_53 = arith.constant 0 : index
    %33 = vector.load %arg1[%c0_51, %c0_52, %c151, %c0_53] : memref<2x3x160x32xf32, #tpu.memory_space<vmem>>, vector<1x1x1x32xf32>
    %34 = vector.shape_cast %33 : vector<1x1x1x32xf32> to vector<1x32xf32>
    %c0_54 = arith.constant 0 : index
    %c0_55 = arith.constant 0 : index
    %c152 = arith.constant 152 : index
    %c0_56 = arith.constant 0 : index
    %35 = vector.load %arg1[%c0_54, %c0_55, %c152, %c0_56] : memref<2x3x160x32xf32, #tpu.memory_space<vmem>>, vector<1x1x1x12xf32>
    %36 = vector.shape_cast %35 : vector<1x1x1x12xf32> to vector<1x12xf32>
    %c0_57 = arith.constant 0 : index
    %c0_58 = arith.constant 0 : index
    %c153 = arith.constant 153 : index
    %c0_59 = arith.constant 0 : index
    %37 = vector.load %arg1[%c0_57, %c0_58, %c153, %c0_59] : memref<2x3x160x32xf32, #tpu.memory_space<vmem>>, vector<1x1x1x12xf32>
    %38 = vector.shape_cast %37 : vector<1x1x1x12xf32> to vector<1x12xf32>
    %c0_60 = arith.constant 0 : index
    %c0_61 = arith.constant 0 : index
    %c154 = arith.constant 154 : index
    %c0_62 = arith.constant 0 : index
    %39 = vector.load %arg1[%c0_60, %c0_61, %c154, %c0_62] : memref<2x3x160x32xf32, #tpu.memory_space<vmem>>, vector<1x1x1x12xf32>
    %40 = vector.shape_cast %39 : vector<1x1x1x12xf32> to vector<1x12xf32>
    %cst = arith.constant dense<0.000000e+00> : vector<16x12xf32>
    %41 = tpu.matmul %0, %6, %cst {dimension_numbers = #tpu.dot_dimension_numbers<[1], [0], [0], [1], [0, 0, 1, 1], [], []>} : vector<16x12xf32>, vector<12x12xf32>, vector<16x12xf32> -> vector<16x12xf32>
    %42 = vector.broadcast %20 : vector<1x12xf32> to vector<16x12xf32>
    %43 = arith.addf %41, %42 : vector<16x12xf32>
    %cst_63 = arith.constant dense<0.000000e+00> : vector<16x12xf32>
    %44 = tpu.matmul %0, %8, %cst_63 {dimension_numbers = #tpu.dot_dimension_numbers<[1], [0], [0], [1], [0, 0, 1, 1], [], []>} : vector<16x12xf32>, vector<12x12xf32>, vector<16x12xf32> -> vector<16x12xf32>
    %45 = vector.broadcast %22 : vector<1x12xf32> to vector<16x12xf32>
    %46 = arith.addf %44, %45 : vector<16x12xf32>
    %cst_64 = arith.constant dense<0.000000e+00> : vector<16x12xf32>
    %47 = tpu.matmul %0, %10, %cst_64 {dimension_numbers = #tpu.dot_dimension_numbers<[1], [0], [0], [1], [0, 0, 1, 1], [], []>} : vector<16x12xf32>, vector<12x12xf32>, vector<16x12xf32> -> vector<16x12xf32>
    %48 = vector.broadcast %24 : vector<1x12xf32> to vector<16x12xf32>
    %49 = arith.addf %47, %48 : vector<16x12xf32>
    %cst_65 = arith.constant dense<0.000000e+00> : vector<16x16xf32>
    %50 = tpu.matmul %43, %46, %cst_65 {dimension_numbers = #tpu.dot_dimension_numbers<[1], [1], [0], [0], [0, 0, 1, 0], [], []>} : vector<16x12xf32>, vector<16x12xf32>, vector<16x16xf32> -> vector<16x16xf32>
    %51 = arith.addf %50, %2 : vector<16x16xf32>
    %cst_66 = arith.constant dense<0xFF800000> : vector<16xf32>
    %52 = vector.multi_reduction <maximumf>, %51, %cst_66 [1] : vector<16x16xf32> to vector<16xf32>
    %53 = vector.shape_cast %52 : vector<16xf32> to vector<16x1xf32>
    %54 = vector.broadcast %53 : vector<16x1xf32> to vector<16x16xf32>
    %55 = arith.subf %51, %54 : vector<16x16xf32>
    %56 = math.exp %55 : vector<16x16xf32>
    %cst_67 = arith.constant dense<0.000000e+00> : vector<16xf32>
    %57 = vector.multi_reduction <add>, %56, %cst_67 [1] : vector<16x16xf32> to vector<16xf32>
    %58 = vector.shape_cast %57 : vector<16xf32> to vector<16x1xf32>
    %59 = vector.broadcast %58 : vector<16x1xf32> to vector<16x16xf32>
    %60 = arith.divf %56, %59 : vector<16x16xf32>
    %cst_68 = arith.constant dense<0.000000e+00> : vector<16x12xf32>
    %61 = tpu.matmul %60, %49, %cst_68 {dimension_numbers = #tpu.dot_dimension_numbers<[1], [0], [0], [1], [0, 0, 1, 1], [], []>} : vector<16x16xf32>, vector<16x12xf32>, vector<16x12xf32> -> vector<16x12xf32>
    %cst_69 = arith.constant dense<0.000000e+00> : vector<16x12xf32>
    %62 = tpu.matmul %61, %12, %cst_69 {dimension_numbers = #tpu.dot_dimension_numbers<[1], [0], [0], [1], [0, 0, 1, 1], [], []>} : vector<16x12xf32>, vector<12x12xf32>, vector<16x12xf32> -> vector<16x12xf32>
    %63 = vector.broadcast %26 : vector<1x12xf32> to vector<16x12xf32>
    %64 = arith.addf %62, %63 : vector<16x12xf32>
    %65 = arith.addf %0, %64 : vector<16x12xf32>
    %cst_70 = arith.constant dense<0.000000e+00> : vector<16xf32>
    %66 = vector.multi_reduction <add>, %65, %cst_70 [1] : vector<16x12xf32> to vector<16xf32>
    %67 = vector.shape_cast %66 : vector<16xf32> to vector<16x1xf32>
    %cst_71 = arith.constant 1.200000e+01 : f32
    %68 = vector.broadcast %cst_71 : f32 to vector<16x1xf32>
    %69 = arith.divf %67, %68 : vector<16x1xf32>
    %70 = vector.broadcast %69 : vector<16x1xf32> to vector<16x12xf32>
    %71 = arith.subf %65, %70 : vector<16x12xf32>
    %72 = arith.mulf %71, %71 : vector<16x12xf32>
    %cst_72 = arith.constant dense<0.000000e+00> : vector<16xf32>
    %73 = vector.multi_reduction <add>, %72, %cst_72 [1] : vector<16x12xf32> to vector<16xf32>
    %74 = vector.shape_cast %73 : vector<16xf32> to vector<16x1xf32>
    %cst_73 = arith.constant 1.200000e+01 : f32
    %75 = vector.broadcast %cst_73 : f32 to vector<16x1xf32>
    %76 = arith.divf %74, %75 : vector<16x1xf32>
    %cst_74 = arith.constant 9.99999974E-6 : f32
    %77 = vector.broadcast %cst_74 : f32 to vector<16x1xf32>
    %78 = arith.addf %76, %77 : vector<16x1xf32>
    %79 = math.rsqrt %78 : vector<16x1xf32>
    %80 = vector.broadcast %79 : vector<16x1xf32> to vector<16x12xf32>
    %81 = arith.mulf %71, %80 : vector<16x12xf32>
    %82 = vector.broadcast %28 : vector<1x12xf32> to vector<16x12xf32>
    %83 = arith.mulf %81, %82 : vector<16x12xf32>
    %84 = vector.broadcast %30 : vector<1x12xf32> to vector<16x12xf32>
    %85 = arith.addf %83, %84 : vector<16x12xf32>
    %cst_75 = arith.constant dense<0.000000e+00> : vector<16x32xf32>
    %86 = tpu.matmul %85, %14, %cst_75 {dimension_numbers = #tpu.dot_dimension_numbers<[1], [0], [0], [1], [0, 0, 1, 1], [], []>} : vector<16x12xf32>, vector<12x32xf32>, vector<16x32xf32> -> vector<16x32xf32>
    %87 = vector.broadcast %32 : vector<1x32xf32> to vector<16x32xf32>
    %88 = arith.addf %86, %87 : vector<16x32xf32>
    %89 = math.tanh %88 : vector<16x32xf32>
    %cst_76 = arith.constant dense<0.000000e+00> : vector<16x32xf32>
    %90 = tpu.matmul %89, %16, %cst_76 {dimension_numbers = #tpu.dot_dimension_numbers<[1], [0], [0], [1], [0, 0, 1, 1], [], []>} : vector<16x32xf32>, vector<32x32xf32>, vector<16x32xf32> -> vector<16x32xf32>
    %91 = vector.broadcast %34 : vector<1x32xf32> to vector<16x32xf32>
    %92 = arith.addf %90, %91 : vector<16x32xf32>
    %93 = math.tanh %92 : vector<16x32xf32>
    %cst_77 = arith.constant dense<0.000000e+00> : vector<16x12xf32>
    %94 = tpu.matmul %93, %18, %cst_77 {dimension_numbers = #tpu.dot_dimension_numbers<[1], [0], [0], [1], [0, 0, 1, 1], [], []>} : vector<16x32xf32>, vector<32x12xf32>, vector<16x12xf32> -> vector<16x12xf32>
    %95 = vector.broadcast %36 : vector<1x12xf32> to vector<16x12xf32>
    %96 = arith.addf %94, %95 : vector<16x12xf32>
    %97 = math.tanh %96 : vector<16x12xf32>
    %98 = arith.addf %85, %97 : vector<16x12xf32>
    %cst_78 = arith.constant dense<0.000000e+00> : vector<16xf32>
    %99 = vector.multi_reduction <add>, %98, %cst_78 [1] : vector<16x12xf32> to vector<16xf32>
    %100 = vector.shape_cast %99 : vector<16xf32> to vector<16x1xf32>
    %cst_79 = arith.constant 1.200000e+01 : f32
    %101 = vector.broadcast %cst_79 : f32 to vector<16x1xf32>
    %102 = arith.divf %100, %101 : vector<16x1xf32>
    %103 = vector.broadcast %102 : vector<16x1xf32> to vector<16x12xf32>
    %104 = arith.subf %98, %103 : vector<16x12xf32>
    %105 = arith.mulf %104, %104 : vector<16x12xf32>
    %cst_80 = arith.constant dense<0.000000e+00> : vector<16xf32>
    %106 = vector.multi_reduction <add>, %105, %cst_80 [1] : vector<16x12xf32> to vector<16xf32>
    %107 = vector.shape_cast %106 : vector<16xf32> to vector<16x1xf32>
    %cst_81 = arith.constant 1.200000e+01 : f32
    %108 = vector.broadcast %cst_81 : f32 to vector<16x1xf32>
    %109 = arith.divf %107, %108 : vector<16x1xf32>
    %cst_82 = arith.constant 9.99999974E-6 : f32
    %110 = vector.broadcast %cst_82 : f32 to vector<16x1xf32>
    %111 = arith.addf %109, %110 : vector<16x1xf32>
    %112 = math.rsqrt %111 : vector<16x1xf32>
    %113 = vector.broadcast %112 : vector<16x1xf32> to vector<16x12xf32>
    %114 = arith.mulf %104, %113 : vector<16x12xf32>
    %115 = vector.broadcast %38 : vector<1x12xf32> to vector<16x12xf32>
    %116 = arith.mulf %114, %115 : vector<16x12xf32>
    %117 = vector.broadcast %40 : vector<1x12xf32> to vector<16x12xf32>
    %118 = arith.addf %116, %117 : vector<16x12xf32>
    %c0_83 = arith.constant 0 : index
    %c1 = arith.constant 1 : index
    %c0_84 = arith.constant 0 : index
    %c0_85 = arith.constant 0 : index
    %119 = vector.load %arg1[%c0_83, %c1, %c0_84, %c0_85] : memref<2x3x160x32xf32, #tpu.memory_space<vmem>>, vector<1x1x12x12xf32>
    %120 = vector.shape_cast %119 : vector<1x1x12x12xf32> to vector<12x12xf32>
    %c0_86 = arith.constant 0 : index
    %c1_87 = arith.constant 1 : index
    %c16_88 = arith.constant 16 : index
    %c0_89 = arith.constant 0 : index
    %121 = vector.load %arg1[%c0_86, %c1_87, %c16_88, %c0_89] : memref<2x3x160x32xf32, #tpu.memory_space<vmem>>, vector<1x1x12x12xf32>
    %122 = vector.shape_cast %121 : vector<1x1x12x12xf32> to vector<12x12xf32>
    %c0_90 = arith.constant 0 : index
    %c1_91 = arith.constant 1 : index
    %c32_92 = arith.constant 32 : index
    %c0_93 = arith.constant 0 : index
    %123 = vector.load %arg1[%c0_90, %c1_91, %c32_92, %c0_93] : memref<2x3x160x32xf32, #tpu.memory_space<vmem>>, vector<1x1x12x12xf32>
    %124 = vector.shape_cast %123 : vector<1x1x12x12xf32> to vector<12x12xf32>
    %c0_94 = arith.constant 0 : index
    %c1_95 = arith.constant 1 : index
    %c48_96 = arith.constant 48 : index
    %c0_97 = arith.constant 0 : index
    %125 = vector.load %arg1[%c0_94, %c1_95, %c48_96, %c0_97] : memref<2x3x160x32xf32, #tpu.memory_space<vmem>>, vector<1x1x12x12xf32>
    %126 = vector.shape_cast %125 : vector<1x1x12x12xf32> to vector<12x12xf32>
    %c0_98 = arith.constant 0 : index
    %c1_99 = arith.constant 1 : index
    %c64_100 = arith.constant 64 : index
    %c0_101 = arith.constant 0 : index
    %127 = vector.load %arg1[%c0_98, %c1_99, %c64_100, %c0_101] : memref<2x3x160x32xf32, #tpu.memory_space<vmem>>, vector<1x1x12x32xf32>
    %128 = vector.shape_cast %127 : vector<1x1x12x32xf32> to vector<12x32xf32>
    %c0_102 = arith.constant 0 : index
    %c1_103 = arith.constant 1 : index
    %c80_104 = arith.constant 80 : index
    %c0_105 = arith.constant 0 : index
    %129 = vector.load %arg1[%c0_102, %c1_103, %c80_104, %c0_105] : memref<2x3x160x32xf32, #tpu.memory_space<vmem>>, vector<1x1x32x32xf32>
    %130 = vector.shape_cast %129 : vector<1x1x32x32xf32> to vector<32x32xf32>
    %c0_106 = arith.constant 0 : index
    %c1_107 = arith.constant 1 : index
    %c112_108 = arith.constant 112 : index
    %c0_109 = arith.constant 0 : index
    %131 = vector.load %arg1[%c0_106, %c1_107, %c112_108, %c0_109] : memref<2x3x160x32xf32, #tpu.memory_space<vmem>>, vector<1x1x32x12xf32>
    %132 = vector.shape_cast %131 : vector<1x1x32x12xf32> to vector<32x12xf32>
    %c0_110 = arith.constant 0 : index
    %c1_111 = arith.constant 1 : index
    %c144_112 = arith.constant 144 : index
    %c0_113 = arith.constant 0 : index
    %133 = vector.load %arg1[%c0_110, %c1_111, %c144_112, %c0_113] : memref<2x3x160x32xf32, #tpu.memory_space<vmem>>, vector<1x1x1x12xf32>
    %134 = vector.shape_cast %133 : vector<1x1x1x12xf32> to vector<1x12xf32>
    %c0_114 = arith.constant 0 : index
    %c1_115 = arith.constant 1 : index
    %c145_116 = arith.constant 145 : index
    %c0_117 = arith.constant 0 : index
    %135 = vector.load %arg1[%c0_114, %c1_115, %c145_116, %c0_117] : memref<2x3x160x32xf32, #tpu.memory_space<vmem>>, vector<1x1x1x12xf32>
    %136 = vector.shape_cast %135 : vector<1x1x1x12xf32> to vector<1x12xf32>
    %c0_118 = arith.constant 0 : index
    %c1_119 = arith.constant 1 : index
    %c146_120 = arith.constant 146 : index
    %c0_121 = arith.constant 0 : index
    %137 = vector.load %arg1[%c0_118, %c1_119, %c146_120, %c0_121] : memref<2x3x160x32xf32, #tpu.memory_space<vmem>>, vector<1x1x1x12xf32>
    %138 = vector.shape_cast %137 : vector<1x1x1x12xf32> to vector<1x12xf32>
    %c0_122 = arith.constant 0 : index
    %c1_123 = arith.constant 1 : index
    %c147_124 = arith.constant 147 : index
    %c0_125 = arith.constant 0 : index
    %139 = vector.load %arg1[%c0_122, %c1_123, %c147_124, %c0_125] : memref<2x3x160x32xf32, #tpu.memory_space<vmem>>, vector<1x1x1x12xf32>
    %140 = vector.shape_cast %139 : vector<1x1x1x12xf32> to vector<1x12xf32>
    %c0_126 = arith.constant 0 : index
    %c1_127 = arith.constant 1 : index
    %c148_128 = arith.constant 148 : index
    %c0_129 = arith.constant 0 : index
    %141 = vector.load %arg1[%c0_126, %c1_127, %c148_128, %c0_129] : memref<2x3x160x32xf32, #tpu.memory_space<vmem>>, vector<1x1x1x12xf32>
    %142 = vector.shape_cast %141 : vector<1x1x1x12xf32> to vector<1x12xf32>
    %c0_130 = arith.constant 0 : index
    %c1_131 = arith.constant 1 : index
    %c149_132 = arith.constant 149 : index
    %c0_133 = arith.constant 0 : index
    %143 = vector.load %arg1[%c0_130, %c1_131, %c149_132, %c0_133] : memref<2x3x160x32xf32, #tpu.memory_space<vmem>>, vector<1x1x1x12xf32>
    %144 = vector.shape_cast %143 : vector<1x1x1x12xf32> to vector<1x12xf32>
    %c0_134 = arith.constant 0 : index
    %c1_135 = arith.constant 1 : index
    %c150_136 = arith.constant 150 : index
    %c0_137 = arith.constant 0 : index
    %145 = vector.load %arg1[%c0_134, %c1_135, %c150_136, %c0_137] : memref<2x3x160x32xf32, #tpu.memory_space<vmem>>, vector<1x1x1x32xf32>
    %146 = vector.shape_cast %145 : vector<1x1x1x32xf32> to vector<1x32xf32>
    %c0_138 = arith.constant 0 : index
    %c1_139 = arith.constant 1 : index
    %c151_140 = arith.constant 151 : index
    %c0_141 = arith.constant 0 : index
    %147 = vector.load %arg1[%c0_138, %c1_139, %c151_140, %c0_141] : memref<2x3x160x32xf32, #tpu.memory_space<vmem>>, vector<1x1x1x32xf32>
    %148 = vector.shape_cast %147 : vector<1x1x1x32xf32> to vector<1x32xf32>
    %c0_142 = arith.constant 0 : index
    %c1_143 = arith.constant 1 : index
    %c152_144 = arith.constant 152 : index
    %c0_145 = arith.constant 0 : index
    %149 = vector.load %arg1[%c0_142, %c1_143, %c152_144, %c0_145] : memref<2x3x160x32xf32, #tpu.memory_space<vmem>>, vector<1x1x1x12xf32>
    %150 = vector.shape_cast %149 : vector<1x1x1x12xf32> to vector<1x12xf32>
    %c0_146 = arith.constant 0 : index
    %c1_147 = arith.constant 1 : index
    %c153_148 = arith.constant 153 : index
    %c0_149 = arith.constant 0 : index
    %151 = vector.load %arg1[%c0_146, %c1_147, %c153_148, %c0_149] : memref<2x3x160x32xf32, #tpu.memory_space<vmem>>, vector<1x1x1x12xf32>
    %152 = vector.shape_cast %151 : vector<1x1x1x12xf32> to vector<1x12xf32>
    %c0_150 = arith.constant 0 : index
    %c1_151 = arith.constant 1 : index
    %c154_152 = arith.constant 154 : index
    %c0_153 = arith.constant 0 : index
    %153 = vector.load %arg1[%c0_150, %c1_151, %c154_152, %c0_153] : memref<2x3x160x32xf32, #tpu.memory_space<vmem>>, vector<1x1x1x12xf32>
    %154 = vector.shape_cast %153 : vector<1x1x1x12xf32> to vector<1x12xf32>
    %cst_154 = arith.constant dense<0.000000e+00> : vector<16x12xf32>
    %155 = tpu.matmul %118, %120, %cst_154 {dimension_numbers = #tpu.dot_dimension_numbers<[1], [0], [0], [1], [0, 0, 1, 1], [], []>} : vector<16x12xf32>, vector<12x12xf32>, vector<16x12xf32> -> vector<16x12xf32>
    %156 = vector.broadcast %134 : vector<1x12xf32> to vector<16x12xf32>
    %157 = arith.addf %155, %156 : vector<16x12xf32>
    %cst_155 = arith.constant dense<0.000000e+00> : vector<16x12xf32>
    %158 = tpu.matmul %118, %122, %cst_155 {dimension_numbers = #tpu.dot_dimension_numbers<[1], [0], [0], [1], [0, 0, 1, 1], [], []>} : vector<16x12xf32>, vector<12x12xf32>, vector<16x12xf32> -> vector<16x12xf32>
    %159 = vector.broadcast %136 : vector<1x12xf32> to vector<16x12xf32>
    %160 = arith.addf %158, %159 : vector<16x12xf32>
    %cst_156 = arith.constant dense<0.000000e+00> : vector<16x12xf32>
    %161 = tpu.matmul %118, %124, %cst_156 {dimension_numbers = #tpu.dot_dimension_numbers<[1], [0], [0], [1], [0, 0, 1, 1], [], []>} : vector<16x12xf32>, vector<12x12xf32>, vector<16x12xf32> -> vector<16x12xf32>
    %162 = vector.broadcast %138 : vector<1x12xf32> to vector<16x12xf32>
    %163 = arith.addf %161, %162 : vector<16x12xf32>
    %cst_157 = arith.constant dense<0.000000e+00> : vector<16x16xf32>
    %164 = tpu.matmul %157, %160, %cst_157 {dimension_numbers = #tpu.dot_dimension_numbers<[1], [1], [0], [0], [0, 0, 1, 0], [], []>} : vector<16x12xf32>, vector<16x12xf32>, vector<16x16xf32> -> vector<16x16xf32>
    %165 = arith.addf %164, %2 : vector<16x16xf32>
    %cst_158 = arith.constant dense<0xFF800000> : vector<16xf32>
    %166 = vector.multi_reduction <maximumf>, %165, %cst_158 [1] : vector<16x16xf32> to vector<16xf32>
    %167 = vector.shape_cast %166 : vector<16xf32> to vector<16x1xf32>
    %168 = vector.broadcast %167 : vector<16x1xf32> to vector<16x16xf32>
    %169 = arith.subf %165, %168 : vector<16x16xf32>
    %170 = math.exp %169 : vector<16x16xf32>
    %cst_159 = arith.constant dense<0.000000e+00> : vector<16xf32>
    %171 = vector.multi_reduction <add>, %170, %cst_159 [1] : vector<16x16xf32> to vector<16xf32>
    %172 = vector.shape_cast %171 : vector<16xf32> to vector<16x1xf32>
    %173 = vector.broadcast %172 : vector<16x1xf32> to vector<16x16xf32>
    %174 = arith.divf %170, %173 : vector<16x16xf32>
    %cst_160 = arith.constant dense<0.000000e+00> : vector<16x12xf32>
    %175 = tpu.matmul %174, %163, %cst_160 {dimension_numbers = #tpu.dot_dimension_numbers<[1], [0], [0], [1], [0, 0, 1, 1], [], []>} : vector<16x16xf32>, vector<16x12xf32>, vector<16x12xf32> -> vector<16x12xf32>
    %cst_161 = arith.constant dense<0.000000e+00> : vector<16x12xf32>
    %176 = tpu.matmul %175, %126, %cst_161 {dimension_numbers = #tpu.dot_dimension_numbers<[1], [0], [0], [1], [0, 0, 1, 1], [], []>} : vector<16x12xf32>, vector<12x12xf32>, vector<16x12xf32> -> vector<16x12xf32>
    %177 = vector.broadcast %140 : vector<1x12xf32> to vector<16x12xf32>
    %178 = arith.addf %176, %177 : vector<16x12xf32>
    %179 = arith.addf %118, %178 : vector<16x12xf32>
    %cst_162 = arith.constant dense<0.000000e+00> : vector<16xf32>
    %180 = vector.multi_reduction <add>, %179, %cst_162 [1] : vector<16x12xf32> to vector<16xf32>
    %181 = vector.shape_cast %180 : vector<16xf32> to vector<16x1xf32>
    %cst_163 = arith.constant 1.200000e+01 : f32
    %182 = vector.broadcast %cst_163 : f32 to vector<16x1xf32>
    %183 = arith.divf %181, %182 : vector<16x1xf32>
    %184 = vector.broadcast %183 : vector<16x1xf32> to vector<16x12xf32>
    %185 = arith.subf %179, %184 : vector<16x12xf32>
    %186 = arith.mulf %185, %185 : vector<16x12xf32>
    %cst_164 = arith.constant dense<0.000000e+00> : vector<16xf32>
    %187 = vector.multi_reduction <add>, %186, %cst_164 [1] : vector<16x12xf32> to vector<16xf32>
    %188 = vector.shape_cast %187 : vector<16xf32> to vector<16x1xf32>
    %cst_165 = arith.constant 1.200000e+01 : f32
    %189 = vector.broadcast %cst_165 : f32 to vector<16x1xf32>
    %190 = arith.divf %188, %189 : vector<16x1xf32>
    %cst_166 = arith.constant 9.99999974E-6 : f32
    %191 = vector.broadcast %cst_166 : f32 to vector<16x1xf32>
    %192 = arith.addf %190, %191 : vector<16x1xf32>
    %193 = math.rsqrt %192 : vector<16x1xf32>
    %194 = vector.broadcast %193 : vector<16x1xf32> to vector<16x12xf32>
    %195 = arith.mulf %185, %194 : vector<16x12xf32>
    %196 = vector.broadcast %142 : vector<1x12xf32> to vector<16x12xf32>
    %197 = arith.mulf %195, %196 : vector<16x12xf32>
    %198 = vector.broadcast %144 : vector<1x12xf32> to vector<16x12xf32>
    %199 = arith.addf %197, %198 : vector<16x12xf32>
    %cst_167 = arith.constant dense<0.000000e+00> : vector<16x32xf32>
    %200 = tpu.matmul %199, %128, %cst_167 {dimension_numbers = #tpu.dot_dimension_numbers<[1], [0], [0], [1], [0, 0, 1, 1], [], []>} : vector<16x12xf32>, vector<12x32xf32>, vector<16x32xf32> -> vector<16x32xf32>
    %201 = vector.broadcast %146 : vector<1x32xf32> to vector<16x32xf32>
    %202 = arith.addf %200, %201 : vector<16x32xf32>
    %203 = math.tanh %202 : vector<16x32xf32>
    %cst_168 = arith.constant dense<0.000000e+00> : vector<16x32xf32>
    %204 = tpu.matmul %203, %130, %cst_168 {dimension_numbers = #tpu.dot_dimension_numbers<[1], [0], [0], [1], [0, 0, 1, 1], [], []>} : vector<16x32xf32>, vector<32x32xf32>, vector<16x32xf32> -> vector<16x32xf32>
    %205 = vector.broadcast %148 : vector<1x32xf32> to vector<16x32xf32>
    %206 = arith.addf %204, %205 : vector<16x32xf32>
    %207 = math.tanh %206 : vector<16x32xf32>
    %cst_169 = arith.constant dense<0.000000e+00> : vector<16x12xf32>
    %208 = tpu.matmul %207, %132, %cst_169 {dimension_numbers = #tpu.dot_dimension_numbers<[1], [0], [0], [1], [0, 0, 1, 1], [], []>} : vector<16x32xf32>, vector<32x12xf32>, vector<16x12xf32> -> vector<16x12xf32>
    %209 = vector.broadcast %150 : vector<1x12xf32> to vector<16x12xf32>
    %210 = arith.addf %208, %209 : vector<16x12xf32>
    %211 = math.tanh %210 : vector<16x12xf32>
    %212 = arith.addf %199, %211 : vector<16x12xf32>
    %cst_170 = arith.constant dense<0.000000e+00> : vector<16xf32>
    %213 = vector.multi_reduction <add>, %212, %cst_170 [1] : vector<16x12xf32> to vector<16xf32>
    %214 = vector.shape_cast %213 : vector<16xf32> to vector<16x1xf32>
    %cst_171 = arith.constant 1.200000e+01 : f32
    %215 = vector.broadcast %cst_171 : f32 to vector<16x1xf32>
    %216 = arith.divf %214, %215 : vector<16x1xf32>
    %217 = vector.broadcast %216 : vector<16x1xf32> to vector<16x12xf32>
    %218 = arith.subf %212, %217 : vector<16x12xf32>
    %219 = arith.mulf %218, %218 : vector<16x12xf32>
    %cst_172 = arith.constant dense<0.000000e+00> : vector<16xf32>
    %220 = vector.multi_reduction <add>, %219, %cst_172 [1] : vector<16x12xf32> to vector<16xf32>
    %221 = vector.shape_cast %220 : vector<16xf32> to vector<16x1xf32>
    %cst_173 = arith.constant 1.200000e+01 : f32
    %222 = vector.broadcast %cst_173 : f32 to vector<16x1xf32>
    %223 = arith.divf %221, %222 : vector<16x1xf32>
    %cst_174 = arith.constant 9.99999974E-6 : f32
    %224 = vector.broadcast %cst_174 : f32 to vector<16x1xf32>
    %225 = arith.addf %223, %224 : vector<16x1xf32>
    %226 = math.rsqrt %225 : vector<16x1xf32>
    %227 = vector.broadcast %226 : vector<16x1xf32> to vector<16x12xf32>
    %228 = arith.mulf %218, %227 : vector<16x12xf32>
    %229 = vector.broadcast %152 : vector<1x12xf32> to vector<16x12xf32>
    %230 = arith.mulf %228, %229 : vector<16x12xf32>
    %231 = vector.broadcast %154 : vector<1x12xf32> to vector<16x12xf32>
    %232 = arith.addf %230, %231 : vector<16x12xf32>
    %c0_175 = arith.constant 0 : index
    %c2 = arith.constant 2 : index
    %c0_176 = arith.constant 0 : index
    %c0_177 = arith.constant 0 : index
    %233 = vector.load %arg1[%c0_175, %c2, %c0_176, %c0_177] : memref<2x3x160x32xf32, #tpu.memory_space<vmem>>, vector<1x1x12x12xf32>
    %234 = vector.shape_cast %233 : vector<1x1x12x12xf32> to vector<12x12xf32>
    %c0_178 = arith.constant 0 : index
    %c2_179 = arith.constant 2 : index
    %c16_180 = arith.constant 16 : index
    %c0_181 = arith.constant 0 : index
    %235 = vector.load %arg1[%c0_178, %c2_179, %c16_180, %c0_181] : memref<2x3x160x32xf32, #tpu.memory_space<vmem>>, vector<1x1x12x12xf32>
    %236 = vector.shape_cast %235 : vector<1x1x12x12xf32> to vector<12x12xf32>
    %c0_182 = arith.constant 0 : index
    %c2_183 = arith.constant 2 : index
    %c32_184 = arith.constant 32 : index
    %c0_185 = arith.constant 0 : index
    %237 = vector.load %arg1[%c0_182, %c2_183, %c32_184, %c0_185] : memref<2x3x160x32xf32, #tpu.memory_space<vmem>>, vector<1x1x12x12xf32>
    %238 = vector.shape_cast %237 : vector<1x1x12x12xf32> to vector<12x12xf32>
    %c0_186 = arith.constant 0 : index
    %c2_187 = arith.constant 2 : index
    %c48_188 = arith.constant 48 : index
    %c0_189 = arith.constant 0 : index
    %239 = vector.load %arg1[%c0_186, %c2_187, %c48_188, %c0_189] : memref<2x3x160x32xf32, #tpu.memory_space<vmem>>, vector<1x1x12x12xf32>
    %240 = vector.shape_cast %239 : vector<1x1x12x12xf32> to vector<12x12xf32>
    %c0_190 = arith.constant 0 : index
    %c2_191 = arith.constant 2 : index
    %c64_192 = arith.constant 64 : index
    %c0_193 = arith.constant 0 : index
    %241 = vector.load %arg1[%c0_190, %c2_191, %c64_192, %c0_193] : memref<2x3x160x32xf32, #tpu.memory_space<vmem>>, vector<1x1x12x32xf32>
    %242 = vector.shape_cast %241 : vector<1x1x12x32xf32> to vector<12x32xf32>
    %c0_194 = arith.constant 0 : index
    %c2_195 = arith.constant 2 : index
    %c80_196 = arith.constant 80 : index
    %c0_197 = arith.constant 0 : index
    %243 = vector.load %arg1[%c0_194, %c2_195, %c80_196, %c0_197] : memref<2x3x160x32xf32, #tpu.memory_space<vmem>>, vector<1x1x32x32xf32>
    %244 = vector.shape_cast %243 : vector<1x1x32x32xf32> to vector<32x32xf32>
    %c0_198 = arith.constant 0 : index
    %c2_199 = arith.constant 2 : index
    %c112_200 = arith.constant 112 : index
    %c0_201 = arith.constant 0 : index
    %245 = vector.load %arg1[%c0_198, %c2_199, %c112_200, %c0_201] : memref<2x3x160x32xf32, #tpu.memory_space<vmem>>, vector<1x1x32x12xf32>
    %246 = vector.shape_cast %245 : vector<1x1x32x12xf32> to vector<32x12xf32>
    %c0_202 = arith.constant 0 : index
    %c2_203 = arith.constant 2 : index
    %c144_204 = arith.constant 144 : index
    %c0_205 = arith.constant 0 : index
    %247 = vector.load %arg1[%c0_202, %c2_203, %c144_204, %c0_205] : memref<2x3x160x32xf32, #tpu.memory_space<vmem>>, vector<1x1x1x12xf32>
    %248 = vector.shape_cast %247 : vector<1x1x1x12xf32> to vector<1x12xf32>
    %c0_206 = arith.constant 0 : index
    %c2_207 = arith.constant 2 : index
    %c145_208 = arith.constant 145 : index
    %c0_209 = arith.constant 0 : index
    %249 = vector.load %arg1[%c0_206, %c2_207, %c145_208, %c0_209] : memref<2x3x160x32xf32, #tpu.memory_space<vmem>>, vector<1x1x1x12xf32>
    %250 = vector.shape_cast %249 : vector<1x1x1x12xf32> to vector<1x12xf32>
    %c0_210 = arith.constant 0 : index
    %c2_211 = arith.constant 2 : index
    %c146_212 = arith.constant 146 : index
    %c0_213 = arith.constant 0 : index
    %251 = vector.load %arg1[%c0_210, %c2_211, %c146_212, %c0_213] : memref<2x3x160x32xf32, #tpu.memory_space<vmem>>, vector<1x1x1x12xf32>
    %252 = vector.shape_cast %251 : vector<1x1x1x12xf32> to vector<1x12xf32>
    %c0_214 = arith.constant 0 : index
    %c2_215 = arith.constant 2 : index
    %c147_216 = arith.constant 147 : index
    %c0_217 = arith.constant 0 : index
    %253 = vector.load %arg1[%c0_214, %c2_215, %c147_216, %c0_217] : memref<2x3x160x32xf32, #tpu.memory_space<vmem>>, vector<1x1x1x12xf32>
    %254 = vector.shape_cast %253 : vector<1x1x1x12xf32> to vector<1x12xf32>
    %c0_218 = arith.constant 0 : index
    %c2_219 = arith.constant 2 : index
    %c148_220 = arith.constant 148 : index
    %c0_221 = arith.constant 0 : index
    %255 = vector.load %arg1[%c0_218, %c2_219, %c148_220, %c0_221] : memref<2x3x160x32xf32, #tpu.memory_space<vmem>>, vector<1x1x1x12xf32>
    %256 = vector.shape_cast %255 : vector<1x1x1x12xf32> to vector<1x12xf32>
    %c0_222 = arith.constant 0 : index
    %c2_223 = arith.constant 2 : index
    %c149_224 = arith.constant 149 : index
    %c0_225 = arith.constant 0 : index
    %257 = vector.load %arg1[%c0_222, %c2_223, %c149_224, %c0_225] : memref<2x3x160x32xf32, #tpu.memory_space<vmem>>, vector<1x1x1x12xf32>
    %258 = vector.shape_cast %257 : vector<1x1x1x12xf32> to vector<1x12xf32>
    %c0_226 = arith.constant 0 : index
    %c2_227 = arith.constant 2 : index
    %c150_228 = arith.constant 150 : index
    %c0_229 = arith.constant 0 : index
    %259 = vector.load %arg1[%c0_226, %c2_227, %c150_228, %c0_229] : memref<2x3x160x32xf32, #tpu.memory_space<vmem>>, vector<1x1x1x32xf32>
    %260 = vector.shape_cast %259 : vector<1x1x1x32xf32> to vector<1x32xf32>
    %c0_230 = arith.constant 0 : index
    %c2_231 = arith.constant 2 : index
    %c151_232 = arith.constant 151 : index
    %c0_233 = arith.constant 0 : index
    %261 = vector.load %arg1[%c0_230, %c2_231, %c151_232, %c0_233] : memref<2x3x160x32xf32, #tpu.memory_space<vmem>>, vector<1x1x1x32xf32>
    %262 = vector.shape_cast %261 : vector<1x1x1x32xf32> to vector<1x32xf32>
    %c0_234 = arith.constant 0 : index
    %c2_235 = arith.constant 2 : index
    %c152_236 = arith.constant 152 : index
    %c0_237 = arith.constant 0 : index
    %263 = vector.load %arg1[%c0_234, %c2_235, %c152_236, %c0_237] : memref<2x3x160x32xf32, #tpu.memory_space<vmem>>, vector<1x1x1x12xf32>
    %264 = vector.shape_cast %263 : vector<1x1x1x12xf32> to vector<1x12xf32>
    %c0_238 = arith.constant 0 : index
    %c2_239 = arith.constant 2 : index
    %c153_240 = arith.constant 153 : index
    %c0_241 = arith.constant 0 : index
    %265 = vector.load %arg1[%c0_238, %c2_239, %c153_240, %c0_241] : memref<2x3x160x32xf32, #tpu.memory_space<vmem>>, vector<1x1x1x12xf32>
    %266 = vector.shape_cast %265 : vector<1x1x1x12xf32> to vector<1x12xf32>
    %c0_242 = arith.constant 0 : index
    %c2_243 = arith.constant 2 : index
    %c154_244 = arith.constant 154 : index
    %c0_245 = arith.constant 0 : index
    %267 = vector.load %arg1[%c0_242, %c2_243, %c154_244, %c0_245] : memref<2x3x160x32xf32, #tpu.memory_space<vmem>>, vector<1x1x1x12xf32>
    %268 = vector.shape_cast %267 : vector<1x1x1x12xf32> to vector<1x12xf32>
    %cst_246 = arith.constant dense<0.000000e+00> : vector<16x12xf32>
    %269 = tpu.matmul %232, %234, %cst_246 {dimension_numbers = #tpu.dot_dimension_numbers<[1], [0], [0], [1], [0, 0, 1, 1], [], []>} : vector<16x12xf32>, vector<12x12xf32>, vector<16x12xf32> -> vector<16x12xf32>
    %270 = vector.broadcast %248 : vector<1x12xf32> to vector<16x12xf32>
    %271 = arith.addf %269, %270 : vector<16x12xf32>
    %cst_247 = arith.constant dense<0.000000e+00> : vector<16x12xf32>
    %272 = tpu.matmul %232, %236, %cst_247 {dimension_numbers = #tpu.dot_dimension_numbers<[1], [0], [0], [1], [0, 0, 1, 1], [], []>} : vector<16x12xf32>, vector<12x12xf32>, vector<16x12xf32> -> vector<16x12xf32>
    %273 = vector.broadcast %250 : vector<1x12xf32> to vector<16x12xf32>
    %274 = arith.addf %272, %273 : vector<16x12xf32>
    %cst_248 = arith.constant dense<0.000000e+00> : vector<16x12xf32>
    %275 = tpu.matmul %232, %238, %cst_248 {dimension_numbers = #tpu.dot_dimension_numbers<[1], [0], [0], [1], [0, 0, 1, 1], [], []>} : vector<16x12xf32>, vector<12x12xf32>, vector<16x12xf32> -> vector<16x12xf32>
    %276 = vector.broadcast %252 : vector<1x12xf32> to vector<16x12xf32>
    %277 = arith.addf %275, %276 : vector<16x12xf32>
    %cst_249 = arith.constant dense<0.000000e+00> : vector<16x16xf32>
    %278 = tpu.matmul %271, %274, %cst_249 {dimension_numbers = #tpu.dot_dimension_numbers<[1], [1], [0], [0], [0, 0, 1, 0], [], []>} : vector<16x12xf32>, vector<16x12xf32>, vector<16x16xf32> -> vector<16x16xf32>
    %279 = arith.addf %278, %2 : vector<16x16xf32>
    %cst_250 = arith.constant dense<0xFF800000> : vector<16xf32>
    %280 = vector.multi_reduction <maximumf>, %279, %cst_250 [1] : vector<16x16xf32> to vector<16xf32>
    %281 = vector.shape_cast %280 : vector<16xf32> to vector<16x1xf32>
    %282 = vector.broadcast %281 : vector<16x1xf32> to vector<16x16xf32>
    %283 = arith.subf %279, %282 : vector<16x16xf32>
    %284 = math.exp %283 : vector<16x16xf32>
    %cst_251 = arith.constant dense<0.000000e+00> : vector<16xf32>
    %285 = vector.multi_reduction <add>, %284, %cst_251 [1] : vector<16x16xf32> to vector<16xf32>
    %286 = vector.shape_cast %285 : vector<16xf32> to vector<16x1xf32>
    %287 = vector.broadcast %286 : vector<16x1xf32> to vector<16x16xf32>
    %288 = arith.divf %284, %287 : vector<16x16xf32>
    %cst_252 = arith.constant dense<0.000000e+00> : vector<16x12xf32>
    %289 = tpu.matmul %288, %277, %cst_252 {dimension_numbers = #tpu.dot_dimension_numbers<[1], [0], [0], [1], [0, 0, 1, 1], [], []>} : vector<16x16xf32>, vector<16x12xf32>, vector<16x12xf32> -> vector<16x12xf32>
    %cst_253 = arith.constant dense<0.000000e+00> : vector<16x12xf32>
    %290 = tpu.matmul %289, %240, %cst_253 {dimension_numbers = #tpu.dot_dimension_numbers<[1], [0], [0], [1], [0, 0, 1, 1], [], []>} : vector<16x12xf32>, vector<12x12xf32>, vector<16x12xf32> -> vector<16x12xf32>
    %291 = vector.broadcast %254 : vector<1x12xf32> to vector<16x12xf32>
    %292 = arith.addf %290, %291 : vector<16x12xf32>
    %293 = arith.addf %232, %292 : vector<16x12xf32>
    %cst_254 = arith.constant dense<0.000000e+00> : vector<16xf32>
    %294 = vector.multi_reduction <add>, %293, %cst_254 [1] : vector<16x12xf32> to vector<16xf32>
    %295 = vector.shape_cast %294 : vector<16xf32> to vector<16x1xf32>
    %cst_255 = arith.constant 1.200000e+01 : f32
    %296 = vector.broadcast %cst_255 : f32 to vector<16x1xf32>
    %297 = arith.divf %295, %296 : vector<16x1xf32>
    %298 = vector.broadcast %297 : vector<16x1xf32> to vector<16x12xf32>
    %299 = arith.subf %293, %298 : vector<16x12xf32>
    %300 = arith.mulf %299, %299 : vector<16x12xf32>
    %cst_256 = arith.constant dense<0.000000e+00> : vector<16xf32>
    %301 = vector.multi_reduction <add>, %300, %cst_256 [1] : vector<16x12xf32> to vector<16xf32>
    %302 = vector.shape_cast %301 : vector<16xf32> to vector<16x1xf32>
    %cst_257 = arith.constant 1.200000e+01 : f32
    %303 = vector.broadcast %cst_257 : f32 to vector<16x1xf32>
    %304 = arith.divf %302, %303 : vector<16x1xf32>
    %cst_258 = arith.constant 9.99999974E-6 : f32
    %305 = vector.broadcast %cst_258 : f32 to vector<16x1xf32>
    %306 = arith.addf %304, %305 : vector<16x1xf32>
    %307 = math.rsqrt %306 : vector<16x1xf32>
    %308 = vector.broadcast %307 : vector<16x1xf32> to vector<16x12xf32>
    %309 = arith.mulf %299, %308 : vector<16x12xf32>
    %310 = vector.broadcast %256 : vector<1x12xf32> to vector<16x12xf32>
    %311 = arith.mulf %309, %310 : vector<16x12xf32>
    %312 = vector.broadcast %258 : vector<1x12xf32> to vector<16x12xf32>
    %313 = arith.addf %311, %312 : vector<16x12xf32>
    %cst_259 = arith.constant dense<0.000000e+00> : vector<16x32xf32>
    %314 = tpu.matmul %313, %242, %cst_259 {dimension_numbers = #tpu.dot_dimension_numbers<[1], [0], [0], [1], [0, 0, 1, 1], [], []>} : vector<16x12xf32>, vector<12x32xf32>, vector<16x32xf32> -> vector<16x32xf32>
    %315 = vector.broadcast %260 : vector<1x32xf32> to vector<16x32xf32>
    %316 = arith.addf %314, %315 : vector<16x32xf32>
    %317 = math.tanh %316 : vector<16x32xf32>
    %cst_260 = arith.constant dense<0.000000e+00> : vector<16x32xf32>
    %318 = tpu.matmul %317, %244, %cst_260 {dimension_numbers = #tpu.dot_dimension_numbers<[1], [0], [0], [1], [0, 0, 1, 1], [], []>} : vector<16x32xf32>, vector<32x32xf32>, vector<16x32xf32> -> vector<16x32xf32>
    %319 = vector.broadcast %262 : vector<1x32xf32> to vector<16x32xf32>
    %320 = arith.addf %318, %319 : vector<16x32xf32>
    %321 = math.tanh %320 : vector<16x32xf32>
    %cst_261 = arith.constant dense<0.000000e+00> : vector<16x12xf32>
    %322 = tpu.matmul %321, %246, %cst_261 {dimension_numbers = #tpu.dot_dimension_numbers<[1], [0], [0], [1], [0, 0, 1, 1], [], []>} : vector<16x32xf32>, vector<32x12xf32>, vector<16x12xf32> -> vector<16x12xf32>
    %323 = vector.broadcast %264 : vector<1x12xf32> to vector<16x12xf32>
    %324 = arith.addf %322, %323 : vector<16x12xf32>
    %325 = math.tanh %324 : vector<16x12xf32>
    %326 = arith.addf %313, %325 : vector<16x12xf32>
    %cst_262 = arith.constant dense<0.000000e+00> : vector<16xf32>
    %327 = vector.multi_reduction <add>, %326, %cst_262 [1] : vector<16x12xf32> to vector<16xf32>
    %328 = vector.shape_cast %327 : vector<16xf32> to vector<16x1xf32>
    %cst_263 = arith.constant 1.200000e+01 : f32
    %329 = vector.broadcast %cst_263 : f32 to vector<16x1xf32>
    %330 = arith.divf %328, %329 : vector<16x1xf32>
    %331 = vector.broadcast %330 : vector<16x1xf32> to vector<16x12xf32>
    %332 = arith.subf %326, %331 : vector<16x12xf32>
    %333 = arith.mulf %332, %332 : vector<16x12xf32>
    %cst_264 = arith.constant dense<0.000000e+00> : vector<16xf32>
    %334 = vector.multi_reduction <add>, %333, %cst_264 [1] : vector<16x12xf32> to vector<16xf32>
    %335 = vector.shape_cast %334 : vector<16xf32> to vector<16x1xf32>
    %cst_265 = arith.constant 1.200000e+01 : f32
    %336 = vector.broadcast %cst_265 : f32 to vector<16x1xf32>
    %337 = arith.divf %335, %336 : vector<16x1xf32>
    %cst_266 = arith.constant 9.99999974E-6 : f32
    %338 = vector.broadcast %cst_266 : f32 to vector<16x1xf32>
    %339 = arith.addf %337, %338 : vector<16x1xf32>
    %340 = math.rsqrt %339 : vector<16x1xf32>
    %341 = vector.broadcast %340 : vector<16x1xf32> to vector<16x12xf32>
    %342 = arith.mulf %332, %341 : vector<16x12xf32>
    %343 = vector.broadcast %266 : vector<1x12xf32> to vector<16x12xf32>
    %344 = arith.mulf %342, %343 : vector<16x12xf32>
    %345 = vector.broadcast %268 : vector<1x12xf32> to vector<16x12xf32>
    %346 = arith.addf %344, %345 : vector<16x12xf32>
    %c0_267 = arith.constant 0 : index
    %c0_268 = arith.constant 0 : index
    %c0_269 = arith.constant 0 : index
    %347 = vector.load %arg2[%c0_267, %c0_268, %c0_269] : memref<2x16x64xf32, #tpu.memory_space<vmem>>, vector<1x12x64xf32>
    %348 = vector.shape_cast %347 : vector<1x12x64xf32> to vector<12x64xf32>
    %c0_270 = arith.constant 0 : index
    %c12 = arith.constant 12 : index
    %c0_271 = arith.constant 0 : index
    %349 = vector.load %arg2[%c0_270, %c12, %c0_271] : memref<2x16x64xf32, #tpu.memory_space<vmem>>, vector<1x1x8xf32>
    %350 = vector.shape_cast %349 : vector<1x1x8xf32> to vector<1x8xf32>
    %cst_272 = arith.constant dense<0.000000e+00> : vector<16x64xf32>
    %351 = tpu.matmul %346, %348, %cst_272 {dimension_numbers = #tpu.dot_dimension_numbers<[1], [0], [0], [1], [0, 0, 1, 1], [], []>} : vector<16x12xf32>, vector<12x64xf32>, vector<16x64xf32> -> vector<16x64xf32>
    %352 = arith.mulf %351, %1 : vector<16x64xf32>
    %cst_273 = arith.constant dense<0.000000e+00> : vector<16x8xf32>
    %353 = tpu.matmul %352, %3, %cst_273 {dimension_numbers = #tpu.dot_dimension_numbers<[1], [0], [0], [1], [0, 0, 1, 1], [], []>} : vector<16x64xf32>, vector<64x8xf32>, vector<16x8xf32> -> vector<16x8xf32>
    %cst_274 = arith.constant dense<0.000000e+00> : vector<2x8xf32>
    %354 = tpu.matmul %4, %353, %cst_274 {dimension_numbers = #tpu.dot_dimension_numbers<[1], [0], [0], [1], [0, 0, 1, 1], [], []>} : vector<2x16xf32>, vector<16x8xf32>, vector<2x8xf32> -> vector<2x8xf32>
    %355 = vector.broadcast %350 : vector<1x8xf32> to vector<2x8xf32>
    %356 = arith.addf %354, %355 : vector<2x8xf32>
    %357 = math.tanh %356 : vector<2x8xf32>
    %c0_275 = arith.constant 0 : index
    %c0_276 = arith.constant 0 : index
    %c0_277 = arith.constant 0 : index
    %358 = vector.load %arg4[%c0_275, %c0_276, %c0_277] : memref<2x2x8xf32, #tpu.memory_space<vmem>>, vector<1x2x8xf32>
    %359 = vector.shape_cast %358 : vector<1x2x8xf32> to vector<2x8xf32>
    %360 = vector.shape_cast %357 : vector<2x8xf32> to vector<1x2x8xf32>
    tpu.vector_store %arg4[%c0_275, %c0_276, %c0_277], %360 {strides = array<i32>} : memref<2x2x8xf32, #tpu.memory_space<vmem>>, vector<1x2x8xf32>,
    %c1_278 = arith.constant 1 : index
    %c0_279 = arith.constant 0 : index
    %c0_280 = arith.constant 0 : index
    %c0_281 = arith.constant 0 : index
    %361 = vector.load %arg1[%c1_278, %c0_279, %c0_280, %c0_281] : memref<2x3x160x32xf32, #tpu.memory_space<vmem>>, vector<1x1x12x12xf32>
    %362 = vector.shape_cast %361 : vector<1x1x12x12xf32> to vector<12x12xf32>
    %c1_282 = arith.constant 1 : index
    %c0_283 = arith.constant 0 : index
    %c16_284 = arith.constant 16 : index
    %c0_285 = arith.constant 0 : index
    %363 = vector.load %arg1[%c1_282, %c0_283, %c16_284, %c0_285] : memref<2x3x160x32xf32, #tpu.memory_space<vmem>>, vector<1x1x12x12xf32>
    %364 = vector.shape_cast %363 : vector<1x1x12x12xf32> to vector<12x12xf32>
    %c1_286 = arith.constant 1 : index
    %c0_287 = arith.constant 0 : index
    %c32_288 = arith.constant 32 : index
    %c0_289 = arith.constant 0 : index
    %365 = vector.load %arg1[%c1_286, %c0_287, %c32_288, %c0_289] : memref<2x3x160x32xf32, #tpu.memory_space<vmem>>, vector<1x1x12x12xf32>
    %366 = vector.shape_cast %365 : vector<1x1x12x12xf32> to vector<12x12xf32>
    %c1_290 = arith.constant 1 : index
    %c0_291 = arith.constant 0 : index
    %c48_292 = arith.constant 48 : index
    %c0_293 = arith.constant 0 : index
    %367 = vector.load %arg1[%c1_290, %c0_291, %c48_292, %c0_293] : memref<2x3x160x32xf32, #tpu.memory_space<vmem>>, vector<1x1x12x12xf32>
    %368 = vector.shape_cast %367 : vector<1x1x12x12xf32> to vector<12x12xf32>
    %c1_294 = arith.constant 1 : index
    %c0_295 = arith.constant 0 : index
    %c64_296 = arith.constant 64 : index
    %c0_297 = arith.constant 0 : index
    %369 = vector.load %arg1[%c1_294, %c0_295, %c64_296, %c0_297] : memref<2x3x160x32xf32, #tpu.memory_space<vmem>>, vector<1x1x12x32xf32>
    %370 = vector.shape_cast %369 : vector<1x1x12x32xf32> to vector<12x32xf32>
    %c1_298 = arith.constant 1 : index
    %c0_299 = arith.constant 0 : index
    %c80_300 = arith.constant 80 : index
    %c0_301 = arith.constant 0 : index
    %371 = vector.load %arg1[%c1_298, %c0_299, %c80_300, %c0_301] : memref<2x3x160x32xf32, #tpu.memory_space<vmem>>, vector<1x1x32x32xf32>
    %372 = vector.shape_cast %371 : vector<1x1x32x32xf32> to vector<32x32xf32>
    %c1_302 = arith.constant 1 : index
    %c0_303 = arith.constant 0 : index
    %c112_304 = arith.constant 112 : index
    %c0_305 = arith.constant 0 : index
    %373 = vector.load %arg1[%c1_302, %c0_303, %c112_304, %c0_305] : memref<2x3x160x32xf32, #tpu.memory_space<vmem>>, vector<1x1x32x12xf32>
    %374 = vector.shape_cast %373 : vector<1x1x32x12xf32> to vector<32x12xf32>
    %c1_306 = arith.constant 1 : index
    %c0_307 = arith.constant 0 : index
    %c144_308 = arith.constant 144 : index
    %c0_309 = arith.constant 0 : index
    %375 = vector.load %arg1[%c1_306, %c0_307, %c144_308, %c0_309] : memref<2x3x160x32xf32, #tpu.memory_space<vmem>>, vector<1x1x1x12xf32>
    %376 = vector.shape_cast %375 : vector<1x1x1x12xf32> to vector<1x12xf32>
    %c1_310 = arith.constant 1 : index
    %c0_311 = arith.constant 0 : index
    %c145_312 = arith.constant 145 : index
    %c0_313 = arith.constant 0 : index
    %377 = vector.load %arg1[%c1_310, %c0_311, %c145_312, %c0_313] : memref<2x3x160x32xf32, #tpu.memory_space<vmem>>, vector<1x1x1x12xf32>
    %378 = vector.shape_cast %377 : vector<1x1x1x12xf32> to vector<1x12xf32>
    %c1_314 = arith.constant 1 : index
    %c0_315 = arith.constant 0 : index
    %c146_316 = arith.constant 146 : index
    %c0_317 = arith.constant 0 : index
    %379 = vector.load %arg1[%c1_314, %c0_315, %c146_316, %c0_317] : memref<2x3x160x32xf32, #tpu.memory_space<vmem>>, vector<1x1x1x12xf32>
    %380 = vector.shape_cast %379 : vector<1x1x1x12xf32> to vector<1x12xf32>
    %c1_318 = arith.constant 1 : index
    %c0_319 = arith.constant 0 : index
    %c147_320 = arith.constant 147 : index
    %c0_321 = arith.constant 0 : index
    %381 = vector.load %arg1[%c1_318, %c0_319, %c147_320, %c0_321] : memref<2x3x160x32xf32, #tpu.memory_space<vmem>>, vector<1x1x1x12xf32>
    %382 = vector.shape_cast %381 : vector<1x1x1x12xf32> to vector<1x12xf32>
    %c1_322 = arith.constant 1 : index
    %c0_323 = arith.constant 0 : index
    %c148_324 = arith.constant 148 : index
    %c0_325 = arith.constant 0 : index
    %383 = vector.load %arg1[%c1_322, %c0_323, %c148_324, %c0_325] : memref<2x3x160x32xf32, #tpu.memory_space<vmem>>, vector<1x1x1x12xf32>
    %384 = vector.shape_cast %383 : vector<1x1x1x12xf32> to vector<1x12xf32>
    %c1_326 = arith.constant 1 : index
    %c0_327 = arith.constant 0 : index
    %c149_328 = arith.constant 149 : index
    %c0_329 = arith.constant 0 : index
    %385 = vector.load %arg1[%c1_326, %c0_327, %c149_328, %c0_329] : memref<2x3x160x32xf32, #tpu.memory_space<vmem>>, vector<1x1x1x12xf32>
    %386 = vector.shape_cast %385 : vector<1x1x1x12xf32> to vector<1x12xf32>
    %c1_330 = arith.constant 1 : index
    %c0_331 = arith.constant 0 : index
    %c150_332 = arith.constant 150 : index
    %c0_333 = arith.constant 0 : index
    %387 = vector.load %arg1[%c1_330, %c0_331, %c150_332, %c0_333] : memref<2x3x160x32xf32, #tpu.memory_space<vmem>>, vector<1x1x1x32xf32>
    %388 = vector.shape_cast %387 : vector<1x1x1x32xf32> to vector<1x32xf32>
    %c1_334 = arith.constant 1 : index
    %c0_335 = arith.constant 0 : index
    %c151_336 = arith.constant 151 : index
    %c0_337 = arith.constant 0 : index
    %389 = vector.load %arg1[%c1_334, %c0_335, %c151_336, %c0_337] : memref<2x3x160x32xf32, #tpu.memory_space<vmem>>, vector<1x1x1x32xf32>
    %390 = vector.shape_cast %389 : vector<1x1x1x32xf32> to vector<1x32xf32>
    %c1_338 = arith.constant 1 : index
    %c0_339 = arith.constant 0 : index
    %c152_340 = arith.constant 152 : index
    %c0_341 = arith.constant 0 : index
    %391 = vector.load %arg1[%c1_338, %c0_339, %c152_340, %c0_341] : memref<2x3x160x32xf32, #tpu.memory_space<vmem>>, vector<1x1x1x12xf32>
    %392 = vector.shape_cast %391 : vector<1x1x1x12xf32> to vector<1x12xf32>
    %c1_342 = arith.constant 1 : index
    %c0_343 = arith.constant 0 : index
    %c153_344 = arith.constant 153 : index
    %c0_345 = arith.constant 0 : index
    %393 = vector.load %arg1[%c1_342, %c0_343, %c153_344, %c0_345] : memref<2x3x160x32xf32, #tpu.memory_space<vmem>>, vector<1x1x1x12xf32>
    %394 = vector.shape_cast %393 : vector<1x1x1x12xf32> to vector<1x12xf32>
    %c1_346 = arith.constant 1 : index
    %c0_347 = arith.constant 0 : index
    %c154_348 = arith.constant 154 : index
    %c0_349 = arith.constant 0 : index
    %395 = vector.load %arg1[%c1_346, %c0_347, %c154_348, %c0_349] : memref<2x3x160x32xf32, #tpu.memory_space<vmem>>, vector<1x1x1x12xf32>
    %396 = vector.shape_cast %395 : vector<1x1x1x12xf32> to vector<1x12xf32>
    %cst_350 = arith.constant dense<0.000000e+00> : vector<16x12xf32>
    %397 = tpu.matmul %0, %362, %cst_350 {dimension_numbers = #tpu.dot_dimension_numbers<[1], [0], [0], [1], [0, 0, 1, 1], [], []>} : vector<16x12xf32>, vector<12x12xf32>, vector<16x12xf32> -> vector<16x12xf32>
    %398 = vector.broadcast %376 : vector<1x12xf32> to vector<16x12xf32>
    %399 = arith.addf %397, %398 : vector<16x12xf32>
    %cst_351 = arith.constant dense<0.000000e+00> : vector<16x12xf32>
    %400 = tpu.matmul %0, %364, %cst_351 {dimension_numbers = #tpu.dot_dimension_numbers<[1], [0], [0], [1], [0, 0, 1, 1], [], []>} : vector<16x12xf32>, vector<12x12xf32>, vector<16x12xf32> -> vector<16x12xf32>
    %401 = vector.broadcast %378 : vector<1x12xf32> to vector<16x12xf32>
    %402 = arith.addf %400, %401 : vector<16x12xf32>
    %cst_352 = arith.constant dense<0.000000e+00> : vector<16x12xf32>
    %403 = tpu.matmul %0, %366, %cst_352 {dimension_numbers = #tpu.dot_dimension_numbers<[1], [0], [0], [1], [0, 0, 1, 1], [], []>} : vector<16x12xf32>, vector<12x12xf32>, vector<16x12xf32> -> vector<16x12xf32>
    %404 = vector.broadcast %380 : vector<1x12xf32> to vector<16x12xf32>
    %405 = arith.addf %403, %404 : vector<16x12xf32>
    %cst_353 = arith.constant dense<0.000000e+00> : vector<16x16xf32>
    %406 = tpu.matmul %399, %402, %cst_353 {dimension_numbers = #tpu.dot_dimension_numbers<[1], [1], [0], [0], [0, 0, 1, 0], [], []>} : vector<16x12xf32>, vector<16x12xf32>, vector<16x16xf32> -> vector<16x16xf32>
    %407 = arith.addf %406, %2 : vector<16x16xf32>
    %cst_354 = arith.constant dense<0xFF800000> : vector<16xf32>
    %408 = vector.multi_reduction <maximumf>, %407, %cst_354 [1] : vector<16x16xf32> to vector<16xf32>
    %409 = vector.shape_cast %408 : vector<16xf32> to vector<16x1xf32>
    %410 = vector.broadcast %409 : vector<16x1xf32> to vector<16x16xf32>
    %411 = arith.subf %407, %410 : vector<16x16xf32>
    %412 = math.exp %411 : vector<16x16xf32>
    %cst_355 = arith.constant dense<0.000000e+00> : vector<16xf32>
    %413 = vector.multi_reduction <add>, %412, %cst_355 [1] : vector<16x16xf32> to vector<16xf32>
    %414 = vector.shape_cast %413 : vector<16xf32> to vector<16x1xf32>
    %415 = vector.broadcast %414 : vector<16x1xf32> to vector<16x16xf32>
    %416 = arith.divf %412, %415 : vector<16x16xf32>
    %cst_356 = arith.constant dense<0.000000e+00> : vector<16x12xf32>
    %417 = tpu.matmul %416, %405, %cst_356 {dimension_numbers = #tpu.dot_dimension_numbers<[1], [0], [0], [1], [0, 0, 1, 1], [], []>} : vector<16x16xf32>, vector<16x12xf32>, vector<16x12xf32> -> vector<16x12xf32>
    %cst_357 = arith.constant dense<0.000000e+00> : vector<16x12xf32>
    %418 = tpu.matmul %417, %368, %cst_357 {dimension_numbers = #tpu.dot_dimension_numbers<[1], [0], [0], [1], [0, 0, 1, 1], [], []>} : vector<16x12xf32>, vector<12x12xf32>, vector<16x12xf32> -> vector<16x12xf32>
    %419 = vector.broadcast %382 : vector<1x12xf32> to vector<16x12xf32>
    %420 = arith.addf %418, %419 : vector<16x12xf32>
    %421 = arith.addf %0, %420 : vector<16x12xf32>
    %cst_358 = arith.constant dense<0.000000e+00> : vector<16xf32>
    %422 = vector.multi_reduction <add>, %421, %cst_358 [1] : vector<16x12xf32> to vector<16xf32>
    %423 = vector.shape_cast %422 : vector<16xf32> to vector<16x1xf32>
    %cst_359 = arith.constant 1.200000e+01 : f32
    %424 = vector.broadcast %cst_359 : f32 to vector<16x1xf32>
    %425 = arith.divf %423, %424 : vector<16x1xf32>
    %426 = vector.broadcast %425 : vector<16x1xf32> to vector<16x12xf32>
    %427 = arith.subf %421, %426 : vector<16x12xf32>
    %428 = arith.mulf %427, %427 : vector<16x12xf32>
    %cst_360 = arith.constant dense<0.000000e+00> : vector<16xf32>
    %429 = vector.multi_reduction <add>, %428, %cst_360 [1] : vector<16x12xf32> to vector<16xf32>
    %430 = vector.shape_cast %429 : vector<16xf32> to vector<16x1xf32>
    %cst_361 = arith.constant 1.200000e+01 : f32
    %431 = vector.broadcast %cst_361 : f32 to vector<16x1xf32>
    %432 = arith.divf %430, %431 : vector<16x1xf32>
    %cst_362 = arith.constant 9.99999974E-6 : f32
    %433 = vector.broadcast %cst_362 : f32 to vector<16x1xf32>
    %434 = arith.addf %432, %433 : vector<16x1xf32>
    %435 = math.rsqrt %434 : vector<16x1xf32>
    %436 = vector.broadcast %435 : vector<16x1xf32> to vector<16x12xf32>
    %437 = arith.mulf %427, %436 : vector<16x12xf32>
    %438 = vector.broadcast %384 : vector<1x12xf32> to vector<16x12xf32>
    %439 = arith.mulf %437, %438 : vector<16x12xf32>
    %440 = vector.broadcast %386 : vector<1x12xf32> to vector<16x12xf32>
    %441 = arith.addf %439, %440 : vector<16x12xf32>
    %cst_363 = arith.constant dense<0.000000e+00> : vector<16x32xf32>
    %442 = tpu.matmul %441, %370, %cst_363 {dimension_numbers = #tpu.dot_dimension_numbers<[1], [0], [0], [1], [0, 0, 1, 1], [], []>} : vector<16x12xf32>, vector<12x32xf32>, vector<16x32xf32> -> vector<16x32xf32>
    %443 = vector.broadcast %388 : vector<1x32xf32> to vector<16x32xf32>
    %444 = arith.addf %442, %443 : vector<16x32xf32>
    %445 = math.tanh %444 : vector<16x32xf32>
    %cst_364 = arith.constant dense<0.000000e+00> : vector<16x32xf32>
    %446 = tpu.matmul %445, %372, %cst_364 {dimension_numbers = #tpu.dot_dimension_numbers<[1], [0], [0], [1], [0, 0, 1, 1], [], []>} : vector<16x32xf32>, vector<32x32xf32>, vector<16x32xf32> -> vector<16x32xf32>
    %447 = vector.broadcast %390 : vector<1x32xf32> to vector<16x32xf32>
    %448 = arith.addf %446, %447 : vector<16x32xf32>
    %449 = math.tanh %448 : vector<16x32xf32>
    %cst_365 = arith.constant dense<0.000000e+00> : vector<16x12xf32>
    %450 = tpu.matmul %449, %374, %cst_365 {dimension_numbers = #tpu.dot_dimension_numbers<[1], [0], [0], [1], [0, 0, 1, 1], [], []>} : vector<16x32xf32>, vector<32x12xf32>, vector<16x12xf32> -> vector<16x12xf32>
    %451 = vector.broadcast %392 : vector<1x12xf32> to vector<16x12xf32>
    %452 = arith.addf %450, %451 : vector<16x12xf32>
    %453 = math.tanh %452 : vector<16x12xf32>
    %454 = arith.addf %441, %453 : vector<16x12xf32>
    %cst_366 = arith.constant dense<0.000000e+00> : vector<16xf32>
    %455 = vector.multi_reduction <add>, %454, %cst_366 [1] : vector<16x12xf32> to vector<16xf32>
    %456 = vector.shape_cast %455 : vector<16xf32> to vector<16x1xf32>
    %cst_367 = arith.constant 1.200000e+01 : f32
    %457 = vector.broadcast %cst_367 : f32 to vector<16x1xf32>
    %458 = arith.divf %456, %457 : vector<16x1xf32>
    %459 = vector.broadcast %458 : vector<16x1xf32> to vector<16x12xf32>
    %460 = arith.subf %454, %459 : vector<16x12xf32>
    %461 = arith.mulf %460, %460 : vector<16x12xf32>
    %cst_368 = arith.constant dense<0.000000e+00> : vector<16xf32>
    %462 = vector.multi_reduction <add>, %461, %cst_368 [1] : vector<16x12xf32> to vector<16xf32>
    %463 = vector.shape_cast %462 : vector<16xf32> to vector<16x1xf32>
    %cst_369 = arith.constant 1.200000e+01 : f32
    %464 = vector.broadcast %cst_369 : f32 to vector<16x1xf32>
    %465 = arith.divf %463, %464 : vector<16x1xf32>
    %cst_370 = arith.constant 9.99999974E-6 : f32
    %466 = vector.broadcast %cst_370 : f32 to vector<16x1xf32>
    %467 = arith.addf %465, %466 : vector<16x1xf32>
    %468 = math.rsqrt %467 : vector<16x1xf32>
    %469 = vector.broadcast %468 : vector<16x1xf32> to vector<16x12xf32>
    %470 = arith.mulf %460, %469 : vector<16x12xf32>
    %471 = vector.broadcast %394 : vector<1x12xf32> to vector<16x12xf32>
    %472 = arith.mulf %470, %471 : vector<16x12xf32>
    %473 = vector.broadcast %396 : vector<1x12xf32> to vector<16x12xf32>
    %474 = arith.addf %472, %473 : vector<16x12xf32>
    %c1_371 = arith.constant 1 : index
    %c1_372 = arith.constant 1 : index
    %c0_373 = arith.constant 0 : index
    %c0_374 = arith.constant 0 : index
    %475 = vector.load %arg1[%c1_371, %c1_372, %c0_373, %c0_374] : memref<2x3x160x32xf32, #tpu.memory_space<vmem>>, vector<1x1x12x12xf32>
    %476 = vector.shape_cast %475 : vector<1x1x12x12xf32> to vector<12x12xf32>
    %c1_375 = arith.constant 1 : index
    %c1_376 = arith.constant 1 : index
    %c16_377 = arith.constant 16 : index
    %c0_378 = arith.constant 0 : index
    %477 = vector.load %arg1[%c1_375, %c1_376, %c16_377, %c0_378] : memref<2x3x160x32xf32, #tpu.memory_space<vmem>>, vector<1x1x12x12xf32>
    %478 = vector.shape_cast %477 : vector<1x1x12x12xf32> to vector<12x12xf32>
    %c1_379 = arith.constant 1 : index
    %c1_380 = arith.constant 1 : index
    %c32_381 = arith.constant 32 : index
    %c0_382 = arith.constant 0 : index
    %479 = vector.load %arg1[%c1_379, %c1_380, %c32_381, %c0_382] : memref<2x3x160x32xf32, #tpu.memory_space<vmem>>, vector<1x1x12x12xf32>
    %480 = vector.shape_cast %479 : vector<1x1x12x12xf32> to vector<12x12xf32>
    %c1_383 = arith.constant 1 : index
    %c1_384 = arith.constant 1 : index
    %c48_385 = arith.constant 48 : index
    %c0_386 = arith.constant 0 : index
    %481 = vector.load %arg1[%c1_383, %c1_384, %c48_385, %c0_386] : memref<2x3x160x32xf32, #tpu.memory_space<vmem>>, vector<1x1x12x12xf32>
    %482 = vector.shape_cast %481 : vector<1x1x12x12xf32> to vector<12x12xf32>
    %c1_387 = arith.constant 1 : index
    %c1_388 = arith.constant 1 : index
    %c64_389 = arith.constant 64 : index
    %c0_390 = arith.constant 0 : index
    %483 = vector.load %arg1[%c1_387, %c1_388, %c64_389, %c0_390] : memref<2x3x160x32xf32, #tpu.memory_space<vmem>>, vector<1x1x12x32xf32>
    %484 = vector.shape_cast %483 : vector<1x1x12x32xf32> to vector<12x32xf32>
    %c1_391 = arith.constant 1 : index
    %c1_392 = arith.constant 1 : index
    %c80_393 = arith.constant 80 : index
    %c0_394 = arith.constant 0 : index
    %485 = vector.load %arg1[%c1_391, %c1_392, %c80_393, %c0_394] : memref<2x3x160x32xf32, #tpu.memory_space<vmem>>, vector<1x1x32x32xf32>
    %486 = vector.shape_cast %485 : vector<1x1x32x32xf32> to vector<32x32xf32>
    %c1_395 = arith.constant 1 : index
    %c1_396 = arith.constant 1 : index
    %c112_397 = arith.constant 112 : index
    %c0_398 = arith.constant 0 : index
    %487 = vector.load %arg1[%c1_395, %c1_396, %c112_397, %c0_398] : memref<2x3x160x32xf32, #tpu.memory_space<vmem>>, vector<1x1x32x12xf32>
    %488 = vector.shape_cast %487 : vector<1x1x32x12xf32> to vector<32x12xf32>
    %c1_399 = arith.constant 1 : index
    %c1_400 = arith.constant 1 : index
    %c144_401 = arith.constant 144 : index
    %c0_402 = arith.constant 0 : index
    %489 = vector.load %arg1[%c1_399, %c1_400, %c144_401, %c0_402] : memref<2x3x160x32xf32, #tpu.memory_space<vmem>>, vector<1x1x1x12xf32>
    %490 = vector.shape_cast %489 : vector<1x1x1x12xf32> to vector<1x12xf32>
    %c1_403 = arith.constant 1 : index
    %c1_404 = arith.constant 1 : index
    %c145_405 = arith.constant 145 : index
    %c0_406 = arith.constant 0 : index
    %491 = vector.load %arg1[%c1_403, %c1_404, %c145_405, %c0_406] : memref<2x3x160x32xf32, #tpu.memory_space<vmem>>, vector<1x1x1x12xf32>
    %492 = vector.shape_cast %491 : vector<1x1x1x12xf32> to vector<1x12xf32>
    %c1_407 = arith.constant 1 : index
    %c1_408 = arith.constant 1 : index
    %c146_409 = arith.constant 146 : index
    %c0_410 = arith.constant 0 : index
    %493 = vector.load %arg1[%c1_407, %c1_408, %c146_409, %c0_410] : memref<2x3x160x32xf32, #tpu.memory_space<vmem>>, vector<1x1x1x12xf32>
    %494 = vector.shape_cast %493 : vector<1x1x1x12xf32> to vector<1x12xf32>
    %c1_411 = arith.constant 1 : index
    %c1_412 = arith.constant 1 : index
    %c147_413 = arith.constant 147 : index
    %c0_414 = arith.constant 0 : index
    %495 = vector.load %arg1[%c1_411, %c1_412, %c147_413, %c0_414] : memref<2x3x160x32xf32, #tpu.memory_space<vmem>>, vector<1x1x1x12xf32>
    %496 = vector.shape_cast %495 : vector<1x1x1x12xf32> to vector<1x12xf32>
    %c1_415 = arith.constant 1 : index
    %c1_416 = arith.constant 1 : index
    %c148_417 = arith.constant 148 : index
    %c0_418 = arith.constant 0 : index
    %497 = vector.load %arg1[%c1_415, %c1_416, %c148_417, %c0_418] : memref<2x3x160x32xf32, #tpu.memory_space<vmem>>, vector<1x1x1x12xf32>
    %498 = vector.shape_cast %497 : vector<1x1x1x12xf32> to vector<1x12xf32>
    %c1_419 = arith.constant 1 : index
    %c1_420 = arith.constant 1 : index
    %c149_421 = arith.constant 149 : index
    %c0_422 = arith.constant 0 : index
    %499 = vector.load %arg1[%c1_419, %c1_420, %c149_421, %c0_422] : memref<2x3x160x32xf32, #tpu.memory_space<vmem>>, vector<1x1x1x12xf32>
    %500 = vector.shape_cast %499 : vector<1x1x1x12xf32> to vector<1x12xf32>
    %c1_423 = arith.constant 1 : index
    %c1_424 = arith.constant 1 : index
    %c150_425 = arith.constant 150 : index
    %c0_426 = arith.constant 0 : index
    %501 = vector.load %arg1[%c1_423, %c1_424, %c150_425, %c0_426] : memref<2x3x160x32xf32, #tpu.memory_space<vmem>>, vector<1x1x1x32xf32>
    %502 = vector.shape_cast %501 : vector<1x1x1x32xf32> to vector<1x32xf32>
    %c1_427 = arith.constant 1 : index
    %c1_428 = arith.constant 1 : index
    %c151_429 = arith.constant 151 : index
    %c0_430 = arith.constant 0 : index
    %503 = vector.load %arg1[%c1_427, %c1_428, %c151_429, %c0_430] : memref<2x3x160x32xf32, #tpu.memory_space<vmem>>, vector<1x1x1x32xf32>
    %504 = vector.shape_cast %503 : vector<1x1x1x32xf32> to vector<1x32xf32>
    %c1_431 = arith.constant 1 : index
    %c1_432 = arith.constant 1 : index
    %c152_433 = arith.constant 152 : index
    %c0_434 = arith.constant 0 : index
    %505 = vector.load %arg1[%c1_431, %c1_432, %c152_433, %c0_434] : memref<2x3x160x32xf32, #tpu.memory_space<vmem>>, vector<1x1x1x12xf32>
    %506 = vector.shape_cast %505 : vector<1x1x1x12xf32> to vector<1x12xf32>
    %c1_435 = arith.constant 1 : index
    %c1_436 = arith.constant 1 : index
    %c153_437 = arith.constant 153 : index
    %c0_438 = arith.constant 0 : index
    %507 = vector.load %arg1[%c1_435, %c1_436, %c153_437, %c0_438] : memref<2x3x160x32xf32, #tpu.memory_space<vmem>>, vector<1x1x1x12xf32>
    %508 = vector.shape_cast %507 : vector<1x1x1x12xf32> to vector<1x12xf32>
    %c1_439 = arith.constant 1 : index
    %c1_440 = arith.constant 1 : index
    %c154_441 = arith.constant 154 : index
    %c0_442 = arith.constant 0 : index
    %509 = vector.load %arg1[%c1_439, %c1_440, %c154_441, %c0_442] : memref<2x3x160x32xf32, #tpu.memory_space<vmem>>, vector<1x1x1x12xf32>
    %510 = vector.shape_cast %509 : vector<1x1x1x12xf32> to vector<1x12xf32>
    %cst_443 = arith.constant dense<0.000000e+00> : vector<16x12xf32>
    %511 = tpu.matmul %474, %476, %cst_443 {dimension_numbers = #tpu.dot_dimension_numbers<[1], [0], [0], [1], [0, 0, 1, 1], [], []>} : vector<16x12xf32>, vector<12x12xf32>, vector<16x12xf32> -> vector<16x12xf32>
    %512 = vector.broadcast %490 : vector<1x12xf32> to vector<16x12xf32>
    %513 = arith.addf %511, %512 : vector<16x12xf32>
    %cst_444 = arith.constant dense<0.000000e+00> : vector<16x12xf32>
    %514 = tpu.matmul %474, %478, %cst_444 {dimension_numbers = #tpu.dot_dimension_numbers<[1], [0], [0], [1], [0, 0, 1, 1], [], []>} : vector<16x12xf32>, vector<12x12xf32>, vector<16x12xf32> -> vector<16x12xf32>
    %515 = vector.broadcast %492 : vector<1x12xf32> to vector<16x12xf32>
    %516 = arith.addf %514, %515 : vector<16x12xf32>
    %cst_445 = arith.constant dense<0.000000e+00> : vector<16x12xf32>
    %517 = tpu.matmul %474, %480, %cst_445 {dimension_numbers = #tpu.dot_dimension_numbers<[1], [0], [0], [1], [0, 0, 1, 1], [], []>} : vector<16x12xf32>, vector<12x12xf32>, vector<16x12xf32> -> vector<16x12xf32>
    %518 = vector.broadcast %494 : vector<1x12xf32> to vector<16x12xf32>
    %519 = arith.addf %517, %518 : vector<16x12xf32>
    %cst_446 = arith.constant dense<0.000000e+00> : vector<16x16xf32>
    %520 = tpu.matmul %513, %516, %cst_446 {dimension_numbers = #tpu.dot_dimension_numbers<[1], [1], [0], [0], [0, 0, 1, 0], [], []>} : vector<16x12xf32>, vector<16x12xf32>, vector<16x16xf32> -> vector<16x16xf32>
    %521 = arith.addf %520, %2 : vector<16x16xf32>
    %cst_447 = arith.constant dense<0xFF800000> : vector<16xf32>
    %522 = vector.multi_reduction <maximumf>, %521, %cst_447 [1] : vector<16x16xf32> to vector<16xf32>
    %523 = vector.shape_cast %522 : vector<16xf32> to vector<16x1xf32>
    %524 = vector.broadcast %523 : vector<16x1xf32> to vector<16x16xf32>
    %525 = arith.subf %521, %524 : vector<16x16xf32>
    %526 = math.exp %525 : vector<16x16xf32>
    %cst_448 = arith.constant dense<0.000000e+00> : vector<16xf32>
    %527 = vector.multi_reduction <add>, %526, %cst_448 [1] : vector<16x16xf32> to vector<16xf32>
    %528 = vector.shape_cast %527 : vector<16xf32> to vector<16x1xf32>
    %529 = vector.broadcast %528 : vector<16x1xf32> to vector<16x16xf32>
    %530 = arith.divf %526, %529 : vector<16x16xf32>
    %cst_449 = arith.constant dense<0.000000e+00> : vector<16x12xf32>
    %531 = tpu.matmul %530, %519, %cst_449 {dimension_numbers = #tpu.dot_dimension_numbers<[1], [0], [0], [1], [0, 0, 1, 1], [], []>} : vector<16x16xf32>, vector<16x12xf32>, vector<16x12xf32> -> vector<16x12xf32>
    %cst_450 = arith.constant dense<0.000000e+00> : vector<16x12xf32>
    %532 = tpu.matmul %531, %482, %cst_450 {dimension_numbers = #tpu.dot_dimension_numbers<[1], [0], [0], [1], [0, 0, 1, 1], [], []>} : vector<16x12xf32>, vector<12x12xf32>, vector<16x12xf32> -> vector<16x12xf32>
    %533 = vector.broadcast %496 : vector<1x12xf32> to vector<16x12xf32>
    %534 = arith.addf %532, %533 : vector<16x12xf32>
    %535 = arith.addf %474, %534 : vector<16x12xf32>
    %cst_451 = arith.constant dense<0.000000e+00> : vector<16xf32>
    %536 = vector.multi_reduction <add>, %535, %cst_451 [1] : vector<16x12xf32> to vector<16xf32>
    %537 = vector.shape_cast %536 : vector<16xf32> to vector<16x1xf32>
    %cst_452 = arith.constant 1.200000e+01 : f32
    %538 = vector.broadcast %cst_452 : f32 to vector<16x1xf32>
    %539 = arith.divf %537, %538 : vector<16x1xf32>
    %540 = vector.broadcast %539 : vector<16x1xf32> to vector<16x12xf32>
    %541 = arith.subf %535, %540 : vector<16x12xf32>
    %542 = arith.mulf %541, %541 : vector<16x12xf32>
    %cst_453 = arith.constant dense<0.000000e+00> : vector<16xf32>
    %543 = vector.multi_reduction <add>, %542, %cst_453 [1] : vector<16x12xf32> to vector<16xf32>
    %544 = vector.shape_cast %543 : vector<16xf32> to vector<16x1xf32>
    %cst_454 = arith.constant 1.200000e+01 : f32
    %545 = vector.broadcast %cst_454 : f32 to vector<16x1xf32>
    %546 = arith.divf %544, %545 : vector<16x1xf32>
    %cst_455 = arith.constant 9.99999974E-6 : f32
    %547 = vector.broadcast %cst_455 : f32 to vector<16x1xf32>
    %548 = arith.addf %546, %547 : vector<16x1xf32>
    %549 = math.rsqrt %548 : vector<16x1xf32>
    %550 = vector.broadcast %549 : vector<16x1xf32> to vector<16x12xf32>
    %551 = arith.mulf %541, %550 : vector<16x12xf32>
    %552 = vector.broadcast %498 : vector<1x12xf32> to vector<16x12xf32>
    %553 = arith.mulf %551, %552 : vector<16x12xf32>
    %554 = vector.broadcast %500 : vector<1x12xf32> to vector<16x12xf32>
    %555 = arith.addf %553, %554 : vector<16x12xf32>
    %cst_456 = arith.constant dense<0.000000e+00> : vector<16x32xf32>
    %556 = tpu.matmul %555, %484, %cst_456 {dimension_numbers = #tpu.dot_dimension_numbers<[1], [0], [0], [1], [0, 0, 1, 1], [], []>} : vector<16x12xf32>, vector<12x32xf32>, vector<16x32xf32> -> vector<16x32xf32>
    %557 = vector.broadcast %502 : vector<1x32xf32> to vector<16x32xf32>
    %558 = arith.addf %556, %557 : vector<16x32xf32>
    %559 = math.tanh %558 : vector<16x32xf32>
    %cst_457 = arith.constant dense<0.000000e+00> : vector<16x32xf32>
    %560 = tpu.matmul %559, %486, %cst_457 {dimension_numbers = #tpu.dot_dimension_numbers<[1], [0], [0], [1], [0, 0, 1, 1], [], []>} : vector<16x32xf32>, vector<32x32xf32>, vector<16x32xf32> -> vector<16x32xf32>
    %561 = vector.broadcast %504 : vector<1x32xf32> to vector<16x32xf32>
    %562 = arith.addf %560, %561 : vector<16x32xf32>
    %563 = math.tanh %562 : vector<16x32xf32>
    %cst_458 = arith.constant dense<0.000000e+00> : vector<16x12xf32>
    %564 = tpu.matmul %563, %488, %cst_458 {dimension_numbers = #tpu.dot_dimension_numbers<[1], [0], [0], [1], [0, 0, 1, 1], [], []>} : vector<16x32xf32>, vector<32x12xf32>, vector<16x12xf32> -> vector<16x12xf32>
    %565 = vector.broadcast %506 : vector<1x12xf32> to vector<16x12xf32>
    %566 = arith.addf %564, %565 : vector<16x12xf32>
    %567 = math.tanh %566 : vector<16x12xf32>
    %568 = arith.addf %555, %567 : vector<16x12xf32>
    %cst_459 = arith.constant dense<0.000000e+00> : vector<16xf32>
    %569 = vector.multi_reduction <add>, %568, %cst_459 [1] : vector<16x12xf32> to vector<16xf32>
    %570 = vector.shape_cast %569 : vector<16xf32> to vector<16x1xf32>
    %cst_460 = arith.constant 1.200000e+01 : f32
    %571 = vector.broadcast %cst_460 : f32 to vector<16x1xf32>
    %572 = arith.divf %570, %571 : vector<16x1xf32>
    %573 = vector.broadcast %572 : vector<16x1xf32> to vector<16x12xf32>
    %574 = arith.subf %568, %573 : vector<16x12xf32>
    %575 = arith.mulf %574, %574 : vector<16x12xf32>
    %cst_461 = arith.constant dense<0.000000e+00> : vector<16xf32>
    %576 = vector.multi_reduction <add>, %575, %cst_461 [1] : vector<16x12xf32> to vector<16xf32>
    %577 = vector.shape_cast %576 : vector<16xf32> to vector<16x1xf32>
    %cst_462 = arith.constant 1.200000e+01 : f32
    %578 = vector.broadcast %cst_462 : f32 to vector<16x1xf32>
    %579 = arith.divf %577, %578 : vector<16x1xf32>
    %cst_463 = arith.constant 9.99999974E-6 : f32
    %580 = vector.broadcast %cst_463 : f32 to vector<16x1xf32>
    %581 = arith.addf %579, %580 : vector<16x1xf32>
    %582 = math.rsqrt %581 : vector<16x1xf32>
    %583 = vector.broadcast %582 : vector<16x1xf32> to vector<16x12xf32>
    %584 = arith.mulf %574, %583 : vector<16x12xf32>
    %585 = vector.broadcast %508 : vector<1x12xf32> to vector<16x12xf32>
    %586 = arith.mulf %584, %585 : vector<16x12xf32>
    %587 = vector.broadcast %510 : vector<1x12xf32> to vector<16x12xf32>
    %588 = arith.addf %586, %587 : vector<16x12xf32>
    %c1_464 = arith.constant 1 : index
    %c2_465 = arith.constant 2 : index
    %c0_466 = arith.constant 0 : index
    %c0_467 = arith.constant 0 : index
    %589 = vector.load %arg1[%c1_464, %c2_465, %c0_466, %c0_467] : memref<2x3x160x32xf32, #tpu.memory_space<vmem>>, vector<1x1x12x12xf32>
    %590 = vector.shape_cast %589 : vector<1x1x12x12xf32> to vector<12x12xf32>
    %c1_468 = arith.constant 1 : index
    %c2_469 = arith.constant 2 : index
    %c16_470 = arith.constant 16 : index
    %c0_471 = arith.constant 0 : index
    %591 = vector.load %arg1[%c1_468, %c2_469, %c16_470, %c0_471] : memref<2x3x160x32xf32, #tpu.memory_space<vmem>>, vector<1x1x12x12xf32>
    %592 = vector.shape_cast %591 : vector<1x1x12x12xf32> to vector<12x12xf32>
    %c1_472 = arith.constant 1 : index
    %c2_473 = arith.constant 2 : index
    %c32_474 = arith.constant 32 : index
    %c0_475 = arith.constant 0 : index
    %593 = vector.load %arg1[%c1_472, %c2_473, %c32_474, %c0_475] : memref<2x3x160x32xf32, #tpu.memory_space<vmem>>, vector<1x1x12x12xf32>
    %594 = vector.shape_cast %593 : vector<1x1x12x12xf32> to vector<12x12xf32>
    %c1_476 = arith.constant 1 : index
    %c2_477 = arith.constant 2 : index
    %c48_478 = arith.constant 48 : index
    %c0_479 = arith.constant 0 : index
    %595 = vector.load %arg1[%c1_476, %c2_477, %c48_478, %c0_479] : memref<2x3x160x32xf32, #tpu.memory_space<vmem>>, vector<1x1x12x12xf32>
    %596 = vector.shape_cast %595 : vector<1x1x12x12xf32> to vector<12x12xf32>
    %c1_480 = arith.constant 1 : index
    %c2_481 = arith.constant 2 : index
    %c64_482 = arith.constant 64 : index
    %c0_483 = arith.constant 0 : index
    %597 = vector.load %arg1[%c1_480, %c2_481, %c64_482, %c0_483] : memref<2x3x160x32xf32, #tpu.memory_space<vmem>>, vector<1x1x12x32xf32>
    %598 = vector.shape_cast %597 : vector<1x1x12x32xf32> to vector<12x32xf32>
    %c1_484 = arith.constant 1 : index
    %c2_485 = arith.constant 2 : index
    %c80_486 = arith.constant 80 : index
    %c0_487 = arith.constant 0 : index
    %599 = vector.load %arg1[%c1_484, %c2_485, %c80_486, %c0_487] : memref<2x3x160x32xf32, #tpu.memory_space<vmem>>, vector<1x1x32x32xf32>
    %600 = vector.shape_cast %599 : vector<1x1x32x32xf32> to vector<32x32xf32>
    %c1_488 = arith.constant 1 : index
    %c2_489 = arith.constant 2 : index
    %c112_490 = arith.constant 112 : index
    %c0_491 = arith.constant 0 : index
    %601 = vector.load %arg1[%c1_488, %c2_489, %c112_490, %c0_491] : memref<2x3x160x32xf32, #tpu.memory_space<vmem>>, vector<1x1x32x12xf32>
    %602 = vector.shape_cast %601 : vector<1x1x32x12xf32> to vector<32x12xf32>
    %c1_492 = arith.constant 1 : index
    %c2_493 = arith.constant 2 : index
    %c144_494 = arith.constant 144 : index
    %c0_495 = arith.constant 0 : index
    %603 = vector.load %arg1[%c1_492, %c2_493, %c144_494, %c0_495] : memref<2x3x160x32xf32, #tpu.memory_space<vmem>>, vector<1x1x1x12xf32>
    %604 = vector.shape_cast %603 : vector<1x1x1x12xf32> to vector<1x12xf32>
    %c1_496 = arith.constant 1 : index
    %c2_497 = arith.constant 2 : index
    %c145_498 = arith.constant 145 : index
    %c0_499 = arith.constant 0 : index
    %605 = vector.load %arg1[%c1_496, %c2_497, %c145_498, %c0_499] : memref<2x3x160x32xf32, #tpu.memory_space<vmem>>, vector<1x1x1x12xf32>
    %606 = vector.shape_cast %605 : vector<1x1x1x12xf32> to vector<1x12xf32>
    %c1_500 = arith.constant 1 : index
    %c2_501 = arith.constant 2 : index
    %c146_502 = arith.constant 146 : index
    %c0_503 = arith.constant 0 : index
    %607 = vector.load %arg1[%c1_500, %c2_501, %c146_502, %c0_503] : memref<2x3x160x32xf32, #tpu.memory_space<vmem>>, vector<1x1x1x12xf32>
    %608 = vector.shape_cast %607 : vector<1x1x1x12xf32> to vector<1x12xf32>
    %c1_504 = arith.constant 1 : index
    %c2_505 = arith.constant 2 : index
    %c147_506 = arith.constant 147 : index
    %c0_507 = arith.constant 0 : index
    %609 = vector.load %arg1[%c1_504, %c2_505, %c147_506, %c0_507] : memref<2x3x160x32xf32, #tpu.memory_space<vmem>>, vector<1x1x1x12xf32>
    %610 = vector.shape_cast %609 : vector<1x1x1x12xf32> to vector<1x12xf32>
    %c1_508 = arith.constant 1 : index
    %c2_509 = arith.constant 2 : index
    %c148_510 = arith.constant 148 : index
    %c0_511 = arith.constant 0 : index
    %611 = vector.load %arg1[%c1_508, %c2_509, %c148_510, %c0_511] : memref<2x3x160x32xf32, #tpu.memory_space<vmem>>, vector<1x1x1x12xf32>
    %612 = vector.shape_cast %611 : vector<1x1x1x12xf32> to vector<1x12xf32>
    %c1_512 = arith.constant 1 : index
    %c2_513 = arith.constant 2 : index
    %c149_514 = arith.constant 149 : index
    %c0_515 = arith.constant 0 : index
    %613 = vector.load %arg1[%c1_512, %c2_513, %c149_514, %c0_515] : memref<2x3x160x32xf32, #tpu.memory_space<vmem>>, vector<1x1x1x12xf32>
    %614 = vector.shape_cast %613 : vector<1x1x1x12xf32> to vector<1x12xf32>
    %c1_516 = arith.constant 1 : index
    %c2_517 = arith.constant 2 : index
    %c150_518 = arith.constant 150 : index
    %c0_519 = arith.constant 0 : index
    %615 = vector.load %arg1[%c1_516, %c2_517, %c150_518, %c0_519] : memref<2x3x160x32xf32, #tpu.memory_space<vmem>>, vector<1x1x1x32xf32>
    %616 = vector.shape_cast %615 : vector<1x1x1x32xf32> to vector<1x32xf32>
    %c1_520 = arith.constant 1 : index
    %c2_521 = arith.constant 2 : index
    %c151_522 = arith.constant 151 : index
    %c0_523 = arith.constant 0 : index
    %617 = vector.load %arg1[%c1_520, %c2_521, %c151_522, %c0_523] : memref<2x3x160x32xf32, #tpu.memory_space<vmem>>, vector<1x1x1x32xf32>
    %618 = vector.shape_cast %617 : vector<1x1x1x32xf32> to vector<1x32xf32>
    %c1_524 = arith.constant 1 : index
    %c2_525 = arith.constant 2 : index
    %c152_526 = arith.constant 152 : index
    %c0_527 = arith.constant 0 : index
    %619 = vector.load %arg1[%c1_524, %c2_525, %c152_526, %c0_527] : memref<2x3x160x32xf32, #tpu.memory_space<vmem>>, vector<1x1x1x12xf32>
    %620 = vector.shape_cast %619 : vector<1x1x1x12xf32> to vector<1x12xf32>
    %c1_528 = arith.constant 1 : index
    %c2_529 = arith.constant 2 : index
    %c153_530 = arith.constant 153 : index
    %c0_531 = arith.constant 0 : index
    %621 = vector.load %arg1[%c1_528, %c2_529, %c153_530, %c0_531] : memref<2x3x160x32xf32, #tpu.memory_space<vmem>>, vector<1x1x1x12xf32>
    %622 = vector.shape_cast %621 : vector<1x1x1x12xf32> to vector<1x12xf32>
    %c1_532 = arith.constant 1 : index
    %c2_533 = arith.constant 2 : index
    %c154_534 = arith.constant 154 : index
    %c0_535 = arith.constant 0 : index
    %623 = vector.load %arg1[%c1_532, %c2_533, %c154_534, %c0_535] : memref<2x3x160x32xf32, #tpu.memory_space<vmem>>, vector<1x1x1x12xf32>
    %624 = vector.shape_cast %623 : vector<1x1x1x12xf32> to vector<1x12xf32>
    %cst_536 = arith.constant dense<0.000000e+00> : vector<16x12xf32>
    %625 = tpu.matmul %588, %590, %cst_536 {dimension_numbers = #tpu.dot_dimension_numbers<[1], [0], [0], [1], [0, 0, 1, 1], [], []>} : vector<16x12xf32>, vector<12x12xf32>, vector<16x12xf32> -> vector<16x12xf32>
    %626 = vector.broadcast %604 : vector<1x12xf32> to vector<16x12xf32>
    %627 = arith.addf %625, %626 : vector<16x12xf32>
    %cst_537 = arith.constant dense<0.000000e+00> : vector<16x12xf32>
    %628 = tpu.matmul %588, %592, %cst_537 {dimension_numbers = #tpu.dot_dimension_numbers<[1], [0], [0], [1], [0, 0, 1, 1], [], []>} : vector<16x12xf32>, vector<12x12xf32>, vector<16x12xf32> -> vector<16x12xf32>
    %629 = vector.broadcast %606 : vector<1x12xf32> to vector<16x12xf32>
    %630 = arith.addf %628, %629 : vector<16x12xf32>
    %cst_538 = arith.constant dense<0.000000e+00> : vector<16x12xf32>
    %631 = tpu.matmul %588, %594, %cst_538 {dimension_numbers = #tpu.dot_dimension_numbers<[1], [0], [0], [1], [0, 0, 1, 1], [], []>} : vector<16x12xf32>, vector<12x12xf32>, vector<16x12xf32> -> vector<16x12xf32>
    %632 = vector.broadcast %608 : vector<1x12xf32> to vector<16x12xf32>
    %633 = arith.addf %631, %632 : vector<16x12xf32>
    %cst_539 = arith.constant dense<0.000000e+00> : vector<16x16xf32>
    %634 = tpu.matmul %627, %630, %cst_539 {dimension_numbers = #tpu.dot_dimension_numbers<[1], [1], [0], [0], [0, 0, 1, 0], [], []>} : vector<16x12xf32>, vector<16x12xf32>, vector<16x16xf32> -> vector<16x16xf32>
    %635 = arith.addf %634, %2 : vector<16x16xf32>
    %cst_540 = arith.constant dense<0xFF800000> : vector<16xf32>
    %636 = vector.multi_reduction <maximumf>, %635, %cst_540 [1] : vector<16x16xf32> to vector<16xf32>
    %637 = vector.shape_cast %636 : vector<16xf32> to vector<16x1xf32>
    %638 = vector.broadcast %637 : vector<16x1xf32> to vector<16x16xf32>
    %639 = arith.subf %635, %638 : vector<16x16xf32>
    %640 = math.exp %639 : vector<16x16xf32>
    %cst_541 = arith.constant dense<0.000000e+00> : vector<16xf32>
    %641 = vector.multi_reduction <add>, %640, %cst_541 [1] : vector<16x16xf32> to vector<16xf32>
    %642 = vector.shape_cast %641 : vector<16xf32> to vector<16x1xf32>
    %643 = vector.broadcast %642 : vector<16x1xf32> to vector<16x16xf32>
    %644 = arith.divf %640, %643 : vector<16x16xf32>
    %cst_542 = arith.constant dense<0.000000e+00> : vector<16x12xf32>
    %645 = tpu.matmul %644, %633, %cst_542 {dimension_numbers = #tpu.dot_dimension_numbers<[1], [0], [0], [1], [0, 0, 1, 1], [], []>} : vector<16x16xf32>, vector<16x12xf32>, vector<16x12xf32> -> vector<16x12xf32>
    %cst_543 = arith.constant dense<0.000000e+00> : vector<16x12xf32>
    %646 = tpu.matmul %645, %596, %cst_543 {dimension_numbers = #tpu.dot_dimension_numbers<[1], [0], [0], [1], [0, 0, 1, 1], [], []>} : vector<16x12xf32>, vector<12x12xf32>, vector<16x12xf32> -> vector<16x12xf32>
    %647 = vector.broadcast %610 : vector<1x12xf32> to vector<16x12xf32>
    %648 = arith.addf %646, %647 : vector<16x12xf32>
    %649 = arith.addf %588, %648 : vector<16x12xf32>
    %cst_544 = arith.constant dense<0.000000e+00> : vector<16xf32>
    %650 = vector.multi_reduction <add>, %649, %cst_544 [1] : vector<16x12xf32> to vector<16xf32>
    %651 = vector.shape_cast %650 : vector<16xf32> to vector<16x1xf32>
    %cst_545 = arith.constant 1.200000e+01 : f32
    %652 = vector.broadcast %cst_545 : f32 to vector<16x1xf32>
    %653 = arith.divf %651, %652 : vector<16x1xf32>
    %654 = vector.broadcast %653 : vector<16x1xf32> to vector<16x12xf32>
    %655 = arith.subf %649, %654 : vector<16x12xf32>
    %656 = arith.mulf %655, %655 : vector<16x12xf32>
    %cst_546 = arith.constant dense<0.000000e+00> : vector<16xf32>
    %657 = vector.multi_reduction <add>, %656, %cst_546 [1] : vector<16x12xf32> to vector<16xf32>
    %658 = vector.shape_cast %657 : vector<16xf32> to vector<16x1xf32>
    %cst_547 = arith.constant 1.200000e+01 : f32
    %659 = vector.broadcast %cst_547 : f32 to vector<16x1xf32>
    %660 = arith.divf %658, %659 : vector<16x1xf32>
    %cst_548 = arith.constant 9.99999974E-6 : f32
    %661 = vector.broadcast %cst_548 : f32 to vector<16x1xf32>
    %662 = arith.addf %660, %661 : vector<16x1xf32>
    %663 = math.rsqrt %662 : vector<16x1xf32>
    %664 = vector.broadcast %663 : vector<16x1xf32> to vector<16x12xf32>
    %665 = arith.mulf %655, %664 : vector<16x12xf32>
    %666 = vector.broadcast %612 : vector<1x12xf32> to vector<16x12xf32>
    %667 = arith.mulf %665, %666 : vector<16x12xf32>
    %668 = vector.broadcast %614 : vector<1x12xf32> to vector<16x12xf32>
    %669 = arith.addf %667, %668 : vector<16x12xf32>
    %cst_549 = arith.constant dense<0.000000e+00> : vector<16x32xf32>
    %670 = tpu.matmul %669, %598, %cst_549 {dimension_numbers = #tpu.dot_dimension_numbers<[1], [0], [0], [1], [0, 0, 1, 1], [], []>} : vector<16x12xf32>, vector<12x32xf32>, vector<16x32xf32> -> vector<16x32xf32>
    %671 = vector.broadcast %616 : vector<1x32xf32> to vector<16x32xf32>
    %672 = arith.addf %670, %671 : vector<16x32xf32>
    %673 = math.tanh %672 : vector<16x32xf32>
    %cst_550 = arith.constant dense<0.000000e+00> : vector<16x32xf32>
    %674 = tpu.matmul %673, %600, %cst_550 {dimension_numbers = #tpu.dot_dimension_numbers<[1], [0], [0], [1], [0, 0, 1, 1], [], []>} : vector<16x32xf32>, vector<32x32xf32>, vector<16x32xf32> -> vector<16x32xf32>
    %675 = vector.broadcast %618 : vector<1x32xf32> to vector<16x32xf32>
    %676 = arith.addf %674, %675 : vector<16x32xf32>
    %677 = math.tanh %676 : vector<16x32xf32>
    %cst_551 = arith.constant dense<0.000000e+00> : vector<16x12xf32>
    %678 = tpu.matmul %677, %602, %cst_551 {dimension_numbers = #tpu.dot_dimension_numbers<[1], [0], [0], [1], [0, 0, 1, 1], [], []>} : vector<16x32xf32>, vector<32x12xf32>, vector<16x12xf32> -> vector<16x12xf32>
    %679 = vector.broadcast %620 : vector<1x12xf32> to vector<16x12xf32>
    %680 = arith.addf %678, %679 : vector<16x12xf32>
    %681 = math.tanh %680 : vector<16x12xf32>
    %682 = arith.addf %669, %681 : vector<16x12xf32>
    %cst_552 = arith.constant dense<0.000000e+00> : vector<16xf32>
    %683 = vector.multi_reduction <add>, %682, %cst_552 [1] : vector<16x12xf32> to vector<16xf32>
    %684 = vector.shape_cast %683 : vector<16xf32> to vector<16x1xf32>
    %cst_553 = arith.constant 1.200000e+01 : f32
    %685 = vector.broadcast %cst_553 : f32 to vector<16x1xf32>
    %686 = arith.divf %684, %685 : vector<16x1xf32>
    %687 = vector.broadcast %686 : vector<16x1xf32> to vector<16x12xf32>
    %688 = arith.subf %682, %687 : vector<16x12xf32>
    %689 = arith.mulf %688, %688 : vector<16x12xf32>
    %cst_554 = arith.constant dense<0.000000e+00> : vector<16xf32>
    %690 = vector.multi_reduction <add>, %689, %cst_554 [1] : vector<16x12xf32> to vector<16xf32>
    %691 = vector.shape_cast %690 : vector<16xf32> to vector<16x1xf32>
    %cst_555 = arith.constant 1.200000e+01 : f32
    %692 = vector.broadcast %cst_555 : f32 to vector<16x1xf32>
    %693 = arith.divf %691, %692 : vector<16x1xf32>
    %cst_556 = arith.constant 9.99999974E-6 : f32
    %694 = vector.broadcast %cst_556 : f32 to vector<16x1xf32>
    %695 = arith.addf %693, %694 : vector<16x1xf32>
    %696 = math.rsqrt %695 : vector<16x1xf32>
    %697 = vector.broadcast %696 : vector<16x1xf32> to vector<16x12xf32>
    %698 = arith.mulf %688, %697 : vector<16x12xf32>
    %699 = vector.broadcast %622 : vector<1x12xf32> to vector<16x12xf32>
    %700 = arith.mulf %698, %699 : vector<16x12xf32>
    %701 = vector.broadcast %624 : vector<1x12xf32> to vector<16x12xf32>
    %702 = arith.addf %700, %701 : vector<16x12xf32>
    %c1_557 = arith.constant 1 : index
    %c0_558 = arith.constant 0 : index
    %c0_559 = arith.constant 0 : index
    %703 = vector.load %arg2[%c1_557, %c0_558, %c0_559] : memref<2x16x64xf32, #tpu.memory_space<vmem>>, vector<1x12x64xf32>
    %704 = vector.shape_cast %703 : vector<1x12x64xf32> to vector<12x64xf32>
    %c1_560 = arith.constant 1 : index
    %c12_561 = arith.constant 12 : index
    %c0_562 = arith.constant 0 : index
    %705 = vector.load %arg2[%c1_560, %c12_561, %c0_562] : memref<2x16x64xf32, #tpu.memory_space<vmem>>, vector<1x1x8xf32>
    %706 = vector.shape_cast %705 : vector<1x1x8xf32> to vector<1x8xf32>
    %cst_563 = arith.constant dense<0.000000e+00> : vector<16x64xf32>
    %707 = tpu.matmul %702, %704, %cst_563 {dimension_numbers = #tpu.dot_dimension_numbers<[1], [0], [0], [1], [0, 0, 1, 1], [], []>} : vector<16x12xf32>, vector<12x64xf32>, vector<16x64xf32> -> vector<16x64xf32>
    %708 = arith.mulf %707, %1 : vector<16x64xf32>
    %cst_564 = arith.constant dense<0.000000e+00> : vector<16x8xf32>
    %709 = tpu.matmul %708, %3, %cst_564 {dimension_numbers = #tpu.dot_dimension_numbers<[1], [0], [0], [1], [0, 0, 1, 1], [], []>} : vector<16x64xf32>, vector<64x8xf32>, vector<16x8xf32> -> vector<16x8xf32>
    %cst_565 = arith.constant dense<0.000000e+00> : vector<2x8xf32>
    %710 = tpu.matmul %4, %709, %cst_565 {dimension_numbers = #tpu.dot_dimension_numbers<[1], [0], [0], [1], [0, 0, 1, 1], [], []>} : vector<2x16xf32>, vector<16x8xf32>, vector<2x8xf32> -> vector<2x8xf32>
    %711 = vector.broadcast %706 : vector<1x8xf32> to vector<2x8xf32>
    %712 = arith.addf %710, %711 : vector<2x8xf32>
    %713 = math.tanh %712 : vector<2x8xf32>
    %c1_566 = arith.constant 1 : index
    %c0_567 = arith.constant 0 : index
    %c0_568 = arith.constant 0 : index
    %714 = vector.load %arg4[%c1_566, %c0_567, %c0_568] : memref<2x2x8xf32, #tpu.memory_space<vmem>>, vector<1x2x8xf32>
    %715 = vector.shape_cast %714 : vector<1x2x8xf32> to vector<2x8xf32>
    %716 = vector.shape_cast %713 : vector<2x8xf32> to vector<1x2x8xf32>
    tpu.vector_store %arg4[%c1_566, %c0_567, %c0_568], %716 {strides = array<i32>} : memref<2x2x8xf32, #tpu.memory_space<vmem>>, vector<1x2x8xf32>,
    return
  }
}

</mosaic_0001>

<llo_original>
// kernel: self_attention_forward.1
$region0: #{self_attention_forward.1}
  #allocation0 [shape = 'u32[]', space=smem, size = 0x4, offset = 0x4, fixed_abs, tag = 'smem constant byte address 0x4 - core index']
  #allocation1 [shape = 'u32[144,128]{1,0:T(1,128)}', space=vmem, size = 0x12000, scoped, tag = 'internal scratch']
  %s0 = inlined_call_operand.vmem [shape: f32[16,12], index: 0, kind: input, shape index: {}]
  %s1 = inlined_call_operand.vmem [shape: f32[2,3,160,32], index: 1, kind: input, shape index: {}]
  %s2 = inlined_call_operand.vmem [shape: f32[2,16,64], index: 2, kind: input, shape index: {}]
  %s3 = inlined_call_operand.vmem [shape: f32[104,64], index: 3, kind: input, shape index: {}]
  %s4 = inlined_call_operand.vmem [shape: f32[2,2,8], index: 4, kind: output, shape index: {}]
  %s5 = sld [smem:[#allocation0]]
  $region26: #{self_attention_forward.1} parent=0
    _
  %s7 = ssub.s32 1, %s5
  %s8 = scalar_select 0, %s7, %s5
  // Predicated region
  $region2: #{self_attention_forward.1} parent=0 // pred_check
    _
  $region3: #{self_attention_forward.1} parent=0 // pred_check_branch
    %10 = sbr.rel (0) target = $region5
  $region4: #{self_attention_forward.1} parent=0 // pred_region
    _
  $region5: #{self_attention_forward.1} parent=0 // pred_fallthru
    _
  // Predicated region
  $region6: #{self_attention_forward.1} parent=0 // pred_check
    _
  $region7: #{self_attention_forward.1} parent=0 // pred_check_branch
    %12 = sbr.rel (0) target = $region9
  $region8: #{self_attention_forward.1} parent=0 // pred_region
    _
  $region9: #{self_attention_forward.1} parent=0 // pred_fallthru
    _
  // Predicated region
  $region10: #{self_attention_forward.1} parent=0 // pred_check
    _
  $region11: #{self_attention_forward.1} parent=0 // pred_check_branch
    %14 = sbr.rel (0) target = $region13
  $region12: #{self_attention_forward.1} parent=0 // pred_region
    _
  $region13: #{self_attention_forward.1} parent=0 // pred_fallthru
    _
  // Predicated region
  $region14: #{self_attention_forward.1} parent=0 // pred_check
    _
  $region15: #{self_attention_forward.1} parent=0 // pred_check_branch
    %16 = sbr.rel (0) target = $region17
  $region16: #{self_attention_forward.1} parent=0 // pred_region
    _
  $region17: #{self_attention_forward.1} parent=0 // pred_fallthru
    _
  %v17 = vld [vmem:[%s0] sm:$0xff]
  %v18 = vld [vmem:[%s0 + $0x8] sm:$0xff]
  %v19 = vld [vmem:[%s3] sm:$0xff]
  %v20 = vld [vmem:[%s3 + $0x8] sm:$0xff]
  %v21 = vld [vmem:[%s3 + $0x10] sm:$0xff]
  %v22 = vld [vmem:[%s3 + $0x18] sm:$0xff]
  %v23 = vld [vmem:[%s3 + $0x20] sm:$0xff]
  %v24 = vld [vmem:[%s3 + $0x28] sm:$0xff]
  %v25 = vld [vmem:[%s3 + $0x30] sm:$0xff]
  %v26 = vld [vmem:[%s3 + $0x38] sm:$0xff]
  %v27 = vld [vmem:[%s3 + $0x40] sm:$0xff]
  %v28 = vld [vmem:[%s3 + $0x48] sm:$0xff]
  %v29 = vld [vmem:[%s3 + $0x50] sm:$0xff]
  %v30 = vld [vmem:[%s3 + $0x58] sm:$0xff]
  %v31 = vld [vmem:[%s3 + $0x60] sm:$0x3]
  %v32 = vld [vmem:[%s1] sm:$0xff]
  %v33 = vld [vmem:[%s1 + $0x8] sm:$0xf]
  %v34 = vld [vmem:[%s1 + $0x10] sm:$0xff]
  %v35 = vld [vmem:[%s1 + $0x18] sm:$0xf]
  %v36 = vld [vmem:[%s1 + $0x20] sm:$0xff]
  %v37 = vld [vmem:[%s1 + $0x28] sm:$0xf]
  %v38 = vld [vmem:[%s1 + $0x30] sm:$0xff]
  %v39 = vld [vmem:[%s1 + $0x38] sm:$0xf]
  %v40 = vld [vmem:[%s1 + $0x40] sm:$0xff]
  %v41 = vld [vmem:[%s1 + $0x48] sm:$0xf]
  %v42 = vld [vmem:[%s1 + $0x50] sm:$0xff]
  %v43 = vld [vmem:[%s1 + $0x58] sm:$0xff]
  %v44 = vld [vmem:[%s1 + $0x60] sm:$0xff]
  %v45 = vld [vmem:[%s1 + $0x68] sm:$0xff]
  %v46 = vld [vmem:[%s1 + $0x70] sm:$0xff]
  %v47 = vld [vmem:[%s1 + $0x78] sm:$0xff]
  %v48 = vld [vmem:[%s1 + $0x80] sm:$0xff]
  %v49 = vld [vmem:[%s1 + $0x88] sm:$0xff]
  %v50 = vld [vmem:[%s1 + $0x90] sm:$0x1]
  %v51 = vld [vmem:[%s1 + $0x91] sm:$0x1]
  %v52 = vld [vmem:[%s1 + $0x92] sm:$0x1]
  %v53 = vld [vmem:[%s1 + $0x93] sm:$0x1]
  %v54 = vld [vmem:[%s1 + $0x94] sm:$0x1]
  %v55 = vld [vmem:[%s1 + $0x95] sm:$0x1]
  %v56 = vld [vmem:[%s1 + $0x96] sm:$0x1]
  %v57 = vld [vmem:[%s1 + $0x97] sm:$0x1]
  %v58 = vld [vmem:[%s1 + $0x98] sm:$0x1]
  %v59 = vld [vmem:[%s1 + $0x99] sm:$0x1]
  %v60 = vld [vmem:[%s1 + $0x9a] sm:$0x1]
  %v61 = vlaneseq
  %v62 = vshrl.u32 %v61, 7
  %v63 = vsub.s32 0, %v62
  %v64 = vrot.slane %v50, %v63
  %vm65 = vcmask 97280
  %v67 = vsel %vm65, %v17, 0
  %v70 = vsel %vm65, %v18, 0
  %vm72 = vcmask 1043456
  %v74 = vsel %vm72, %v33, 0
  %76 = vmatprep.subr.mxu0 0.0
  %77 = vmatpush1.msra.mxu0 %v32
  %78 = vmatprep.subr.mxu0 0.0
  %79 = vmatpush1.msra.mxu0 %v74
  %80 = vmatprep.subr.mxu0 0.0
  %81 = vmatpush1.msra.mxu0 0.0
  %82 = vmatprep.subr.mxu0 0.0
  %83 = vmatpush1.msra.mxu0 0.0
  %84 = vmatprep.subr.mxu0 0.0
  %85 = vmatpush1.msra.mxu0 0.0
  %86 = vmatprep.subr.mxu0 0.0
  %87 = vmatpush1.msra.mxu0 0.0
  %88 = vmatprep.subr.mxu0 0.0
  %89 = vmatpush1.msra.mxu0 0.0
  %90 = vmatprep.subr.mxu0 0.0
  %91 = vmatpush1.msra.mxu0 0.0
  %92 = vmatprep.subr.mxu0 0.0
  %93 = vmatpush1.msra.mxu0 0.0
  %94 = vmatprep.subr.mxu0 0.0
  %95 = vmatpush1.msra.mxu0 0.0
  %96 = vmatprep.subr.mxu0 0.0
  %97 = vmatpush1.msra.mxu0 0.0
  %98 = vmatprep.subr.mxu0 0.0
  %99 = vmatpush1.msra.mxu0 0.0
  %100 = vmatprep.subr.mxu0 0.0
  %101 = vmatpush1.msra.mxu0 0.0
  %102 = vmatprep.subr.mxu0 0.0
  %103 = vmatpush1.msra.mxu0 0.0
  %104 = vmatprep.subr.mxu0 0.0
  %105 = vmatpush1.msra.mxu0 0.0
  %106 = vmatprep.subr.mxu0 0.0
  %107 = vmatpush1.msra.mxu0 0.0
  %108 = vmatprep.subr.mxu0 0.0
  %109 = vmatpush1.msra.mxu0 0.0
  %110 = vmatprep.subr.mxu0 0.0
  %111 = vmatpush1.msra.mxu0 0.0
  %112 = vmatprep.subr.mxu0 0.0
  %113 = vmatpush1.msra.mxu0 0.0
  %114 = vmatprep.subr.mxu0 0.0
  %115 = vmatpush1.msra.mxu0 0.0
  %116 = vmatprep.subr.mxu0 0.0
  %117 = vmatpush1.msra.mxu0 0.0
  %118 = vmatprep.subr.mxu0 0.0
  %119 = vmatpush1.msra.mxu0 0.0
  %120 = vmatprep.subr.mxu0 0.0
  %121 = vmatpush1.msra.mxu0 0.0
  %122 = vmatprep.subr.mxu0 0.0
  %123 = vmatpush1.msra.mxu0 0.0
  %124 = vmatprep.subr.mxu0 0.0
  %125 = vmatpush1.msra.mxu0 0.0
  %126 = vmatprep.subr.mxu0 0.0
  %127 = vmatpush1.msra.mxu0 0.0
  %128 = vmatprep.subr.mxu0 0.0
  %129 = vmatpush1.msra.mxu0 0.0
  %130 = vmatprep.subr.mxu0 0.0
  %131 = vmatpush1.msra.mxu0 0.0
  %132 = vmatprep.subr.mxu0 0.0
  %133 = vmatpush1.msra.mxu0 0.0
  %134 = vmatprep.subr.mxu0 0.0
  %135 = vmatpush1.msra.mxu0 0.0
  %136 = vmatprep.subr.mxu0 0.0
  %137 = vmatpush1.msra.mxu0 0.0
  %138 = vmatprep.subr.mxu0 0.0
  %139 = vmatpush1.msra.mxu0 0.0
  %140 = vmatprep.mubr.f32.mxu0 0.0
  %141 = vmatmul.mubr.f32.gmra.mrb[0].mxu0 %v67
  %v142 = vpop.f32.mrb[0].mxu0
  %v143 = vadd.f32 %v64, %v142
  %v144 = vpop.f32.mrb[0].mxu0
  %145 = vmatprep.mubr.f32.mxu0 0.0
  %146 = vmatmul.mubr.f32.gmra.mrb[0].mxu0 %v70
  %v147 = vpop.f32.mrb[0].mxu0
  %v148 = vadd.f32 %v64, %v147
  %v149 = vpop.f32.mrb[0].mxu0
  %150 = vdwg.mxu0
  %v151 = vlaneseq
  %v152 = vshrl.u32 %v151, 7
  %v153 = vsub.s32 0, %v152
  %v154 = vrot.slane %v51, %v153
  %v156 = vsel %vm72, %v35, 0
  %158 = vmatprep.subr.mxu0 0.0
  %159 = vmatpush1.msra.mxu0 %v34
  %160 = vmatprep.subr.mxu0 0.0
  %161 = vmatpush1.msra.mxu0 %v156
  %162 = vmatprep.subr.mxu0 0.0
  %163 = vmatpush1.msra.mxu0 0.0
  %164 = vmatprep.subr.mxu0 0.0
  %165 = vmatpush1.msra.mxu0 0.0
  %166 = vmatprep.subr.mxu0 0.0
  %167 = vmatpush1.msra.mxu0 0.0
  %168 = vmatprep.subr.mxu0 0.0
  %169 = vmatpush1.msra.mxu0 0.0
  %170 = vmatprep.subr.mxu0 0.0
  %171 = vmatpush1.msra.mxu0 0.0
  %172 = vmatprep.subr.mxu0 0.0
  %173 = vmatpush1.msra.mxu0 0.0
  %174 = vmatprep.subr.mxu0 0.0
  %175 = vmatpush1.msra.mxu0 0.0
  %176 = vmatprep.subr.mxu0 0.0
  %177 = vmatpush1.msra.mxu0 0.0
  %178 = vmatprep.subr.mxu0 0.0
  %179 = vmatpush1.msra.mxu0 0.0
  %180 = vmatprep.subr.mxu0 0.0
  %181 = vmatpush1.msra.mxu0 0.0
  %182 = vmatprep.subr.mxu0 0.0
  %183 = vmatpush1.msra.mxu0 0.0
  %184 = vmatprep.subr.mxu0 0.0
  %185 = vmatpush1.msra.mxu0 0.0
  %186 = vmatprep.subr.mxu0 0.0
  %187 = vmatpush1.msra.mxu0 0.0
  %188 = vmatprep.subr.mxu0 0.0
  %189 = vmatpush1.msra.mxu0 0.0
  %190 = vmatprep.subr.mxu0 0.0
  %191 = vmatpush1.msra.mxu0 0.0
  %192 = vmatprep.subr.mxu0 0.0
  %193 = vmatpush1.msra.mxu0 0.0
  %194 = vmatprep.subr.mxu0 0.0
  %195 = vmatpush1.msra.mxu0 0.0
  %196 = vmatprep.subr.mxu0 0.0
  %197 = vmatpush1.msra.mxu0 0.0
  %198 = vmatprep.subr.mxu0 0.0
  %199 = vmatpush1.msra.mxu0 0.0
  %200 = vmatprep.subr.mxu0 0.0
  %201 = vmatpush1.msra.mxu0 0.0
  %202 = vmatprep.subr.mxu0 0.0
  %203 = vmatpush1.msra.mxu0 0.0
  %204 = vmatprep.subr.mxu0 0.0
  %205 = vmatpush1.msra.mxu0 0.0
  %206 = vmatprep.subr.mxu0 0.0
  %207 = vmatpush1.msra.mxu0 0.0
  %208 = vmatprep.subr.mxu0 0.0
  %209 = vmatpush1.msra.mxu0 0.0
  %210 = vmatprep.subr.mxu0 0.0
  %211 = vmatpush1.msra.mxu0 0.0
  %212 = vmatprep.subr.mxu0 0.0
  %213 = vmatpush1.msra.mxu0 0.0
  %214 = vmatprep.subr.mxu0 0.0
  %215 = vmatpush1.msra.mxu0 0.0
  %216 = vmatprep.subr.mxu0 0.0
  %217 = vmatpush1.msra.mxu0 0.0
  %218 = vmatprep.subr.mxu0 0.0
  %219 = vmatpush1.msra.mxu0 0.0
  %220 = vmatprep.subr.mxu0 0.0
  %221 = vmatpush1.msra.mxu0 0.0
  %222 = vmatprep.mubr.f32.mxu0 0.0
  %223 = vmatmul.mubr.f32.gmra.mrb[0].mxu0 %v67
  %v224 = vpop.f32.mrb[0].mxu0
  %v225 = vadd.f32 %v154, %v224
  %v226 = vpop.f32.mrb[0].mxu0
  %227 = vmatprep.mubr.f32.mxu0 0.0
  %228 = vmatmul.mubr.f32.gmra.mrb[0].mxu0 %v70
  %v229 = vpop.f32.mrb[0].mxu0
  %v230 = vadd.f32 %v154, %v229
  %v231 = vpop.f32.mrb[0].mxu0
  %232 = vdwg.mxu0
  %v233 = vlaneseq
  %v234 = vshrl.u32 %v233, 7
  %v235 = vsub.s32 0, %v234
  %v236 = vrot.slane %v52, %v235
  %v238 = vsel %vm72, %v37, 0
  %240 = vmatprep.subr.mxu0 0.0
  %241 = vmatpush1.msra.mxu0 %v36
  %242 = vmatprep.subr.mxu0 0.0
  %243 = vmatpush1.msra.mxu0 %v238
  %244 = vmatprep.subr.mxu0 0.0
  %245 = vmatpush1.msra.mxu0 0.0
  %246 = vmatprep.subr.mxu0 0.0
  %247 = vmatpush1.msra.mxu0 0.0
  %248 = vmatprep.subr.mxu0 0.0
  %249 = vmatpush1.msra.mxu0 0.0
  %250 = vmatprep.subr.mxu0 0.0
  %251 = vmatpush1.msra.mxu0 0.0
  %252 = vmatprep.subr.mxu0 0.0
  %253 = vmatpush1.msra.mxu0 0.0
  %254 = vmatprep.subr.mxu0 0.0
  %255 = vmatpush1.msra.mxu0 0.0
  %256 = vmatprep.subr.mxu0 0.0
  %257 = vmatpush1.msra.mxu0 0.0
  %258 = vmatprep.subr.mxu0 0.0
  %259 = vmatpush1.msra.mxu0 0.0
  %260 = vmatprep.subr.mxu0 0.0
  %261 = vmatpush1.msra.mxu0 0.0
  %262 = vmatprep.subr.mxu0 0.0
  %263 = vmatpush1.msra.mxu0 0.0
  %264 = vmatprep.subr.mxu0 0.0
  %265 = vmatpush1.msra.mxu0 0.0
  %266 = vmatprep.subr.mxu0 0.0
  %267 = vmatpush1.msra.mxu0 0.0
  %268 = vmatprep.subr.mxu0 0.0
  %269 = vmatpush1.msra.mxu0 0.0
  %270 = vmatprep.subr.mxu0 0.0
  %271 = vmatpush1.msra.mxu0 0.0
  %272 = vmatprep.subr.mxu0 0.0
  %273 = vmatpush1.msra.mxu0 0.0
  %274 = vmatprep.subr.mxu0 0.0
  %275 = vmatpush1.msra.mxu0 0.0
  %276 = vmatprep.subr.mxu0 0.0
  %277 = vmatpush1.msra.mxu0 0.0
  %278 = vmatprep.subr.mxu0 0.0
  %279 = vmatpush1.msra.mxu0 0.0
  %280 = vmatprep.subr.mxu0 0.0
  %281 = vmatpush1.msra.mxu0 0.0
  %282 = vmatprep.subr.mxu0 0.0
  %283 = vmatpush1.msra.mxu0 0.0
  %284 = vmatprep.subr.mxu0 0.0
  %285 = vmatpush1.msra.mxu0 0.0
  %286 = vmatprep.subr.mxu0 0.0
  %287 = vmatpush1.msra.mxu0 0.0
  %288 = vmatprep.subr.mxu0 0.0
  %289 = vmatpush1.msra.mxu0 0.0
  %290 = vmatprep.subr.mxu0 0.0
  %291 = vmatpush1.msra.mxu0 0.0
  %292 = vmatprep.subr.mxu0 0.0
  %293 = vmatpush1.msra.mxu0 0.0
  %294 = vmatprep.subr.mxu0 0.0
  %295 = vmatpush1.msra.mxu0 0.0
  %296 = vmatprep.subr.mxu0 0.0
  %297 = vmatpush1.msra.mxu0 0.0
  %298 = vmatprep.subr.mxu0 0.0
  %299 = vmatpush1.msra.mxu0 0.0
  %300 = vmatprep.subr.mxu0 0.0
  %301 = vmatpush1.msra.mxu0 0.0
  %302 = vmatprep.subr.mxu0 0.0
  %303 = vmatpush1.msra.mxu0 0.0
  %304 = vmatprep.mubr.f32.mxu0 0.0
  %305 = vmatmul.mubr.f32.gmra.mrb[0].mxu0 %v67
  %v306 = vpop.f32.mrb[0].mxu0
  %v307 = vadd.f32 %v236, %v306
  %v308 = vpop.f32.mrb[0].mxu0
  %309 = vmatprep.mubr.f32.mxu0 0.0
  %310 = vmatmul.mubr.f32.gmra.mrb[0].mxu0 %v70
  %v311 = vpop.f32.mrb[0].mxu0
  %v312 = vadd.f32 %v236, %v311
  %v313 = vpop.f32.mrb[0].mxu0
  %314 = vdwg.mxu0
  %v316 = vsel %vm65, %v143, 0
  %v319 = vsel %vm65, %v148, 0
  %v322 = vsel %vm65, %v225, 0
  %v325 = vsel %vm65, %v230, 0
  %327 = vmatprep.subr.mxu0 0.0
  %328 = vmatpush1.xpose.msra.mxu0 %v322
  %329 = vmatprep.subr.mxu0 0.0
  %330 = vmatpush1.xpose.msra.mxu0 %v325
  %331 = vmatprep.subr.mxu0 0.0
  %332 = vmatpush1.xpose.msra.mxu0 0.0
  %333 = vmatprep.subr.mxu0 0.0
  %334 = vmatpush1.xpose.msra.mxu0 0.0
  %335 = vmatprep.subr.mxu0 0.0
  %336 = vmatpush1.xpose.msra.mxu0 0.0
  %337 = vmatprep.subr.mxu0 0.0
  %338 = vmatpush1.xpose.msra.mxu0 0.0
  %339 = vmatprep.subr.mxu0 0.0
  %340 = vmatpush1.xpose.msra.mxu0 0.0
  %341 = vmatprep.subr.mxu0 0.0
  %342 = vmatpush1.xpose.msra.mxu0 0.0
  %343 = vmatprep.subr.mxu0 0.0
  %344 = vmatpush1.xpose.msra.mxu0 0.0
  %345 = vmatprep.subr.mxu0 0.0
  %346 = vmatpush1.xpose.msra.mxu0 0.0
  %347 = vmatprep.subr.mxu0 0.0
  %348 = vmatpush1.xpose.msra.mxu0 0.0
  %349 = vmatprep.subr.mxu0 0.0
  %350 = vmatpush1.xpose.msra.mxu0 0.0
  %351 = vmatprep.subr.mxu0 0.0
  %352 = vmatpush1.xpose.msra.mxu0 0.0
  %353 = vmatprep.subr.mxu0 0.0
  %354 = vmatpush1.xpose.msra.mxu0 0.0
  %355 = vmatprep.subr.mxu0 0.0
  %356 = vmatpush1.xpose.msra.mxu0 0.0
  %357 = vmatprep.subr.mxu0 0.0
  %358 = vmatpush1.xpose.msra.mxu0 0.0
  %359 = vmatprep.subr.mxu0 0.0
  %360 = vmatpush1.xpose.msra.mxu0 0.0
  %361 = vmatprep.subr.mxu0 0.0
  %362 = vmatpush1.xpose.msra.mxu0 0.0
  %363 = vmatprep.subr.mxu0 0.0
  %364 = vmatpush1.xpose.msra.mxu0 0.0
  %365 = vmatprep.subr.mxu0 0.0
  %366 = vmatpush1.xpose.msra.mxu0 0.0
  %367 = vmatprep.subr.mxu0 0.0
  %368 = vmatpush1.xpose.msra.mxu0 0.0
  %369 = vmatprep.subr.mxu0 0.0
  %370 = vmatpush1.xpose.msra.mxu0 0.0
  %371 = vmatprep.subr.mxu0 0.0
  %372 = vmatpush1.xpose.msra.mxu0 0.0
  %373 = vmatprep.subr.mxu0 0.0
  %374 = vmatpush1.xpose.msra.mxu0 0.0
  %375 = vmatprep.subr.mxu0 0.0
  %376 = vmatpush1.xpose.msra.mxu0 0.0
  %377 = vmatprep.subr.mxu0 0.0
  %378 = vmatpush1.xpose.msra.mxu0 0.0
  %379 = vmatprep.subr.mxu0 0.0
  %380 = vmatpush1.xpose.msra.mxu0 0.0
  %381 = vmatprep.subr.mxu0 0.0
  %382 = vmatpush1.xpose.msra.mxu0 0.0
  %383 = vmatprep.subr.mxu0 0.0
  %384 = vmatpush1.xpose.msra.mxu0 0.0
  %385 = vmatprep.subr.mxu0 0.0
  %386 = vmatpush1.xpose.msra.mxu0 0.0
  %387 = vmatprep.subr.mxu0 0.0
  %388 = vmatpush1.xpose.msra.mxu0 0.0
  %389 = vmatprep.subr.mxu0 0.0
  %390 = vmatpush1.xpose.msra.mxu0 0.0
  %391 = vmatprep.mubr.f32.mxu0 0.0
  %392 = vmatmul.mubr.f32.gmra.mrb[0].mxu0 %v316
  %v393 = vpop.f32.mrb[0].mxu0
  %v394 = vadd.f32 %v21, %v393
  %v395 = vpop.f32.mrb[0].mxu0
  %396 = vmatprep.mubr.f32.mxu0 0.0
  %397 = vmatmul.mubr.f32.gmra.mrb[0].mxu0 %v319
  %v398 = vpop.f32.mrb[0].mxu0
  %v399 = vadd.f32 %v22, %v398
  %v400 = vpop.f32.mrb[0].mxu0
  %401 = vdwg.mxu0
  %vm402 = vcmask 130048
  %v403 = vsel %vm402, %v394, -inf
  %404 = vmax.xlane.f32.xlu0 %v403
  %v405 = vpop.xlane.xlu0 %404
  %v406 = vsel %vm402, %v399, -inf
  %407 = vmax.xlane.f32.xlu0 %v406
  %v408 = vpop.xlane.xlu0 %407
  %v409 = vsub.f32 %v394, %v405
  %v410 = vsub.f32 %v399, %v408
  %v411 = vmul.f32 %v409, 1.442695
  %v412 = vpow.pop %v411
  %v413 = vmul.f32 %v410, 1.442695
  %v414 = vpow.pop %v413
  %v415 = vsel %vm402, %v412, 0.0
  %416 = vadd.xlane.f32.xlu0 %v415
  %v417 = vpop.xlane.xlu0 %416
  %v418 = vsel %vm402, %v414, 0.0
  %419 = vadd.xlane.f32.xlu0 %v418
  %v420 = vpop.xlane.xlu0 %419
  %v421 = vrcp.pop %v417
  %v422 = vmul.f32 %v412, %v421
  %v423 = vrcp.pop %v420
  %v424 = vmul.f32 %v414, %v423
  %v426 = vsel %vm402, %v422, 0
  %v429 = vsel %vm402, %v424, 0
  %431 = vmatprep.subr.mxu0 0.0
  %432 = vmatpush1.msra.mxu0 %v307
  %433 = vmatprep.subr.mxu0 0.0
  %434 = vmatpush1.msra.mxu0 %v312
  %435 = vmatprep.subr.mxu0 0.0
  %436 = vmatpush1.msra.mxu0 0.0
  %437 = vmatprep.subr.mxu0 0.0
  %438 = vmatpush1.msra.mxu0 0.0
  %439 = vmatprep.subr.mxu0 0.0
  %440 = vmatpush1.msra.mxu0 0.0
  %441 = vmatprep.subr.mxu0 0.0
  %442 = vmatpush1.msra.mxu0 0.0
  %443 = vmatprep.subr.mxu0 0.0
  %444 = vmatpush1.msra.mxu0 0.0
  %445 = vmatprep.subr.mxu0 0.0
  %446 = vmatpush1.msra.mxu0 0.0
  %447 = vmatprep.subr.mxu0 0.0
  %448 = vmatpush1.msra.mxu0 0.0
  %449 = vmatprep.subr.mxu0 0.0
  %450 = vmatpush1.msra.mxu0 0.0
  %451 = vmatprep.subr.mxu0 0.0
  %452 = vmatpush1.msra.mxu0 0.0
  %453 = vmatprep.subr.mxu0 0.0
  %454 = vmatpush1.msra.mxu0 0.0
  %455 = vmatprep.subr.mxu0 0.0
  %456 = vmatpush1.msra.mxu0 0.0
  %457 = vmatprep.subr.mxu0 0.0
  %458 = vmatpush1.msra.mxu0 0.0
  %459 = vmatprep.subr.mxu0 0.0
  %460 = vmatpush1.msra.mxu0 0.0
  %461 = vmatprep.subr.mxu0 0.0
  %462 = vmatpush1.msra.mxu0 0.0
  %463 = vmatprep.subr.mxu0 0.0
  %464 = vmatpush1.msra.mxu0 0.0
  %465 = vmatprep.subr.mxu0 0.0
  %466 = vmatpush1.msra.mxu0 0.0
  %467 = vmatprep.subr.mxu0 0.0
  %468 = vmatpush1.msra.mxu0 0.0
  %469 = vmatprep.subr.mxu0 0.0
  %470 = vmatpush1.msra.mxu0 0.0
  %471 = vmatprep.subr.mxu0 0.0
  %472 = vmatpush1.msra.mxu0 0.0
  %473 = vmatprep.subr.mxu0 0.0
  %474 = vmatpush1.msra.mxu0 0.0
  %475 = vmatprep.subr.mxu0 0.0
  %476 = vmatpush1.msra.mxu0 0.0
  %477 = vmatprep.subr.mxu0 0.0
  %478 = vmatpush1.msra.mxu0 0.0
  %479 = vmatprep.subr.mxu0 0.0
  %480 = vmatpush1.msra.mxu0 0.0
  %481 = vmatprep.subr.mxu0 0.0
  %482 = vmatpush1.msra.mxu0 0.0
  %483 = vmatprep.subr.mxu0 0.0
  %484 = vmatpush1.msra.mxu0 0.0
  %485 = vmatprep.subr.mxu0 0.0
  %486 = vmatpush1.msra.mxu0 0.0
  %487 = vmatprep.subr.mxu0 0.0
  %488 = vmatpush1.msra.mxu0 0.0
  %489 = vmatprep.subr.mxu0 0.0
  %490 = vmatpush1.msra.mxu0 0.0
  %491 = vmatprep.subr.mxu0 0.0
  %492 = vmatpush1.msra.mxu0 0.0
  %493 = vmatprep.subr.mxu0 0.0
  %494 = vmatpush1.msra.mxu0 0.0
  %495 = vmatprep.mubr.f32.mxu0 0.0
  %496 = vmatmul.mubr.f32.gmra.mrb[0].mxu0 %v426
  %v497 = vpop.f32.mrb[0].mxu0
  %v498 = vadd.f32 0.0, %v497
  %v499 = vpop.f32.mrb[0].mxu0
  %500 = vmatprep.mubr.f32.mxu0 0.0
  %501 = vmatmul.mubr.f32.gmra.mrb[0].mxu0 %v429
  %v502 = vpop.f32.mrb[0].mxu0
  %v503 = vadd.f32 0.0, %v502
  %v504 = vpop.f32.mrb[0].mxu0
  %505 = vdwg.mxu0
  %v506 = vlaneseq
  %v507 = vshrl.u32 %v506, 7
  %v508 = vsub.s32 0, %v507
  %v509 = vrot.slane %v53, %v508
  %v511 = vsel %vm65, %v498, 0
  %v514 = vsel %vm65, %v503, 0
  %v517 = vsel %vm72, %v39, 0
  %519 = vmatprep.subr.mxu0 0.0
  %520 = vmatpush1.msra.mxu0 %v38
  %521 = vmatprep.subr.mxu0 0.0
  %522 = vmatpush1.msra.mxu0 %v517
  %523 = vmatprep.subr.mxu0 0.0
  %524 = vmatpush1.msra.mxu0 0.0
  %525 = vmatprep.subr.mxu0 0.0
  %526 = vmatpush1.msra.mxu0 0.0
  %527 = vmatprep.subr.mxu0 0.0
  %528 = vmatpush1.msra.mxu0 0.0
  %529 = vmatprep.subr.mxu0 0.0
  %530 = vmatpush1.msra.mxu0 0.0
  %531 = vmatprep.subr.mxu0 0.0
  %532 = vmatpush1.msra.mxu0 0.0
  %533 = vmatprep.subr.mxu0 0.0
  %534 = vmatpush1.msra.mxu0 0.0
  %535 = vmatprep.subr.mxu0 0.0
  %536 = vmatpush1.msra.mxu0 0.0
  %537 = vmatprep.subr.mxu0 0.0
  %538 = vmatpush1.msra.mxu0 0.0
  %539 = vmatprep.subr.mxu0 0.0
  %540 = vmatpush1.msra.mxu0 0.0
  %541 = vmatprep.subr.mxu0 0.0
  %542 = vmatpush1.msra.mxu0 0.0
  %543 = vmatprep.subr.mxu0 0.0
  %544 = vmatpush1.msra.mxu0 0.0
  %545 = vmatprep.subr.mxu0 0.0
  %546 = vmatpush1.msra.mxu0 0.0
  %547 = vmatprep.subr.mxu0 0.0
  %548 = vmatpush1.msra.mxu0 0.0
  %549 = vmatprep.subr.mxu0 0.0
  %550 = vmatpush1.msra.mxu0 0.0
  %551 = vmatprep.subr.mxu0 0.0
  %552 = vmatpush1.msra.mxu0 0.0
  %553 = vmatprep.subr.mxu0 0.0
  %554 = vmatpush1.msra.mxu0 0.0
  %555 = vmatprep.subr.mxu0 0.0
  %556 = vmatpush1.msra.mxu0 0.0
  %557 = vmatprep.subr.mxu0 0.0
  %558 = vmatpush1.msra.mxu0 0.0
  %559 = vmatprep.subr.mxu0 0.0
  %560 = vmatpush1.msra.mxu0 0.0
  %561 = vmatprep.subr.mxu0 0.0
  %562 = vmatpush1.msra.mxu0 0.0
  %563 = vmatprep.subr.mxu0 0.0
  %564 = vmatpush1.msra.mxu0 0.0
  %565 = vmatprep.subr.mxu0 0.0
  %566 = vmatpush1.msra.mxu0 0.0
  %567 = vmatprep.subr.mxu0 0.0
  %568 = vmatpush1.msra.mxu0 0.0
  %569 = vmatprep.subr.mxu0 0.0
  %570 = vmatpush1.msra.mxu0 0.0
  %571 = vmatprep.subr.mxu0 0.0
  %572 = vmatpush1.msra.mxu0 0.0
  %573 = vmatprep.subr.mxu0 0.0
  %574 = vmatpush1.msra.mxu0 0.0
  %575 = vmatprep.subr.mxu0 0.0
  %576 = vmatpush1.msra.mxu0 0.0
  %577 = vmatprep.subr.mxu0 0.0
  %578 = vmatpush1.msra.mxu0 0.0
  %579 = vmatprep.subr.mxu0 0.0
  %580 = vmatpush1.msra.mxu0 0.0
  %581 = vmatprep.subr.mxu0 0.0
  %582 = vmatpush1.msra.mxu0 0.0
  %583 = vmatprep.mubr.f32.mxu0 0.0
  %584 = vmatmul.mubr.f32.gmra.mrb[0].mxu0 %v511
  %v585 = vpop.f32.mrb[0].mxu0
  %v586 = vadd.f32 %v509, %v585
  %v587 = vpop.f32.mrb[0].mxu0
  %588 = vmatprep.mubr.f32.mxu0 0.0
  %589 = vmatmul.mubr.f32.gmra.mrb[0].mxu0 %v514
  %v590 = vpop.f32.mrb[0].mxu0
  %v591 = vadd.f32 %v509, %v590
  %v592 = vpop.f32.mrb[0].mxu0
  %593 = vdwg.mxu0
  %v594 = vadd.f32 %v17, %v586
  %v595 = vadd.f32 %v18, %v591
  %v596 = vsel %vm65, %v594, 0.0
  %597 = vadd.xlane.f32.xlu0 %v596
  %v598 = vpop.xlane.xlu0 %597
  %v599 = vsel %vm65, %v595, 0.0
  %600 = vadd.xlane.f32.xlu0 %v599
  %v601 = vpop.xlane.xlu0 %600
  %v602 = vrcp.pop 12.0
  %v603 = vmul.f32 %v598, %v602
  %v604 = vmul.f32 %v601, %v602
  %v605 = vsub.f32 %v594, %v603
  %v606 = vsub.f32 %v595, %v604
  %v607 = vmul.f32 %v605, %v605
  %v608 = vmul.f32 %v606, %v606
  %v609 = vsel %vm65, %v607, 0.0
  %610 = vadd.xlane.f32.xlu0 %v609
  %v611 = vpop.xlane.xlu0 %610
  %v612 = vsel %vm65, %v608, 0.0
  %613 = vadd.xlane.f32.xlu0 %v612
  %v614 = vpop.xlane.xlu0 %613
  %v615 = vmul.f32 %v611, %v602
  %v616 = vmul.f32 %v614, %v602
  %v617 = vadd.f32 %v615, 1e-05
  %v618 = vadd.f32 %v616, 1e-05
  %v619 = vrsqrt.pop %v617
  %v620 = vrsqrt.pop %v618
  %v621 = vmul.f32 %v605, %v619
  %v622 = vmul.f32 %v606, %v620
  %v623 = vlaneseq
  %v624 = vshrl.u32 %v623, 7
  %v625 = vsub.s32 0, %v624
  %v626 = vrot.slane %v54, %v625
  %v627 = vmul.f32 %v621, %v626
  %v628 = vmul.f32 %v622, %v626
  %v629 = vlaneseq
  %v630 = vshrl.u32 %v629, 7
  %v631 = vsub.s32 0, %v630
  %v632 = vrot.slane %v55, %v631
  %v633 = vadd.f32 %v627, %v632
  %v634 = vadd.f32 %v628, %v632
  %v635 = vlaneseq
  %v636 = vshrl.u32 %v635, 7
  %v637 = vsub.s32 0, %v636
  %v638 = vrot.slane %v56, %v637
  %v640 = vsel %vm65, %v633, 0
  %v643 = vsel %vm65, %v634, 0
  %v646 = vsel %vm72, %v41, 0
  %648 = vmatprep.subr.mxu0 0.0
  %649 = vmatpush1.msra.mxu0 %v40
  %650 = vmatprep.subr.mxu0 0.0
  %651 = vmatpush1.msra.mxu0 %v646
  %652 = vmatprep.subr.mxu0 0.0
  %653 = vmatpush1.msra.mxu0 0.0
  %654 = vmatprep.subr.mxu0 0.0
  %655 = vmatpush1.msra.mxu0 0.0
  %656 = vmatprep.subr.mxu0 0.0
  %657 = vmatpush1.msra.mxu0 0.0
  %658 = vmatprep.subr.mxu0 0.0
  %659 = vmatpush1.msra.mxu0 0.0
  %660 = vmatprep.subr.mxu0 0.0
  %661 = vmatpush1.msra.mxu0 0.0
  %662 = vmatprep.subr.mxu0 0.0
  %663 = vmatpush1.msra.mxu0 0.0
  %664 = vmatprep.subr.mxu0 0.0
  %665 = vmatpush1.msra.mxu0 0.0
  %666 = vmatprep.subr.mxu0 0.0
  %667 = vmatpush1.msra.mxu0 0.0
  %668 = vmatprep.subr.mxu0 0.0
  %669 = vmatpush1.msra.mxu0 0.0
  %670 = vmatprep.subr.mxu0 0.0
  %671 = vmatpush1.msra.mxu0 0.0
  %672 = vmatprep.subr.mxu0 0.0
  %673 = vmatpush1.msra.mxu0 0.0
  %674 = vmatprep.subr.mxu0 0.0
  %675 = vmatpush1.msra.mxu0 0.0
  %676 = vmatprep.subr.mxu0 0.0
  %677 = vmatpush1.msra.mxu0 0.0
  %678 = vmatprep.subr.mxu0 0.0
  %679 = vmatpush1.msra.mxu0 0.0
  %680 = vmatprep.subr.mxu0 0.0
  %681 = vmatpush1.msra.mxu0 0.0
  %682 = vmatprep.subr.mxu0 0.0
  %683 = vmatpush1.msra.mxu0 0.0
  %684 = vmatprep.subr.mxu0 0.0
  %685 = vmatpush1.msra.mxu0 0.0
  %686 = vmatprep.subr.mxu0 0.0
  %687 = vmatpush1.msra.mxu0 0.0
  %688 = vmatprep.subr.mxu0 0.0
  %689 = vmatpush1.msra.mxu0 0.0
  %690 = vmatprep.subr.mxu0 0.0
  %691 = vmatpush1.msra.mxu0 0.0
  %692 = vmatprep.subr.mxu0 0.0
  %693 = vmatpush1.msra.mxu0 0.0
  %694 = vmatprep.subr.mxu0 0.0
  %695 = vmatpush1.msra.mxu0 0.0
  %696 = vmatprep.subr.mxu0 0.0
  %697 = vmatpush1.msra.mxu0 0.0
  %698 = vmatprep.subr.mxu0 0.0
  %699 = vmatpush1.msra.mxu0 0.0
  %700 = vmatprep.subr.mxu0 0.0
  %701 = vmatpush1.msra.mxu0 0.0
  %702 = vmatprep.subr.mxu0 0.0
  %703 = vmatpush1.msra.mxu0 0.0
  %704 = vmatprep.subr.mxu0 0.0
  %705 = vmatpush1.msra.mxu0 0.0
  %706 = vmatprep.subr.mxu0 0.0
  %707 = vmatpush1.msra.mxu0 0.0
  %708 = vmatprep.subr.mxu0 0.0
  %709 = vmatpush1.msra.mxu0 0.0
  %710 = vmatprep.subr.mxu0 0.0
  %711 = vmatpush1.msra.mxu0 0.0
  %712 = vmatprep.mubr.f32.mxu0 0.0
  %713 = vmatmul.mubr.f32.gmra.mrb[0].mxu0 %v640
  %v714 = vpop.f32.mrb[0].mxu0
  %v715 = vadd.f32 %v638, %v714
  %v716 = vpop.f32.mrb[0].mxu0
  %717 = vmatprep.mubr.f32.mxu0 0.0
  %718 = vmatmul.mubr.f32.gmra.mrb[0].mxu0 %v643
  %v719 = vpop.f32.mrb[0].mxu0
  %v720 = vadd.f32 %v638, %v719
  %v721 = vpop.f32.mrb[0].mxu0
  %722 = vdwg.mxu0
  %v723 = vtanh.pop %v715
  %v724 = vtanh.pop %v720
  %v725 = vlaneseq
  %v726 = vshrl.u32 %v725, 7
  %v727 = vsub.s32 0, %v726
  %v728 = vrot.slane %v57, %v727
  %vm729 = vcmask 261120
  %v731 = vsel %vm729, %v723, 0
  %v734 = vsel %vm729, %v724, 0
  %736 = vmatprep.subr.mxu0 0.0
  %737 = vmatpush1.msra.mxu0 %v42
  %738 = vmatprep.subr.mxu0 0.0
  %739 = vmatpush1.msra.mxu0 %v43
  %740 = vmatprep.subr.mxu0 0.0
  %741 = vmatpush1.msra.mxu0 %v44
  %742 = vmatprep.subr.mxu0 0.0
  %743 = vmatpush1.msra.mxu0 %v45
  %744 = vmatprep.subr.mxu0 0.0
  %745 = vmatpush1.msra.mxu0 0.0
  %746 = vmatprep.subr.mxu0 0.0
  %747 = vmatpush1.msra.mxu0 0.0
  %748 = vmatprep.subr.mxu0 0.0
  %749 = vmatpush1.msra.mxu0 0.0
  %750 = vmatprep.subr.mxu0 0.0
  %751 = vmatpush1.msra.mxu0 0.0
  %752 = vmatprep.subr.mxu0 0.0
  %753 = vmatpush1.msra.mxu0 0.0
  %754 = vmatprep.subr.mxu0 0.0
  %755 = vmatpush1.msra.mxu0 0.0
  %756 = vmatprep.subr.mxu0 0.0
  %757 = vmatpush1.msra.mxu0 0.0
  %758 = vmatprep.subr.mxu0 0.0
  %759 = vmatpush1.msra.mxu0 0.0
  %760 = vmatprep.subr.mxu0 0.0
  %761 = vmatpush1.msra.mxu0 0.0
  %762 = vmatprep.subr.mxu0 0.0
  %763 = vmatpush1.msra.mxu0 0.0
  %764 = vmatprep.subr.mxu0 0.0
  %765 = vmatpush1.msra.mxu0 0.0
  %766 = vmatprep.subr.mxu0 0.0
  %767 = vmatpush1.msra.mxu0 0.0
  %768 = vmatprep.subr.mxu0 0.0
  %769 = vmatpush1.msra.mxu0 0.0
  %770 = vmatprep.subr.mxu0 0.0
  %771 = vmatpush1.msra.mxu0 0.0
  %772 = vmatprep.subr.mxu0 0.0
  %773 = vmatpush1.msra.mxu0 0.0
  %774 = vmatprep.subr.mxu0 0.0
  %775 = vmatpush1.msra.mxu0 0.0
  %776 = vmatprep.subr.mxu0 0.0
  %777 = vmatpush1.msra.mxu0 0.0
  %778 = vmatprep.subr.mxu0 0.0
  %779 = vmatpush1.msra.mxu0 0.0
  %780 = vmatprep.subr.mxu0 0.0
  %781 = vmatpush1.msra.mxu0 0.0
  %782 = vmatprep.subr.mxu0 0.0
  %783 = vmatpush1.msra.mxu0 0.0
  %784 = vmatprep.subr.mxu0 0.0
  %785 = vmatpush1.msra.mxu0 0.0
  %786 = vmatprep.subr.mxu0 0.0
  %787 = vmatpush1.msra.mxu0 0.0
  %788 = vmatprep.subr.mxu0 0.0
  %789 = vmatpush1.msra.mxu0 0.0
  %790 = vmatprep.subr.mxu0 0.0
  %791 = vmatpush1.msra.mxu0 0.0
  %792 = vmatprep.subr.mxu0 0.0
  %793 = vmatpush1.msra.mxu0 0.0
  %794 = vmatprep.subr.mxu0 0.0
  %795 = vmatpush1.msra.mxu0 0.0
  %796 = vmatprep.subr.mxu0 0.0
  %797 = vmatpush1.msra.mxu0 0.0
  %798 = vmatprep.subr.mxu0 0.0
  %799 = vmatpush1.msra.mxu0 0.0
  %800 = vmatprep.mubr.f32.mxu0 0.0
  %801 = vmatmul.mubr.f32.gmra.mrb[0].mxu0 %v731
  %v802 = vpop.f32.mrb[0].mxu0
  %v803 = vadd.f32 %v728, %v802
  %v804 = vpop.f32.mrb[0].mxu0
  %805 = vmatprep.mubr.f32.mxu0 0.0
  %806 = vmatmul.mubr.f32.gmra.mrb[0].mxu0 %v734
  %v807 = vpop.f32.mrb[0].mxu0
  %v808 = vadd.f32 %v728, %v807
  %v809 = vpop.f32.mrb[0].mxu0
  %810 = vdwg.mxu0
  %v811 = vtanh.pop %v803
  %v812 = vtanh.pop %v808
  %v813 = vlaneseq
  %v814 = vshrl.u32 %v813, 7
  %v815 = vsub.s32 0, %v814
  %v816 = vrot.slane %v58, %v815
  %v818 = vsel %vm729, %v811, 0
  %v821 = vsel %vm729, %v812, 0
  %823 = vmatprep.subr.mxu0 0.0
  %824 = vmatpush1.msra.mxu0 %v46
  %825 = vmatprep.subr.mxu0 0.0
  %826 = vmatpush1.msra.mxu0 %v47
  %827 = vmatprep.subr.mxu0 0.0
  %828 = vmatpush1.msra.mxu0 %v48
  %829 = vmatprep.subr.mxu0 0.0
  %830 = vmatpush1.msra.mxu0 %v49
  %831 = vmatprep.subr.mxu0 0.0
  %832 = vmatpush1.msra.mxu0 0.0
  %833 = vmatprep.subr.mxu0 0.0
  %834 = vmatpush1.msra.mxu0 0.0
  %835 = vmatprep.subr.mxu0 0.0
  %836 = vmatpush1.msra.mxu0 0.0
  %837 = vmatprep.subr.mxu0 0.0
  %838 = vmatpush1.msra.mxu0 0.0
  %839 = vmatprep.subr.mxu0 0.0
  %840 = vmatpush1.msra.mxu0 0.0
  %841 = vmatprep.subr.mxu0 0.0
  %842 = vmatpush1.msra.mxu0 0.0
  %843 = vmatprep.subr.mxu0 0.0
  %844 = vmatpush1.msra.mxu0 0.0
  %845 = vmatprep.subr.mxu0 0.0
  %846 = vmatpush1.msra.mxu0 0.0
  %847 = vmatprep.subr.mxu0 0.0
  %848 = vmatpush1.msra.mxu0 0.0
  %849 = vmatprep.subr.mxu0 0.0
  %850 = vmatpush1.msra.mxu0 0.0
  %851 = vmatprep.subr.mxu0 0.0
  %852 = vmatpush1.msra.mxu0 0.0
  %853 = vmatprep.subr.mxu0 0.0
  %854 = vmatpush1.msra.mxu0 0.0
  %855 = vmatprep.subr.mxu0 0.0
  %856 = vmatpush1.msra.mxu0 0.0
  %857 = vmatprep.subr.mxu0 0.0
  %858 = vmatpush1.msra.mxu0 0.0
  %859 = vmatprep.subr.mxu0 0.0
  %860 = vmatpush1.msra.mxu0 0.0
  %861 = vmatprep.subr.mxu0 0.0
  %862 = vmatpush1.msra.mxu0 0.0
  %863 = vmatprep.subr.mxu0 0.0
  %864 = vmatpush1.msra.mxu0 0.0
  %865 = vmatprep.subr.mxu0 0.0
  %866 = vmatpush1.msra.mxu0 0.0
  %867 = vmatprep.subr.mxu0 0.0
  %868 = vmatpush1.msra.mxu0 0.0
  %869 = vmatprep.subr.mxu0 0.0
  %870 = vmatpush1.msra.mxu0 0.0
  %871 = vmatprep.subr.mxu0 0.0
  %872 = vmatpush1.msra.mxu0 0.0
  %873 = vmatprep.subr.mxu0 0.0
  %874 = vmatpush1.msra.mxu0 0.0
  %875 = vmatprep.subr.mxu0 0.0
  %876 = vmatpush1.msra.mxu0 0.0
  %877 = vmatprep.subr.mxu0 0.0
  %878 = vmatpush1.msra.mxu0 0.0
  %879 = vmatprep.subr.mxu0 0.0
  %880 = vmatpush1.msra.mxu0 0.0
  %881 = vmatprep.subr.mxu0 0.0
  %882 = vmatpush1.msra.mxu0 0.0
  %883 = vmatprep.subr.mxu0 0.0
  %884 = vmatpush1.msra.mxu0 0.0
  %885 = vmatprep.subr.mxu0 0.0
  %886 = vmatpush1.msra.mxu0 0.0
  %887 = vmatprep.mubr.f32.mxu0 0.0
  %888 = vmatmul.mubr.f32.gmra.mrb[0].mxu0 %v818
  %v889 = vpop.f32.mrb[0].mxu0
  %v890 = vadd.f32 %v816, %v889
  %v891 = vpop.f32.mrb[0].mxu0
  %892 = vmatprep.mubr.f32.mxu0 0.0
  %893 = vmatmul.mubr.f32.gmra.mrb[0].mxu0 %v821
  %v894 = vpop.f32.mrb[0].mxu0
  %v895 = vadd.f32 %v816, %v894
  %v896 = vpop.f32.mrb[0].mxu0
  %897 = vdwg.mxu0
  %v898 = vtanh.pop %v890
  %v899 = vtanh.pop %v895
  %v900 = vadd.f32 %v633, %v898
  %v901 = vadd.f32 %v634, %v899
  %v902 = vsel %vm65, %v900, 0.0
  %903 = vadd.xlane.f32.xlu0 %v902
  %v904 = vpop.xlane.xlu0 %903
  %v905 = vsel %vm65, %v901, 0.0
  %906 = vadd.xlane.f32.xlu0 %v905
  %v907 = vpop.xlane.xlu0 %906
  %v908 = vmul.f32 %v904, %v602
  %v909 = vmul.f32 %v907, %v602
  %v910 = vsub.f32 %v900, %v908
  %v911 = vsub.f32 %v901, %v909
  %v912 = vmul.f32 %v910, %v910
  %v913 = vmul.f32 %v911, %v911
  %v914 = vsel %vm65, %v912, 0.0
  %915 = vadd.xlane.f32.xlu0 %v914
  %v916 = vpop.xlane.xlu0 %915
  %v917 = vsel %vm65, %v913, 0.0
  %918 = vadd.xlane.f32.xlu0 %v917
  %v919 = vpop.xlane.xlu0 %918
  %v920 = vmul.f32 %v916, %v602
  %v921 = vmul.f32 %v919, %v602
  %v922 = vadd.f32 %v920, 1e-05
  %v923 = vadd.f32 %v921, 1e-05
  %v924 = vrsqrt.pop %v922
  %v925 = vrsqrt.pop %v923
  %v926 = vmul.f32 %v910, %v924
  %v927 = vmul.f32 %v911, %v925
  %v928 = vlaneseq
  %v929 = vshrl.u32 %v928, 7
  %v930 = vsub.s32 0, %v929
  %v931 = vrot.slane %v59, %v930
  %v932 = vmul.f32 %v926, %v931
  %v933 = vmul.f32 %v927, %v931
  %v934 = vlaneseq
  %v935 = vshrl.u32 %v934, 7
  %v936 = vsub.s32 0, %v935
  %v937 = vrot.slane %v60, %v936
  %v938 = vadd.f32 %v932, %v937
  %v939 = vadd.f32 %v933, %v937
  %s940 = scalar_lea.vmem %s1, 160
  %v941 = vld [vmem:[%s940] sm:$0xff]
  %v942 = vld [vmem:[%s940 + $0x8] sm:$0xf]
  %v943 = vld [vmem:[%s940 + $0x10] sm:$0xff]
  %v944 = vld [vmem:[%s940 + $0x18] sm:$0xf]
  %v945 = vld [vmem:[%s940 + $0x20] sm:$0xff]
  %v946 = vld [vmem:[%s940 + $0x28] sm:$0xf]
  %v947 = vld [vmem:[%s940 + $0x30] sm:$0xff]
  %v948 = vld [vmem:[%s940 + $0x38] sm:$0xf]
  %v949 = vld [vmem:[%s940 + $0x40] sm:$0xff]
  %v950 = vld [vmem:[%s940 + $0x48] sm:$0xf]
  %v951 = vld [vmem:[%s940 + $0x50] sm:$0xff]
  %v952 = vld [vmem:[%s940 + $0x58] sm:$0xff]
  %v953 = vld [vmem:[%s940 + $0x60] sm:$0xff]
  %v954 = vld [vmem:[%s940 + $0x68] sm:$0xff]
  %v955 = vld [vmem:[%s940 + $0x70] sm:$0xff]
  %v956 = vld [vmem:[%s940 + $0x78] sm:$0xff]
  %v957 = vld [vmem:[%s940 + $0x80] sm:$0xff]
  %v958 = vld [vmem:[%s940 + $0x88] sm:$0xff]
  %v959 = vld [vmem:[%s940 + $0x90] sm:$0x1]
  %v960 = vld [vmem:[%s940 + $0x91] sm:$0x1]
  %v961 = vld [vmem:[%s940 + $0x92] sm:$0x1]
  %v962 = vld [vmem:[%s940 + $0x93] sm:$0x1]
  %v963 = vld [vmem:[%s940 + $0x94] sm:$0x1]
  %v964 = vld [vmem:[%s940 + $0x95] sm:$0x1]
  %v965 = vld [vmem:[%s940 + $0x96] sm:$0x1]
  %v966 = vld [vmem:[%s940 + $0x97] sm:$0x1]
  %v967 = vld [vmem:[%s940 + $0x98] sm:$0x1]
  %v968 = vld [vmem:[%s940 + $0x99] sm:$0x1]
  %v969 = vld [vmem:[%s940 + $0x9a] sm:$0x1]
  %v970 = vlaneseq
  %v971 = vshrl.u32 %v970, 7
  %v972 = vsub.s32 0, %v971
  %v973 = vrot.slane %v959, %v972
  %v975 = vsel %vm65, %v938, 0
  %v978 = vsel %vm65, %v939, 0
  %v981 = vsel %vm72, %v942, 0
  %983 = vmatprep.subr.mxu0 0.0
  %984 = vmatpush1.msra.mxu0 %v941
  %985 = vmatprep.subr.mxu0 0.0
  %986 = vmatpush1.msra.mxu0 %v981
  %987 = vmatprep.subr.mxu0 0.0
  %988 = vmatpush1.msra.mxu0 0.0
  %989 = vmatprep.subr.mxu0 0.0
  %990 = vmatpush1.msra.mxu0 0.0
  %991 = vmatprep.subr.mxu0 0.0
  %992 = vmatpush1.msra.mxu0 0.0
  %993 = vmatprep.subr.mxu0 0.0
  %994 = vmatpush1.msra.mxu0 0.0
  %995 = vmatprep.subr.mxu0 0.0
  %996 = vmatpush1.msra.mxu0 0.0
  %997 = vmatprep.subr.mxu0 0.0
  %998 = vmatpush1.msra.mxu0 0.0
  %999 = vmatprep.subr.mxu0 0.0
  %1000 = vmatpush1.msra.mxu0 0.0
  %1001 = vmatprep.subr.mxu0 0.0
  %1002 = vmatpush1.msra.mxu0 0.0
  %1003 = vmatprep.subr.mxu0 0.0
  %1004 = vmatpush1.msra.mxu0 0.0
  %1005 = vmatprep.subr.mxu0 0.0
  %1006 = vmatpush1.msra.mxu0 0.0
  %1007 = vmatprep.subr.mxu0 0.0
  %1008 = vmatpush1.msra.mxu0 0.0
  %1009 = vmatprep.subr.mxu0 0.0
  %1010 = vmatpush1.msra.mxu0 0.0
  %1011 = vmatprep.subr.mxu0 0.0
  %1012 = vmatpush1.msra.mxu0 0.0
  %1013 = vmatprep.subr.mxu0 0.0
  %1014 = vmatpush1.msra.mxu0 0.0
  %1015 = vmatprep.subr.mxu0 0.0
  %1016 = vmatpush1.msra.mxu0 0.0
  %1017 = vmatprep.subr.mxu0 0.0
  %1018 = vmatpush1.msra.mxu0 0.0
  %1019 = vmatprep.subr.mxu0 0.0
  %1020 = vmatpush1.msra.mxu0 0.0
  %1021 = vmatprep.subr.mxu0 0.0
  %1022 = vmatpush1.msra.mxu0 0.0
  %1023 = vmatprep.subr.mxu0 0.0
  %1024 = vmatpush1.msra.mxu0 0.0
  %1025 = vmatprep.subr.mxu0 0.0
  %1026 = vmatpush1.msra.mxu0 0.0
  %1027 = vmatprep.subr.mxu0 0.0
  %1028 = vmatpush1.msra.mxu0 0.0
  %1029 = vmatprep.subr.mxu0 0.0
  %1030 = vmatpush1.msra.mxu0 0.0
  %1031 = vmatprep.subr.mxu0 0.0
  %1032 = vmatpush1.msra.mxu0 0.0
  %1033 = vmatprep.subr.mxu0 0.0
  %1034 = vmatpush1.msra.mxu0 0.0
  %1035 = vmatprep.subr.mxu0 0.0
  %1036 = vmatpush1.msra.mxu0 0.0
  %1037 = vmatprep.subr.mxu0 0.0
  %1038 = vmatpush1.msra.mxu0 0.0
  %1039 = vmatprep.subr.mxu0 0.0
  %1040 = vmatpush1.msra.mxu0 0.0
  %1041 = vmatprep.subr.mxu0 0.0
  %1042 = vmatpush1.msra.mxu0 0.0
  %1043 = vmatprep.subr.mxu0 0.0
  %1044 = vmatpush1.msra.mxu0 0.0
  %1045 = vmatprep.subr.mxu0 0.0
  %1046 = vmatpush1.msra.mxu0 0.0
  %1047 = vmatprep.mubr.f32.mxu0 0.0
  %1048 = vmatmul.mubr.f32.gmra.mrb[0].mxu0 %v975
  %v1049 = vpop.f32.mrb[0].mxu0
  %v1050 = vadd.f32 %v973, %v1049
  %v1051 = vpop.f32.mrb[0].mxu0
  %1052 = vmatprep.mubr.f32.mxu0 0.0
  %1053 = vmatmul.mubr.f32.gmra.mrb[0].mxu0 %v978
  %v1054 = vpop.f32.mrb[0].mxu0
  %v1055 = vadd.f32 %v973, %v1054
  %v1056 = vpop.f32.mrb[0].mxu0
  %1057 = vdwg.mxu0
  %v1058 = vlaneseq
  %v1059 = vshrl.u32 %v1058, 7
  %v1060 = vsub.s32 0, %v1059
  %v1061 = vrot.slane %v960, %v1060
  %v1063 = vsel %vm72, %v944, 0
  %1065 = vmatprep.subr.mxu0 0.0
  %1066 = vmatpush1.msra.mxu0 %v943
  %1067 = vmatprep.subr.mxu0 0.0
  %1068 = vmatpush1.msra.mxu0 %v1063
  %1069 = vmatprep.subr.mxu0 0.0
  %1070 = vmatpush1.msra.mxu0 0.0
  %1071 = vmatprep.subr.mxu0 0.0
  %1072 = vmatpush1.msra.mxu0 0.0
  %1073 = vmatprep.subr.mxu0 0.0
  %1074 = vmatpush1.msra.mxu0 0.0
  %1075 = vmatprep.subr.mxu0 0.0
  %1076 = vmatpush1.msra.mxu0 0.0
  %1077 = vmatprep.subr.mxu0 0.0
  %1078 = vmatpush1.msra.mxu0 0.0
  %1079 = vmatprep.subr.mxu0 0.0
  %1080 = vmatpush1.msra.mxu0 0.0
  %1081 = vmatprep.subr.mxu0 0.0
  %1082 = vmatpush1.msra.mxu0 0.0
  %1083 = vmatprep.subr.mxu0 0.0
  %1084 = vmatpush1.msra.mxu0 0.0
  %1085 = vmatprep.subr.mxu0 0.0
  %1086 = vmatpush1.msra.mxu0 0.0
  %1087 = vmatprep.subr.mxu0 0.0
  %1088 = vmatpush1.msra.mxu0 0.0
  %1089 = vmatprep.subr.mxu0 0.0
  %1090 = vmatpush1.msra.mxu0 0.0
  %1091 = vmatprep.subr.mxu0 0.0
  %1092 = vmatpush1.msra.mxu0 0.0
  %1093 = vmatprep.subr.mxu0 0.0
  %1094 = vmatpush1.msra.mxu0 0.0
  %1095 = vmatprep.subr.mxu0 0.0
  %1096 = vmatpush1.msra.mxu0 0.0
  %1097 = vmatprep.subr.mxu0 0.0
  %1098 = vmatpush1.msra.mxu0 0.0
  %1099 = vmatprep.subr.mxu0 0.0
  %1100 = vmatpush1.msra.mxu0 0.0
  %1101 = vmatprep.subr.mxu0 0.0
  %1102 = vmatpush1.msra.mxu0 0.0
  %1103 = vmatprep.subr.mxu0 0.0
  %1104 = vmatpush1.msra.mxu0 0.0
  %1105 = vmatprep.subr.mxu0 0.0
  %1106 = vmatpush1.msra.mxu0 0.0
  %1107 = vmatprep.subr.mxu0 0.0
  %1108 = vmatpush1.msra.mxu0 0.0
  %1109 = vmatprep.subr.mxu0 0.0
  %1110 = vmatpush1.msra.mxu0 0.0
  %1111 = vmatprep.subr.mxu0 0.0
  %1112 = vmatpush1.msra.mxu0 0.0
  %1113 = vmatprep.subr.mxu0 0.0
  %1114 = vmatpush1.msra.mxu0 0.0
  %1115 = vmatprep.subr.mxu0 0.0
  %1116 = vmatpush1.msra.mxu0 0.0
  %1117 = vmatprep.subr.mxu0 0.0
  %1118 = vmatpush1.msra.mxu0 0.0
  %1119 = vmatprep.subr.mxu0 0.0
  %1120 = vmatpush1.msra.mxu0 0.0
  %1121 = vmatprep.subr.mxu0 0.0
  %1122 = vmatpush1.msra.mxu0 0.0
  %1123 = vmatprep.subr.mxu0 0.0
  %1124 = vmatpush1.msra.mxu0 0.0
  %1125 = vmatprep.subr.mxu0 0.0
  %1126 = vmatpush1.msra.mxu0 0.0
  %1127 = vmatprep.subr.mxu0 0.0
  %1128 = vmatpush1.msra.mxu0 0.0
  %1129 = vmatprep.mubr.f32.mxu0 0.0
  %1130 = vmatmul.mubr.f32.gmra.mrb[0].mxu0 %v975
  %v1131 = vpop.f32.mrb[0].mxu0
  %v1132 = vadd.f32 %v1061, %v1131
  %v1133 = vpop.f32.mrb[0].mxu0
  %1134 = vmatprep.mubr.f32.mxu0 0.0
  %1135 = vmatmul.mubr.f32.gmra.mrb[0].mxu0 %v978
  %v1136 = vpop.f32.mrb[0].mxu0
  %v1137 = vadd.f32 %v1061, %v1136
  %v1138 = vpop.f32.mrb[0].mxu0
  %1139 = vdwg.mxu0
  %v1140 = vlaneseq
  %v1141 = vshrl.u32 %v1140, 7
  %v1142 = vsub.s32 0, %v1141
  %v1143 = vrot.slane %v961, %v1142
  %v1145 = vsel %vm72, %v946, 0
  %1147 = vmatprep.subr.mxu0 0.0
  %1148 = vmatpush1.msra.mxu0 %v945
  %1149 = vmatprep.subr.mxu0 0.0
  %1150 = vmatpush1.msra.mxu0 %v1145
  %1151 = vmatprep.subr.mxu0 0.0
  %1152 = vmatpush1.msra.mxu0 0.0
  %1153 = vmatprep.subr.mxu0 0.0
  %1154 = vmatpush1.msra.mxu0 0.0
  %1155 = vmatprep.subr.mxu0 0.0
  %1156 = vmatpush1.msra.mxu0 0.0
  %1157 = vmatprep.subr.mxu0 0.0
  %1158 = vmatpush1.msra.mxu0 0.0
  %1159 = vmatprep.subr.mxu0 0.0
  %1160 = vmatpush1.msra.mxu0 0.0
  %1161 = vmatprep.subr.mxu0 0.0
  %1162 = vmatpush1.msra.mxu0 0.0
  %1163 = vmatprep.subr.mxu0 0.0
  %1164 = vmatpush1.msra.mxu0 0.0
  %1165 = vmatprep.subr.mxu0 0.0
  %1166 = vmatpush1.msra.mxu0 0.0
  %1167 = vmatprep.subr.mxu0 0.0
  %1168 = vmatpush1.msra.mxu0 0.0
  %1169 = vmatprep.subr.mxu0 0.0
  %1170 = vmatpush1.msra.mxu0 0.0
  %1171 = vmatprep.subr.mxu0 0.0
  %1172 = vmatpush1.msra.mxu0 0.0
  %1173 = vmatprep.subr.mxu0 0.0
  %1174 = vmatpush1.msra.mxu0 0.0
  %1175 = vmatprep.subr.mxu0 0.0
  %1176 = vmatpush1.msra.mxu0 0.0
  %1177 = vmatprep.subr.mxu0 0.0
  %1178 = vmatpush1.msra.mxu0 0.0
  %1179 = vmatprep.subr.mxu0 0.0
  %1180 = vmatpush1.msra.mxu0 0.0
  %1181 = vmatprep.subr.mxu0 0.0
  %1182 = vmatpush1.msra.mxu0 0.0
  %1183 = vmatprep.subr.mxu0 0.0
  %1184 = vmatpush1.msra.mxu0 0.0
  %1185 = vmatprep.subr.mxu0 0.0
  %1186 = vmatpush1.msra.mxu0 0.0
  %1187 = vmatprep.subr.mxu0 0.0
  %1188 = vmatpush1.msra.mxu0 0.0
  %1189 = vmatprep.subr.mxu0 0.0
  %1190 = vmatpush1.msra.mxu0 0.0
  %1191 = vmatprep.subr.mxu0 0.0
  %1192 = vmatpush1.msra.mxu0 0.0
  %1193 = vmatprep.subr.mxu0 0.0
  %1194 = vmatpush1.msra.mxu0 0.0
  %1195 = vmatprep.subr.mxu0 0.0
  %1196 = vmatpush1.msra.mxu0 0.0
  %1197 = vmatprep.subr.mxu0 0.0
  %1198 = vmatpush1.msra.mxu0 0.0
  %1199 = vmatprep.subr.mxu0 0.0
  %1200 = vmatpush1.msra.mxu0 0.0
  %1201 = vmatprep.subr.mxu0 0.0
  %1202 = vmatpush1.msra.mxu0 0.0
  %1203 = vmatprep.subr.mxu0 0.0
  %1204 = vmatpush1.msra.mxu0 0.0
  %1205 = vmatprep.subr.mxu0 0.0
  %1206 = vmatpush1.msra.mxu0 0.0
  %1207 = vmatprep.subr.mxu0 0.0
  %1208 = vmatpush1.msra.mxu0 0.0
  %1209 = vmatprep.subr.mxu0 0.0
  %1210 = vmatpush1.msra.mxu0 0.0
  %1211 = vmatprep.mubr.f32.mxu0 0.0
  %1212 = vmatmul.mubr.f32.gmra.mrb[0].mxu0 %v975
  %v1213 = vpop.f32.mrb[0].mxu0
  %v1214 = vadd.f32 %v1143, %v1213
  %v1215 = vpop.f32.mrb[0].mxu0
  %1216 = vmatprep.mubr.f32.mxu0 0.0
  %1217 = vmatmul.mubr.f32.gmra.mrb[0].mxu0 %v978
  %v1218 = vpop.f32.mrb[0].mxu0
  %v1219 = vadd.f32 %v1143, %v1218
  %v1220 = vpop.f32.mrb[0].mxu0
  %1221 = vdwg.mxu0
  %v1223 = vsel %vm65, %v1050, 0
  %v1226 = vsel %vm65, %v1055, 0
  %v1229 = vsel %vm65, %v1132, 0
  %v1232 = vsel %vm65, %v1137, 0
  %1234 = vmatprep.subr.mxu0 0.0
  %1235 = vmatpush1.xpose.msra.mxu0 %v1229
  %1236 = vmatprep.subr.mxu0 0.0
  %1237 = vmatpush1.xpose.msra.mxu0 %v1232
  %1238 = vmatprep.subr.mxu0 0.0
  %1239 = vmatpush1.xpose.msra.mxu0 0.0
  %1240 = vmatprep.subr.mxu0 0.0
  %1241 = vmatpush1.xpose.msra.mxu0 0.0
  %1242 = vmatprep.subr.mxu0 0.0
  %1243 = vmatpush1.xpose.msra.mxu0 0.0
  %1244 = vmatprep.subr.mxu0 0.0
  %1245 = vmatpush1.xpose.msra.mxu0 0.0
  %1246 = vmatprep.subr.mxu0 0.0
  %1247 = vmatpush1.xpose.msra.mxu0 0.0
  %1248 = vmatprep.subr.mxu0 0.0
  %1249 = vmatpush1.xpose.msra.mxu0 0.0
  %1250 = vmatprep.subr.mxu0 0.0
  %1251 = vmatpush1.xpose.msra.mxu0 0.0
  %1252 = vmatprep.subr.mxu0 0.0
  %1253 = vmatpush1.xpose.msra.mxu0 0.0
  %1254 = vmatprep.subr.mxu0 0.0
  %1255 = vmatpush1.xpose.msra.mxu0 0.0
  %1256 = vmatprep.subr.mxu0 0.0
  %1257 = vmatpush1.xpose.msra.mxu0 0.0
  %1258 = vmatprep.subr.mxu0 0.0
  %1259 = vmatpush1.xpose.msra.mxu0 0.0
  %1260 = vmatprep.subr.mxu0 0.0
  %1261 = vmatpush1.xpose.msra.mxu0 0.0
  %1262 = vmatprep.subr.mxu0 0.0
  %1263 = vmatpush1.xpose.msra.mxu0 0.0
  %1264 = vmatprep.subr.mxu0 0.0
  %1265 = vmatpush1.xpose.msra.mxu0 0.0
  %1266 = vmatprep.subr.mxu0 0.0
  %1267 = vmatpush1.xpose.msra.mxu0 0.0
  %1268 = vmatprep.subr.mxu0 0.0
  %1269 = vmatpush1.xpose.msra.mxu0 0.0
  %1270 = vmatprep.subr.mxu0 0.0
  %1271 = vmatpush1.xpose.msra.mxu0 0.0
  %1272 = vmatprep.subr.mxu0 0.0
  %1273 = vmatpush1.xpose.msra.mxu0 0.0
  %1274 = vmatprep.subr.mxu0 0.0
  %1275 = vmatpush1.xpose.msra.mxu0 0.0
  %1276 = vmatprep.subr.mxu0 0.0
  %1277 = vmatpush1.xpose.msra.mxu0 0.0
  %1278 = vmatprep.subr.mxu0 0.0
  %1279 = vmatpush1.xpose.msra.mxu0 0.0
  %1280 = vmatprep.subr.mxu0 0.0
  %1281 = vmatpush1.xpose.msra.mxu0 0.0
  %1282 = vmatprep.subr.mxu0 0.0
  %1283 = vmatpush1.xpose.msra.mxu0 0.0
  %1284 = vmatprep.subr.mxu0 0.0
  %1285 = vmatpush1.xpose.msra.mxu0 0.0
  %1286 = vmatprep.subr.mxu0 0.0
  %1287 = vmatpush1.xpose.msra.mxu0 0.0
  %1288 = vmatprep.subr.mxu0 0.0
  %1289 = vmatpush1.xpose.msra.mxu0 0.0
  %1290 = vmatprep.subr.mxu0 0.0
  %1291 = vmatpush1.xpose.msra.mxu0 0.0
  %1292 = vmatprep.subr.mxu0 0.0
  %1293 = vmatpush1.xpose.msra.mxu0 0.0
  %1294 = vmatprep.subr.mxu0 0.0
  %1295 = vmatpush1.xpose.msra.mxu0 0.0
  %1296 = vmatprep.subr.mxu0 0.0
  %1297 = vmatpush1.xpose.msra.mxu0 0.0
  %1298 = vmatprep.mubr.f32.mxu0 0.0
  %1299 = vmatmul.mubr.f32.gmra.mrb[0].mxu0 %v1223
  %v1300 = vpop.f32.mrb[0].mxu0
  %v1301 = vadd.f32 %v21, %v1300
  %v1302 = vpop.f32.mrb[0].mxu0
  %1303 = vmatprep.mubr.f32.mxu0 0.0
  %1304 = vmatmul.mubr.f32.gmra.mrb[0].mxu0 %v1226
  %v1305 = vpop.f32.mrb[0].mxu0
  %v1306 = vadd.f32 %v22, %v1305
  %v1307 = vpop.f32.mrb[0].mxu0
  %1308 = vdwg.mxu0
  %v1309 = vsel %vm402, %v1301, -inf
  %1310 = vmax.xlane.f32.xlu0 %v1309
  %v1311 = vpop.xlane.xlu0 %1310
  %v1312 = vsel %vm402, %v1306, -inf
  %1313 = vmax.xlane.f32.xlu0 %v1312
  %v1314 = vpop.xlane.xlu0 %1313
  %v1315 = vsub.f32 %v1301, %v1311
  %v1316 = vsub.f32 %v1306, %v1314
  %v1317 = vmul.f32 %v1315, 1.442695
  %v1318 = vpow.pop %v1317
  %v1319 = vmul.f32 %v1316, 1.442695
  %v1320 = vpow.pop %v1319
  %v1321 = vsel %vm402, %v1318, 0.0
  %1322 = vadd.xlane.f32.xlu0 %v1321
  %v1323 = vpop.xlane.xlu0 %1322
  %v1324 = vsel %vm402, %v1320, 0.0
  %1325 = vadd.xlane.f32.xlu0 %v1324
  %v1326 = vpop.xlane.xlu0 %1325
  %v1327 = vrcp.pop %v1323
  %v1328 = vmul.f32 %v1318, %v1327
  %v1329 = vrcp.pop %v1326
  %v1330 = vmul.f32 %v1320, %v1329
  %v1332 = vsel %vm402, %v1328, 0
  %v1335 = vsel %vm402, %v1330, 0
  %1337 = vmatprep.subr.mxu0 0.0
  %1338 = vmatpush1.msra.mxu0 %v1214
  %1339 = vmatprep.subr.mxu0 0.0
  %1340 = vmatpush1.msra.mxu0 %v1219
  %1341 = vmatprep.subr.mxu0 0.0
  %1342 = vmatpush1.msra.mxu0 0.0
  %1343 = vmatprep.subr.mxu0 0.0
  %1344 = vmatpush1.msra.mxu0 0.0
  %1345 = vmatprep.subr.mxu0 0.0
  %1346 = vmatpush1.msra.mxu0 0.0
  %1347 = vmatprep.subr.mxu0 0.0
  %1348 = vmatpush1.msra.mxu0 0.0
  %1349 = vmatprep.subr.mxu0 0.0
  %1350 = vmatpush1.msra.mxu0 0.0
  %1351 = vmatprep.subr.mxu0 0.0
  %1352 = vmatpush1.msra.mxu0 0.0
  %1353 = vmatprep.subr.mxu0 0.0
  %1354 = vmatpush1.msra.mxu0 0.0
  %1355 = vmatprep.subr.mxu0 0.0
  %1356 = vmatpush1.msra.mxu0 0.0
  %1357 = vmatprep.subr.mxu0 0.0
  %1358 = vmatpush1.msra.mxu0 0.0
  %1359 = vmatprep.subr.mxu0 0.0
  %1360 = vmatpush1.msra.mxu0 0.0
  %1361 = vmatprep.subr.mxu0 0.0
  %1362 = vmatpush1.msra.mxu0 0.0
  %1363 = vmatprep.subr.mxu0 0.0
  %1364 = vmatpush1.msra.mxu0 0.0
  %1365 = vmatprep.subr.mxu0 0.0
  %1366 = vmatpush1.msra.mxu0 0.0
  %1367 = vmatprep.subr.mxu0 0.0
  %1368 = vmatpush1.msra.mxu0 0.0
  %1369 = vmatprep.subr.mxu0 0.0
  %1370 = vmatpush1.msra.mxu0 0.0
  %1371 = vmatprep.subr.mxu0 0.0
  %1372 = vmatpush1.msra.mxu0 0.0
  %1373 = vmatprep.subr.mxu0 0.0
  %1374 = vmatpush1.msra.mxu0 0.0
  %1375 = vmatprep.subr.mxu0 0.0
  %1376 = vmatpush1.msra.mxu0 0.0
  %1377 = vmatprep.subr.mxu0 0.0
  %1378 = vmatpush1.msra.mxu0 0.0
  %1379 = vmatprep.subr.mxu0 0.0
  %1380 = vmatpush1.msra.mxu0 0.0
  %1381 = vmatprep.subr.mxu0 0.0
  %1382 = vmatpush1.msra.mxu0 0.0
  %1383 = vmatprep.subr.mxu0 0.0
  %1384 = vmatpush1.msra.mxu0 0.0
  %1385 = vmatprep.subr.mxu0 0.0
  %1386 = vmatpush1.msra.mxu0 0.0
  %1387 = vmatprep.subr.mxu0 0.0
  %1388 = vmatpush1.msra.mxu0 0.0
  %1389 = vmatprep.subr.mxu0 0.0
  %1390 = vmatpush1.msra.mxu0 0.0
  %1391 = vmatprep.subr.mxu0 0.0
  %1392 = vmatpush1.msra.mxu0 0.0
  %1393 = vmatprep.subr.mxu0 0.0
  %1394 = vmatpush1.msra.mxu0 0.0
  %1395 = vmatprep.subr.mxu0 0.0
  %1396 = vmatpush1.msra.mxu0 0.0
  %1397 = vmatprep.subr.mxu0 0.0
  %1398 = vmatpush1.msra.mxu0 0.0
  %1399 = vmatprep.subr.mxu0 0.0
  %1400 = vmatpush1.msra.mxu0 0.0
  %1401 = vmatprep.mubr.f32.mxu0 0.0
  %1402 = vmatmul.mubr.f32.gmra.mrb[0].mxu0 %v1332
  %v1403 = vpop.f32.mrb[0].mxu0
  %v1404 = vadd.f32 0.0, %v1403
  %v1405 = vpop.f32.mrb[0].mxu0
  %1406 = vmatprep.mubr.f32.mxu0 0.0
  %1407 = vmatmul.mubr.f32.gmra.mrb[0].mxu0 %v1335
  %v1408 = vpop.f32.mrb[0].mxu0
  %v1409 = vadd.f32 0.0, %v1408
  %v1410 = vpop.f32.mrb[0].mxu0
  %1411 = vdwg.mxu0
  %v1412 = vlaneseq
  %v1413 = vshrl.u32 %v1412, 7
  %v1414 = vsub.s32 0, %v1413
  %v1415 = vrot.slane %v962, %v1414
  %v1417 = vsel %vm65, %v1404, 0
  %v1420 = vsel %vm65, %v1409, 0
  %v1423 = vsel %vm72, %v948, 0
  %1425 = vmatprep.subr.mxu0 0.0
  %1426 = vmatpush1.msra.mxu0 %v947
  %1427 = vmatprep.subr.mxu0 0.0
  %1428 = vmatpush1.msra.mxu0 %v1423
  %1429 = vmatprep.subr.mxu0 0.0
  %1430 = vmatpush1.msra.mxu0 0.0
  %1431 = vmatprep.subr.mxu0 0.0
  %1432 = vmatpush1.msra.mxu0 0.0
  %1433 = vmatprep.subr.mxu0 0.0
  %1434 = vmatpush1.msra.mxu0 0.0
  %1435 = vmatprep.subr.mxu0 0.0
  %1436 = vmatpush1.msra.mxu0 0.0
  %1437 = vmatprep.subr.mxu0 0.0
  %1438 = vmatpush1.msra.mxu0 0.0
  %1439 = vmatprep.subr.mxu0 0.0
  %1440 = vmatpush1.msra.mxu0 0.0
  %1441 = vmatprep.subr.mxu0 0.0
  %1442 = vmatpush1.msra.mxu0 0.0
  %1443 = vmatprep.subr.mxu0 0.0
  %1444 = vmatpush1.msra.mxu0 0.0
  %1445 = vmatprep.subr.mxu0 0.0
  %1446 = vmatpush1.msra.mxu0 0.0
  %1447 = vmatprep.subr.mxu0 0.0
  %1448 = vmatpush1.msra.mxu0 0.0
  %1449 = vmatprep.subr.mxu0 0.0
  %1450 = vmatpush1.msra.mxu0 0.0
  %1451 = vmatprep.subr.mxu0 0.0
  %1452 = vmatpush1.msra.mxu0 0.0
  %1453 = vmatprep.subr.mxu0 0.0
  %1454 = vmatpush1.msra.mxu0 0.0
  %1455 = vmatprep.subr.mxu0 0.0
  %1456 = vmatpush1.msra.mxu0 0.0
  %1457 = vmatprep.subr.mxu0 0.0
  %1458 = vmatpush1.msra.mxu0 0.0
  %1459 = vmatprep.subr.mxu0 0.0
  %1460 = vmatpush1.msra.mxu0 0.0
  %1461 = vmatprep.subr.mxu0 0.0
  %1462 = vmatpush1.msra.mxu0 0.0
  %1463 = vmatprep.subr.mxu0 0.0
  %1464 = vmatpush1.msra.mxu0 0.0
  %1465 = vmatprep.subr.mxu0 0.0
  %1466 = vmatpush1.msra.mxu0 0.0
  %1467 = vmatprep.subr.mxu0 0.0
  %1468 = vmatpush1.msra.mxu0 0.0
  %1469 = vmatprep.subr.mxu0 0.0
  %1470 = vmatpush1.msra.mxu0 0.0
  %1471 = vmatprep.subr.mxu0 0.0
  %1472 = vmatpush1.msra.mxu0 0.0
  %1473 = vmatprep.subr.mxu0 0.0
  %1474 = vmatpush1.msra.mxu0 0.0
  %1475 = vmatprep.subr.mxu0 0.0
  %1476 = vmatpush1.msra.mxu0 0.0
  %1477 = vmatprep.subr.mxu0 0.0
  %1478 = vmatpush1.msra.mxu0 0.0
  %1479 = vmatprep.subr.mxu0 0.0
  %1480 = vmatpush1.msra.mxu0 0.0
  %1481 = vmatprep.subr.mxu0 0.0
  %1482 = vmatpush1.msra.mxu0 0.0
  %1483 = vmatprep.subr.mxu0 0.0
  %1484 = vmatpush1.msra.mxu0 0.0
  %1485 = vmatprep.subr.mxu0 0.0
  %1486 = vmatpush1.msra.mxu0 0.0
  %1487 = vmatprep.subr.mxu0 0.0
  %1488 = vmatpush1.msra.mxu0 0.0
  %1489 = vmatprep.mubr.f32.mxu0 0.0
  %1490 = vmatmul.mubr.f32.gmra.mrb[0].mxu0 %v1417
  %v1491 = vpop.f32.mrb[0].mxu0
  %v1492 = vadd.f32 %v1415, %v1491
  %v1493 = vpop.f32.mrb[0].mxu0
  %1494 = vmatprep.mubr.f32.mxu0 0.0
  %1495 = vmatmul.mubr.f32.gmra.mrb[0].mxu0 %v1420
  %v1496 = vpop.f32.mrb[0].mxu0
  %v1497 = vadd.f32 %v1415, %v1496
  %v1498 = vpop.f32.mrb[0].mxu0
  %1499 = vdwg.mxu0
  %v1500 = vadd.f32 %v938, %v1492
  %v1501 = vadd.f32 %v939, %v1497
  %v1502 = vsel %vm65, %v1500, 0.0
  %1503 = vadd.xlane.f32.xlu0 %v1502
  %v1504 = vpop.xlane.xlu0 %1503
  %v1505 = vsel %vm65, %v1501, 0.0
  %1506 = vadd.xlane.f32.xlu0 %v1505
  %v1507 = vpop.xlane.xlu0 %1506
  %v1508 = vmul.f32 %v1504, %v602
  %v1509 = vmul.f32 %v1507, %v602
  %v1510 = vsub.f32 %v1500, %v1508
  %v1511 = vsub.f32 %v1501, %v1509
  %v1512 = vmul.f32 %v1510, %v1510
  %v1513 = vmul.f32 %v1511, %v1511
  %v1514 = vsel %vm65, %v1512, 0.0
  %1515 = vadd.xlane.f32.xlu0 %v1514
  %v1516 = vpop.xlane.xlu0 %1515
  %v1517 = vsel %vm65, %v1513, 0.0
  %1518 = vadd.xlane.f32.xlu0 %v1517
  %v1519 = vpop.xlane.xlu0 %1518
  %v1520 = vmul.f32 %v1516, %v602
  %v1521 = vmul.f32 %v1519, %v602
  %v1522 = vadd.f32 %v1520, 1e-05
  %v1523 = vadd.f32 %v1521, 1e-05
  %v1524 = vrsqrt.pop %v1522
  %v1525 = vrsqrt.pop %v1523
  %v1526 = vmul.f32 %v1510, %v1524
  %v1527 = vmul.f32 %v1511, %v1525
  %v1528 = vlaneseq
  %v1529 = vshrl.u32 %v1528, 7
  %v1530 = vsub.s32 0, %v1529
  %v1531 = vrot.slane %v963, %v1530
  %v1532 = vmul.f32 %v1526, %v1531
  %v1533 = vmul.f32 %v1527, %v1531
  %v1534 = vlaneseq
  %v1535 = vshrl.u32 %v1534, 7
  %v1536 = vsub.s32 0, %v1535
  %v1537 = vrot.slane %v964, %v1536
  %v1538 = vadd.f32 %v1532, %v1537
  %v1539 = vadd.f32 %v1533, %v1537
  %v1540 = vlaneseq
  %v1541 = vshrl.u32 %v1540, 7
  %v1542 = vsub.s32 0, %v1541
  %v1543 = vrot.slane %v965, %v1542
  %v1545 = vsel %vm65, %v1538, 0
  %v1548 = vsel %vm65, %v1539, 0
  %v1551 = vsel %vm72, %v950, 0
  %1553 = vmatprep.subr.mxu0 0.0
  %1554 = vmatpush1.msra.mxu0 %v949
  %1555 = vmatprep.subr.mxu0 0.0
  %1556 = vmatpush1.msra.mxu0 %v1551
  %1557 = vmatprep.subr.mxu0 0.0
  %1558 = vmatpush1.msra.mxu0 0.0
  %1559 = vmatprep.subr.mxu0 0.0
  %1560 = vmatpush1.msra.mxu0 0.0
  %1561 = vmatprep.subr.mxu0 0.0
  %1562 = vmatpush1.msra.mxu0 0.0
  %1563 = vmatprep.subr.mxu0 0.0
  %1564 = vmatpush1.msra.mxu0 0.0
  %1565 = vmatprep.subr.mxu0 0.0
  %1566 = vmatpush1.msra.mxu0 0.0
  %1567 = vmatprep.subr.mxu0 0.0
  %1568 = vmatpush1.msra.mxu0 0.0
  %1569 = vmatprep.subr.mxu0 0.0
  %1570 = vmatpush1.msra.mxu0 0.0
  %1571 = vmatprep.subr.mxu0 0.0
  %1572 = vmatpush1.msra.mxu0 0.0
  %1573 = vmatprep.subr.mxu0 0.0
  %1574 = vmatpush1.msra.mxu0 0.0
  %1575 = vmatprep.subr.mxu0 0.0
  %1576 = vmatpush1.msra.mxu0 0.0
  %1577 = vmatprep.subr.mxu0 0.0
  %1578 = vmatpush1.msra.mxu0 0.0
  %1579 = vmatprep.subr.mxu0 0.0
  %1580 = vmatpush1.msra.mxu0 0.0
  %1581 = vmatprep.subr.mxu0 0.0
  %1582 = vmatpush1.msra.mxu0 0.0
  %1583 = vmatprep.subr.mxu0 0.0
  %1584 = vmatpush1.msra.mxu0 0.0
  %1585 = vmatprep.subr.mxu0 0.0
  %1586 = vmatpush1.msra.mxu0 0.0
  %1587 = vmatprep.subr.mxu0 0.0
  %1588 = vmatpush1.msra.mxu0 0.0
  %1589 = vmatprep.subr.mxu0 0.0
  %1590 = vmatpush1.msra.mxu0 0.0
  %1591 = vmatprep.subr.mxu0 0.0
  %1592 = vmatpush1.msra.mxu0 0.0
  %1593 = vmatprep.subr.mxu0 0.0
  %1594 = vmatpush1.msra.mxu0 0.0
  %1595 = vmatprep.subr.mxu0 0.0
  %1596 = vmatpush1.msra.mxu0 0.0
  %1597 = vmatprep.subr.mxu0 0.0
  %1598 = vmatpush1.msra.mxu0 0.0
  %1599 = vmatprep.subr.mxu0 0.0
  %1600 = vmatpush1.msra.mxu0 0.0
  %1601 = vmatprep.subr.mxu0 0.0
  %1602 = vmatpush1.msra.mxu0 0.0
  %1603 = vmatprep.subr.mxu0 0.0
  %1604 = vmatpush1.msra.mxu0 0.0
  %1605 = vmatprep.subr.mxu0 0.0
  %1606 = vmatpush1.msra.mxu0 0.0
  %1607 = vmatprep.subr.mxu0 0.0
  %1608 = vmatpush1.msra.mxu0 0.0
  %1609 = vmatprep.subr.mxu0 0.0
  %1610 = vmatpush1.msra.mxu0 0.0
  %1611 = vmatprep.subr.mxu0 0.0
  %1612 = vmatpush1.msra.mxu0 0.0
  %1613 = vmatprep.subr.mxu0 0.0
  %1614 = vmatpush1.msra.mxu0 0.0
  %1615 = vmatprep.subr.mxu0 0.0
  %1616 = vmatpush1.msra.mxu0 0.0
  %1617 = vmatprep.mubr.f32.mxu0 0.0
  %1618 = vmatmul.mubr.f32.gmra.mrb[0].mxu0 %v1545
  %v1619 = vpop.f32.mrb[0].mxu0
  %v1620 = vadd.f32 %v1543, %v1619
  %v1621 = vpop.f32.mrb[0].mxu0
  %1622 = vmatprep.mubr.f32.mxu0 0.0
  %1623 = vmatmul.mubr.f32.gmra.mrb[0].mxu0 %v1548
  %v1624 = vpop.f32.mrb[0].mxu0
  %v1625 = vadd.f32 %v1543, %v1624
  %v1626 = vpop.f32.mrb[0].mxu0
  %1627 = vdwg.mxu0
  %v1628 = vtanh.pop %v1620
  %v1629 = vtanh.pop %v1625
  %v1630 = vlaneseq
  %v1631 = vshrl.u32 %v1630, 7
  %v1632 = vsub.s32 0, %v1631
  %v1633 = vrot.slane %v966, %v1632
  %v1635 = vsel %vm729, %v1628, 0
  %v1638 = vsel %vm729, %v1629, 0
  %1640 = vmatprep.subr.mxu0 0.0
  %1641 = vmatpush1.msra.mxu0 %v951
  %1642 = vmatprep.subr.mxu0 0.0
  %1643 = vmatpush1.msra.mxu0 %v952
  %1644 = vmatprep.subr.mxu0 0.0
  %1645 = vmatpush1.msra.mxu0 %v953
  %1646 = vmatprep.subr.mxu0 0.0
  %1647 = vmatpush1.msra.mxu0 %v954
  %1648 = vmatprep.subr.mxu0 0.0
  %1649 = vmatpush1.msra.mxu0 0.0
  %1650 = vmatprep.subr.mxu0 0.0
  %1651 = vmatpush1.msra.mxu0 0.0
  %1652 = vmatprep.subr.mxu0 0.0
  %1653 = vmatpush1.msra.mxu0 0.0
  %1654 = vmatprep.subr.mxu0 0.0
  %1655 = vmatpush1.msra.mxu0 0.0
  %1656 = vmatprep.subr.mxu0 0.0
  %1657 = vmatpush1.msra.mxu0 0.0
  %1658 = vmatprep.subr.mxu0 0.0
  %1659 = vmatpush1.msra.mxu0 0.0
  %1660 = vmatprep.subr.mxu0 0.0
  %1661 = vmatpush1.msra.mxu0 0.0
  %1662 = vmatprep.subr.mxu0 0.0
  %1663 = vmatpush1.msra.mxu0 0.0
  %1664 = vmatprep.subr.mxu0 0.0
  %1665 = vmatpush1.msra.mxu0 0.0
  %1666 = vmatprep.subr.mxu0 0.0
  %1667 = vmatpush1.msra.mxu0 0.0
  %1668 = vmatprep.subr.mxu0 0.0
  %1669 = vmatpush1.msra.mxu0 0.0
  %1670 = vmatprep.subr.mxu0 0.0
  %1671 = vmatpush1.msra.mxu0 0.0
  %1672 = vmatprep.subr.mxu0 0.0
  %1673 = vmatpush1.msra.mxu0 0.0
  %1674 = vmatprep.subr.mxu0 0.0
  %1675 = vmatpush1.msra.mxu0 0.0
  %1676 = vmatprep.subr.mxu0 0.0
  %1677 = vmatpush1.msra.mxu0 0.0
  %1678 = vmatprep.subr.mxu0 0.0
  %1679 = vmatpush1.msra.mxu0 0.0
  %1680 = vmatprep.subr.mxu0 0.0
  %1681 = vmatpush1.msra.mxu0 0.0
  %1682 = vmatprep.subr.mxu0 0.0
  %1683 = vmatpush1.msra.mxu0 0.0
  %1684 = vmatprep.subr.mxu0 0.0
  %1685 = vmatpush1.msra.mxu0 0.0
  %1686 = vmatprep.subr.mxu0 0.0
  %1687 = vmatpush1.msra.mxu0 0.0
  %1688 = vmatprep.subr.mxu0 0.0
  %1689 = vmatpush1.msra.mxu0 0.0
  %1690 = vmatprep.subr.mxu0 0.0
  %1691 = vmatpush1.msra.mxu0 0.0
  %1692 = vmatprep.subr.mxu0 0.0
  %1693 = vmatpush1.msra.mxu0 0.0
  %1694 = vmatprep.subr.mxu0 0.0
  %1695 = vmatpush1.msra.mxu0 0.0
  %1696 = vmatprep.subr.mxu0 0.0
  %1697 = vmatpush1.msra.mxu0 0.0
  %1698 = vmatprep.subr.mxu0 0.0
  %1699 = vmatpush1.msra.mxu0 0.0
  %1700 = vmatprep.subr.mxu0 0.0
  %1701 = vmatpush1.msra.mxu0 0.0
  %1702 = vmatprep.subr.mxu0 0.0
  %1703 = vmatpush1.msra.mxu0 0.0
  %1704 = vmatprep.mubr.f32.mxu0 0.0
  %1705 = vmatmul.mubr.f32.gmra.mrb[0].mxu0 %v1635
  %v1706 = vpop.f32.mrb[0].mxu0
  %v1707 = vadd.f32 %v1633, %v1706
  %v1708 = vpop.f32.mrb[0].mxu0
  %1709 = vmatprep.mubr.f32.mxu0 0.0
  %1710 = vmatmul.mubr.f32.gmra.mrb[0].mxu0 %v1638
  %v1711 = vpop.f32.mrb[0].mxu0
  %v1712 = vadd.f32 %v1633, %v1711
  %v1713 = vpop.f32.mrb[0].mxu0
  %1714 = vdwg.mxu0
  %v1715 = vtanh.pop %v1707
  %v1716 = vtanh.pop %v1712
  %v1717 = vlaneseq
  %v1718 = vshrl.u32 %v1717, 7
  %v1719 = vsub.s32 0, %v1718
  %v1720 = vrot.slane %v967, %v1719
  %v1722 = vsel %vm729, %v1715, 0
  %v1725 = vsel %vm729, %v1716, 0
  %1727 = vmatprep.subr.mxu0 0.0
  %1728 = vmatpush1.msra.mxu0 %v955
  %1729 = vmatprep.subr.mxu0 0.0
  %1730 = vmatpush1.msra.mxu0 %v956
  %1731 = vmatprep.subr.mxu0 0.0
  %1732 = vmatpush1.msra.mxu0 %v957
  %1733 = vmatprep.subr.mxu0 0.0
  %1734 = vmatpush1.msra.mxu0 %v958
  %1735 = vmatprep.subr.mxu0 0.0
  %1736 = vmatpush1.msra.mxu0 0.0
  %1737 = vmatprep.subr.mxu0 0.0
  %1738 = vmatpush1.msra.mxu0 0.0
  %1739 = vmatprep.subr.mxu0 0.0
  %1740 = vmatpush1.msra.mxu0 0.0
  %1741 = vmatprep.subr.mxu0 0.0
  %1742 = vmatpush1.msra.mxu0 0.0
  %1743 = vmatprep.subr.mxu0 0.0
  %1744 = vmatpush1.msra.mxu0 0.0
  %1745 = vmatprep.subr.mxu0 0.0
  %1746 = vmatpush1.msra.mxu0 0.0
  %1747 = vmatprep.subr.mxu0 0.0
  %1748 = vmatpush1.msra.mxu0 0.0
  %1749 = vmatprep.subr.mxu0 0.0
  %1750 = vmatpush1.msra.mxu0 0.0
  %1751 = vmatprep.subr.mxu0 0.0
  %1752 = vmatpush1.msra.mxu0 0.0
  %1753 = vmatprep.subr.mxu0 0.0
  %1754 = vmatpush1.msra.mxu0 0.0
  %1755 = vmatprep.subr.mxu0 0.0
  %1756 = vmatpush1.msra.mxu0 0.0
  %1757 = vmatprep.subr.mxu0 0.0
  %1758 = vmatpush1.msra.mxu0 0.0
  %1759 = vmatprep.subr.mxu0 0.0
  %1760 = vmatpush1.msra.mxu0 0.0
  %1761 = vmatprep.subr.mxu0 0.0
  %1762 = vmatpush1.msra.mxu0 0.0
  %1763 = vmatprep.subr.mxu0 0.0
  %1764 = vmatpush1.msra.mxu0 0.0
  %1765 = vmatprep.subr.mxu0 0.0
  %1766 = vmatpush1.msra.mxu0 0.0
  %1767 = vmatprep.subr.mxu0 0.0
  %1768 = vmatpush1.msra.mxu0 0.0
  %1769 = vmatprep.subr.mxu0 0.0
  %1770 = vmatpush1.msra.mxu0 0.0
  %1771 = vmatprep.subr.mxu0 0.0
  %1772 = vmatpush1.msra.mxu0 0.0
  %1773 = vmatprep.subr.mxu0 0.0
  %1774 = vmatpush1.msra.mxu0 0.0
  %1775 = vmatprep.subr.mxu0 0.0
  %1776 = vmatpush1.msra.mxu0 0.0
  %1777 = vmatprep.subr.mxu0 0.0
  %1778 = vmatpush1.msra.mxu0 0.0
  %1779 = vmatprep.subr.mxu0 0.0
  %1780 = vmatpush1.msra.mxu0 0.0
  %1781 = vmatprep.subr.mxu0 0.0
  %1782 = vmatpush1.msra.mxu0 0.0
  %1783 = vmatprep.subr.mxu0 0.0
  %1784 = vmatpush1.msra.mxu0 0.0
  %1785 = vmatprep.subr.mxu0 0.0
  %1786 = vmatpush1.msra.mxu0 0.0
  %1787 = vmatprep.subr.mxu0 0.0
  %1788 = vmatpush1.msra.mxu0 0.0
  %1789 = vmatprep.subr.mxu0 0.0
  %1790 = vmatpush1.msra.mxu0 0.0
  %1791 = vmatprep.mubr.f32.mxu0 0.0
  %1792 = vmatmul.mubr.f32.gmra.mrb[0].mxu0 %v1722
  %v1793 = vpop.f32.mrb[0].mxu0
  %v1794 = vadd.f32 %v1720, %v1793
  %v1795 = vpop.f32.mrb[0].mxu0
  %1796 = vmatprep.mubr.f32.mxu0 0.0
  %1797 = vmatmul.mubr.f32.gmra.mrb[0].mxu0 %v1725
  %v1798 = vpop.f32.mrb[0].mxu0
  %v1799 = vadd.f32 %v1720, %v1798
  %v1800 = vpop.f32.mrb[0].mxu0
  %1801 = vdwg.mxu0
  %v1802 = vtanh.pop %v1794
  %v1803 = vtanh.pop %v1799
  %v1804 = vadd.f32 %v1538, %v1802
  %v1805 = vadd.f32 %v1539, %v1803
  %v1806 = vsel %vm65, %v1804, 0.0
  %1807 = vadd.xlane.f32.xlu0 %v1806
  %v1808 = vpop.xlane.xlu0 %1807
  %v1809 = vsel %vm65, %v1805, 0.0
  %1810 = vadd.xlane.f32.xlu0 %v1809
  %v1811 = vpop.xlane.xlu0 %1810
  %v1812 = vmul.f32 %v1808, %v602
  %v1813 = vmul.f32 %v1811, %v602
  %v1814 = vsub.f32 %v1804, %v1812
  %v1815 = vsub.f32 %v1805, %v1813
  %v1816 = vmul.f32 %v1814, %v1814
  %v1817 = vmul.f32 %v1815, %v1815
  %v1818 = vsel %vm65, %v1816, 0.0
  %1819 = vadd.xlane.f32.xlu0 %v1818
  %v1820 = vpop.xlane.xlu0 %1819
  %v1821 = vsel %vm65, %v1817, 0.0
  %1822 = vadd.xlane.f32.xlu0 %v1821
  %v1823 = vpop.xlane.xlu0 %1822
  %v1824 = vmul.f32 %v1820, %v602
  %v1825 = vmul.f32 %v1823, %v602
  %v1826 = vadd.f32 %v1824, 1e-05
  %v1827 = vadd.f32 %v1825, 1e-05
  %v1828 = vrsqrt.pop %v1826
  %v1829 = vrsqrt.pop %v1827
  %v1830 = vmul.f32 %v1814, %v1828
  %v1831 = vmul.f32 %v1815, %v1829
  %v1832 = vlaneseq
  %v1833 = vshrl.u32 %v1832, 7
  %v1834 = vsub.s32 0, %v1833
  %v1835 = vrot.slane %v968, %v1834
  %v1836 = vmul.f32 %v1830, %v1835
  %v1837 = vmul.f32 %v1831, %v1835
  %v1838 = vlaneseq
  %v1839 = vshrl.u32 %v1838, 7
  %v1840 = vsub.s32 0, %v1839
  %v1841 = vrot.slane %v969, %v1840
  %v1842 = vadd.f32 %v1836, %v1841
  %v1843 = vadd.f32 %v1837, %v1841
  %s1844 = scalar_lea.vmem %s1, 320
  %v1845 = vld [vmem:[%s1844] sm:$0xff]
  %v1846 = vld [vmem:[%s1844 + $0x8] sm:$0xf]
  %v1847 = vld [vmem:[%s1844 + $0x10] sm:$0xff]
  %v1848 = vld [vmem:[%s1844 + $0x18] sm:$0xf]
  %v1849 = vld [vmem:[%s1844 + $0x20] sm:$0xff]
  %v1850 = vld [vmem:[%s1844 + $0x28] sm:$0xf]
  %v1851 = vld [vmem:[%s1844 + $0x30] sm:$0xff]
  %v1852 = vld [vmem:[%s1844 + $0x38] sm:$0xf]
  %v1853 = vld [vmem:[%s1844 + $0x40] sm:$0xff]
  %v1854 = vld [vmem:[%s1844 + $0x48] sm:$0xf]
  %v1855 = vld [vmem:[%s1844 + $0x50] sm:$0xff]
  %v1856 = vld [vmem:[%s1844 + $0x58] sm:$0xff]
  %v1857 = vld [vmem:[%s1844 + $0x60] sm:$0xff]
  %v1858 = vld [vmem:[%s1844 + $0x68] sm:$0xff]
  %v1859 = vld [vmem:[%s1844 + $0x70] sm:$0xff]
  %v1860 = vld [vmem:[%s1844 + $0x78] sm:$0xff]
  %v1861 = vld [vmem:[%s1844 + $0x80] sm:$0xff]
  %v1862 = vld [vmem:[%s1844 + $0x88] sm:$0xff]
  %v1863 = vld [vmem:[%s1844 + $0x90] sm:$0x1]
  %v1864 = vld [vmem:[%s1844 + $0x91] sm:$0x1]
  %v1865 = vld [vmem:[%s1844 + $0x92] sm:$0x1]
  %v1866 = vld [vmem:[%s1844 + $0x93] sm:$0x1]
  %v1867 = vld [vmem:[%s1844 + $0x94] sm:$0x1]
  %v1868 = vld [vmem:[%s1844 + $0x95] sm:$0x1]
  %v1869 = vld [vmem:[%s1844 + $0x96] sm:$0x1]
  %v1870 = vld [vmem:[%s1844 + $0x97] sm:$0x1]
  %v1871 = vld [vmem:[%s1844 + $0x98] sm:$0x1]
  %v1872 = vld [vmem:[%s1844 + $0x99] sm:$0x1]
  %v1873 = vld [vmem:[%s1844 + $0x9a] sm:$0x1]
  %v1874 = vlaneseq
  %v1875 = vshrl.u32 %v1874, 7
  %v1876 = vsub.s32 0, %v1875
  %v1877 = vrot.slane %v1863, %v1876
  %v1879 = vsel %vm65, %v1842, 0
  %v1882 = vsel %vm65, %v1843, 0
  %v1885 = vsel %vm72, %v1846, 0
  %1887 = vmatprep.subr.mxu0 0.0
  %1888 = vmatpush1.msra.mxu0 %v1845
  %1889 = vmatprep.subr.mxu0 0.0
  %1890 = vmatpush1.msra.mxu0 %v1885
  %1891 = vmatprep.subr.mxu0 0.0
  %1892 = vmatpush1.msra.mxu0 0.0
  %1893 = vmatprep.subr.mxu0 0.0
  %1894 = vmatpush1.msra.mxu0 0.0
  %1895 = vmatprep.subr.mxu0 0.0
  %1896 = vmatpush1.msra.mxu0 0.0
  %1897 = vmatprep.subr.mxu0 0.0
  %1898 = vmatpush1.msra.mxu0 0.0
  %1899 = vmatprep.subr.mxu0 0.0
  %1900 = vmatpush1.msra.mxu0 0.0
  %1901 = vmatprep.subr.mxu0 0.0
  %1902 = vmatpush1.msra.mxu0 0.0
  %1903 = vmatprep.subr.mxu0 0.0
  %1904 = vmatpush1.msra.mxu0 0.0
  %1905 = vmatprep.subr.mxu0 0.0
  %1906 = vmatpush1.msra.mxu0 0.0
  %1907 = vmatprep.subr.mxu0 0.0
  %1908 = vmatpush1.msra.mxu0 0.0
  %1909 = vmatprep.subr.mxu0 0.0
  %1910 = vmatpush1.msra.mxu0 0.0
  %1911 = vmatprep.subr.mxu0 0.0
  %1912 = vmatpush1.msra.mxu0 0.0
  %1913 = vmatprep.subr.mxu0 0.0
  %1914 = vmatpush1.msra.mxu0 0.0
  %1915 = vmatprep.subr.mxu0 0.0
  %1916 = vmatpush1.msra.mxu0 0.0
  %1917 = vmatprep.subr.mxu0 0.0
  %1918 = vmatpush1.msra.mxu0 0.0
  %1919 = vmatprep.subr.mxu0 0.0
  %1920 = vmatpush1.msra.mxu0 0.0
  %1921 = vmatprep.subr.mxu0 0.0
  %1922 = vmatpush1.msra.mxu0 0.0
  %1923 = vmatprep.subr.mxu0 0.0
  %1924 = vmatpush1.msra.mxu0 0.0
  %1925 = vmatprep.subr.mxu0 0.0
  %1926 = vmatpush1.msra.mxu0 0.0
  %1927 = vmatprep.subr.mxu0 0.0
  %1928 = vmatpush1.msra.mxu0 0.0
  %1929 = vmatprep.subr.mxu0 0.0
  %1930 = vmatpush1.msra.mxu0 0.0
  %1931 = vmatprep.subr.mxu0 0.0
  %1932 = vmatpush1.msra.mxu0 0.0
  %1933 = vmatprep.subr.mxu0 0.0
  %1934 = vmatpush1.msra.mxu0 0.0
  %1935 = vmatprep.subr.mxu0 0.0
  %1936 = vmatpush1.msra.mxu0 0.0
  %1937 = vmatprep.subr.mxu0 0.0
  %1938 = vmatpush1.msra.mxu0 0.0
  %1939 = vmatprep.subr.mxu0 0.0
  %1940 = vmatpush1.msra.mxu0 0.0
  %1941 = vmatprep.subr.mxu0 0.0
  %1942 = vmatpush1.msra.mxu0 0.0
  %1943 = vmatprep.subr.mxu0 0.0
  %1944 = vmatpush1.msra.mxu0 0.0
  %1945 = vmatprep.subr.mxu0 0.0
  %1946 = vmatpush1.msra.mxu0 0.0
  %1947 = vmatprep.subr.mxu0 0.0
  %1948 = vmatpush1.msra.mxu0 0.0
  %1949 = vmatprep.subr.mxu0 0.0
  %1950 = vmatpush1.msra.mxu0 0.0
  %1951 = vmatprep.mubr.f32.mxu0 0.0
  %1952 = vmatmul.mubr.f32.gmra.mrb[0].mxu0 %v1879
  %v1953 = vpop.f32.mrb[0].mxu0
  %v1954 = vadd.f32 %v1877, %v1953
  %v1955 = vpop.f32.mrb[0].mxu0
  %1956 = vmatprep.mubr.f32.mxu0 0.0
  %1957 = vmatmul.mubr.f32.gmra.mrb[0].mxu0 %v1882
  %v1958 = vpop.f32.mrb[0].mxu0
  %v1959 = vadd.f32 %v1877, %v1958
  %v1960 = vpop.f32.mrb[0].mxu0
  %1961 = vdwg.mxu0
  %v1962 = vlaneseq
  %v1963 = vshrl.u32 %v1962, 7
  %v1964 = vsub.s32 0, %v1963
  %v1965 = vrot.slane %v1864, %v1964
  %v1967 = vsel %vm72, %v1848, 0
  %1969 = vmatprep.subr.mxu0 0.0
  %1970 = vmatpush1.msra.mxu0 %v1847
  %1971 = vmatprep.subr.mxu0 0.0
  %1972 = vmatpush1.msra.mxu0 %v1967
  %1973 = vmatprep.subr.mxu0 0.0
  %1974 = vmatpush1.msra.mxu0 0.0
  %1975 = vmatprep.subr.mxu0 0.0
  %1976 = vmatpush1.msra.mxu0 0.0
  %1977 = vmatprep.subr.mxu0 0.0
  %1978 = vmatpush1.msra.mxu0 0.0
  %1979 = vmatprep.subr.mxu0 0.0
  %1980 = vmatpush1.msra.mxu0 0.0
  %1981 = vmatprep.subr.mxu0 0.0
  %1982 = vmatpush1.msra.mxu0 0.0
  %1983 = vmatprep.subr.mxu0 0.0
  %1984 = vmatpush1.msra.mxu0 0.0
  %1985 = vmatprep.subr.mxu0 0.0
  %1986 = vmatpush1.msra.mxu0 0.0
  %1987 = vmatprep.subr.mxu0 0.0
  %1988 = vmatpush1.msra.mxu0 0.0
  %1989 = vmatprep.subr.mxu0 0.0
  %1990 = vmatpush1.msra.mxu0 0.0
  %1991 = vmatprep.subr.mxu0 0.0
  %1992 = vmatpush1.msra.mxu0 0.0
  %1993 = vmatprep.subr.mxu0 0.0
  %1994 = vmatpush1.msra.mxu0 0.0
  %1995 = vmatprep.subr.mxu0 0.0
  %1996 = vmatpush1.msra.mxu0 0.0
  %1997 = vmatprep.subr.mxu0 0.0
  %1998 = vmatpush1.msra.mxu0 0.0
  %1999 = vmatprep.subr.mxu0 0.0
  %2000 = vmatpush1.msra.mxu0 0.0
  %2001 = vmatprep.subr.mxu0 0.0
  %2002 = vmatpush1.msra.mxu0 0.0
  %2003 = vmatprep.subr.mxu0 0.0
  %2004 = vmatpush1.msra.mxu0 0.0
  %2005 = vmatprep.subr.mxu0 0.0
  %2006 = vmatpush1.msra.mxu0 0.0
  %2007 = vmatprep.subr.mxu0 0.0
  %2008 = vmatpush1.msra.mxu0 0.0
  %2009 = vmatprep.subr.mxu0 0.0
  %2010 = vmatpush1.msra.mxu0 0.0
  %2011 = vmatprep.subr.mxu0 0.0
  %2012 = vmatpush1.msra.mxu0 0.0
  %2013 = vmatprep.subr.mxu0 0.0
  %2014 = vmatpush1.msra.mxu0 0.0
  %2015 = vmatprep.subr.mxu0 0.0
  %2016 = vmatpush1.msra.mxu0 0.0
  %2017 = vmatprep.subr.mxu0 0.0
  %2018 = vmatpush1.msra.mxu0 0.0
  %2019 = vmatprep.subr.mxu0 0.0
  %2020 = vmatpush1.msra.mxu0 0.0
  %2021 = vmatprep.subr.mxu0 0.0
  %2022 = vmatpush1.msra.mxu0 0.0
  %2023 = vmatprep.subr.mxu0 0.0
  %2024 = vmatpush1.msra.mxu0 0.0
  %2025 = vmatprep.subr.mxu0 0.0
  %2026 = vmatpush1.msra.mxu0 0.0
  %2027 = vmatprep.subr.mxu0 0.0
  %2028 = vmatpush1.msra.mxu0 0.0
  %2029 = vmatprep.subr.mxu0 0.0
  %2030 = vmatpush1.msra.mxu0 0.0
  %2031 = vmatprep.subr.mxu0 0.0
  %2032 = vmatpush1.msra.mxu0 0.0
  %2033 = vmatprep.mubr.f32.mxu0 0.0
  %2034 = vmatmul.mubr.f32.gmra.mrb[0].mxu0 %v1879
  %v2035 = vpop.f32.mrb[0].mxu0
  %v2036 = vadd.f32 %v1965, %v2035
  %v2037 = vpop.f32.mrb[0].mxu0
  %2038 = vmatprep.mubr.f32.mxu0 0.0
  %2039 = vmatmul.mubr.f32.gmra.mrb[0].mxu0 %v1882
  %v2040 = vpop.f32.mrb[0].mxu0
  %v2041 = vadd.f32 %v1965, %v2040
  %v2042 = vpop.f32.mrb[0].mxu0
  %2043 = vdwg.mxu0
  %v2044 = vlaneseq
  %v2045 = vshrl.u32 %v2044, 7
  %v2046 = vsub.s32 0, %v2045
  %v2047 = vrot.slane %v1865, %v2046
  %v2049 = vsel %vm72, %v1850, 0
  %2051 = vmatprep.subr.mxu0 0.0
  %2052 = vmatpush1.msra.mxu0 %v1849
  %2053 = vmatprep.subr.mxu0 0.0
  %2054 = vmatpush1.msra.mxu0 %v2049
  %2055 = vmatprep.subr.mxu0 0.0
  %2056 = vmatpush1.msra.mxu0 0.0
  %2057 = vmatprep.subr.mxu0 0.0
  %2058 = vmatpush1.msra.mxu0 0.0
  %2059 = vmatprep.subr.mxu0 0.0
  %2060 = vmatpush1.msra.mxu0 0.0
  %2061 = vmatprep.subr.mxu0 0.0
  %2062 = vmatpush1.msra.mxu0 0.0
  %2063 = vmatprep.subr.mxu0 0.0
  %2064 = vmatpush1.msra.mxu0 0.0
  %2065 = vmatprep.subr.mxu0 0.0
  %2066 = vmatpush1.msra.mxu0 0.0
  %2067 = vmatprep.subr.mxu0 0.0
  %2068 = vmatpush1.msra.mxu0 0.0
  %2069 = vmatprep.subr.mxu0 0.0
  %2070 = vmatpush1.msra.mxu0 0.0
  %2071 = vmatprep.subr.mxu0 0.0
  %2072 = vmatpush1.msra.mxu0 0.0
  %2073 = vmatprep.subr.mxu0 0.0
  %2074 = vmatpush1.msra.mxu0 0.0
  %2075 = vmatprep.subr.mxu0 0.0
  %2076 = vmatpush1.msra.mxu0 0.0
  %2077 = vmatprep.subr.mxu0 0.0
  %2078 = vmatpush1.msra.mxu0 0.0
  %2079 = vmatprep.subr.mxu0 0.0
  %2080 = vmatpush1.msra.mxu0 0.0
  %2081 = vmatprep.subr.mxu0 0.0
  %2082 = vmatpush1.msra.mxu0 0.0
  %2083 = vmatprep.subr.mxu0 0.0
  %2084 = vmatpush1.msra.mxu0 0.0
  %2085 = vmatprep.subr.mxu0 0.0
  %2086 = vmatpush1.msra.mxu0 0.0
  %2087 = vmatprep.subr.mxu0 0.0
  %2088 = vmatpush1.msra.mxu0 0.0
  %2089 = vmatprep.subr.mxu0 0.0
  %2090 = vmatpush1.msra.mxu0 0.0
  %2091 = vmatprep.subr.mxu0 0.0
  %2092 = vmatpush1.msra.mxu0 0.0
  %2093 = vmatprep.subr.mxu0 0.0
  %2094 = vmatpush1.msra.mxu0 0.0
  %2095 = vmatprep.subr.mxu0 0.0
  %2096 = vmatpush1.msra.mxu0 0.0
  %2097 = vmatprep.subr.mxu0 0.0
  %2098 = vmatpush1.msra.mxu0 0.0
  %2099 = vmatprep.subr.mxu0 0.0
  %2100 = vmatpush1.msra.mxu0 0.0
  %2101 = vmatprep.subr.mxu0 0.0
  %2102 = vmatpush1.msra.mxu0 0.0
  %2103 = vmatprep.subr.mxu0 0.0
  %2104 = vmatpush1.msra.mxu0 0.0
  %2105 = vmatprep.subr.mxu0 0.0
  %2106 = vmatpush1.msra.mxu0 0.0
  %2107 = vmatprep.subr.mxu0 0.0
  %2108 = vmatpush1.msra.mxu0 0.0
  %2109 = vmatprep.subr.mxu0 0.0
  %2110 = vmatpush1.msra.mxu0 0.0
  %2111 = vmatprep.subr.mxu0 0.0
  %2112 = vmatpush1.msra.mxu0 0.0
  %2113 = vmatprep.subr.mxu0 0.0
  %2114 = vmatpush1.msra.mxu0 0.0
  %2115 = vmatprep.mubr.f32.mxu0 0.0
  %2116 = vmatmul.mubr.f32.gmra.mrb[0].mxu0 %v1879
  %v2117 = vpop.f32.mrb[0].mxu0
  %v2118 = vadd.f32 %v2047, %v2117
  %v2119 = vpop.f32.mrb[0].mxu0
  %2120 = vmatprep.mubr.f32.mxu0 0.0
  %2121 = vmatmul.mubr.f32.gmra.mrb[0].mxu0 %v1882
  %v2122 = vpop.f32.mrb[0].mxu0
  %v2123 = vadd.f32 %v2047, %v2122
  %v2124 = vpop.f32.mrb[0].mxu0
  %2125 = vdwg.mxu0
  %v2127 = vsel %vm65, %v1954, 0
  %v2130 = vsel %vm65, %v1959, 0
  %v2133 = vsel %vm65, %v2036, 0
  %v2136 = vsel %vm65, %v2041, 0
  %2138 = vmatprep.subr.mxu0 0.0
  %2139 = vmatpush1.xpose.msra.mxu0 %v2133
  %2140 = vmatprep.subr.mxu0 0.0
  %2141 = vmatpush1.xpose.msra.mxu0 %v2136
  %2142 = vmatprep.subr.mxu0 0.0
  %2143 = vmatpush1.xpose.msra.mxu0 0.0
  %2144 = vmatprep.subr.mxu0 0.0
  %2145 = vmatpush1.xpose.msra.mxu0 0.0
  %2146 = vmatprep.subr.mxu0 0.0
  %2147 = vmatpush1.xpose.msra.mxu0 0.0
  %2148 = vmatprep.subr.mxu0 0.0
  %2149 = vmatpush1.xpose.msra.mxu0 0.0
  %2150 = vmatprep.subr.mxu0 0.0
  %2151 = vmatpush1.xpose.msra.mxu0 0.0
  %2152 = vmatprep.subr.mxu0 0.0
  %2153 = vmatpush1.xpose.msra.mxu0 0.0
  %2154 = vmatprep.subr.mxu0 0.0
  %2155 = vmatpush1.xpose.msra.mxu0 0.0
  %2156 = vmatprep.subr.mxu0 0.0
  %2157 = vmatpush1.xpose.msra.mxu0 0.0
  %2158 = vmatprep.subr.mxu0 0.0
  %2159 = vmatpush1.xpose.msra.mxu0 0.0
  %2160 = vmatprep.subr.mxu0 0.0
  %2161 = vmatpush1.xpose.msra.mxu0 0.0
  %2162 = vmatprep.subr.mxu0 0.0
  %2163 = vmatpush1.xpose.msra.mxu0 0.0
  %2164 = vmatprep.subr.mxu0 0.0
  %2165 = vmatpush1.xpose.msra.mxu0 0.0
  %2166 = vmatprep.subr.mxu0 0.0
  %2167 = vmatpush1.xpose.msra.mxu0 0.0
  %2168 = vmatprep.subr.mxu0 0.0
  %2169 = vmatpush1.xpose.msra.mxu0 0.0
  %2170 = vmatprep.subr.mxu0 0.0
  %2171 = vmatpush1.xpose.msra.mxu0 0.0
  %2172 = vmatprep.subr.mxu0 0.0
  %2173 = vmatpush1.xpose.msra.mxu0 0.0
  %2174 = vmatprep.subr.mxu0 0.0
  %2175 = vmatpush1.xpose.msra.mxu0 0.0
  %2176 = vmatprep.subr.mxu0 0.0
  %2177 = vmatpush1.xpose.msra.mxu0 0.0
  %2178 = vmatprep.subr.mxu0 0.0
  %2179 = vmatpush1.xpose.msra.mxu0 0.0
  %2180 = vmatprep.subr.mxu0 0.0
  %2181 = vmatpush1.xpose.msra.mxu0 0.0
  %2182 = vmatprep.subr.mxu0 0.0
  %2183 = vmatpush1.xpose.msra.mxu0 0.0
  %2184 = vmatprep.subr.mxu0 0.0
  %2185 = vmatpush1.xpose.msra.mxu0 0.0
  %2186 = vmatprep.subr.mxu0 0.0
  %2187 = vmatpush1.xpose.msra.mxu0 0.0
  %2188 = vmatprep.subr.mxu0 0.0
  %2189 = vmatpush1.xpose.msra.mxu0 0.0
  %2190 = vmatprep.subr.mxu0 0.0
  %2191 = vmatpush1.xpose.msra.mxu0 0.0
  %2192 = vmatprep.subr.mxu0 0.0
  %2193 = vmatpush1.xpose.msra.mxu0 0.0
  %2194 = vmatprep.subr.mxu0 0.0
  %2195 = vmatpush1.xpose.msra.mxu0 0.0
  %2196 = vmatprep.subr.mxu0 0.0
  %2197 = vmatpush1.xpose.msra.mxu0 0.0
  %2198 = vmatprep.subr.mxu0 0.0
  %2199 = vmatpush1.xpose.msra.mxu0 0.0
  %2200 = vmatprep.subr.mxu0 0.0
  %2201 = vmatpush1.xpose.msra.mxu0 0.0
  %2202 = vmatprep.mubr.f32.mxu0 0.0
  %2203 = vmatmul.mubr.f32.gmra.mrb[0].mxu0 %v2127
  %v2204 = vpop.f32.mrb[0].mxu0
  %v2205 = vadd.f32 %v21, %v2204
  %v2206 = vpop.f32.mrb[0].mxu0
  %2207 = vmatprep.mubr.f32.mxu0 0.0
  %2208 = vmatmul.mubr.f32.gmra.mrb[0].mxu0 %v2130
  %v2209 = vpop.f32.mrb[0].mxu0
  %v2210 = vadd.f32 %v22, %v2209
  %v2211 = vpop.f32.mrb[0].mxu0
  %2212 = vdwg.mxu0
  %v2213 = vsel %vm402, %v2205, -inf
  %2214 = vmax.xlane.f32.xlu0 %v2213
  %v2215 = vpop.xlane.xlu0 %2214
  %v2216 = vsel %vm402, %v2210, -inf
  %2217 = vmax.xlane.f32.xlu0 %v2216
  %v2218 = vpop.xlane.xlu0 %2217
  %v2219 = vsub.f32 %v2205, %v2215
  %v2220 = vsub.f32 %v2210, %v2218
  %v2221 = vmul.f32 %v2219, 1.442695
  %v2222 = vpow.pop %v2221
  %v2223 = vmul.f32 %v2220, 1.442695
  %v2224 = vpow.pop %v2223
  %v2225 = vsel %vm402, %v2222, 0.0
  %2226 = vadd.xlane.f32.xlu0 %v2225
  %v2227 = vpop.xlane.xlu0 %2226
  %v2228 = vsel %vm402, %v2224, 0.0
  %2229 = vadd.xlane.f32.xlu0 %v2228
  %v2230 = vpop.xlane.xlu0 %2229
  %v2231 = vrcp.pop %v2227
  %v2232 = vmul.f32 %v2222, %v2231
  %v2233 = vrcp.pop %v2230
  %v2234 = vmul.f32 %v2224, %v2233
  %v2236 = vsel %vm402, %v2232, 0
  %v2239 = vsel %vm402, %v2234, 0
  %2241 = vmatprep.subr.mxu0 0.0
  %2242 = vmatpush1.msra.mxu0 %v2118
  %2243 = vmatprep.subr.mxu0 0.0
  %2244 = vmatpush1.msra.mxu0 %v2123
  %2245 = vmatprep.subr.mxu0 0.0
  %2246 = vmatpush1.msra.mxu0 0.0
  %2247 = vmatprep.subr.mxu0 0.0
  %2248 = vmatpush1.msra.mxu0 0.0
  %2249 = vmatprep.subr.mxu0 0.0
  %2250 = vmatpush1.msra.mxu0 0.0
  %2251 = vmatprep.subr.mxu0 0.0
  %2252 = vmatpush1.msra.mxu0 0.0
  %2253 = vmatprep.subr.mxu0 0.0
  %2254 = vmatpush1.msra.mxu0 0.0
  %2255 = vmatprep.subr.mxu0 0.0
  %2256 = vmatpush1.msra.mxu0 0.0
  %2257 = vmatprep.subr.mxu0 0.0
  %2258 = vmatpush1.msra.mxu0 0.0
  %2259 = vmatprep.subr.mxu0 0.0
  %2260 = vmatpush1.msra.mxu0 0.0
  %2261 = vmatprep.subr.mxu0 0.0
  %2262 = vmatpush1.msra.mxu0 0.0
  %2263 = vmatprep.subr.mxu0 0.0
  %2264 = vmatpush1.msra.mxu0 0.0
  %2265 = vmatprep.subr.mxu0 0.0
  %2266 = vmatpush1.msra.mxu0 0.0
  %2267 = vmatprep.subr.mxu0 0.0
  %2268 = vmatpush1.msra.mxu0 0.0
  %2269 = vmatprep.subr.mxu0 0.0
  %2270 = vmatpush1.msra.mxu0 0.0
  %2271 = vmatprep.subr.mxu0 0.0
  %2272 = vmatpush1.msra.mxu0 0.0
  %2273 = vmatprep.subr.mxu0 0.0
  %2274 = vmatpush1.msra.mxu0 0.0
  %2275 = vmatprep.subr.mxu0 0.0
  %2276 = vmatpush1.msra.mxu0 0.0
  %2277 = vmatprep.subr.mxu0 0.0
  %2278 = vmatpush1.msra.mxu0 0.0
  %2279 = vmatprep.subr.mxu0 0.0
  %2280 = vmatpush1.msra.mxu0 0.0
  %2281 = vmatprep.subr.mxu0 0.0
  %2282 = vmatpush1.msra.mxu0 0.0
  %2283 = vmatprep.subr.mxu0 0.0
  %2284 = vmatpush1.msra.mxu0 0.0
  %2285 = vmatprep.subr.mxu0 0.0
  %2286 = vmatpush1.msra.mxu0 0.0
  %2287 = vmatprep.subr.mxu0 0.0
  %2288 = vmatpush1.msra.mxu0 0.0
  %2289 = vmatprep.subr.mxu0 0.0
  %2290 = vmatpush1.msra.mxu0 0.0
  %2291 = vmatprep.subr.mxu0 0.0
  %2292 = vmatpush1.msra.mxu0 0.0
  %2293 = vmatprep.subr.mxu0 0.0
  %2294 = vmatpush1.msra.mxu0 0.0
  %2295 = vmatprep.subr.mxu0 0.0
  %2296 = vmatpush1.msra.mxu0 0.0
  %2297 = vmatprep.subr.mxu0 0.0
  %2298 = vmatpush1.msra.mxu0 0.0
  %2299 = vmatprep.subr.mxu0 0.0
  %2300 = vmatpush1.msra.mxu0 0.0
  %2301 = vmatprep.subr.mxu0 0.0
  %2302 = vmatpush1.msra.mxu0 0.0
  %2303 = vmatprep.subr.mxu0 0.0
  %2304 = vmatpush1.msra.mxu0 0.0
  %2305 = vmatprep.mubr.f32.mxu0 0.0
  %2306 = vmatmul.mubr.f32.gmra.mrb[0].mxu0 %v2236
  %v2307 = vpop.f32.mrb[0].mxu0
  %v2308 = vadd.f32 0.0, %v2307
  %v2309 = vpop.f32.mrb[0].mxu0
  %2310 = vmatprep.mubr.f32.mxu0 0.0
  %2311 = vmatmul.mubr.f32.gmra.mrb[0].mxu0 %v2239
  %v2312 = vpop.f32.mrb[0].mxu0
  %v2313 = vadd.f32 0.0, %v2312
  %v2314 = vpop.f32.mrb[0].mxu0
  %2315 = vdwg.mxu0
  %v2316 = vlaneseq
  %v2317 = vshrl.u32 %v2316, 7
  %v2318 = vsub.s32 0, %v2317
  %v2319 = vrot.slane %v1866, %v2318
  %v2321 = vsel %vm65, %v2308, 0
  %v2324 = vsel %vm65, %v2313, 0
  %v2327 = vsel %vm72, %v1852, 0
  %2329 = vmatprep.subr.mxu0 0.0
  %2330 = vmatpush1.msra.mxu0 %v1851
  %2331 = vmatprep.subr.mxu0 0.0
  %2332 = vmatpush1.msra.mxu0 %v2327
  %2333 = vmatprep.subr.mxu0 0.0
  %2334 = vmatpush1.msra.mxu0 0.0
  %2335 = vmatprep.subr.mxu0 0.0
  %2336 = vmatpush1.msra.mxu0 0.0
  %2337 = vmatprep.subr.mxu0 0.0
  %2338 = vmatpush1.msra.mxu0 0.0
  %2339 = vmatprep.subr.mxu0 0.0
  %2340 = vmatpush1.msra.mxu0 0.0
  %2341 = vmatprep.subr.mxu0 0.0
  %2342 = vmatpush1.msra.mxu0 0.0
  %2343 = vmatprep.subr.mxu0 0.0
  %2344 = vmatpush1.msra.mxu0 0.0
  %2345 = vmatprep.subr.mxu0 0.0
  %2346 = vmatpush1.msra.mxu0 0.0
  %2347 = vmatprep.subr.mxu0 0.0
  %2348 = vmatpush1.msra.mxu0 0.0
  %2349 = vmatprep.subr.mxu0 0.0
  %2350 = vmatpush1.msra.mxu0 0.0
  %2351 = vmatprep.subr.mxu0 0.0
  %2352 = vmatpush1.msra.mxu0 0.0
  %2353 = vmatprep.subr.mxu0 0.0
  %2354 = vmatpush1.msra.mxu0 0.0
  %2355 = vmatprep.subr.mxu0 0.0
  %2356 = vmatpush1.msra.mxu0 0.0
  %2357 = vmatprep.subr.mxu0 0.0
  %2358 = vmatpush1.msra.mxu0 0.0
  %2359 = vmatprep.subr.mxu0 0.0
  %2360 = vmatpush1.msra.mxu0 0.0
  %2361 = vmatprep.subr.mxu0 0.0
  %2362 = vmatpush1.msra.mxu0 0.0
  %2363 = vmatprep.subr.mxu0 0.0
  %2364 = vmatpush1.msra.mxu0 0.0
  %2365 = vmatprep.subr.mxu0 0.0
  %2366 = vmatpush1.msra.mxu0 0.0
  %2367 = vmatprep.subr.mxu0 0.0
  %2368 = vmatpush1.msra.mxu0 0.0
  %2369 = vmatprep.subr.mxu0 0.0
  %2370 = vmatpush1.msra.mxu0 0.0
  %2371 = vmatprep.subr.mxu0 0.0
  %2372 = vmatpush1.msra.mxu0 0.0
  %2373 = vmatprep.subr.mxu0 0.0
  %2374 = vmatpush1.msra.mxu0 0.0
  %2375 = vmatprep.subr.mxu0 0.0
  %2376 = vmatpush1.msra.mxu0 0.0
  %2377 = vmatprep.subr.mxu0 0.0
  %2378 = vmatpush1.msra.mxu0 0.0
  %2379 = vmatprep.subr.mxu0 0.0
  %2380 = vmatpush1.msra.mxu0 0.0
  %2381 = vmatprep.subr.mxu0 0.0
  %2382 = vmatpush1.msra.mxu0 0.0
  %2383 = vmatprep.subr.mxu0 0.0
  %2384 = vmatpush1.msra.mxu0 0.0
  %2385 = vmatprep.subr.mxu0 0.0
  %2386 = vmatpush1.msra.mxu0 0.0
  %2387 = vmatprep.subr.mxu0 0.0
  %2388 = vmatpush1.msra.mxu0 0.0
  %2389 = vmatprep.subr.mxu0 0.0
  %2390 = vmatpush1.msra.mxu0 0.0
  %2391 = vmatprep.subr.mxu0 0.0
  %2392 = vmatpush1.msra.mxu0 0.0
  %2393 = vmatprep.mubr.f32.mxu0 0.0
  %2394 = vmatmul.mubr.f32.gmra.mrb[0].mxu0 %v2321
  %v2395 = vpop.f32.mrb[0].mxu0
  %v2396 = vadd.f32 %v2319, %v2395
  %v2397 = vpop.f32.mrb[0].mxu0
  %2398 = vmatprep.mubr.f32.mxu0 0.0
  %2399 = vmatmul.mubr.f32.gmra.mrb[0].mxu0 %v2324
  %v2400 = vpop.f32.mrb[0].mxu0
  %v2401 = vadd.f32 %v2319, %v2400
  %v2402 = vpop.f32.mrb[0].mxu0
  %2403 = vdwg.mxu0
  %v2404 = vadd.f32 %v1842, %v2396
  %v2405 = vadd.f32 %v1843, %v2401
  %v2406 = vsel %vm65, %v2404, 0.0
  %2407 = vadd.xlane.f32.xlu0 %v2406
  %v2408 = vpop.xlane.xlu0 %2407
  %v2409 = vsel %vm65, %v2405, 0.0
  %2410 = vadd.xlane.f32.xlu0 %v2409
  %v2411 = vpop.xlane.xlu0 %2410
  %v2412 = vmul.f32 %v2408, %v602
  %v2413 = vmul.f32 %v2411, %v602
  %v2414 = vsub.f32 %v2404, %v2412
  %v2415 = vsub.f32 %v2405, %v2413
  %v2416 = vmul.f32 %v2414, %v2414
  %v2417 = vmul.f32 %v2415, %v2415
  %v2418 = vsel %vm65, %v2416, 0.0
  %2419 = vadd.xlane.f32.xlu0 %v2418
  %v2420 = vpop.xlane.xlu0 %2419
  %v2421 = vsel %vm65, %v2417, 0.0
  %2422 = vadd.xlane.f32.xlu0 %v2421
  %v2423 = vpop.xlane.xlu0 %2422
  %v2424 = vmul.f32 %v2420, %v602
  %v2425 = vmul.f32 %v2423, %v602
  %v2426 = vadd.f32 %v2424, 1e-05
  %v2427 = vadd.f32 %v2425, 1e-05
  %v2428 = vrsqrt.pop %v2426
  %v2429 = vrsqrt.pop %v2427
  %v2430 = vmul.f32 %v2414, %v2428
  %v2431 = vmul.f32 %v2415, %v2429
  %v2432 = vlaneseq
  %v2433 = vshrl.u32 %v2432, 7
  %v2434 = vsub.s32 0, %v2433
  %v2435 = vrot.slane %v1867, %v2434
  %v2436 = vmul.f32 %v2430, %v2435
  %v2437 = vmul.f32 %v2431, %v2435
  %v2438 = vlaneseq
  %v2439 = vshrl.u32 %v2438, 7
  %v2440 = vsub.s32 0, %v2439
  %v2441 = vrot.slane %v1868, %v2440
  %v2442 = vadd.f32 %v2436, %v2441
  %v2443 = vadd.f32 %v2437, %v2441
  %v2444 = vlaneseq
  %v2445 = vshrl.u32 %v2444, 7
  %v2446 = vsub.s32 0, %v2445
  %v2447 = vrot.slane %v1869, %v2446
  %v2449 = vsel %vm65, %v2442, 0
  %v2452 = vsel %vm65, %v2443, 0
  %v2455 = vsel %vm72, %v1854, 0
  %2457 = vmatprep.subr.mxu0 0.0
  %2458 = vmatpush1.msra.mxu0 %v1853
  %2459 = vmatprep.subr.mxu0 0.0
  %2460 = vmatpush1.msra.mxu0 %v2455
  %2461 = vmatprep.subr.mxu0 0.0
  %2462 = vmatpush1.msra.mxu0 0.0
  %2463 = vmatprep.subr.mxu0 0.0
  %2464 = vmatpush1.msra.mxu0 0.0
  %2465 = vmatprep.subr.mxu0 0.0
  %2466 = vmatpush1.msra.mxu0 0.0
  %2467 = vmatprep.subr.mxu0 0.0
  %2468 = vmatpush1.msra.mxu0 0.0
  %2469 = vmatprep.subr.mxu0 0.0
  %2470 = vmatpush1.msra.mxu0 0.0
  %2471 = vmatprep.subr.mxu0 0.0
  %2472 = vmatpush1.msra.mxu0 0.0
  %2473 = vmatprep.subr.mxu0 0.0
  %2474 = vmatpush1.msra.mxu0 0.0
  %2475 = vmatprep.subr.mxu0 0.0
  %2476 = vmatpush1.msra.mxu0 0.0
  %2477 = vmatprep.subr.mxu0 0.0
  %2478 = vmatpush1.msra.mxu0 0.0
  %2479 = vmatprep.subr.mxu0 0.0
  %2480 = vmatpush1.msra.mxu0 0.0
  %2481 = vmatprep.subr.mxu0 0.0
  %2482 = vmatpush1.msra.mxu0 0.0
  %2483 = vmatprep.subr.mxu0 0.0
  %2484 = vmatpush1.msra.mxu0 0.0
  %2485 = vmatprep.subr.mxu0 0.0
  %2486 = vmatpush1.msra.mxu0 0.0
  %2487 = vmatprep.subr.mxu0 0.0
  %2488 = vmatpush1.msra.mxu0 0.0
  %2489 = vmatprep.subr.mxu0 0.0
  %2490 = vmatpush1.msra.mxu0 0.0
  %2491 = vmatprep.subr.mxu0 0.0
  %2492 = vmatpush1.msra.mxu0 0.0
  %2493 = vmatprep.subr.mxu0 0.0
  %2494 = vmatpush1.msra.mxu0 0.0
  %2495 = vmatprep.subr.mxu0 0.0
  %2496 = vmatpush1.msra.mxu0 0.0
  %2497 = vmatprep.subr.mxu0 0.0
  %2498 = vmatpush1.msra.mxu0 0.0
  %2499 = vmatprep.subr.mxu0 0.0
  %2500 = vmatpush1.msra.mxu0 0.0
  %2501 = vmatprep.subr.mxu0 0.0
  %2502 = vmatpush1.msra.mxu0 0.0
  %2503 = vmatprep.subr.mxu0 0.0
  %2504 = vmatpush1.msra.mxu0 0.0
  %2505 = vmatprep.subr.mxu0 0.0
  %2506 = vmatpush1.msra.mxu0 0.0
  %2507 = vmatprep.subr.mxu0 0.0
  %2508 = vmatpush1.msra.mxu0 0.0
  %2509 = vmatprep.subr.mxu0 0.0
  %2510 = vmatpush1.msra.mxu0 0.0
  %2511 = vmatprep.subr.mxu0 0.0
  %2512 = vmatpush1.msra.mxu0 0.0
  %2513 = vmatprep.subr.mxu0 0.0
  %2514 = vmatpush1.msra.mxu0 0.0
  %2515 = vmatprep.subr.mxu0 0.0
  %2516 = vmatpush1.msra.mxu0 0.0
  %2517 = vmatprep.subr.mxu0 0.0
  %2518 = vmatpush1.msra.mxu0 0.0
  %2519 = vmatprep.subr.mxu0 0.0
  %2520 = vmatpush1.msra.mxu0 0.0
  %2521 = vmatprep.mubr.f32.mxu0 0.0
  %2522 = vmatmul.mubr.f32.gmra.mrb[0].mxu0 %v2449
  %v2523 = vpop.f32.mrb[0].mxu0
  %v2524 = vadd.f32 %v2447, %v2523
  %v2525 = vpop.f32.mrb[0].mxu0
  %2526 = vmatprep.mubr.f32.mxu0 0.0
  %2527 = vmatmul.mubr.f32.gmra.mrb[0].mxu0 %v2452
  %v2528 = vpop.f32.mrb[0].mxu0
  %v2529 = vadd.f32 %v2447, %v2528
  %v2530 = vpop.f32.mrb[0].mxu0
  %2531 = vdwg.mxu0
  %v2532 = vtanh.pop %v2524
  %v2533 = vtanh.pop %v2529
  %v2534 = vlaneseq
  %v2535 = vshrl.u32 %v2534, 7
  %v2536 = vsub.s32 0, %v2535
  %v2537 = vrot.slane %v1870, %v2536
  %v2539 = vsel %vm729, %v2532, 0
  %v2542 = vsel %vm729, %v2533, 0
  %2544 = vmatprep.subr.mxu0 0.0
  %2545 = vmatpush1.msra.mxu0 %v1855
  %2546 = vmatprep.subr.mxu0 0.0
  %2547 = vmatpush1.msra.mxu0 %v1856
  %2548 = vmatprep.subr.mxu0 0.0
  %2549 = vmatpush1.msra.mxu0 %v1857
  %2550 = vmatprep.subr.mxu0 0.0
  %2551 = vmatpush1.msra.mxu0 %v1858
  %2552 = vmatprep.subr.mxu0 0.0
  %2553 = vmatpush1.msra.mxu0 0.0
  %2554 = vmatprep.subr.mxu0 0.0
  %2555 = vmatpush1.msra.mxu0 0.0
  %2556 = vmatprep.subr.mxu0 0.0
  %2557 = vmatpush1.msra.mxu0 0.0
  %2558 = vmatprep.subr.mxu0 0.0
  %2559 = vmatpush1.msra.mxu0 0.0
  %2560 = vmatprep.subr.mxu0 0.0
  %2561 = vmatpush1.msra.mxu0 0.0
  %2562 = vmatprep.subr.mxu0 0.0
  %2563 = vmatpush1.msra.mxu0 0.0
  %2564 = vmatprep.subr.mxu0 0.0
  %2565 = vmatpush1.msra.mxu0 0.0
  %2566 = vmatprep.subr.mxu0 0.0
  %2567 = vmatpush1.msra.mxu0 0.0
  %2568 = vmatprep.subr.mxu0 0.0
  %2569 = vmatpush1.msra.mxu0 0.0
  %2570 = vmatprep.subr.mxu0 0.0
  %2571 = vmatpush1.msra.mxu0 0.0
  %2572 = vmatprep.subr.mxu0 0.0
  %2573 = vmatpush1.msra.mxu0 0.0
  %2574 = vmatprep.subr.mxu0 0.0
  %2575 = vmatpush1.msra.mxu0 0.0
  %2576 = vmatprep.subr.mxu0 0.0
  %2577 = vmatpush1.msra.mxu0 0.0
  %2578 = vmatprep.subr.mxu0 0.0
  %2579 = vmatpush1.msra.mxu0 0.0
  %2580 = vmatprep.subr.mxu0 0.0
  %2581 = vmatpush1.msra.mxu0 0.0
  %2582 = vmatprep.subr.mxu0 0.0
  %2583 = vmatpush1.msra.mxu0 0.0
  %2584 = vmatprep.subr.mxu0 0.0
  %2585 = vmatpush1.msra.mxu0 0.0
  %2586 = vmatprep.subr.mxu0 0.0
  %2587 = vmatpush1.msra.mxu0 0.0
  %2588 = vmatprep.subr.mxu0 0.0
  %2589 = vmatpush1.msra.mxu0 0.0
  %2590 = vmatprep.subr.mxu0 0.0
  %2591 = vmatpush1.msra.mxu0 0.0
  %2592 = vmatprep.subr.mxu0 0.0
  %2593 = vmatpush1.msra.mxu0 0.0
  %2594 = vmatprep.subr.mxu0 0.0
  %2595 = vmatpush1.msra.mxu0 0.0
  %2596 = vmatprep.subr.mxu0 0.0
  %2597 = vmatpush1.msra.mxu0 0.0
  %2598 = vmatprep.subr.mxu0 0.0
  %2599 = vmatpush1.msra.mxu0 0.0
  %2600 = vmatprep.subr.mxu0 0.0
  %2601 = vmatpush1.msra.mxu0 0.0
  %2602 = vmatprep.subr.mxu0 0.0
  %2603 = vmatpush1.msra.mxu0 0.0
  %2604 = vmatprep.subr.mxu0 0.0
  %2605 = vmatpush1.msra.mxu0 0.0
  %2606 = vmatprep.subr.mxu0 0.0
  %2607 = vmatpush1.msra.mxu0 0.0
  %2608 = vmatprep.mubr.f32.mxu0 0.0
  %2609 = vmatmul.mubr.f32.gmra.mrb[0].mxu0 %v2539
  %v2610 = vpop.f32.mrb[0].mxu0
  %v2611 = vadd.f32 %v2537, %v2610
  %v2612 = vpop.f32.mrb[0].mxu0
  %2613 = vmatprep.mubr.f32.mxu0 0.0
  %2614 = vmatmul.mubr.f32.gmra.mrb[0].mxu0 %v2542
  %v2615 = vpop.f32.mrb[0].mxu0
  %v2616 = vadd.f32 %v2537, %v2615
  %v2617 = vpop.f32.mrb[0].mxu0
  %2618 = vdwg.mxu0
  %v2619 = vtanh.pop %v2611
  %v2620 = vtanh.pop %v2616
  %v2621 = vlaneseq
  %v2622 = vshrl.u32 %v2621, 7
  %v2623 = vsub.s32 0, %v2622
  %v2624 = vrot.slane %v1871, %v2623
  %v2626 = vsel %vm729, %v2619, 0
  %v2629 = vsel %vm729, %v2620, 0
  %2631 = vmatprep.subr.mxu0 0.0
  %2632 = vmatpush1.msra.mxu0 %v1859
  %2633 = vmatprep.subr.mxu0 0.0
  %2634 = vmatpush1.msra.mxu0 %v1860
  %2635 = vmatprep.subr.mxu0 0.0
  %2636 = vmatpush1.msra.mxu0 %v1861
  %2637 = vmatprep.subr.mxu0 0.0
  %2638 = vmatpush1.msra.mxu0 %v1862
  %2639 = vmatprep.subr.mxu0 0.0
  %2640 = vmatpush1.msra.mxu0 0.0
  %2641 = vmatprep.subr.mxu0 0.0
  %2642 = vmatpush1.msra.mxu0 0.0
  %2643 = vmatprep.subr.mxu0 0.0
  %2644 = vmatpush1.msra.mxu0 0.0
  %2645 = vmatprep.subr.mxu0 0.0
  %2646 = vmatpush1.msra.mxu0 0.0
  %2647 = vmatprep.subr.mxu0 0.0
  %2648 = vmatpush1.msra.mxu0 0.0
  %2649 = vmatprep.subr.mxu0 0.0
  %2650 = vmatpush1.msra.mxu0 0.0
  %2651 = vmatprep.subr.mxu0 0.0
  %2652 = vmatpush1.msra.mxu0 0.0
  %2653 = vmatprep.subr.mxu0 0.0
  %2654 = vmatpush1.msra.mxu0 0.0
  %2655 = vmatprep.subr.mxu0 0.0
  %2656 = vmatpush1.msra.mxu0 0.0
  %2657 = vmatprep.subr.mxu0 0.0
  %2658 = vmatpush1.msra.mxu0 0.0
  %2659 = vmatprep.subr.mxu0 0.0
  %2660 = vmatpush1.msra.mxu0 0.0
  %2661 = vmatprep.subr.mxu0 0.0
  %2662 = vmatpush1.msra.mxu0 0.0
  %2663 = vmatprep.subr.mxu0 0.0
  %2664 = vmatpush1.msra.mxu0 0.0
  %2665 = vmatprep.subr.mxu0 0.0
  %2666 = vmatpush1.msra.mxu0 0.0
  %2667 = vmatprep.subr.mxu0 0.0
  %2668 = vmatpush1.msra.mxu0 0.0
  %2669 = vmatprep.subr.mxu0 0.0
  %2670 = vmatpush1.msra.mxu0 0.0
  %2671 = vmatprep.subr.mxu0 0.0
  %2672 = vmatpush1.msra.mxu0 0.0
  %2673 = vmatprep.subr.mxu0 0.0
  %2674 = vmatpush1.msra.mxu0 0.0
  %2675 = vmatprep.subr.mxu0 0.0
  %2676 = vmatpush1.msra.mxu0 0.0
  %2677 = vmatprep.subr.mxu0 0.0
  %2678 = vmatpush1.msra.mxu0 0.0
  %2679 = vmatprep.subr.mxu0 0.0
  %2680 = vmatpush1.msra.mxu0 0.0
  %2681 = vmatprep.subr.mxu0 0.0
  %2682 = vmatpush1.msra.mxu0 0.0
  %2683 = vmatprep.subr.mxu0 0.0
  %2684 = vmatpush1.msra.mxu0 0.0
  %2685 = vmatprep.subr.mxu0 0.0
  %2686 = vmatpush1.msra.mxu0 0.0
  %2687 = vmatprep.subr.mxu0 0.0
  %2688 = vmatpush1.msra.mxu0 0.0
  %2689 = vmatprep.subr.mxu0 0.0
  %2690 = vmatpush1.msra.mxu0 0.0
  %2691 = vmatprep.subr.mxu0 0.0
  %2692 = vmatpush1.msra.mxu0 0.0
  %2693 = vmatprep.subr.mxu0 0.0
  %2694 = vmatpush1.msra.mxu0 0.0
  %2695 = vmatprep.mubr.f32.mxu0 0.0
  %2696 = vmatmul.mubr.f32.gmra.mrb[0].mxu0 %v2626
  %v2697 = vpop.f32.mrb[0].mxu0
  %v2698 = vadd.f32 %v2624, %v2697
  %v2699 = vpop.f32.mrb[0].mxu0
  %2700 = vmatprep.mubr.f32.mxu0 0.0
  %2701 = vmatmul.mubr.f32.gmra.mrb[0].mxu0 %v2629
  %v2702 = vpop.f32.mrb[0].mxu0
  %v2703 = vadd.f32 %v2624, %v2702
  %v2704 = vpop.f32.mrb[0].mxu0
  %2705 = vdwg.mxu0
  %v2706 = vtanh.pop %v2698
  %v2707 = vtanh.pop %v2703
  %v2708 = vadd.f32 %v2442, %v2706
  %v2709 = vadd.f32 %v2443, %v2707
  %v2710 = vsel %vm65, %v2708, 0.0
  %2711 = vadd.xlane.f32.xlu0 %v2710
  %v2712 = vpop.xlane.xlu0 %2711
  %v2713 = vsel %vm65, %v2709, 0.0
  %2714 = vadd.xlane.f32.xlu0 %v2713
  %v2715 = vpop.xlane.xlu0 %2714
  %v2716 = vmul.f32 %v2712, %v602
  %v2717 = vmul.f32 %v2715, %v602
  %v2718 = vsub.f32 %v2708, %v2716
  %v2719 = vsub.f32 %v2709, %v2717
  %v2720 = vmul.f32 %v2718, %v2718
  %v2721 = vmul.f32 %v2719, %v2719
  %v2722 = vsel %vm65, %v2720, 0.0
  %2723 = vadd.xlane.f32.xlu0 %v2722
  %v2724 = vpop.xlane.xlu0 %2723
  %v2725 = vsel %vm65, %v2721, 0.0
  %2726 = vadd.xlane.f32.xlu0 %v2725
  %v2727 = vpop.xlane.xlu0 %2726
  %v2728 = vmul.f32 %v2724, %v602
  %v2729 = vmul.f32 %v2727, %v602
  %v2730 = vadd.f32 %v2728, 1e-05
  %v2731 = vadd.f32 %v2729, 1e-05
  %v2732 = vrsqrt.pop %v2730
  %v2733 = vrsqrt.pop %v2731
  %v2734 = vmul.f32 %v2718, %v2732
  %v2735 = vmul.f32 %v2719, %v2733
  %v2736 = vlaneseq
  %v2737 = vshrl.u32 %v2736, 7
  %v2738 = vsub.s32 0, %v2737
  %v2739 = vrot.slane %v1872, %v2738
  %v2740 = vmul.f32 %v2734, %v2739
  %v2741 = vmul.f32 %v2735, %v2739
  %v2742 = vlaneseq
  %v2743 = vshrl.u32 %v2742, 7
  %v2744 = vsub.s32 0, %v2743
  %v2745 = vrot.slane %v1873, %v2744
  %v2746 = vadd.f32 %v2740, %v2745
  %v2747 = vadd.f32 %v2741, %v2745
  %v2748 = vld [vmem:[%s2] sm:$0xff]
  %v2749 = vld [vmem:[%s2 + $0x8] sm:$0xf]
  %v2750 = vld [vmem:[%s2 + $0xc] sm:$0x1]
  %v2752 = vsel %vm65, %v2746, 0
  %v2755 = vsel %vm65, %v2747, 0
  %v2758 = vsel %vm72, %v2749, 0
  %2760 = vmatprep.subr.mxu0 0.0
  %2761 = vmatpush1.msra.mxu0 %v2748
  %2762 = vmatprep.subr.mxu0 0.0
  %2763 = vmatpush1.msra.mxu0 %v2758
  %2764 = vmatprep.subr.mxu0 0.0
  %2765 = vmatpush1.msra.mxu0 0.0
  %2766 = vmatprep.subr.mxu0 0.0
  %2767 = vmatpush1.msra.mxu0 0.0
  %2768 = vmatprep.subr.mxu0 0.0
  %2769 = vmatpush1.msra.mxu0 0.0
  %2770 = vmatprep.subr.mxu0 0.0
  %2771 = vmatpush1.msra.mxu0 0.0
  %2772 = vmatprep.subr.mxu0 0.0
  %2773 = vmatpush1.msra.mxu0 0.0
  %2774 = vmatprep.subr.mxu0 0.0
  %2775 = vmatpush1.msra.mxu0 0.0
  %2776 = vmatprep.subr.mxu0 0.0
  %2777 = vmatpush1.msra.mxu0 0.0
  %2778 = vmatprep.subr.mxu0 0.0
  %2779 = vmatpush1.msra.mxu0 0.0
  %2780 = vmatprep.subr.mxu0 0.0
  %2781 = vmatpush1.msra.mxu0 0.0
  %2782 = vmatprep.subr.mxu0 0.0
  %2783 = vmatpush1.msra.mxu0 0.0
  %2784 = vmatprep.subr.mxu0 0.0
  %2785 = vmatpush1.msra.mxu0 0.0
  %2786 = vmatprep.subr.mxu0 0.0
  %2787 = vmatpush1.msra.mxu0 0.0
  %2788 = vmatprep.subr.mxu0 0.0
  %2789 = vmatpush1.msra.mxu0 0.0
  %2790 = vmatprep.subr.mxu0 0.0
  %2791 = vmatpush1.msra.mxu0 0.0
  %2792 = vmatprep.subr.mxu0 0.0
  %2793 = vmatpush1.msra.mxu0 0.0
  %2794 = vmatprep.subr.mxu0 0.0
  %2795 = vmatpush1.msra.mxu0 0.0
  %2796 = vmatprep.subr.mxu0 0.0
  %2797 = vmatpush1.msra.mxu0 0.0
  %2798 = vmatprep.subr.mxu0 0.0
  %2799 = vmatpush1.msra.mxu0 0.0
  %2800 = vmatprep.subr.mxu0 0.0
  %2801 = vmatpush1.msra.mxu0 0.0
  %2802 = vmatprep.subr.mxu0 0.0
  %2803 = vmatpush1.msra.mxu0 0.0
  %2804 = vmatprep.subr.mxu0 0.0
  %2805 = vmatpush1.msra.mxu0 0.0
  %2806 = vmatprep.subr.mxu0 0.0
  %2807 = vmatpush1.msra.mxu0 0.0
  %2808 = vmatprep.subr.mxu0 0.0
  %2809 = vmatpush1.msra.mxu0 0.0
  %2810 = vmatprep.subr.mxu0 0.0
  %2811 = vmatpush1.msra.mxu0 0.0
  %2812 = vmatprep.subr.mxu0 0.0
  %2813 = vmatpush1.msra.mxu0 0.0
  %2814 = vmatprep.subr.mxu0 0.0
  %2815 = vmatpush1.msra.mxu0 0.0
  %2816 = vmatprep.subr.mxu0 0.0
  %2817 = vmatpush1.msra.mxu0 0.0
  %2818 = vmatprep.subr.mxu0 0.0
  %2819 = vmatpush1.msra.mxu0 0.0
  %2820 = vmatprep.subr.mxu0 0.0
  %2821 = vmatpush1.msra.mxu0 0.0
  %2822 = vmatprep.subr.mxu0 0.0
  %2823 = vmatpush1.msra.mxu0 0.0
  %2824 = vmatprep.mubr.f32.mxu0 0.0
  %2825 = vmatmul.mubr.f32.gmra.mrb[0].mxu0 %v2752
  %v2826 = vpop.f32.mrb[0].mxu0
  %v2827 = vadd.f32 0.0, %v2826
  %v2828 = vpop.f32.mrb[0].mxu0
  %2829 = vmatprep.mubr.f32.mxu0 0.0
  %2830 = vmatmul.mubr.f32.gmra.mrb[0].mxu0 %v2755
  %v2831 = vpop.f32.mrb[0].mxu0
  %v2832 = vadd.f32 0.0, %v2831
  %v2833 = vpop.f32.mrb[0].mxu0
  %2834 = vdwg.mxu0
  %v2835 = vmul.f32 %v2827, %v19
  %v2836 = vmul.f32 %v2832, %v20
  %vm2837 = vcmask 523264
  %v2839 = vsel %vm2837, %v2835, 0
  %v2842 = vsel %vm2837, %v2836, 0
  %2844 = vmatprep.subr.mxu0 0.0
  %2845 = vmatpush1.msra.mxu0 %v23
  %2846 = vmatprep.subr.mxu0 0.0
  %2847 = vmatpush1.msra.mxu0 %v24
  %2848 = vmatprep.subr.mxu0 0.0
  %2849 = vmatpush1.msra.mxu0 %v25
  %2850 = vmatprep.subr.mxu0 0.0
  %2851 = vmatpush1.msra.mxu0 %v26
  %2852 = vmatprep.subr.mxu0 0.0
  %2853 = vmatpush1.msra.mxu0 %v27
  %2854 = vmatprep.subr.mxu0 0.0
  %2855 = vmatpush1.msra.mxu0 %v28
  %2856 = vmatprep.subr.mxu0 0.0
  %2857 = vmatpush1.msra.mxu0 %v29
  %2858 = vmatprep.subr.mxu0 0.0
  %2859 = vmatpush1.msra.mxu0 %v30
  %2860 = vmatprep.subr.mxu0 0.0
  %2861 = vmatpush1.msra.mxu0 0.0
  %2862 = vmatprep.subr.mxu0 0.0
  %2863 = vmatpush1.msra.mxu0 0.0
  %2864 = vmatprep.subr.mxu0 0.0
  %2865 = vmatpush1.msra.mxu0 0.0
  %2866 = vmatprep.subr.mxu0 0.0
  %2867 = vmatpush1.msra.mxu0 0.0
  %2868 = vmatprep.subr.mxu0 0.0
  %2869 = vmatpush1.msra.mxu0 0.0
  %2870 = vmatprep.subr.mxu0 0.0
  %2871 = vmatpush1.msra.mxu0 0.0
  %2872 = vmatprep.subr.mxu0 0.0
  %2873 = vmatpush1.msra.mxu0 0.0
  %2874 = vmatprep.subr.mxu0 0.0
  %2875 = vmatpush1.msra.mxu0 0.0
  %2876 = vmatprep.subr.mxu0 0.0
  %2877 = vmatpush1.msra.mxu0 0.0
  %2878 = vmatprep.subr.mxu0 0.0
  %2879 = vmatpush1.msra.mxu0 0.0
  %2880 = vmatprep.subr.mxu0 0.0
  %2881 = vmatpush1.msra.mxu0 0.0
  %2882 = vmatprep.subr.mxu0 0.0
  %2883 = vmatpush1.msra.mxu0 0.0
  %2884 = vmatprep.subr.mxu0 0.0
  %2885 = vmatpush1.msra.mxu0 0.0
  %2886 = vmatprep.subr.mxu0 0.0
  %2887 = vmatpush1.msra.mxu0 0.0
  %2888 = vmatprep.subr.mxu0 0.0
  %2889 = vmatpush1.msra.mxu0 0.0
  %2890 = vmatprep.subr.mxu0 0.0
  %2891 = vmatpush1.msra.mxu0 0.0
  %2892 = vmatprep.subr.mxu0 0.0
  %2893 = vmatpush1.msra.mxu0 0.0
  %2894 = vmatprep.subr.mxu0 0.0
  %2895 = vmatpush1.msra.mxu0 0.0
  %2896 = vmatprep.subr.mxu0 0.0
  %2897 = vmatpush1.msra.mxu0 0.0
  %2898 = vmatprep.subr.mxu0 0.0
  %2899 = vmatpush1.msra.mxu0 0.0
  %2900 = vmatprep.subr.mxu0 0.0
  %2901 = vmatpush1.msra.mxu0 0.0
  %2902 = vmatprep.subr.mxu0 0.0
  %2903 = vmatpush1.msra.mxu0 0.0
  %2904 = vmatprep.subr.mxu0 0.0
  %2905 = vmatpush1.msra.mxu0 0.0
  %2906 = vmatprep.subr.mxu0 0.0
  %2907 = vmatpush1.msra.mxu0 0.0
  %2908 = vmatprep.mubr.f32.mxu0 0.0
  %2909 = vmatmul.mubr.f32.gmra.mrb[0].mxu0 %v2839
  %v2910 = vpop.f32.mrb[0].mxu0
  %v2911 = vadd.f32 0.0, %v2910
  %v2912 = vpop.f32.mrb[0].mxu0
  %2913 = vmatprep.mubr.f32.mxu0 0.0
  %2914 = vmatmul.mubr.f32.gmra.mrb[0].mxu0 %v2842
  %v2915 = vpop.f32.mrb[0].mxu0
  %v2916 = vadd.f32 0.0, %v2915
  %v2917 = vpop.f32.mrb[0].mxu0
  %2918 = vdwg.mxu0
  %v2919 = vlaneseq
  %v2920 = vshrl.u32 %v2919, 7
  %v2921 = vsub.s32 0, %v2920
  %v2922 = vrot.slane %v2750, %v2921
  %v2924 = vsel %vm402, %v31, 0
  %2926 = vmatprep.subr.mxu0 0.0
  %2927 = vmatpush1.msra.mxu0 %v2911
  %2928 = vmatprep.subr.mxu0 0.0
  %2929 = vmatpush1.msra.mxu0 %v2916
  %2930 = vmatprep.subr.mxu0 0.0
  %2931 = vmatpush1.msra.mxu0 0.0
  %2932 = vmatprep.subr.mxu0 0.0
  %2933 = vmatpush1.msra.mxu0 0.0
  %2934 = vmatprep.subr.mxu0 0.0
  %2935 = vmatpush1.msra.mxu0 0.0
  %2936 = vmatprep.subr.mxu0 0.0
  %2937 = vmatpush1.msra.mxu0 0.0
  %2938 = vmatprep.subr.mxu0 0.0
  %2939 = vmatpush1.msra.mxu0 0.0
  %2940 = vmatprep.subr.mxu0 0.0
  %2941 = vmatpush1.msra.mxu0 0.0
  %2942 = vmatprep.subr.mxu0 0.0
  %2943 = vmatpush1.msra.mxu0 0.0
  %2944 = vmatprep.subr.mxu0 0.0
  %2945 = vmatpush1.msra.mxu0 0.0
  %2946 = vmatprep.subr.mxu0 0.0
  %2947 = vmatpush1.msra.mxu0 0.0
  %2948 = vmatprep.subr.mxu0 0.0
  %2949 = vmatpush1.msra.mxu0 0.0
  %2950 = vmatprep.subr.mxu0 0.0
  %2951 = vmatpush1.msra.mxu0 0.0
  %2952 = vmatprep.subr.mxu0 0.0
  %2953 = vmatpush1.msra.mxu0 0.0
  %2954 = vmatprep.subr.mxu0 0.0
  %2955 = vmatpush1.msra.mxu0 0.0
  %2956 = vmatprep.subr.mxu0 0.0
  %2957 = vmatpush1.msra.mxu0 0.0
  %2958 = vmatprep.subr.mxu0 0.0
  %2959 = vmatpush1.msra.mxu0 0.0
  %2960 = vmatprep.subr.mxu0 0.0
  %2961 = vmatpush1.msra.mxu0 0.0
  %2962 = vmatprep.subr.mxu0 0.0
  %2963 = vmatpush1.msra.mxu0 0.0
  %2964 = vmatprep.subr.mxu0 0.0
  %2965 = vmatpush1.msra.mxu0 0.0
  %2966 = vmatprep.subr.mxu0 0.0
  %2967 = vmatpush1.msra.mxu0 0.0
  %2968 = vmatprep.subr.mxu0 0.0
  %2969 = vmatpush1.msra.mxu0 0.0
  %2970 = vmatprep.subr.mxu0 0.0
  %2971 = vmatpush1.msra.mxu0 0.0
  %2972 = vmatprep.subr.mxu0 0.0
  %2973 = vmatpush1.msra.mxu0 0.0
  %2974 = vmatprep.subr.mxu0 0.0
  %2975 = vmatpush1.msra.mxu0 0.0
  %2976 = vmatprep.subr.mxu0 0.0
  %2977 = vmatpush1.msra.mxu0 0.0
  %2978 = vmatprep.subr.mxu0 0.0
  %2979 = vmatpush1.msra.mxu0 0.0
  %2980 = vmatprep.subr.mxu0 0.0
  %2981 = vmatpush1.msra.mxu0 0.0
  %2982 = vmatprep.subr.mxu0 0.0
  %2983 = vmatpush1.msra.mxu0 0.0
  %2984 = vmatprep.subr.mxu0 0.0
  %2985 = vmatpush1.msra.mxu0 0.0
  %2986 = vmatprep.subr.mxu0 0.0
  %2987 = vmatpush1.msra.mxu0 0.0
  %2988 = vmatprep.subr.mxu0 0.0
  %2989 = vmatpush1.msra.mxu0 0.0
  %2990 = vmatprep.mubr.f32.mxu0 0.0
  %2991 = vmatmul.mubr.f32.gmra.mrb[0].mxu0 %v2924
  %v2992 = vpop.f32.mrb[0].mxu0
  %v2993 = vadd.f32 %v2922, %v2992
  %v2994 = vpop.f32.mrb[0].mxu0
  %2995 = vdwg.mxu0
  %v2996 = vtanh.pop %v2993
  %vm2997 = vcmask 58368
  %2998 = vst.msk [vmem:[%s4] sm:$0x3] %vm2997, %v2996
  %s2999 = scalar_lea.vmem %s1, 480
  %v3000 = vld [vmem:[%s2999] sm:$0xff]
  %v3001 = vld [vmem:[%s2999 + $0x8] sm:$0xf]
  %v3002 = vld [vmem:[%s2999 + $0x10] sm:$0xff]
  %v3003 = vld [vmem:[%s2999 + $0x18] sm:$0xf]
  %v3004 = vld [vmem:[%s2999 + $0x20] sm:$0xff]
  %v3005 = vld [vmem:[%s2999 + $0x28] sm:$0xf]
  %v3006 = vld [vmem:[%s2999 + $0x30] sm:$0xff]
  %v3007 = vld [vmem:[%s2999 + $0x38] sm:$0xf]
  %v3008 = vld [vmem:[%s2999 + $0x40] sm:$0xff]
  %v3009 = vld [vmem:[%s2999 + $0x48] sm:$0xf]
  %v3010 = vld [vmem:[%s2999 + $0x50] sm:$0xff]
  %v3011 = vld [vmem:[%s2999 + $0x58] sm:$0xff]
  %v3012 = vld [vmem:[%s2999 + $0x60] sm:$0xff]
  %v3013 = vld [vmem:[%s2999 + $0x68] sm:$0xff]
  %v3014 = vld [vmem:[%s2999 + $0x70] sm:$0xff]
  %v3015 = vld [vmem:[%s2999 + $0x78] sm:$0xff]
  %v3016 = vld [vmem:[%s2999 + $0x80] sm:$0xff]
  %v3017 = vld [vmem:[%s2999 + $0x88] sm:$0xff]
  %v3018 = vld [vmem:[%s2999 + $0x90] sm:$0x1]
  %v3019 = vld [vmem:[%s2999 + $0x91] sm:$0x1]
  %v3020 = vld [vmem:[%s2999 + $0x92] sm:$0x1]
  %v3021 = vld [vmem:[%s2999 + $0x93] sm:$0x1]
  %v3022 = vld [vmem:[%s2999 + $0x94] sm:$0x1]
  %v3023 = vld [vmem:[%s2999 + $0x95] sm:$0x1]
  %v3024 = vld [vmem:[%s2999 + $0x96] sm:$0x1]
  %v3025 = vld [vmem:[%s2999 + $0x97] sm:$0x1]
  %v3026 = vld [vmem:[%s2999 + $0x98] sm:$0x1]
  %v3027 = vld [vmem:[%s2999 + $0x99] sm:$0x1]
  %v3028 = vld [vmem:[%s2999 + $0x9a] sm:$0x1]
  %v3029 = vlaneseq
  %v3030 = vshrl.u32 %v3029, 7
  %v3031 = vsub.s32 0, %v3030
  %v3032 = vrot.slane %v3018, %v3031
  %v3034 = vsel %vm72, %v3001, 0
  %3036 = vmatprep.subr.mxu0 0.0
  %3037 = vmatpush1.msra.mxu0 %v3000
  %3038 = vmatprep.subr.mxu0 0.0
  %3039 = vmatpush1.msra.mxu0 %v3034
  %3040 = vmatprep.subr.mxu0 0.0
  %3041 = vmatpush1.msra.mxu0 0.0
  %3042 = vmatprep.subr.mxu0 0.0
  %3043 = vmatpush1.msra.mxu0 0.0
  %3044 = vmatprep.subr.mxu0 0.0
  %3045 = vmatpush1.msra.mxu0 0.0
  %3046 = vmatprep.subr.mxu0 0.0
  %3047 = vmatpush1.msra.mxu0 0.0
  %3048 = vmatprep.subr.mxu0 0.0
  %3049 = vmatpush1.msra.mxu0 0.0
  %3050 = vmatprep.subr.mxu0 0.0
  %3051 = vmatpush1.msra.mxu0 0.0
  %3052 = vmatprep.subr.mxu0 0.0
  %3053 = vmatpush1.msra.mxu0 0.0
  %3054 = vmatprep.subr.mxu0 0.0
  %3055 = vmatpush1.msra.mxu0 0.0
  %3056 = vmatprep.subr.mxu0 0.0
  %3057 = vmatpush1.msra.mxu0 0.0
  %3058 = vmatprep.subr.mxu0 0.0
  %3059 = vmatpush1.msra.mxu0 0.0
  %3060 = vmatprep.subr.mxu0 0.0
  %3061 = vmatpush1.msra.mxu0 0.0
  %3062 = vmatprep.subr.mxu0 0.0
  %3063 = vmatpush1.msra.mxu0 0.0
  %3064 = vmatprep.subr.mxu0 0.0
  %3065 = vmatpush1.msra.mxu0 0.0
  %3066 = vmatprep.subr.mxu0 0.0
  %3067 = vmatpush1.msra.mxu0 0.0
  %3068 = vmatprep.subr.mxu0 0.0
  %3069 = vmatpush1.msra.mxu0 0.0
  %3070 = vmatprep.subr.mxu0 0.0
  %3071 = vmatpush1.msra.mxu0 0.0
  %3072 = vmatprep.subr.mxu0 0.0
  %3073 = vmatpush1.msra.mxu0 0.0
  %3074 = vmatprep.subr.mxu0 0.0
  %3075 = vmatpush1.msra.mxu0 0.0
  %3076 = vmatprep.subr.mxu0 0.0
  %3077 = vmatpush1.msra.mxu0 0.0
  %3078 = vmatprep.subr.mxu0 0.0
  %3079 = vmatpush1.msra.mxu0 0.0
  %3080 = vmatprep.subr.mxu0 0.0
  %3081 = vmatpush1.msra.mxu0 0.0
  %3082 = vmatprep.subr.mxu0 0.0
  %3083 = vmatpush1.msra.mxu0 0.0
  %3084 = vmatprep.subr.mxu0 0.0
  %3085 = vmatpush1.msra.mxu0 0.0
  %3086 = vmatprep.subr.mxu0 0.0
  %3087 = vmatpush1.msra.mxu0 0.0
  %3088 = vmatprep.subr.mxu0 0.0
  %3089 = vmatpush1.msra.mxu0 0.0
  %3090 = vmatprep.subr.mxu0 0.0
  %3091 = vmatpush1.msra.mxu0 0.0
  %3092 = vmatprep.subr.mxu0 0.0
  %3093 = vmatpush1.msra.mxu0 0.0
  %3094 = vmatprep.subr.mxu0 0.0
  %3095 = vmatpush1.msra.mxu0 0.0
  %3096 = vmatprep.subr.mxu0 0.0
  %3097 = vmatpush1.msra.mxu0 0.0
  %3098 = vmatprep.subr.mxu0 0.0
  %3099 = vmatpush1.msra.mxu0 0.0
  %3100 = vmatprep.mubr.f32.mxu0 0.0
  %3101 = vmatmul.mubr.f32.gmra.mrb[0].mxu0 %v67
  %v3102 = vpop.f32.mrb[0].mxu0
  %v3103 = vadd.f32 %v3032, %v3102
  %v3104 = vpop.f32.mrb[0].mxu0
  %3105 = vmatprep.mubr.f32.mxu0 0.0
  %3106 = vmatmul.mubr.f32.gmra.mrb[0].mxu0 %v70
  %v3107 = vpop.f32.mrb[0].mxu0
  %v3108 = vadd.f32 %v3032, %v3107
  %v3109 = vpop.f32.mrb[0].mxu0
  %3110 = vdwg.mxu0
  %v3111 = vlaneseq
  %v3112 = vshrl.u32 %v3111, 7
  %v3113 = vsub.s32 0, %v3112
  %v3114 = vrot.slane %v3019, %v3113
  %v3116 = vsel %vm72, %v3003, 0
  %3118 = vmatprep.subr.mxu0 0.0
  %3119 = vmatpush1.msra.mxu0 %v3002
  %3120 = vmatprep.subr.mxu0 0.0
  %3121 = vmatpush1.msra.mxu0 %v3116
  %3122 = vmatprep.subr.mxu0 0.0
  %3123 = vmatpush1.msra.mxu0 0.0
  %3124 = vmatprep.subr.mxu0 0.0
  %3125 = vmatpush1.msra.mxu0 0.0
  %3126 = vmatprep.subr.mxu0 0.0
  %3127 = vmatpush1.msra.mxu0 0.0
  %3128 = vmatprep.subr.mxu0 0.0
  %3129 = vmatpush1.msra.mxu0 0.0
  %3130 = vmatprep.subr.mxu0 0.0
  %3131 = vmatpush1.msra.mxu0 0.0
  %3132 = vmatprep.subr.mxu0 0.0
  %3133 = vmatpush1.msra.mxu0 0.0
  %3134 = vmatprep.subr.mxu0 0.0
  %3135 = vmatpush1.msra.mxu0 0.0
  %3136 = vmatprep.subr.mxu0 0.0
  %3137 = vmatpush1.msra.mxu0 0.0
  %3138 = vmatprep.subr.mxu0 0.0
  %3139 = vmatpush1.msra.mxu0 0.0
  %3140 = vmatprep.subr.mxu0 0.0
  %3141 = vmatpush1.msra.mxu0 0.0
  %3142 = vmatprep.subr.mxu0 0.0
  %3143 = vmatpush1.msra.mxu0 0.0
  %3144 = vmatprep.subr.mxu0 0.0
  %3145 = vmatpush1.msra.mxu0 0.0
  %3146 = vmatprep.subr.mxu0 0.0
  %3147 = vmatpush1.msra.mxu0 0.0
  %3148 = vmatprep.subr.mxu0 0.0
  %3149 = vmatpush1.msra.mxu0 0.0
  %3150 = vmatprep.subr.mxu0 0.0
  %3151 = vmatpush1.msra.mxu0 0.0
  %3152 = vmatprep.subr.mxu0 0.0
  %3153 = vmatpush1.msra.mxu0 0.0
  %3154 = vmatprep.subr.mxu0 0.0
  %3155 = vmatpush1.msra.mxu0 0.0
  %3156 = vmatprep.subr.mxu0 0.0
  %3157 = vmatpush1.msra.mxu0 0.0
  %3158 = vmatprep.subr.mxu0 0.0
  %3159 = vmatpush1.msra.mxu0 0.0
  %3160 = vmatprep.subr.mxu0 0.0
  %3161 = vmatpush1.msra.mxu0 0.0
  %3162 = vmatprep.subr.mxu0 0.0
  %3163 = vmatpush1.msra.mxu0 0.0
  %3164 = vmatprep.subr.mxu0 0.0
  %3165 = vmatpush1.msra.mxu0 0.0
  %3166 = vmatprep.subr.mxu0 0.0
  %3167 = vmatpush1.msra.mxu0 0.0
  %3168 = vmatprep.subr.mxu0 0.0
  %3169 = vmatpush1.msra.mxu0 0.0
  %3170 = vmatprep.subr.mxu0 0.0
  %3171 = vmatpush1.msra.mxu0 0.0
  %3172 = vmatprep.subr.mxu0 0.0
  %3173 = vmatpush1.msra.mxu0 0.0
  %3174 = vmatprep.subr.mxu0 0.0
  %3175 = vmatpush1.msra.mxu0 0.0
  %3176 = vmatprep.subr.mxu0 0.0
  %3177 = vmatpush1.msra.mxu0 0.0
  %3178 = vmatprep.subr.mxu0 0.0
  %3179 = vmatpush1.msra.mxu0 0.0
  %3180 = vmatprep.subr.mxu0 0.0
  %3181 = vmatpush1.msra.mxu0 0.0
  %3182 = vmatprep.mubr.f32.mxu0 0.0
  %3183 = vmatmul.mubr.f32.gmra.mrb[0].mxu0 %v67
  %v3184 = vpop.f32.mrb[0].mxu0
  %v3185 = vadd.f32 %v3114, %v3184
  %v3186 = vpop.f32.mrb[0].mxu0
  %3187 = vmatprep.mubr.f32.mxu0 0.0
  %3188 = vmatmul.mubr.f32.gmra.mrb[0].mxu0 %v70
  %v3189 = vpop.f32.mrb[0].mxu0
  %v3190 = vadd.f32 %v3114, %v3189
  %v3191 = vpop.f32.mrb[0].mxu0
  %3192 = vdwg.mxu0
  %v3193 = vlaneseq
  %v3194 = vshrl.u32 %v3193, 7
  %v3195 = vsub.s32 0, %v3194
  %v3196 = vrot.slane %v3020, %v3195
  %v3198 = vsel %vm72, %v3005, 0
  %3200 = vmatprep.subr.mxu0 0.0
  %3201 = vmatpush1.msra.mxu0 %v3004
  %3202 = vmatprep.subr.mxu0 0.0
  %3203 = vmatpush1.msra.mxu0 %v3198
  %3204 = vmatprep.subr.mxu0 0.0
  %3205 = vmatpush1.msra.mxu0 0.0
  %3206 = vmatprep.subr.mxu0 0.0
  %3207 = vmatpush1.msra.mxu0 0.0
  %3208 = vmatprep.subr.mxu0 0.0
  %3209 = vmatpush1.msra.mxu0 0.0
  %3210 = vmatprep.subr.mxu0 0.0
  %3211 = vmatpush1.msra.mxu0 0.0
  %3212 = vmatprep.subr.mxu0 0.0
  %3213 = vmatpush1.msra.mxu0 0.0
  %3214 = vmatprep.subr.mxu0 0.0
  %3215 = vmatpush1.msra.mxu0 0.0
  %3216 = vmatprep.subr.mxu0 0.0
  %3217 = vmatpush1.msra.mxu0 0.0
  %3218 = vmatprep.subr.mxu0 0.0
  %3219 = vmatpush1.msra.mxu0 0.0
  %3220 = vmatprep.subr.mxu0 0.0
  %3221 = vmatpush1.msra.mxu0 0.0
  %3222 = vmatprep.subr.mxu0 0.0
  %3223 = vmatpush1.msra.mxu0 0.0
  %3224 = vmatprep.subr.mxu0 0.0
  %3225 = vmatpush1.msra.mxu0 0.0
  %3226 = vmatprep.subr.mxu0 0.0
  %3227 = vmatpush1.msra.mxu0 0.0
  %3228 = vmatprep.subr.mxu0 0.0
  %3229 = vmatpush1.msra.mxu0 0.0
  %3230 = vmatprep.subr.mxu0 0.0
  %3231 = vmatpush1.msra.mxu0 0.0
  %3232 = vmatprep.subr.mxu0 0.0
  %3233 = vmatpush1.msra.mxu0 0.0
  %3234 = vmatprep.subr.mxu0 0.0
  %3235 = vmatpush1.msra.mxu0 0.0
  %3236 = vmatprep.subr.mxu0 0.0
  %3237 = vmatpush1.msra.mxu0 0.0
  %3238 = vmatprep.subr.mxu0 0.0
  %3239 = vmatpush1.msra.mxu0 0.0
  %3240 = vmatprep.subr.mxu0 0.0
  %3241 = vmatpush1.msra.mxu0 0.0
  %3242 = vmatprep.subr.mxu0 0.0
  %3243 = vmatpush1.msra.mxu0 0.0
  %3244 = vmatprep.subr.mxu0 0.0
  %3245 = vmatpush1.msra.mxu0 0.0
  %3246 = vmatprep.subr.mxu0 0.0
  %3247 = vmatpush1.msra.mxu0 0.0
  %3248 = vmatprep.subr.mxu0 0.0
  %3249 = vmatpush1.msra.mxu0 0.0
  %3250 = vmatprep.subr.mxu0 0.0
  %3251 = vmatpush1.msra.mxu0 0.0
  %3252 = vmatprep.subr.mxu0 0.0
  %3253 = vmatpush1.msra.mxu0 0.0
  %3254 = vmatprep.subr.mxu0 0.0
  %3255 = vmatpush1.msra.mxu0 0.0
  %3256 = vmatprep.subr.mxu0 0.0
  %3257 = vmatpush1.msra.mxu0 0.0
  %3258 = vmatprep.subr.mxu0 0.0
  %3259 = vmatpush1.msra.mxu0 0.0
  %3260 = vmatprep.subr.mxu0 0.0
  %3261 = vmatpush1.msra.mxu0 0.0
  %3262 = vmatprep.subr.mxu0 0.0
  %3263 = vmatpush1.msra.mxu0 0.0
  %3264 = vmatprep.mubr.f32.mxu0 0.0
  %3265 = vmatmul.mubr.f32.gmra.mrb[0].mxu0 %v67
  %v3266 = vpop.f32.mrb[0].mxu0
  %v3267 = vadd.f32 %v3196, %v3266
  %v3268 = vpop.f32.mrb[0].mxu0
  %3269 = vmatprep.mubr.f32.mxu0 0.0
  %3270 = vmatmul.mubr.f32.gmra.mrb[0].mxu0 %v70
  %v3271 = vpop.f32.mrb[0].mxu0
  %v3272 = vadd.f32 %v3196, %v3271
  %v3273 = vpop.f32.mrb[0].mxu0
  %3274 = vdwg.mxu0
  %v3276 = vsel %vm65, %v3103, 0
  %v3279 = vsel %vm65, %v3108, 0
  %v3282 = vsel %vm65, %v3185, 0
  %v3285 = vsel %vm65, %v3190, 0
  %3287 = vmatprep.subr.mxu0 0.0
  %3288 = vmatpush1.xpose.msra.mxu0 %v3282
  %3289 = vmatprep.subr.mxu0 0.0
  %3290 = vmatpush1.xpose.msra.mxu0 %v3285
  %3291 = vmatprep.subr.mxu0 0.0
  %3292 = vmatpush1.xpose.msra.mxu0 0.0
  %3293 = vmatprep.subr.mxu0 0.0
  %3294 = vmatpush1.xpose.msra.mxu0 0.0
  %3295 = vmatprep.subr.mxu0 0.0
  %3296 = vmatpush1.xpose.msra.mxu0 0.0
  %3297 = vmatprep.subr.mxu0 0.0
  %3298 = vmatpush1.xpose.msra.mxu0 0.0
  %3299 = vmatprep.subr.mxu0 0.0
  %3300 = vmatpush1.xpose.msra.mxu0 0.0
  %3301 = vmatprep.subr.mxu0 0.0
  %3302 = vmatpush1.xpose.msra.mxu0 0.0
  %3303 = vmatprep.subr.mxu0 0.0
  %3304 = vmatpush1.xpose.msra.mxu0 0.0
  %3305 = vmatprep.subr.mxu0 0.0
  %3306 = vmatpush1.xpose.msra.mxu0 0.0
  %3307 = vmatprep.subr.mxu0 0.0
  %3308 = vmatpush1.xpose.msra.mxu0 0.0
  %3309 = vmatprep.subr.mxu0 0.0
  %3310 = vmatpush1.xpose.msra.mxu0 0.0
  %3311 = vmatprep.subr.mxu0 0.0
  %3312 = vmatpush1.xpose.msra.mxu0 0.0
  %3313 = vmatprep.subr.mxu0 0.0
  %3314 = vmatpush1.xpose.msra.mxu0 0.0
  %3315 = vmatprep.subr.mxu0 0.0
  %3316 = vmatpush1.xpose.msra.mxu0 0.0
  %3317 = vmatprep.subr.mxu0 0.0
  %3318 = vmatpush1.xpose.msra.mxu0 0.0
  %3319 = vmatprep.subr.mxu0 0.0
  %3320 = vmatpush1.xpose.msra.mxu0 0.0
  %3321 = vmatprep.subr.mxu0 0.0
  %3322 = vmatpush1.xpose.msra.mxu0 0.0
  %3323 = vmatprep.subr.mxu0 0.0
  %3324 = vmatpush1.xpose.msra.mxu0 0.0
  %3325 = vmatprep.subr.mxu0 0.0
  %3326 = vmatpush1.xpose.msra.mxu0 0.0
  %3327 = vmatprep.subr.mxu0 0.0
  %3328 = vmatpush1.xpose.msra.mxu0 0.0
  %3329 = vmatprep.subr.mxu0 0.0
  %3330 = vmatpush1.xpose.msra.mxu0 0.0
  %3331 = vmatprep.subr.mxu0 0.0
  %3332 = vmatpush1.xpose.msra.mxu0 0.0
  %3333 = vmatprep.subr.mxu0 0.0
  %3334 = vmatpush1.xpose.msra.mxu0 0.0
  %3335 = vmatprep.subr.mxu0 0.0
  %3336 = vmatpush1.xpose.msra.mxu0 0.0
  %3337 = vmatprep.subr.mxu0 0.0
  %3338 = vmatpush1.xpose.msra.mxu0 0.0
  %3339 = vmatprep.subr.mxu0 0.0
  %3340 = vmatpush1.xpose.msra.mxu0 0.0
  %3341 = vmatprep.subr.mxu0 0.0
  %3342 = vmatpush1.xpose.msra.mxu0 0.0
  %3343 = vmatprep.subr.mxu0 0.0
  %3344 = vmatpush1.xpose.msra.mxu0 0.0
  %3345 = vmatprep.subr.mxu0 0.0
  %3346 = vmatpush1.xpose.msra.mxu0 0.0
  %3347 = vmatprep.subr.mxu0 0.0
  %3348 = vmatpush1.xpose.msra.mxu0 0.0
  %3349 = vmatprep.subr.mxu0 0.0
  %3350 = vmatpush1.xpose.msra.mxu0 0.0
  %3351 = vmatprep.mubr.f32.mxu0 0.0
  %3352 = vmatmul.mubr.f32.gmra.mrb[0].mxu0 %v3276
  %v3353 = vpop.f32.mrb[0].mxu0
  %v3354 = vadd.f32 %v21, %v3353
  %v3355 = vpop.f32.mrb[0].mxu0
  %3356 = vmatprep.mubr.f32.mxu0 0.0
  %3357 = vmatmul.mubr.f32.gmra.mrb[0].mxu0 %v3279
  %v3358 = vpop.f32.mrb[0].mxu0
  %v3359 = vadd.f32 %v22, %v3358
  %v3360 = vpop.f32.mrb[0].mxu0
  %3361 = vdwg.mxu0
  %v3362 = vsel %vm402, %v3354, -inf
  %3363 = vmax.xlane.f32.xlu0 %v3362
  %v3364 = vpop.xlane.xlu0 %3363
  %v3365 = vsel %vm402, %v3359, -inf
  %3366 = vmax.xlane.f32.xlu0 %v3365
  %v3367 = vpop.xlane.xlu0 %3366
  %v3368 = vsub.f32 %v3354, %v3364
  %v3369 = vsub.f32 %v3359, %v3367
  %v3370 = vmul.f32 %v3368, 1.442695
  %v3371 = vpow.pop %v3370
  %v3372 = vmul.f32 %v3369, 1.442695
  %v3373 = vpow.pop %v3372
  %v3374 = vsel %vm402, %v3371, 0.0
  %3375 = vadd.xlane.f32.xlu0 %v3374
  %v3376 = vpop.xlane.xlu0 %3375
  %v3377 = vsel %vm402, %v3373, 0.0
  %3378 = vadd.xlane.f32.xlu0 %v3377
  %v3379 = vpop.xlane.xlu0 %3378
  %v3380 = vrcp.pop %v3376
  %v3381 = vmul.f32 %v3371, %v3380
  %v3382 = vrcp.pop %v3379
  %v3383 = vmul.f32 %v3373, %v3382
  %v3385 = vsel %vm402, %v3381, 0
  %v3388 = vsel %vm402, %v3383, 0
  %3390 = vmatprep.subr.mxu0 0.0
  %3391 = vmatpush1.msra.mxu0 %v3267
  %3392 = vmatprep.subr.mxu0 0.0
  %3393 = vmatpush1.msra.mxu0 %v3272
  %3394 = vmatprep.subr.mxu0 0.0
  %3395 = vmatpush1.msra.mxu0 0.0
  %3396 = vmatprep.subr.mxu0 0.0
  %3397 = vmatpush1.msra.mxu0 0.0
  %3398 = vmatprep.subr.mxu0 0.0
  %3399 = vmatpush1.msra.mxu0 0.0
  %3400 = vmatprep.subr.mxu0 0.0
  %3401 = vmatpush1.msra.mxu0 0.0
  %3402 = vmatprep.subr.mxu0 0.0
  %3403 = vmatpush1.msra.mxu0 0.0
  %3404 = vmatprep.subr.mxu0 0.0
  %3405 = vmatpush1.msra.mxu0 0.0
  %3406 = vmatprep.subr.mxu0 0.0
  %3407 = vmatpush1.msra.mxu0 0.0
  %3408 = vmatprep.subr.mxu0 0.0
  %3409 = vmatpush1.msra.mxu0 0.0
  %3410 = vmatprep.subr.mxu0 0.0
  %3411 = vmatpush1.msra.mxu0 0.0
  %3412 = vmatprep.subr.mxu0 0.0
  %3413 = vmatpush1.msra.mxu0 0.0
  %3414 = vmatprep.subr.mxu0 0.0
  %3415 = vmatpush1.msra.mxu0 0.0
  %3416 = vmatprep.subr.mxu0 0.0
  %3417 = vmatpush1.msra.mxu0 0.0
  %3418 = vmatprep.subr.mxu0 0.0
  %3419 = vmatpush1.msra.mxu0 0.0
  %3420 = vmatprep.subr.mxu0 0.0
  %3421 = vmatpush1.msra.mxu0 0.0
  %3422 = vmatprep.subr.mxu0 0.0
  %3423 = vmatpush1.msra.mxu0 0.0
  %3424 = vmatprep.subr.mxu0 0.0
  %3425 = vmatpush1.msra.mxu0 0.0
  %3426 = vmatprep.subr.mxu0 0.0
  %3427 = vmatpush1.msra.mxu0 0.0
  %3428 = vmatprep.subr.mxu0 0.0
  %3429 = vmatpush1.msra.mxu0 0.0
  %3430 = vmatprep.subr.mxu0 0.0
  %3431 = vmatpush1.msra.mxu0 0.0
  %3432 = vmatprep.subr.mxu0 0.0
  %3433 = vmatpush1.msra.mxu0 0.0
  %3434 = vmatprep.subr.mxu0 0.0
  %3435 = vmatpush1.msra.mxu0 0.0
  %3436 = vmatprep.subr.mxu0 0.0
  %3437 = vmatpush1.msra.mxu0 0.0
  %3438 = vmatprep.subr.mxu0 0.0
  %3439 = vmatpush1.msra.mxu0 0.0
  %3440 = vmatprep.subr.mxu0 0.0
  %3441 = vmatpush1.msra.mxu0 0.0
  %3442 = vmatprep.subr.mxu0 0.0
  %3443 = vmatpush1.msra.mxu0 0.0
  %3444 = vmatprep.subr.mxu0 0.0
  %3445 = vmatpush1.msra.mxu0 0.0
  %3446 = vmatprep.subr.mxu0 0.0
  %3447 = vmatpush1.msra.mxu0 0.0
  %3448 = vmatprep.subr.mxu0 0.0
  %3449 = vmatpush1.msra.mxu0 0.0
  %3450 = vmatprep.subr.mxu0 0.0
  %3451 = vmatpush1.msra.mxu0 0.0
  %3452 = vmatprep.subr.mxu0 0.0
  %3453 = vmatpush1.msra.mxu0 0.0
  %3454 = vmatprep.mubr.f32.mxu0 0.0
  %3455 = vmatmul.mubr.f32.gmra.mrb[0].mxu0 %v3385
  %v3456 = vpop.f32.mrb[0].mxu0
  %v3457 = vadd.f32 0.0, %v3456
  %v3458 = vpop.f32.mrb[0].mxu0
  %3459 = vmatprep.mubr.f32.mxu0 0.0
  %3460 = vmatmul.mubr.f32.gmra.mrb[0].mxu0 %v3388
  %v3461 = vpop.f32.mrb[0].mxu0
  %v3462 = vadd.f32 0.0, %v3461
  %v3463 = vpop.f32.mrb[0].mxu0
  %3464 = vdwg.mxu0
  %v3465 = vlaneseq
  %v3466 = vshrl.u32 %v3465, 7
  %v3467 = vsub.s32 0, %v3466
  %v3468 = vrot.slane %v3021, %v3467
  %v3470 = vsel %vm65, %v3457, 0
  %v3473 = vsel %vm65, %v3462, 0
  %v3476 = vsel %vm72, %v3007, 0
  %3478 = vmatprep.subr.mxu0 0.0
  %3479 = vmatpush1.msra.mxu0 %v3006
  %3480 = vmatprep.subr.mxu0 0.0
  %3481 = vmatpush1.msra.mxu0 %v3476
  %3482 = vmatprep.subr.mxu0 0.0
  %3483 = vmatpush1.msra.mxu0 0.0
  %3484 = vmatprep.subr.mxu0 0.0
  %3485 = vmatpush1.msra.mxu0 0.0
  %3486 = vmatprep.subr.mxu0 0.0
  %3487 = vmatpush1.msra.mxu0 0.0
  %3488 = vmatprep.subr.mxu0 0.0
  %3489 = vmatpush1.msra.mxu0 0.0
  %3490 = vmatprep.subr.mxu0 0.0
  %3491 = vmatpush1.msra.mxu0 0.0
  %3492 = vmatprep.subr.mxu0 0.0
  %3493 = vmatpush1.msra.mxu0 0.0
  %3494 = vmatprep.subr.mxu0 0.0
  %3495 = vmatpush1.msra.mxu0 0.0
  %3496 = vmatprep.subr.mxu0 0.0
  %3497 = vmatpush1.msra.mxu0 0.0
  %3498 = vmatprep.subr.mxu0 0.0
  %3499 = vmatpush1.msra.mxu0 0.0
  %3500 = vmatprep.subr.mxu0 0.0
  %3501 = vmatpush1.msra.mxu0 0.0
  %3502 = vmatprep.subr.mxu0 0.0
  %3503 = vmatpush1.msra.mxu0 0.0
  %3504 = vmatprep.subr.mxu0 0.0
  %3505 = vmatpush1.msra.mxu0 0.0
  %3506 = vmatprep.subr.mxu0 0.0
  %3507 = vmatpush1.msra.mxu0 0.0
  %3508 = vmatprep.subr.mxu0 0.0
  %3509 = vmatpush1.msra.mxu0 0.0
  %3510 = vmatprep.subr.mxu0 0.0
  %3511 = vmatpush1.msra.mxu0 0.0
  %3512 = vmatprep.subr.mxu0 0.0
  %3513 = vmatpush1.msra.mxu0 0.0
  %3514 = vmatprep.subr.mxu0 0.0
  %3515 = vmatpush1.msra.mxu0 0.0
  %3516 = vmatprep.subr.mxu0 0.0
  %3517 = vmatpush1.msra.mxu0 0.0
  %3518 = vmatprep.subr.mxu0 0.0
  %3519 = vmatpush1.msra.mxu0 0.0
  %3520 = vmatprep.subr.mxu0 0.0
  %3521 = vmatpush1.msra.mxu0 0.0
  %3522 = vmatprep.subr.mxu0 0.0
  %3523 = vmatpush1.msra.mxu0 0.0
  %3524 = vmatprep.subr.mxu0 0.0
  %3525 = vmatpush1.msra.mxu0 0.0
  %3526 = vmatprep.subr.mxu0 0.0
  %3527 = vmatpush1.msra.mxu0 0.0
  %3528 = vmatprep.subr.mxu0 0.0
  %3529 = vmatpush1.msra.mxu0 0.0
  %3530 = vmatprep.subr.mxu0 0.0
  %3531 = vmatpush1.msra.mxu0 0.0
  %3532 = vmatprep.subr.mxu0 0.0
  %3533 = vmatpush1.msra.mxu0 0.0
  %3534 = vmatprep.subr.mxu0 0.0
  %3535 = vmatpush1.msra.mxu0 0.0
  %3536 = vmatprep.subr.mxu0 0.0
  %3537 = vmatpush1.msra.mxu0 0.0
  %3538 = vmatprep.subr.mxu0 0.0
  %3539 = vmatpush1.msra.mxu0 0.0
  %3540 = vmatprep.subr.mxu0 0.0
  %3541 = vmatpush1.msra.mxu0 0.0
  %3542 = vmatprep.mubr.f32.mxu0 0.0
  %3543 = vmatmul.mubr.f32.gmra.mrb[0].mxu0 %v3470
  %v3544 = vpop.f32.mrb[0].mxu0
  %v3545 = vadd.f32 %v3468, %v3544
  %v3546 = vpop.f32.mrb[0].mxu0
  %3547 = vmatprep.mubr.f32.mxu0 0.0
  %3548 = vmatmul.mubr.f32.gmra.mrb[0].mxu0 %v3473
  %v3549 = vpop.f32.mrb[0].mxu0
  %v3550 = vadd.f32 %v3468, %v3549
  %v3551 = vpop.f32.mrb[0].mxu0
  %3552 = vdwg.mxu0
  %v3553 = vadd.f32 %v17, %v3545
  %v3554 = vadd.f32 %v18, %v3550
  %v3555 = vsel %vm65, %v3553, 0.0
  %3556 = vadd.xlane.f32.xlu0 %v3555
  %v3557 = vpop.xlane.xlu0 %3556
  %v3558 = vsel %vm65, %v3554, 0.0
  %3559 = vadd.xlane.f32.xlu0 %v3558
  %v3560 = vpop.xlane.xlu0 %3559
  %v3561 = vmul.f32 %v3557, %v602
  %v3562 = vmul.f32 %v3560, %v602
  %v3563 = vsub.f32 %v3553, %v3561
  %v3564 = vsub.f32 %v3554, %v3562
  %v3565 = vmul.f32 %v3563, %v3563
  %v3566 = vmul.f32 %v3564, %v3564
  %v3567 = vsel %vm65, %v3565, 0.0
  %3568 = vadd.xlane.f32.xlu0 %v3567
  %v3569 = vpop.xlane.xlu0 %3568
  %v3570 = vsel %vm65, %v3566, 0.0
  %3571 = vadd.xlane.f32.xlu0 %v3570
  %v3572 = vpop.xlane.xlu0 %3571
  %v3573 = vmul.f32 %v3569, %v602
  %v3574 = vmul.f32 %v3572, %v602
  %v3575 = vadd.f32 %v3573, 1e-05
  %v3576 = vadd.f32 %v3574, 1e-05
  %v3577 = vrsqrt.pop %v3575
  %v3578 = vrsqrt.pop %v3576
  %v3579 = vmul.f32 %v3563, %v3577
  %v3580 = vmul.f32 %v3564, %v3578
  %v3581 = vlaneseq
  %v3582 = vshrl.u32 %v3581, 7
  %v3583 = vsub.s32 0, %v3582
  %v3584 = vrot.slane %v3022, %v3583
  %v3585 = vmul.f32 %v3579, %v3584
  %v3586 = vmul.f32 %v3580, %v3584
  %v3587 = vlaneseq
  %v3588 = vshrl.u32 %v3587, 7
  %v3589 = vsub.s32 0, %v3588
  %v3590 = vrot.slane %v3023, %v3589
  %v3591 = vadd.f32 %v3585, %v3590
  %v3592 = vadd.f32 %v3586, %v3590
  %v3593 = vlaneseq
  %v3594 = vshrl.u32 %v3593, 7
  %v3595 = vsub.s32 0, %v3594
  %v3596 = vrot.slane %v3024, %v3595
  %v3598 = vsel %vm65, %v3591, 0
  %v3601 = vsel %vm65, %v3592, 0
  %v3604 = vsel %vm72, %v3009, 0
  %3606 = vmatprep.subr.mxu0 0.0
  %3607 = vmatpush1.msra.mxu0 %v3008
  %3608 = vmatprep.subr.mxu0 0.0
  %3609 = vmatpush1.msra.mxu0 %v3604
  %3610 = vmatprep.subr.mxu0 0.0
  %3611 = vmatpush1.msra.mxu0 0.0
  %3612 = vmatprep.subr.mxu0 0.0
  %3613 = vmatpush1.msra.mxu0 0.0
  %3614 = vmatprep.subr.mxu0 0.0
  %3615 = vmatpush1.msra.mxu0 0.0
  %3616 = vmatprep.subr.mxu0 0.0
  %3617 = vmatpush1.msra.mxu0 0.0
  %3618 = vmatprep.subr.mxu0 0.0
  %3619 = vmatpush1.msra.mxu0 0.0
  %3620 = vmatprep.subr.mxu0 0.0
  %3621 = vmatpush1.msra.mxu0 0.0
  %3622 = vmatprep.subr.mxu0 0.0
  %3623 = vmatpush1.msra.mxu0 0.0
  %3624 = vmatprep.subr.mxu0 0.0
  %3625 = vmatpush1.msra.mxu0 0.0
  %3626 = vmatprep.subr.mxu0 0.0
  %3627 = vmatpush1.msra.mxu0 0.0
  %3628 = vmatprep.subr.mxu0 0.0
  %3629 = vmatpush1.msra.mxu0 0.0
  %3630 = vmatprep.subr.mxu0 0.0
  %3631 = vmatpush1.msra.mxu0 0.0
  %3632 = vmatprep.subr.mxu0 0.0
  %3633 = vmatpush1.msra.mxu0 0.0
  %3634 = vmatprep.subr.mxu0 0.0
  %3635 = vmatpush1.msra.mxu0 0.0
  %3636 = vmatprep.subr.mxu0 0.0
  %3637 = vmatpush1.msra.mxu0 0.0
  %3638 = vmatprep.subr.mxu0 0.0
  %3639 = vmatpush1.msra.mxu0 0.0
  %3640 = vmatprep.subr.mxu0 0.0
  %3641 = vmatpush1.msra.mxu0 0.0
  %3642 = vmatprep.subr.mxu0 0.0
  %3643 = vmatpush1.msra.mxu0 0.0
  %3644 = vmatprep.subr.mxu0 0.0
  %3645 = vmatpush1.msra.mxu0 0.0
  %3646 = vmatprep.subr.mxu0 0.0
  %3647 = vmatpush1.msra.mxu0 0.0
  %3648 = vmatprep.subr.mxu0 0.0
  %3649 = vmatpush1.msra.mxu0 0.0
  %3650 = vmatprep.subr.mxu0 0.0
  %3651 = vmatpush1.msra.mxu0 0.0
  %3652 = vmatprep.subr.mxu0 0.0
  %3653 = vmatpush1.msra.mxu0 0.0
  %3654 = vmatprep.subr.mxu0 0.0
  %3655 = vmatpush1.msra.mxu0 0.0
  %3656 = vmatprep.subr.mxu0 0.0
  %3657 = vmatpush1.msra.mxu0 0.0
  %3658 = vmatprep.subr.mxu0 0.0
  %3659 = vmatpush1.msra.mxu0 0.0
  %3660 = vmatprep.subr.mxu0 0.0
  %3661 = vmatpush1.msra.mxu0 0.0
  %3662 = vmatprep.subr.mxu0 0.0
  %3663 = vmatpush1.msra.mxu0 0.0
  %3664 = vmatprep.subr.mxu0 0.0
  %3665 = vmatpush1.msra.mxu0 0.0
  %3666 = vmatprep.subr.mxu0 0.0
  %3667 = vmatpush1.msra.mxu0 0.0
  %3668 = vmatprep.subr.mxu0 0.0
  %3669 = vmatpush1.msra.mxu0 0.0
  %3670 = vmatprep.mubr.f32.mxu0 0.0
  %3671 = vmatmul.mubr.f32.gmra.mrb[0].mxu0 %v3598
  %v3672 = vpop.f32.mrb[0].mxu0
  %v3673 = vadd.f32 %v3596, %v3672
  %v3674 = vpop.f32.mrb[0].mxu0
  %3675 = vmatprep.mubr.f32.mxu0 0.0
  %3676 = vmatmul.mubr.f32.gmra.mrb[0].mxu0 %v3601
  %v3677 = vpop.f32.mrb[0].mxu0
  %v3678 = vadd.f32 %v3596, %v3677
  %v3679 = vpop.f32.mrb[0].mxu0
  %3680 = vdwg.mxu0
  %v3681 = vtanh.pop %v3673
  %v3682 = vtanh.pop %v3678
  %v3683 = vlaneseq
  %v3684 = vshrl.u32 %v3683, 7
  %v3685 = vsub.s32 0, %v3684
  %v3686 = vrot.slane %v3025, %v3685
  %v3688 = vsel %vm729, %v3681, 0
  %v3691 = vsel %vm729, %v3682, 0
  %3693 = vmatprep.subr.mxu0 0.0
  %3694 = vmatpush1.msra.mxu0 %v3010
  %3695 = vmatprep.subr.mxu0 0.0
  %3696 = vmatpush1.msra.mxu0 %v3011
  %3697 = vmatprep.subr.mxu0 0.0
  %3698 = vmatpush1.msra.mxu0 %v3012
  %3699 = vmatprep.subr.mxu0 0.0
  %3700 = vmatpush1.msra.mxu0 %v3013
  %3701 = vmatprep.subr.mxu0 0.0
  %3702 = vmatpush1.msra.mxu0 0.0
  %3703 = vmatprep.subr.mxu0 0.0
  %3704 = vmatpush1.msra.mxu0 0.0
  %3705 = vmatprep.subr.mxu0 0.0
  %3706 = vmatpush1.msra.mxu0 0.0
  %3707 = vmatprep.subr.mxu0 0.0
  %3708 = vmatpush1.msra.mxu0 0.0
  %3709 = vmatprep.subr.mxu0 0.0
  %3710 = vmatpush1.msra.mxu0 0.0
  %3711 = vmatprep.subr.mxu0 0.0
  %3712 = vmatpush1.msra.mxu0 0.0
  %3713 = vmatprep.subr.mxu0 0.0
  %3714 = vmatpush1.msra.mxu0 0.0
  %3715 = vmatprep.subr.mxu0 0.0
  %3716 = vmatpush1.msra.mxu0 0.0
  %3717 = vmatprep.subr.mxu0 0.0
  %3718 = vmatpush1.msra.mxu0 0.0
  %3719 = vmatprep.subr.mxu0 0.0
  %3720 = vmatpush1.msra.mxu0 0.0
  %3721 = vmatprep.subr.mxu0 0.0
  %3722 = vmatpush1.msra.mxu0 0.0
  %3723 = vmatprep.subr.mxu0 0.0
  %3724 = vmatpush1.msra.mxu0 0.0
  %3725 = vmatprep.subr.mxu0 0.0
  %3726 = vmatpush1.msra.mxu0 0.0
  %3727 = vmatprep.subr.mxu0 0.0
  %3728 = vmatpush1.msra.mxu0 0.0
  %3729 = vmatprep.subr.mxu0 0.0
  %3730 = vmatpush1.msra.mxu0 0.0
  %3731 = vmatprep.subr.mxu0 0.0
  %3732 = vmatpush1.msra.mxu0 0.0
  %3733 = vmatprep.subr.mxu0 0.0
  %3734 = vmatpush1.msra.mxu0 0.0
  %3735 = vmatprep.subr.mxu0 0.0
  %3736 = vmatpush1.msra.mxu0 0.0
  %3737 = vmatprep.subr.mxu0 0.0
  %3738 = vmatpush1.msra.mxu0 0.0
  %3739 = vmatprep.subr.mxu0 0.0
  %3740 = vmatpush1.msra.mxu0 0.0
  %3741 = vmatprep.subr.mxu0 0.0
  %3742 = vmatpush1.msra.mxu0 0.0
  %3743 = vmatprep.subr.mxu0 0.0
  %3744 = vmatpush1.msra.mxu0 0.0
  %3745 = vmatprep.subr.mxu0 0.0
  %3746 = vmatpush1.msra.mxu0 0.0
  %3747 = vmatprep.subr.mxu0 0.0
  %3748 = vmatpush1.msra.mxu0 0.0
  %3749 = vmatprep.subr.mxu0 0.0
  %3750 = vmatpush1.msra.mxu0 0.0
  %3751 = vmatprep.subr.mxu0 0.0
  %3752 = vmatpush1.msra.mxu0 0.0
  %3753 = vmatprep.subr.mxu0 0.0
  %3754 = vmatpush1.msra.mxu0 0.0
  %3755 = vmatprep.subr.mxu0 0.0
  %3756 = vmatpush1.msra.mxu0 0.0
  %3757 = vmatprep.mubr.f32.mxu0 0.0
  %3758 = vmatmul.mubr.f32.gmra.mrb[0].mxu0 %v3688
  %v3759 = vpop.f32.mrb[0].mxu0
  %v3760 = vadd.f32 %v3686, %v3759
  %v3761 = vpop.f32.mrb[0].mxu0
  %3762 = vmatprep.mubr.f32.mxu0 0.0
  %3763 = vmatmul.mubr.f32.gmra.mrb[0].mxu0 %v3691
  %v3764 = vpop.f32.mrb[0].mxu0
  %v3765 = vadd.f32 %v3686, %v3764
  %v3766 = vpop.f32.mrb[0].mxu0
  %3767 = vdwg.mxu0
  %v3768 = vtanh.pop %v3760
  %v3769 = vtanh.pop %v3765
  %v3770 = vlaneseq
  %v3771 = vshrl.u32 %v3770, 7
  %v3772 = vsub.s32 0, %v3771
  %v3773 = vrot.slane %v3026, %v3772
  %v3775 = vsel %vm729, %v3768, 0
  %v3778 = vsel %vm729, %v3769, 0
  %3780 = vmatprep.subr.mxu0 0.0
  %3781 = vmatpush1.msra.mxu0 %v3014
  %3782 = vmatprep.subr.mxu0 0.0
  %3783 = vmatpush1.msra.mxu0 %v3015
  %3784 = vmatprep.subr.mxu0 0.0
  %3785 = vmatpush1.msra.mxu0 %v3016
  %3786 = vmatprep.subr.mxu0 0.0
  %3787 = vmatpush1.msra.mxu0 %v3017
  %3788 = vmatprep.subr.mxu0 0.0
  %3789 = vmatpush1.msra.mxu0 0.0
  %3790 = vmatprep.subr.mxu0 0.0
  %3791 = vmatpush1.msra.mxu0 0.0
  %3792 = vmatprep.subr.mxu0 0.0
  %3793 = vmatpush1.msra.mxu0 0.0
  %3794 = vmatprep.subr.mxu0 0.0
  %3795 = vmatpush1.msra.mxu0 0.0
  %3796 = vmatprep.subr.mxu0 0.0
  %3797 = vmatpush1.msra.mxu0 0.0
  %3798 = vmatprep.subr.mxu0 0.0
  %3799 = vmatpush1.msra.mxu0 0.0
  %3800 = vmatprep.subr.mxu0 0.0
  %3801 = vmatpush1.msra.mxu0 0.0
  %3802 = vmatprep.subr.mxu0 0.0
  %3803 = vmatpush1.msra.mxu0 0.0
  %3804 = vmatprep.subr.mxu0 0.0
  %3805 = vmatpush1.msra.mxu0 0.0
  %3806 = vmatprep.subr.mxu0 0.0
  %3807 = vmatpush1.msra.mxu0 0.0
  %3808 = vmatprep.subr.mxu0 0.0
  %3809 = vmatpush1.msra.mxu0 0.0
  %3810 = vmatprep.subr.mxu0 0.0
  %3811 = vmatpush1.msra.mxu0 0.0
  %3812 = vmatprep.subr.mxu0 0.0
  %3813 = vmatpush1.msra.mxu0 0.0
  %3814 = vmatprep.subr.mxu0 0.0
  %3815 = vmatpush1.msra.mxu0 0.0
  %3816 = vmatprep.subr.mxu0 0.0
  %3817 = vmatpush1.msra.mxu0 0.0
  %3818 = vmatprep.subr.mxu0 0.0
  %3819 = vmatpush1.msra.mxu0 0.0
  %3820 = vmatprep.subr.mxu0 0.0
  %3821 = vmatpush1.msra.mxu0 0.0
  %3822 = vmatprep.subr.mxu0 0.0
  %3823 = vmatpush1.msra.mxu0 0.0
  %3824 = vmatprep.subr.mxu0 0.0
  %3825 = vmatpush1.msra.mxu0 0.0
  %3826 = vmatprep.subr.mxu0 0.0
  %3827 = vmatpush1.msra.mxu0 0.0
  %3828 = vmatprep.subr.mxu0 0.0
  %3829 = vmatpush1.msra.mxu0 0.0
  %3830 = vmatprep.subr.mxu0 0.0
  %3831 = vmatpush1.msra.mxu0 0.0
  %3832 = vmatprep.subr.mxu0 0.0
  %3833 = vmatpush1.msra.mxu0 0.0
  %3834 = vmatprep.subr.mxu0 0.0
  %3835 = vmatpush1.msra.mxu0 0.0
  %3836 = vmatprep.subr.mxu0 0.0
  %3837 = vmatpush1.msra.mxu0 0.0
  %3838 = vmatprep.subr.mxu0 0.0
  %3839 = vmatpush1.msra.mxu0 0.0
  %3840 = vmatprep.subr.mxu0 0.0
  %3841 = vmatpush1.msra.mxu0 0.0
  %3842 = vmatprep.subr.mxu0 0.0
  %3843 = vmatpush1.msra.mxu0 0.0
  %3844 = vmatprep.mubr.f32.mxu0 0.0
  %3845 = vmatmul.mubr.f32.gmra.mrb[0].mxu0 %v3775
  %v3846 = vpop.f32.mrb[0].mxu0
  %v3847 = vadd.f32 %v3773, %v3846
  %v3848 = vpop.f32.mrb[0].mxu0
  %3849 = vmatprep.mubr.f32.mxu0 0.0
  %3850 = vmatmul.mubr.f32.gmra.mrb[0].mxu0 %v3778
  %v3851 = vpop.f32.mrb[0].mxu0
  %v3852 = vadd.f32 %v3773, %v3851
  %v3853 = vpop.f32.mrb[0].mxu0
  %3854 = vdwg.mxu0
  %v3855 = vtanh.pop %v3847
  %v3856 = vtanh.pop %v3852
  %v3857 = vadd.f32 %v3591, %v3855
  %v3858 = vadd.f32 %v3592, %v3856
  %v3859 = vsel %vm65, %v3857, 0.0
  %3860 = vadd.xlane.f32.xlu0 %v3859
  %v3861 = vpop.xlane.xlu0 %3860
  %v3862 = vsel %vm65, %v3858, 0.0
  %3863 = vadd.xlane.f32.xlu0 %v3862
  %v3864 = vpop.xlane.xlu0 %3863
  %v3865 = vmul.f32 %v3861, %v602
  %v3866 = vmul.f32 %v3864, %v602
  %v3867 = vsub.f32 %v3857, %v3865
  %v3868 = vsub.f32 %v3858, %v3866
  %v3869 = vmul.f32 %v3867, %v3867
  %v3870 = vmul.f32 %v3868, %v3868
  %v3871 = vsel %vm65, %v3869, 0.0
  %3872 = vadd.xlane.f32.xlu0 %v3871
  %v3873 = vpop.xlane.xlu0 %3872
  %v3874 = vsel %vm65, %v3870, 0.0
  %3875 = vadd.xlane.f32.xlu0 %v3874
  %v3876 = vpop.xlane.xlu0 %3875
  %v3877 = vmul.f32 %v3873, %v602
  %v3878 = vmul.f32 %v3876, %v602
  %v3879 = vadd.f32 %v3877, 1e-05
  %v3880 = vadd.f32 %v3878, 1e-05
  %v3881 = vrsqrt.pop %v3879
  %v3882 = vrsqrt.pop %v3880
  %v3883 = vmul.f32 %v3867, %v3881
  %v3884 = vmul.f32 %v3868, %v3882
  %v3885 = vlaneseq
  %v3886 = vshrl.u32 %v3885, 7
  %v3887 = vsub.s32 0, %v3886
  %v3888 = vrot.slane %v3027, %v3887
  %v3889 = vmul.f32 %v3883, %v3888
  %v3890 = vmul.f32 %v3884, %v3888
  %v3891 = vlaneseq
  %v3892 = vshrl.u32 %v3891, 7
  %v3893 = vsub.s32 0, %v3892
  %v3894 = vrot.slane %v3028, %v3893
  %v3895 = vadd.f32 %v3889, %v3894
  %v3896 = vadd.f32 %v3890, %v3894
  %s3897 = scalar_lea.vmem %s1, 640
  %v3898 = vld [vmem:[%s3897] sm:$0xff]
  %v3899 = vld [vmem:[%s3897 + $0x8] sm:$0xf]
  %v3900 = vld [vmem:[%s3897 + $0x10] sm:$0xff]
  %v3901 = vld [vmem:[%s3897 + $0x18] sm:$0xf]
  %v3902 = vld [vmem:[%s3897 + $0x20] sm:$0xff]
  %v3903 = vld [vmem:[%s3897 + $0x28] sm:$0xf]
  %v3904 = vld [vmem:[%s3897 + $0x30] sm:$0xff]
  %v3905 = vld [vmem:[%s3897 + $0x38] sm:$0xf]
  %v3906 = vld [vmem:[%s3897 + $0x40] sm:$0xff]
  %v3907 = vld [vmem:[%s3897 + $0x48] sm:$0xf]
  %v3908 = vld [vmem:[%s3897 + $0x50] sm:$0xff]
  %v3909 = vld [vmem:[%s3897 + $0x58] sm:$0xff]
  %v3910 = vld [vmem:[%s3897 + $0x60] sm:$0xff]
  %v3911 = vld [vmem:[%s3897 + $0x68] sm:$0xff]
  %v3912 = vld [vmem:[%s3897 + $0x70] sm:$0xff]
  %v3913 = vld [vmem:[%s3897 + $0x78] sm:$0xff]
  %v3914 = vld [vmem:[%s3897 + $0x80] sm:$0xff]
  %v3915 = vld [vmem:[%s3897 + $0x88] sm:$0xff]
  %v3916 = vld [vmem:[%s3897 + $0x90] sm:$0x1]
  %v3917 = vld [vmem:[%s3897 + $0x91] sm:$0x1]
  %v3918 = vld [vmem:[%s3897 + $0x92] sm:$0x1]
  %v3919 = vld [vmem:[%s3897 + $0x93] sm:$0x1]
  %v3920 = vld [vmem:[%s3897 + $0x94] sm:$0x1]
  %v3921 = vld [vmem:[%s3897 + $0x95] sm:$0x1]
  %v3922 = vld [vmem:[%s3897 + $0x96] sm:$0x1]
  %v3923 = vld [vmem:[%s3897 + $0x97] sm:$0x1]
  %v3924 = vld [vmem:[%s3897 + $0x98] sm:$0x1]
  %v3925 = vld [vmem:[%s3897 + $0x99] sm:$0x1]
  %v3926 = vld [vmem:[%s3897 + $0x9a] sm:$0x1]
  %v3927 = vlaneseq
  %v3928 = vshrl.u32 %v3927, 7
  %v3929 = vsub.s32 0, %v3928
  %v3930 = vrot.slane %v3916, %v3929
  %v3932 = vsel %vm65, %v3895, 0
  %v3935 = vsel %vm65, %v3896, 0
  %v3938 = vsel %vm72, %v3899, 0
  %3940 = vmatprep.subr.mxu0 0.0
  %3941 = vmatpush1.msra.mxu0 %v3898
  %3942 = vmatprep.subr.mxu0 0.0
  %3943 = vmatpush1.msra.mxu0 %v3938
  %3944 = vmatprep.subr.mxu0 0.0
  %3945 = vmatpush1.msra.mxu0 0.0
  %3946 = vmatprep.subr.mxu0 0.0
  %3947 = vmatpush1.msra.mxu0 0.0
  %3948 = vmatprep.subr.mxu0 0.0
  %3949 = vmatpush1.msra.mxu0 0.0
  %3950 = vmatprep.subr.mxu0 0.0
  %3951 = vmatpush1.msra.mxu0 0.0
  %3952 = vmatprep.subr.mxu0 0.0
  %3953 = vmatpush1.msra.mxu0 0.0
  %3954 = vmatprep.subr.mxu0 0.0
  %3955 = vmatpush1.msra.mxu0 0.0
  %3956 = vmatprep.subr.mxu0 0.0
  %3957 = vmatpush1.msra.mxu0 0.0
  %3958 = vmatprep.subr.mxu0 0.0
  %3959 = vmatpush1.msra.mxu0 0.0
  %3960 = vmatprep.subr.mxu0 0.0
  %3961 = vmatpush1.msra.mxu0 0.0
  %3962 = vmatprep.subr.mxu0 0.0
  %3963 = vmatpush1.msra.mxu0 0.0
  %3964 = vmatprep.subr.mxu0 0.0
  %3965 = vmatpush1.msra.mxu0 0.0
  %3966 = vmatprep.subr.mxu0 0.0
  %3967 = vmatpush1.msra.mxu0 0.0
  %3968 = vmatprep.subr.mxu0 0.0
  %3969 = vmatpush1.msra.mxu0 0.0
  %3970 = vmatprep.subr.mxu0 0.0
  %3971 = vmatpush1.msra.mxu0 0.0
  %3972 = vmatprep.subr.mxu0 0.0
  %3973 = vmatpush1.msra.mxu0 0.0
  %3974 = vmatprep.subr.mxu0 0.0
  %3975 = vmatpush1.msra.mxu0 0.0
  %3976 = vmatprep.subr.mxu0 0.0
  %3977 = vmatpush1.msra.mxu0 0.0
  %3978 = vmatprep.subr.mxu0 0.0
  %3979 = vmatpush1.msra.mxu0 0.0
  %3980 = vmatprep.subr.mxu0 0.0
  %3981 = vmatpush1.msra.mxu0 0.0
  %3982 = vmatprep.subr.mxu0 0.0
  %3983 = vmatpush1.msra.mxu0 0.0
  %3984 = vmatprep.subr.mxu0 0.0
  %3985 = vmatpush1.msra.mxu0 0.0
  %3986 = vmatprep.subr.mxu0 0.0
  %3987 = vmatpush1.msra.mxu0 0.0
  %3988 = vmatprep.subr.mxu0 0.0
  %3989 = vmatpush1.msra.mxu0 0.0
  %3990 = vmatprep.subr.mxu0 0.0
  %3991 = vmatpush1.msra.mxu0 0.0
  %3992 = vmatprep.subr.mxu0 0.0
  %3993 = vmatpush1.msra.mxu0 0.0
  %3994 = vmatprep.subr.mxu0 0.0
  %3995 = vmatpush1.msra.mxu0 0.0
  %3996 = vmatprep.subr.mxu0 0.0
  %3997 = vmatpush1.msra.mxu0 0.0
  %3998 = vmatprep.subr.mxu0 0.0
  %3999 = vmatpush1.msra.mxu0 0.0
  %4000 = vmatprep.subr.mxu0 0.0
  %4001 = vmatpush1.msra.mxu0 0.0
  %4002 = vmatprep.subr.mxu0 0.0
  %4003 = vmatpush1.msra.mxu0 0.0
  %4004 = vmatprep.mubr.f32.mxu0 0.0
  %4005 = vmatmul.mubr.f32.gmra.mrb[0].mxu0 %v3932
  %v4006 = vpop.f32.mrb[0].mxu0
  %v4007 = vadd.f32 %v3930, %v4006
  %v4008 = vpop.f32.mrb[0].mxu0
  %4009 = vmatprep.mubr.f32.mxu0 0.0
  %4010 = vmatmul.mubr.f32.gmra.mrb[0].mxu0 %v3935
  %v4011 = vpop.f32.mrb[0].mxu0
  %v4012 = vadd.f32 %v3930, %v4011
  %v4013 = vpop.f32.mrb[0].mxu0
  %4014 = vdwg.mxu0
  %v4015 = vlaneseq
  %v4016 = vshrl.u32 %v4015, 7
  %v4017 = vsub.s32 0, %v4016
  %v4018 = vrot.slane %v3917, %v4017
  %v4020 = vsel %vm72, %v3901, 0
  %4022 = vmatprep.subr.mxu0 0.0
  %4023 = vmatpush1.msra.mxu0 %v3900
  %4024 = vmatprep.subr.mxu0 0.0
  %4025 = vmatpush1.msra.mxu0 %v4020
  %4026 = vmatprep.subr.mxu0 0.0
  %4027 = vmatpush1.msra.mxu0 0.0
  %4028 = vmatprep.subr.mxu0 0.0
  %4029 = vmatpush1.msra.mxu0 0.0
  %4030 = vmatprep.subr.mxu0 0.0
  %4031 = vmatpush1.msra.mxu0 0.0
  %4032 = vmatprep.subr.mxu0 0.0
  %4033 = vmatpush1.msra.mxu0 0.0
  %4034 = vmatprep.subr.mxu0 0.0
  %4035 = vmatpush1.msra.mxu0 0.0
  %4036 = vmatprep.subr.mxu0 0.0
  %4037 = vmatpush1.msra.mxu0 0.0
  %4038 = vmatprep.subr.mxu0 0.0
  %4039 = vmatpush1.msra.mxu0 0.0
  %4040 = vmatprep.subr.mxu0 0.0
  %4041 = vmatpush1.msra.mxu0 0.0
  %4042 = vmatprep.subr.mxu0 0.0
  %4043 = vmatpush1.msra.mxu0 0.0
  %4044 = vmatprep.subr.mxu0 0.0
  %4045 = vmatpush1.msra.mxu0 0.0
  %4046 = vmatprep.subr.mxu0 0.0
  %4047 = vmatpush1.msra.mxu0 0.0
  %4048 = vmatprep.subr.mxu0 0.0
  %4049 = vmatpush1.msra.mxu0 0.0
  %4050 = vmatprep.subr.mxu0 0.0
  %4051 = vmatpush1.msra.mxu0 0.0
  %4052 = vmatprep.subr.mxu0 0.0
  %4053 = vmatpush1.msra.mxu0 0.0
  %4054 = vmatprep.subr.mxu0 0.0
  %4055 = vmatpush1.msra.mxu0 0.0
  %4056 = vmatprep.subr.mxu0 0.0
  %4057 = vmatpush1.msra.mxu0 0.0
  %4058 = vmatprep.subr.mxu0 0.0
  %4059 = vmatpush1.msra.mxu0 0.0
  %4060 = vmatprep.subr.mxu0 0.0
  %4061 = vmatpush1.msra.mxu0 0.0
  %4062 = vmatprep.subr.mxu0 0.0
  %4063 = vmatpush1.msra.mxu0 0.0
  %4064 = vmatprep.subr.mxu0 0.0
  %4065 = vmatpush1.msra.mxu0 0.0
  %4066 = vmatprep.subr.mxu0 0.0
  %4067 = vmatpush1.msra.mxu0 0.0
  %4068 = vmatprep.subr.mxu0 0.0
  %4069 = vmatpush1.msra.mxu0 0.0
  %4070 = vmatprep.subr.mxu0 0.0
  %4071 = vmatpush1.msra.mxu0 0.0
  %4072 = vmatprep.subr.mxu0 0.0
  %4073 = vmatpush1.msra.mxu0 0.0
  %4074 = vmatprep.subr.mxu0 0.0
  %4075 = vmatpush1.msra.mxu0 0.0
  %4076 = vmatprep.subr.mxu0 0.0
  %4077 = vmatpush1.msra.mxu0 0.0
  %4078 = vmatprep.subr.mxu0 0.0
  %4079 = vmatpush1.msra.mxu0 0.0
  %4080 = vmatprep.subr.mxu0 0.0
  %4081 = vmatpush1.msra.mxu0 0.0
  %4082 = vmatprep.subr.mxu0 0.0
  %4083 = vmatpush1.msra.mxu0 0.0
  %4084 = vmatprep.subr.mxu0 0.0
  %4085 = vmatpush1.msra.mxu0 0.0
  %4086 = vmatprep.mubr.f32.mxu0 0.0
  %4087 = vmatmul.mubr.f32.gmra.mrb[0].mxu0 %v3932
  %v4088 = vpop.f32.mrb[0].mxu0
  %v4089 = vadd.f32 %v4018, %v4088
  %v4090 = vpop.f32.mrb[0].mxu0
  %4091 = vmatprep.mubr.f32.mxu0 0.0
  %4092 = vmatmul.mubr.f32.gmra.mrb[0].mxu0 %v3935
  %v4093 = vpop.f32.mrb[0].mxu0
  %v4094 = vadd.f32 %v4018, %v4093
  %v4095 = vpop.f32.mrb[0].mxu0
  %4096 = vdwg.mxu0
  %v4097 = vlaneseq
  %v4098 = vshrl.u32 %v4097, 7
  %v4099 = vsub.s32 0, %v4098
  %v4100 = vrot.slane %v3918, %v4099
  %v4102 = vsel %vm72, %v3903, 0
  %4104 = vmatprep.subr.mxu0 0.0
  %4105 = vmatpush1.msra.mxu0 %v3902
  %4106 = vmatprep.subr.mxu0 0.0
  %4107 = vmatpush1.msra.mxu0 %v4102
  %4108 = vmatprep.subr.mxu0 0.0
  %4109 = vmatpush1.msra.mxu0 0.0
  %4110 = vmatprep.subr.mxu0 0.0
  %4111 = vmatpush1.msra.mxu0 0.0
  %4112 = vmatprep.subr.mxu0 0.0
  %4113 = vmatpush1.msra.mxu0 0.0
  %4114 = vmatprep.subr.mxu0 0.0
  %4115 = vmatpush1.msra.mxu0 0.0
  %4116 = vmatprep.subr.mxu0 0.0
  %4117 = vmatpush1.msra.mxu0 0.0
  %4118 = vmatprep.subr.mxu0 0.0
  %4119 = vmatpush1.msra.mxu0 0.0
  %4120 = vmatprep.subr.mxu0 0.0
  %4121 = vmatpush1.msra.mxu0 0.0
  %4122 = vmatprep.subr.mxu0 0.0
  %4123 = vmatpush1.msra.mxu0 0.0
  %4124 = vmatprep.subr.mxu0 0.0
  %4125 = vmatpush1.msra.mxu0 0.0
  %4126 = vmatprep.subr.mxu0 0.0
  %4127 = vmatpush1.msra.mxu0 0.0
  %4128 = vmatprep.subr.mxu0 0.0
  %4129 = vmatpush1.msra.mxu0 0.0
  %4130 = vmatprep.subr.mxu0 0.0
  %4131 = vmatpush1.msra.mxu0 0.0
  %4132 = vmatprep.subr.mxu0 0.0
  %4133 = vmatpush1.msra.mxu0 0.0
  %4134 = vmatprep.subr.mxu0 0.0
  %4135 = vmatpush1.msra.mxu0 0.0
  %4136 = vmatprep.subr.mxu0 0.0
  %4137 = vmatpush1.msra.mxu0 0.0
  %4138 = vmatprep.subr.mxu0 0.0
  %4139 = vmatpush1.msra.mxu0 0.0
  %4140 = vmatprep.subr.mxu0 0.0
  %4141 = vmatpush1.msra.mxu0 0.0
  %4142 = vmatprep.subr.mxu0 0.0
  %4143 = vmatpush1.msra.mxu0 0.0
  %4144 = vmatprep.subr.mxu0 0.0
  %4145 = vmatpush1.msra.mxu0 0.0
  %4146 = vmatprep.subr.mxu0 0.0
  %4147 = vmatpush1.msra.mxu0 0.0
  %4148 = vmatprep.subr.mxu0 0.0
  %4149 = vmatpush1.msra.mxu0 0.0
  %4150 = vmatprep.subr.mxu0 0.0
  %4151 = vmatpush1.msra.mxu0 0.0
  %4152 = vmatprep.subr.mxu0 0.0
  %4153 = vmatpush1.msra.mxu0 0.0
  %4154 = vmatprep.subr.mxu0 0.0
  %4155 = vmatpush1.msra.mxu0 0.0
  %4156 = vmatprep.subr.mxu0 0.0
  %4157 = vmatpush1.msra.mxu0 0.0
  %4158 = vmatprep.subr.mxu0 0.0
  %4159 = vmatpush1.msra.mxu0 0.0
  %4160 = vmatprep.subr.mxu0 0.0
  %4161 = vmatpush1.msra.mxu0 0.0
  %4162 = vmatprep.subr.mxu0 0.0
  %4163 = vmatpush1.msra.mxu0 0.0
  %4164 = vmatprep.subr.mxu0 0.0
  %4165 = vmatpush1.msra.mxu0 0.0
  %4166 = vmatprep.subr.mxu0 0.0
  %4167 = vmatpush1.msra.mxu0 0.0
  %4168 = vmatprep.mubr.f32.mxu0 0.0
  %4169 = vmatmul.mubr.f32.gmra.mrb[0].mxu0 %v3932
  %v4170 = vpop.f32.mrb[0].mxu0
  %v4171 = vadd.f32 %v4100, %v4170
  %v4172 = vpop.f32.mrb[0].mxu0
  %4173 = vmatprep.mubr.f32.mxu0 0.0
  %4174 = vmatmul.mubr.f32.gmra.mrb[0].mxu0 %v3935
  %v4175 = vpop.f32.mrb[0].mxu0
  %v4176 = vadd.f32 %v4100, %v4175
  %v4177 = vpop.f32.mrb[0].mxu0
  %4178 = vdwg.mxu0
  %v4180 = vsel %vm65, %v4007, 0
  %v4183 = vsel %vm65, %v4012, 0
  %v4186 = vsel %vm65, %v4089, 0
  %v4189 = vsel %vm65, %v4094, 0
  %4191 = vmatprep.subr.mxu0 0.0
  %4192 = vmatpush1.xpose.msra.mxu0 %v4186
  %4193 = vmatprep.subr.mxu0 0.0
  %4194 = vmatpush1.xpose.msra.mxu0 %v4189
  %4195 = vmatprep.subr.mxu0 0.0
  %4196 = vmatpush1.xpose.msra.mxu0 0.0
  %4197 = vmatprep.subr.mxu0 0.0
  %4198 = vmatpush1.xpose.msra.mxu0 0.0
  %4199 = vmatprep.subr.mxu0 0.0
  %4200 = vmatpush1.xpose.msra.mxu0 0.0
  %4201 = vmatprep.subr.mxu0 0.0
  %4202 = vmatpush1.xpose.msra.mxu0 0.0
  %4203 = vmatprep.subr.mxu0 0.0
  %4204 = vmatpush1.xpose.msra.mxu0 0.0
  %4205 = vmatprep.subr.mxu0 0.0
  %4206 = vmatpush1.xpose.msra.mxu0 0.0
  %4207 = vmatprep.subr.mxu0 0.0
  %4208 = vmatpush1.xpose.msra.mxu0 0.0
  %4209 = vmatprep.subr.mxu0 0.0
  %4210 = vmatpush1.xpose.msra.mxu0 0.0
  %4211 = vmatprep.subr.mxu0 0.0
  %4212 = vmatpush1.xpose.msra.mxu0 0.0
  %4213 = vmatprep.subr.mxu0 0.0
  %4214 = vmatpush1.xpose.msra.mxu0 0.0
  %4215 = vmatprep.subr.mxu0 0.0
  %4216 = vmatpush1.xpose.msra.mxu0 0.0
  %4217 = vmatprep.subr.mxu0 0.0
  %4218 = vmatpush1.xpose.msra.mxu0 0.0
  %4219 = vmatprep.subr.mxu0 0.0
  %4220 = vmatpush1.xpose.msra.mxu0 0.0
  %4221 = vmatprep.subr.mxu0 0.0
  %4222 = vmatpush1.xpose.msra.mxu0 0.0
  %4223 = vmatprep.subr.mxu0 0.0
  %4224 = vmatpush1.xpose.msra.mxu0 0.0
  %4225 = vmatprep.subr.mxu0 0.0
  %4226 = vmatpush1.xpose.msra.mxu0 0.0
  %4227 = vmatprep.subr.mxu0 0.0
  %4228 = vmatpush1.xpose.msra.mxu0 0.0
  %4229 = vmatprep.subr.mxu0 0.0
  %4230 = vmatpush1.xpose.msra.mxu0 0.0
  %4231 = vmatprep.subr.mxu0 0.0
  %4232 = vmatpush1.xpose.msra.mxu0 0.0
  %4233 = vmatprep.subr.mxu0 0.0
  %4234 = vmatpush1.xpose.msra.mxu0 0.0
  %4235 = vmatprep.subr.mxu0 0.0
  %4236 = vmatpush1.xpose.msra.mxu0 0.0
  %4237 = vmatprep.subr.mxu0 0.0
  %4238 = vmatpush1.xpose.msra.mxu0 0.0
  %4239 = vmatprep.subr.mxu0 0.0
  %4240 = vmatpush1.xpose.msra.mxu0 0.0
  %4241 = vmatprep.subr.mxu0 0.0
  %4242 = vmatpush1.xpose.msra.mxu0 0.0
  %4243 = vmatprep.subr.mxu0 0.0
  %4244 = vmatpush1.xpose.msra.mxu0 0.0
  %4245 = vmatprep.subr.mxu0 0.0
  %4246 = vmatpush1.xpose.msra.mxu0 0.0
  %4247 = vmatprep.subr.mxu0 0.0
  %4248 = vmatpush1.xpose.msra.mxu0 0.0
  %4249 = vmatprep.subr.mxu0 0.0
  %4250 = vmatpush1.xpose.msra.mxu0 0.0
  %4251 = vmatprep.subr.mxu0 0.0
  %4252 = vmatpush1.xpose.msra.mxu0 0.0
  %4253 = vmatprep.subr.mxu0 0.0
  %4254 = vmatpush1.xpose.msra.mxu0 0.0
  %4255 = vmatprep.mubr.f32.mxu0 0.0
  %4256 = vmatmul.mubr.f32.gmra.mrb[0].mxu0 %v4180
  %v4257 = vpop.f32.mrb[0].mxu0
  %v4258 = vadd.f32 %v21, %v4257
  %v4259 = vpop.f32.mrb[0].mxu0
  %4260 = vmatprep.mubr.f32.mxu0 0.0
  %4261 = vmatmul.mubr.f32.gmra.mrb[0].mxu0 %v4183
  %v4262 = vpop.f32.mrb[0].mxu0
  %v4263 = vadd.f32 %v22, %v4262
  %v4264 = vpop.f32.mrb[0].mxu0
  %4265 = vdwg.mxu0
  %v4266 = vsel %vm402, %v4258, -inf
  %4267 = vmax.xlane.f32.xlu0 %v4266
  %v4268 = vpop.xlane.xlu0 %4267
  %v4269 = vsel %vm402, %v4263, -inf
  %4270 = vmax.xlane.f32.xlu0 %v4269
  %v4271 = vpop.xlane.xlu0 %4270
  %v4272 = vsub.f32 %v4258, %v4268
  %v4273 = vsub.f32 %v4263, %v4271
  %v4274 = vmul.f32 %v4272, 1.442695
  %v4275 = vpow.pop %v4274
  %v4276 = vmul.f32 %v4273, 1.442695
  %v4277 = vpow.pop %v4276
  %v4278 = vsel %vm402, %v4275, 0.0
  %4279 = vadd.xlane.f32.xlu0 %v4278
  %v4280 = vpop.xlane.xlu0 %4279
  %v4281 = vsel %vm402, %v4277, 0.0
  %4282 = vadd.xlane.f32.xlu0 %v4281
  %v4283 = vpop.xlane.xlu0 %4282
  %v4284 = vrcp.pop %v4280
  %v4285 = vmul.f32 %v4275, %v4284
  %v4286 = vrcp.pop %v4283
  %v4287 = vmul.f32 %v4277, %v4286
  %v4289 = vsel %vm402, %v4285, 0
  %v4292 = vsel %vm402, %v4287, 0
  %4294 = vmatprep.subr.mxu0 0.0
  %4295 = vmatpush1.msra.mxu0 %v4171
  %4296 = vmatprep.subr.mxu0 0.0
  %4297 = vmatpush1.msra.mxu0 %v4176
  %4298 = vmatprep.subr.mxu0 0.0
  %4299 = vmatpush1.msra.mxu0 0.0
  %4300 = vmatprep.subr.mxu0 0.0
  %4301 = vmatpush1.msra.mxu0 0.0
  %4302 = vmatprep.subr.mxu0 0.0
  %4303 = vmatpush1.msra.mxu0 0.0
  %4304 = vmatprep.subr.mxu0 0.0
  %4305 = vmatpush1.msra.mxu0 0.0
  %4306 = vmatprep.subr.mxu0 0.0
  %4307 = vmatpush1.msra.mxu0 0.0
  %4308 = vmatprep.subr.mxu0 0.0
  %4309 = vmatpush1.msra.mxu0 0.0
  %4310 = vmatprep.subr.mxu0 0.0
  %4311 = vmatpush1.msra.mxu0 0.0
  %4312 = vmatprep.subr.mxu0 0.0
  %4313 = vmatpush1.msra.mxu0 0.0
  %4314 = vmatprep.subr.mxu0 0.0
  %4315 = vmatpush1.msra.mxu0 0.0
  %4316 = vmatprep.subr.mxu0 0.0
  %4317 = vmatpush1.msra.mxu0 0.0
  %4318 = vmatprep.subr.mxu0 0.0
  %4319 = vmatpush1.msra.mxu0 0.0
  %4320 = vmatprep.subr.mxu0 0.0
  %4321 = vmatpush1.msra.mxu0 0.0
  %4322 = vmatprep.subr.mxu0 0.0
  %4323 = vmatpush1.msra.mxu0 0.0
  %4324 = vmatprep.subr.mxu0 0.0
  %4325 = vmatpush1.msra.mxu0 0.0
  %4326 = vmatprep.subr.mxu0 0.0
  %4327 = vmatpush1.msra.mxu0 0.0
  %4328 = vmatprep.subr.mxu0 0.0
  %4329 = vmatpush1.msra.mxu0 0.0
  %4330 = vmatprep.subr.mxu0 0.0
  %4331 = vmatpush1.msra.mxu0 0.0
  %4332 = vmatprep.subr.mxu0 0.0
  %4333 = vmatpush1.msra.mxu0 0.0
  %4334 = vmatprep.subr.mxu0 0.0
  %4335 = vmatpush1.msra.mxu0 0.0
  %4336 = vmatprep.subr.mxu0 0.0
  %4337 = vmatpush1.msra.mxu0 0.0
  %4338 = vmatprep.subr.mxu0 0.0
  %4339 = vmatpush1.msra.mxu0 0.0
  %4340 = vmatprep.subr.mxu0 0.0
  %4341 = vmatpush1.msra.mxu0 0.0
  %4342 = vmatprep.subr.mxu0 0.0
  %4343 = vmatpush1.msra.mxu0 0.0
  %4344 = vmatprep.subr.mxu0 0.0
  %4345 = vmatpush1.msra.mxu0 0.0
  %4346 = vmatprep.subr.mxu0 0.0
  %4347 = vmatpush1.msra.mxu0 0.0
  %4348 = vmatprep.subr.mxu0 0.0
  %4349 = vmatpush1.msra.mxu0 0.0
  %4350 = vmatprep.subr.mxu0 0.0
  %4351 = vmatpush1.msra.mxu0 0.0
  %4352 = vmatprep.subr.mxu0 0.0
  %4353 = vmatpush1.msra.mxu0 0.0
  %4354 = vmatprep.subr.mxu0 0.0
  %4355 = vmatpush1.msra.mxu0 0.0
  %4356 = vmatprep.subr.mxu0 0.0
  %4357 = vmatpush1.msra.mxu0 0.0
  %4358 = vmatprep.mubr.f32.mxu0 0.0
  %4359 = vmatmul.mubr.f32.gmra.mrb[0].mxu0 %v4289
  %v4360 = vpop.f32.mrb[0].mxu0
  %v4361 = vadd.f32 0.0, %v4360
  %v4362 = vpop.f32.mrb[0].mxu0
  %4363 = vmatprep.mubr.f32.mxu0 0.0
  %4364 = vmatmul.mubr.f32.gmra.mrb[0].mxu0 %v4292
  %v4365 = vpop.f32.mrb[0].mxu0
  %v4366 = vadd.f32 0.0, %v4365
  %v4367 = vpop.f32.mrb[0].mxu0
  %4368 = vdwg.mxu0
  %v4369 = vlaneseq
  %v4370 = vshrl.u32 %v4369, 7
  %v4371 = vsub.s32 0, %v4370
  %v4372 = vrot.slane %v3919, %v4371
  %v4374 = vsel %vm65, %v4361, 0
  %v4377 = vsel %vm65, %v4366, 0
  %v4380 = vsel %vm72, %v3905, 0
  %4382 = vmatprep.subr.mxu0 0.0
  %4383 = vmatpush1.msra.mxu0 %v3904
  %4384 = vmatprep.subr.mxu0 0.0
  %4385 = vmatpush1.msra.mxu0 %v4380
  %4386 = vmatprep.subr.mxu0 0.0
  %4387 = vmatpush1.msra.mxu0 0.0
  %4388 = vmatprep.subr.mxu0 0.0
  %4389 = vmatpush1.msra.mxu0 0.0
  %4390 = vmatprep.subr.mxu0 0.0
  %4391 = vmatpush1.msra.mxu0 0.0
  %4392 = vmatprep.subr.mxu0 0.0
  %4393 = vmatpush1.msra.mxu0 0.0
  %4394 = vmatprep.subr.mxu0 0.0
  %4395 = vmatpush1.msra.mxu0 0.0
  %4396 = vmatprep.subr.mxu0 0.0
  %4397 = vmatpush1.msra.mxu0 0.0
  %4398 = vmatprep.subr.mxu0 0.0
  %4399 = vmatpush1.msra.mxu0 0.0
  %4400 = vmatprep.subr.mxu0 0.0
  %4401 = vmatpush1.msra.mxu0 0.0
  %4402 = vmatprep.subr.mxu0 0.0
  %4403 = vmatpush1.msra.mxu0 0.0
  %4404 = vmatprep.subr.mxu0 0.0
  %4405 = vmatpush1.msra.mxu0 0.0
  %4406 = vmatprep.subr.mxu0 0.0
  %4407 = vmatpush1.msra.mxu0 0.0
  %4408 = vmatprep.subr.mxu0 0.0
  %4409 = vmatpush1.msra.mxu0 0.0
  %4410 = vmatprep.subr.mxu0 0.0
  %4411 = vmatpush1.msra.mxu0 0.0
  %4412 = vmatprep.subr.mxu0 0.0
  %4413 = vmatpush1.msra.mxu0 0.0
  %4414 = vmatprep.subr.mxu0 0.0
  %4415 = vmatpush1.msra.mxu0 0.0
  %4416 = vmatprep.subr.mxu0 0.0
  %4417 = vmatpush1.msra.mxu0 0.0
  %4418 = vmatprep.subr.mxu0 0.0
  %4419 = vmatpush1.msra.mxu0 0.0
  %4420 = vmatprep.subr.mxu0 0.0
  %4421 = vmatpush1.msra.mxu0 0.0
  %4422 = vmatprep.subr.mxu0 0.0
  %4423 = vmatpush1.msra.mxu0 0.0
  %4424 = vmatprep.subr.mxu0 0.0
  %4425 = vmatpush1.msra.mxu0 0.0
  %4426 = vmatprep.subr.mxu0 0.0
  %4427 = vmatpush1.msra.mxu0 0.0
  %4428 = vmatprep.subr.mxu0 0.0
  %4429 = vmatpush1.msra.mxu0 0.0
  %4430 = vmatprep.subr.mxu0 0.0
  %4431 = vmatpush1.msra.mxu0 0.0
  %4432 = vmatprep.subr.mxu0 0.0
  %4433 = vmatpush1.msra.mxu0 0.0
  %4434 = vmatprep.subr.mxu0 0.0
  %4435 = vmatpush1.msra.mxu0 0.0
  %4436 = vmatprep.subr.mxu0 0.0
  %4437 = vmatpush1.msra.mxu0 0.0
  %4438 = vmatprep.subr.mxu0 0.0
  %4439 = vmatpush1.msra.mxu0 0.0
  %4440 = vmatprep.subr.mxu0 0.0
  %4441 = vmatpush1.msra.mxu0 0.0
  %4442 = vmatprep.subr.mxu0 0.0
  %4443 = vmatpush1.msra.mxu0 0.0
  %4444 = vmatprep.subr.mxu0 0.0
  %4445 = vmatpush1.msra.mxu0 0.0
  %4446 = vmatprep.mubr.f32.mxu0 0.0
  %4447 = vmatmul.mubr.f32.gmra.mrb[0].mxu0 %v4374
  %v4448 = vpop.f32.mrb[0].mxu0
  %v4449 = vadd.f32 %v4372, %v4448
  %v4450 = vpop.f32.mrb[0].mxu0
  %4451 = vmatprep.mubr.f32.mxu0 0.0
  %4452 = vmatmul.mubr.f32.gmra.mrb[0].mxu0 %v4377
  %v4453 = vpop.f32.mrb[0].mxu0
  %v4454 = vadd.f32 %v4372, %v4453
  %v4455 = vpop.f32.mrb[0].mxu0
  %4456 = vdwg.mxu0
  %v4457 = vadd.f32 %v3895, %v4449
  %v4458 = vadd.f32 %v3896, %v4454
  %v4459 = vsel %vm65, %v4457, 0.0
  %4460 = vadd.xlane.f32.xlu0 %v4459
  %v4461 = vpop.xlane.xlu0 %4460
  %v4462 = vsel %vm65, %v4458, 0.0
  %4463 = vadd.xlane.f32.xlu0 %v4462
  %v4464 = vpop.xlane.xlu0 %4463
  %v4465 = vmul.f32 %v4461, %v602
  %v4466 = vmul.f32 %v4464, %v602
  %v4467 = vsub.f32 %v4457, %v4465
  %v4468 = vsub.f32 %v4458, %v4466
  %v4469 = vmul.f32 %v4467, %v4467
  %v4470 = vmul.f32 %v4468, %v4468
  %v4471 = vsel %vm65, %v4469, 0.0
  %4472 = vadd.xlane.f32.xlu0 %v4471
  %v4473 = vpop.xlane.xlu0 %4472
  %v4474 = vsel %vm65, %v4470, 0.0
  %4475 = vadd.xlane.f32.xlu0 %v4474
  %v4476 = vpop.xlane.xlu0 %4475
  %v4477 = vmul.f32 %v4473, %v602
  %v4478 = vmul.f32 %v4476, %v602
  %v4479 = vadd.f32 %v4477, 1e-05
  %v4480 = vadd.f32 %v4478, 1e-05
  %v4481 = vrsqrt.pop %v4479
  %v4482 = vrsqrt.pop %v4480
  %v4483 = vmul.f32 %v4467, %v4481
  %v4484 = vmul.f32 %v4468, %v4482
  %v4485 = vlaneseq
  %v4486 = vshrl.u32 %v4485, 7
  %v4487 = vsub.s32 0, %v4486
  %v4488 = vrot.slane %v3920, %v4487
  %v4489 = vmul.f32 %v4483, %v4488
  %v4490 = vmul.f32 %v4484, %v4488
  %v4491 = vlaneseq
  %v4492 = vshrl.u32 %v4491, 7
  %v4493 = vsub.s32 0, %v4492
  %v4494 = vrot.slane %v3921, %v4493
  %v4495 = vadd.f32 %v4489, %v4494
  %v4496 = vadd.f32 %v4490, %v4494
  %v4497 = vlaneseq
  %v4498 = vshrl.u32 %v4497, 7
  %v4499 = vsub.s32 0, %v4498
  %v4500 = vrot.slane %v3922, %v4499
  %v4502 = vsel %vm65, %v4495, 0
  %v4505 = vsel %vm65, %v4496, 0
  %v4508 = vsel %vm72, %v3907, 0
  %4510 = vmatprep.subr.mxu0 0.0
  %4511 = vmatpush1.msra.mxu0 %v3906
  %4512 = vmatprep.subr.mxu0 0.0
  %4513 = vmatpush1.msra.mxu0 %v4508
  %4514 = vmatprep.subr.mxu0 0.0
  %4515 = vmatpush1.msra.mxu0 0.0
  %4516 = vmatprep.subr.mxu0 0.0
  %4517 = vmatpush1.msra.mxu0 0.0
  %4518 = vmatprep.subr.mxu0 0.0
  %4519 = vmatpush1.msra.mxu0 0.0
  %4520 = vmatprep.subr.mxu0 0.0
  %4521 = vmatpush1.msra.mxu0 0.0
  %4522 = vmatprep.subr.mxu0 0.0
  %4523 = vmatpush1.msra.mxu0 0.0
  %4524 = vmatprep.subr.mxu0 0.0
  %4525 = vmatpush1.msra.mxu0 0.0
  %4526 = vmatprep.subr.mxu0 0.0
  %4527 = vmatpush1.msra.mxu0 0.0
  %4528 = vmatprep.subr.mxu0 0.0
  %4529 = vmatpush1.msra.mxu0 0.0
  %4530 = vmatprep.subr.mxu0 0.0
  %4531 = vmatpush1.msra.mxu0 0.0
  %4532 = vmatprep.subr.mxu0 0.0
  %4533 = vmatpush1.msra.mxu0 0.0
  %4534 = vmatprep.subr.mxu0 0.0
  %4535 = vmatpush1.msra.mxu0 0.0
  %4536 = vmatprep.subr.mxu0 0.0
  %4537 = vmatpush1.msra.mxu0 0.0
  %4538 = vmatprep.subr.mxu0 0.0
  %4539 = vmatpush1.msra.mxu0 0.0
  %4540 = vmatprep.subr.mxu0 0.0
  %4541 = vmatpush1.msra.mxu0 0.0
  %4542 = vmatprep.subr.mxu0 0.0
  %4543 = vmatpush1.msra.mxu0 0.0
  %4544 = vmatprep.subr.mxu0 0.0
  %4545 = vmatpush1.msra.mxu0 0.0
  %4546 = vmatprep.subr.mxu0 0.0
  %4547 = vmatpush1.msra.mxu0 0.0
  %4548 = vmatprep.subr.mxu0 0.0
  %4549 = vmatpush1.msra.mxu0 0.0
  %4550 = vmatprep.subr.mxu0 0.0
  %4551 = vmatpush1.msra.mxu0 0.0
  %4552 = vmatprep.subr.mxu0 0.0
  %4553 = vmatpush1.msra.mxu0 0.0
  %4554 = vmatprep.subr.mxu0 0.0
  %4555 = vmatpush1.msra.mxu0 0.0
  %4556 = vmatprep.subr.mxu0 0.0
  %4557 = vmatpush1.msra.mxu0 0.0
  %4558 = vmatprep.subr.mxu0 0.0
  %4559 = vmatpush1.msra.mxu0 0.0
  %4560 = vmatprep.subr.mxu0 0.0
  %4561 = vmatpush1.msra.mxu0 0.0
  %4562 = vmatprep.subr.mxu0 0.0
  %4563 = vmatpush1.msra.mxu0 0.0
  %4564 = vmatprep.subr.mxu0 0.0
  %4565 = vmatpush1.msra.mxu0 0.0
  %4566 = vmatprep.subr.mxu0 0.0
  %4567 = vmatpush1.msra.mxu0 0.0
  %4568 = vmatprep.subr.mxu0 0.0
  %4569 = vmatpush1.msra.mxu0 0.0
  %4570 = vmatprep.subr.mxu0 0.0
  %4571 = vmatpush1.msra.mxu0 0.0
  %4572 = vmatprep.subr.mxu0 0.0
  %4573 = vmatpush1.msra.mxu0 0.0
  %4574 = vmatprep.mubr.f32.mxu0 0.0
  %4575 = vmatmul.mubr.f32.gmra.mrb[0].mxu0 %v4502
  %v4576 = vpop.f32.mrb[0].mxu0
  %v4577 = vadd.f32 %v4500, %v4576
  %v4578 = vpop.f32.mrb[0].mxu0
  %4579 = vmatprep.mubr.f32.mxu0 0.0
  %4580 = vmatmul.mubr.f32.gmra.mrb[0].mxu0 %v4505
  %v4581 = vpop.f32.mrb[0].mxu0
  %v4582 = vadd.f32 %v4500, %v4581
  %v4583 = vpop.f32.mrb[0].mxu0
  %4584 = vdwg.mxu0
  %v4585 = vtanh.pop %v4577
  %v4586 = vtanh.pop %v4582
  %v4587 = vlaneseq
  %v4588 = vshrl.u32 %v4587, 7
  %v4589 = vsub.s32 0, %v4588
  %v4590 = vrot.slane %v3923, %v4589
  %v4592 = vsel %vm729, %v4585, 0
  %v4595 = vsel %vm729, %v4586, 0
  %4597 = vmatprep.subr.mxu0 0.0
  %4598 = vmatpush1.msra.mxu0 %v3908
  %4599 = vmatprep.subr.mxu0 0.0
  %4600 = vmatpush1.msra.mxu0 %v3909
  %4601 = vmatprep.subr.mxu0 0.0
  %4602 = vmatpush1.msra.mxu0 %v3910
  %4603 = vmatprep.subr.mxu0 0.0
  %4604 = vmatpush1.msra.mxu0 %v3911
  %4605 = vmatprep.subr.mxu0 0.0
  %4606 = vmatpush1.msra.mxu0 0.0
  %4607 = vmatprep.subr.mxu0 0.0
  %4608 = vmatpush1.msra.mxu0 0.0
  %4609 = vmatprep.subr.mxu0 0.0
  %4610 = vmatpush1.msra.mxu0 0.0
  %4611 = vmatprep.subr.mxu0 0.0
  %4612 = vmatpush1.msra.mxu0 0.0
  %4613 = vmatprep.subr.mxu0 0.0
  %4614 = vmatpush1.msra.mxu0 0.0
  %4615 = vmatprep.subr.mxu0 0.0
  %4616 = vmatpush1.msra.mxu0 0.0
  %4617 = vmatprep.subr.mxu0 0.0
  %4618 = vmatpush1.msra.mxu0 0.0
  %4619 = vmatprep.subr.mxu0 0.0
  %4620 = vmatpush1.msra.mxu0 0.0
  %4621 = vmatprep.subr.mxu0 0.0
  %4622 = vmatpush1.msra.mxu0 0.0
  %4623 = vmatprep.subr.mxu0 0.0
  %4624 = vmatpush1.msra.mxu0 0.0
  %4625 = vmatprep.subr.mxu0 0.0
  %4626 = vmatpush1.msra.mxu0 0.0
  %4627 = vmatprep.subr.mxu0 0.0
  %4628 = vmatpush1.msra.mxu0 0.0
  %4629 = vmatprep.subr.mxu0 0.0
  %4630 = vmatpush1.msra.mxu0 0.0
  %4631 = vmatprep.subr.mxu0 0.0
  %4632 = vmatpush1.msra.mxu0 0.0
  %4633 = vmatprep.subr.mxu0 0.0
  %4634 = vmatpush1.msra.mxu0 0.0
  %4635 = vmatprep.subr.mxu0 0.0
  %4636 = vmatpush1.msra.mxu0 0.0
  %4637 = vmatprep.subr.mxu0 0.0
  %4638 = vmatpush1.msra.mxu0 0.0
  %4639 = vmatprep.subr.mxu0 0.0
  %4640 = vmatpush1.msra.mxu0 0.0
  %4641 = vmatprep.subr.mxu0 0.0
  %4642 = vmatpush1.msra.mxu0 0.0
  %4643 = vmatprep.subr.mxu0 0.0
  %4644 = vmatpush1.msra.mxu0 0.0
  %4645 = vmatprep.subr.mxu0 0.0
  %4646 = vmatpush1.msra.mxu0 0.0
  %4647 = vmatprep.subr.mxu0 0.0
  %4648 = vmatpush1.msra.mxu0 0.0
  %4649 = vmatprep.subr.mxu0 0.0
  %4650 = vmatpush1.msra.mxu0 0.0
  %4651 = vmatprep.subr.mxu0 0.0
  %4652 = vmatpush1.msra.mxu0 0.0
  %4653 = vmatprep.subr.mxu0 0.0
  %4654 = vmatpush1.msra.mxu0 0.0
  %4655 = vmatprep.subr.mxu0 0.0
  %4656 = vmatpush1.msra.mxu0 0.0
  %4657 = vmatprep.subr.mxu0 0.0
  %4658 = vmatpush1.msra.mxu0 0.0
  %4659 = vmatprep.subr.mxu0 0.0
  %4660 = vmatpush1.msra.mxu0 0.0
  %4661 = vmatprep.mubr.f32.mxu0 0.0
  %4662 = vmatmul.mubr.f32.gmra.mrb[0].mxu0 %v4592
  %v4663 = vpop.f32.mrb[0].mxu0
  %v4664 = vadd.f32 %v4590, %v4663
  %v4665 = vpop.f32.mrb[0].mxu0
  %4666 = vmatprep.mubr.f32.mxu0 0.0
  %4667 = vmatmul.mubr.f32.gmra.mrb[0].mxu0 %v4595
  %v4668 = vpop.f32.mrb[0].mxu0
  %v4669 = vadd.f32 %v4590, %v4668
  %v4670 = vpop.f32.mrb[0].mxu0
  %4671 = vdwg.mxu0
  %v4672 = vtanh.pop %v4664
  %v4673 = vtanh.pop %v4669
  %v4674 = vlaneseq
  %v4675 = vshrl.u32 %v4674, 7
  %v4676 = vsub.s32 0, %v4675
  %v4677 = vrot.slane %v3924, %v4676
  %v4679 = vsel %vm729, %v4672, 0
  %v4682 = vsel %vm729, %v4673, 0
  %4684 = vmatprep.subr.mxu0 0.0
  %4685 = vmatpush1.msra.mxu0 %v3912
  %4686 = vmatprep.subr.mxu0 0.0
  %4687 = vmatpush1.msra.mxu0 %v3913
  %4688 = vmatprep.subr.mxu0 0.0
  %4689 = vmatpush1.msra.mxu0 %v3914
  %4690 = vmatprep.subr.mxu0 0.0
  %4691 = vmatpush1.msra.mxu0 %v3915
  %4692 = vmatprep.subr.mxu0 0.0
  %4693 = vmatpush1.msra.mxu0 0.0
  %4694 = vmatprep.subr.mxu0 0.0
  %4695 = vmatpush1.msra.mxu0 0.0
  %4696 = vmatprep.subr.mxu0 0.0
  %4697 = vmatpush1.msra.mxu0 0.0
  %4698 = vmatprep.subr.mxu0 0.0
  %4699 = vmatpush1.msra.mxu0 0.0
  %4700 = vmatprep.subr.mxu0 0.0
  %4701 = vmatpush1.msra.mxu0 0.0
  %4702 = vmatprep.subr.mxu0 0.0
  %4703 = vmatpush1.msra.mxu0 0.0
  %4704 = vmatprep.subr.mxu0 0.0
  %4705 = vmatpush1.msra.mxu0 0.0
  %4706 = vmatprep.subr.mxu0 0.0
  %4707 = vmatpush1.msra.mxu0 0.0
  %4708 = vmatprep.subr.mxu0 0.0
  %4709 = vmatpush1.msra.mxu0 0.0
  %4710 = vmatprep.subr.mxu0 0.0
  %4711 = vmatpush1.msra.mxu0 0.0
  %4712 = vmatprep.subr.mxu0 0.0
  %4713 = vmatpush1.msra.mxu0 0.0
  %4714 = vmatprep.subr.mxu0 0.0
  %4715 = vmatpush1.msra.mxu0 0.0
  %4716 = vmatprep.subr.mxu0 0.0
  %4717 = vmatpush1.msra.mxu0 0.0
  %4718 = vmatprep.subr.mxu0 0.0
  %4719 = vmatpush1.msra.mxu0 0.0
  %4720 = vmatprep.subr.mxu0 0.0
  %4721 = vmatpush1.msra.mxu0 0.0
  %4722 = vmatprep.subr.mxu0 0.0
  %4723 = vmatpush1.msra.mxu0 0.0
  %4724 = vmatprep.subr.mxu0 0.0
  %4725 = vmatpush1.msra.mxu0 0.0
  %4726 = vmatprep.subr.mxu0 0.0
  %4727 = vmatpush1.msra.mxu0 0.0
  %4728 = vmatprep.subr.mxu0 0.0
  %4729 = vmatpush1.msra.mxu0 0.0
  %4730 = vmatprep.subr.mxu0 0.0
  %4731 = vmatpush1.msra.mxu0 0.0
  %4732 = vmatprep.subr.mxu0 0.0
  %4733 = vmatpush1.msra.mxu0 0.0
  %4734 = vmatprep.subr.mxu0 0.0
  %4735 = vmatpush1.msra.mxu0 0.0
  %4736 = vmatprep.subr.mxu0 0.0
  %4737 = vmatpush1.msra.mxu0 0.0
  %4738 = vmatprep.subr.mxu0 0.0
  %4739 = vmatpush1.msra.mxu0 0.0
  %4740 = vmatprep.subr.mxu0 0.0
  %4741 = vmatpush1.msra.mxu0 0.0
  %4742 = vmatprep.subr.mxu0 0.0
  %4743 = vmatpush1.msra.mxu0 0.0
  %4744 = vmatprep.subr.mxu0 0.0
  %4745 = vmatpush1.msra.mxu0 0.0
  %4746 = vmatprep.subr.mxu0 0.0
  %4747 = vmatpush1.msra.mxu0 0.0
  %4748 = vmatprep.mubr.f32.mxu0 0.0
  %4749 = vmatmul.mubr.f32.gmra.mrb[0].mxu0 %v4679
  %v4750 = vpop.f32.mrb[0].mxu0
  %v4751 = vadd.f32 %v4677, %v4750
  %v4752 = vpop.f32.mrb[0].mxu0
  %4753 = vmatprep.mubr.f32.mxu0 0.0
  %4754 = vmatmul.mubr.f32.gmra.mrb[0].mxu0 %v4682
  %v4755 = vpop.f32.mrb[0].mxu0
  %v4756 = vadd.f32 %v4677, %v4755
  %v4757 = vpop.f32.mrb[0].mxu0
  %4758 = vdwg.mxu0
  %v4759 = vtanh.pop %v4751
  %v4760 = vtanh.pop %v4756
  %v4761 = vadd.f32 %v4495, %v4759
  %v4762 = vadd.f32 %v4496, %v4760
  %v4763 = vsel %vm65, %v4761, 0.0
  %4764 = vadd.xlane.f32.xlu0 %v4763
  %v4765 = vpop.xlane.xlu0 %4764
  %v4766 = vsel %vm65, %v4762, 0.0
  %4767 = vadd.xlane.f32.xlu0 %v4766
  %v4768 = vpop.xlane.xlu0 %4767
  %v4769 = vmul.f32 %v4765, %v602
  %v4770 = vmul.f32 %v4768, %v602
  %v4771 = vsub.f32 %v4761, %v4769
  %v4772 = vsub.f32 %v4762, %v4770
  %v4773 = vmul.f32 %v4771, %v4771
  %v4774 = vmul.f32 %v4772, %v4772
  %v4775 = vsel %vm65, %v4773, 0.0
  %4776 = vadd.xlane.f32.xlu0 %v4775
  %v4777 = vpop.xlane.xlu0 %4776
  %v4778 = vsel %vm65, %v4774, 0.0
  %4779 = vadd.xlane.f32.xlu0 %v4778
  %v4780 = vpop.xlane.xlu0 %4779
  %v4781 = vmul.f32 %v4777, %v602
  %v4782 = vmul.f32 %v4780, %v602
  %v4783 = vadd.f32 %v4781, 1e-05
  %v4784 = vadd.f32 %v4782, 1e-05
  %v4785 = vrsqrt.pop %v4783
  %v4786 = vrsqrt.pop %v4784
  %v4787 = vmul.f32 %v4771, %v4785
  %v4788 = vmul.f32 %v4772, %v4786
  %v4789 = vlaneseq
  %v4790 = vshrl.u32 %v4789, 7
  %v4791 = vsub.s32 0, %v4790
  %v4792 = vrot.slane %v3925, %v4791
  %v4793 = vmul.f32 %v4787, %v4792
  %v4794 = vmul.f32 %v4788, %v4792
  %v4795 = vlaneseq
  %v4796 = vshrl.u32 %v4795, 7
  %v4797 = vsub.s32 0, %v4796
  %v4798 = vrot.slane %v3926, %v4797
  %v4799 = vadd.f32 %v4793, %v4798
  %v4800 = vadd.f32 %v4794, %v4798
  %s4801 = scalar_lea.vmem %s1, 800
  %v4802 = vld [vmem:[%s4801] sm:$0xff]
  %v4803 = vld [vmem:[%s4801 + $0x8] sm:$0xf]
  %v4804 = vld [vmem:[%s4801 + $0x10] sm:$0xff]
  %v4805 = vld [vmem:[%s4801 + $0x18] sm:$0xf]
  %v4806 = vld [vmem:[%s4801 + $0x20] sm:$0xff]
  %v4807 = vld [vmem:[%s4801 + $0x28] sm:$0xf]
  %v4808 = vld [vmem:[%s4801 + $0x30] sm:$0xff]
  %v4809 = vld [vmem:[%s4801 + $0x38] sm:$0xf]
  %v4810 = vld [vmem:[%s4801 + $0x40] sm:$0xff]
  %v4811 = vld [vmem:[%s4801 + $0x48] sm:$0xf]
  %v4812 = vld [vmem:[%s4801 + $0x50] sm:$0xff]
  %v4813 = vld [vmem:[%s4801 + $0x58] sm:$0xff]
  %v4814 = vld [vmem:[%s4801 + $0x60] sm:$0xff]
  %v4815 = vld [vmem:[%s4801 + $0x68] sm:$0xff]
  %v4816 = vld [vmem:[%s4801 + $0x70] sm:$0xff]
  %v4817 = vld [vmem:[%s4801 + $0x78] sm:$0xff]
  %v4818 = vld [vmem:[%s4801 + $0x80] sm:$0xff]
  %v4819 = vld [vmem:[%s4801 + $0x88] sm:$0xff]
  %v4820 = vld [vmem:[%s4801 + $0x90] sm:$0x1]
  %v4821 = vld [vmem:[%s4801 + $0x91] sm:$0x1]
  %v4822 = vld [vmem:[%s4801 + $0x92] sm:$0x1]
  %v4823 = vld [vmem:[%s4801 + $0x93] sm:$0x1]
  %v4824 = vld [vmem:[%s4801 + $0x94] sm:$0x1]
  %v4825 = vld [vmem:[%s4801 + $0x95] sm:$0x1]
  %v4826 = vld [vmem:[%s4801 + $0x96] sm:$0x1]
  %v4827 = vld [vmem:[%s4801 + $0x97] sm:$0x1]
  %v4828 = vld [vmem:[%s4801 + $0x98] sm:$0x1]
  %v4829 = vld [vmem:[%s4801 + $0x99] sm:$0x1]
  %v4830 = vld [vmem:[%s4801 + $0x9a] sm:$0x1]
  %v4831 = vlaneseq
  %v4832 = vshrl.u32 %v4831, 7
  %v4833 = vsub.s32 0, %v4832
  %v4834 = vrot.slane %v4820, %v4833
  %v4836 = vsel %vm65, %v4799, 0
  %v4839 = vsel %vm65, %v4800, 0
  %v4842 = vsel %vm72, %v4803, 0
  %4844 = vmatprep.subr.mxu0 0.0
  %4845 = vmatpush1.msra.mxu0 %v4802
  %4846 = vmatprep.subr.mxu0 0.0
  %4847 = vmatpush1.msra.mxu0 %v4842
  %4848 = vmatprep.subr.mxu0 0.0
  %4849 = vmatpush1.msra.mxu0 0.0
  %4850 = vmatprep.subr.mxu0 0.0
  %4851 = vmatpush1.msra.mxu0 0.0
  %4852 = vmatprep.subr.mxu0 0.0
  %4853 = vmatpush1.msra.mxu0 0.0
  %4854 = vmatprep.subr.mxu0 0.0
  %4855 = vmatpush1.msra.mxu0 0.0
  %4856 = vmatprep.subr.mxu0 0.0
  %4857 = vmatpush1.msra.mxu0 0.0
  %4858 = vmatprep.subr.mxu0 0.0
  %4859 = vmatpush1.msra.mxu0 0.0
  %4860 = vmatprep.subr.mxu0 0.0
  %4861 = vmatpush1.msra.mxu0 0.0
  %4862 = vmatprep.subr.mxu0 0.0
  %4863 = vmatpush1.msra.mxu0 0.0
  %4864 = vmatprep.subr.mxu0 0.0
  %4865 = vmatpush1.msra.mxu0 0.0
  %4866 = vmatprep.subr.mxu0 0.0
  %4867 = vmatpush1.msra.mxu0 0.0
  %4868 = vmatprep.subr.mxu0 0.0
  %4869 = vmatpush1.msra.mxu0 0.0
  %4870 = vmatprep.subr.mxu0 0.0
  %4871 = vmatpush1.msra.mxu0 0.0
  %4872 = vmatprep.subr.mxu0 0.0
  %4873 = vmatpush1.msra.mxu0 0.0
  %4874 = vmatprep.subr.mxu0 0.0
  %4875 = vmatpush1.msra.mxu0 0.0
  %4876 = vmatprep.subr.mxu0 0.0
  %4877 = vmatpush1.msra.mxu0 0.0
  %4878 = vmatprep.subr.mxu0 0.0
  %4879 = vmatpush1.msra.mxu0 0.0
  %4880 = vmatprep.subr.mxu0 0.0
  %4881 = vmatpush1.msra.mxu0 0.0
  %4882 = vmatprep.subr.mxu0 0.0
  %4883 = vmatpush1.msra.mxu0 0.0
  %4884 = vmatprep.subr.mxu0 0.0
  %4885 = vmatpush1.msra.mxu0 0.0
  %4886 = vmatprep.subr.mxu0 0.0
  %4887 = vmatpush1.msra.mxu0 0.0
  %4888 = vmatprep.subr.mxu0 0.0
  %4889 = vmatpush1.msra.mxu0 0.0
  %4890 = vmatprep.subr.mxu0 0.0
  %4891 = vmatpush1.msra.mxu0 0.0
  %4892 = vmatprep.subr.mxu0 0.0
  %4893 = vmatpush1.msra.mxu0 0.0
  %4894 = vmatprep.subr.mxu0 0.0
  %4895 = vmatpush1.msra.mxu0 0.0
  %4896 = vmatprep.subr.mxu0 0.0
  %4897 = vmatpush1.msra.mxu0 0.0
  %4898 = vmatprep.subr.mxu0 0.0
  %4899 = vmatpush1.msra.mxu0 0.0
  %4900 = vmatprep.subr.mxu0 0.0
  %4901 = vmatpush1.msra.mxu0 0.0
  %4902 = vmatprep.subr.mxu0 0.0
  %4903 = vmatpush1.msra.mxu0 0.0
  %4904 = vmatprep.subr.mxu0 0.0
  %4905 = vmatpush1.msra.mxu0 0.0
  %4906 = vmatprep.subr.mxu0 0.0
  %4907 = vmatpush1.msra.mxu0 0.0
  %4908 = vmatprep.mubr.f32.mxu0 0.0
  %4909 = vmatmul.mubr.f32.gmra.mrb[0].mxu0 %v4836
  %v4910 = vpop.f32.mrb[0].mxu0
  %v4911 = vadd.f32 %v4834, %v4910
  %v4912 = vpop.f32.mrb[0].mxu0
  %4913 = vmatprep.mubr.f32.mxu0 0.0
  %4914 = vmatmul.mubr.f32.gmra.mrb[0].mxu0 %v4839
  %v4915 = vpop.f32.mrb[0].mxu0
  %v4916 = vadd.f32 %v4834, %v4915
  %v4917 = vpop.f32.mrb[0].mxu0
  %4918 = vdwg.mxu0
  %v4919 = vlaneseq
  %v4920 = vshrl.u32 %v4919, 7
  %v4921 = vsub.s32 0, %v4920
  %v4922 = vrot.slane %v4821, %v4921
  %v4924 = vsel %vm72, %v4805, 0
  %4926 = vmatprep.subr.mxu0 0.0
  %4927 = vmatpush1.msra.mxu0 %v4804
  %4928 = vmatprep.subr.mxu0 0.0
  %4929 = vmatpush1.msra.mxu0 %v4924
  %4930 = vmatprep.subr.mxu0 0.0
  %4931 = vmatpush1.msra.mxu0 0.0
  %4932 = vmatprep.subr.mxu0 0.0
  %4933 = vmatpush1.msra.mxu0 0.0
  %4934 = vmatprep.subr.mxu0 0.0
  %4935 = vmatpush1.msra.mxu0 0.0
  %4936 = vmatprep.subr.mxu0 0.0
  %4937 = vmatpush1.msra.mxu0 0.0
  %4938 = vmatprep.subr.mxu0 0.0
  %4939 = vmatpush1.msra.mxu0 0.0
  %4940 = vmatprep.subr.mxu0 0.0
  %4941 = vmatpush1.msra.mxu0 0.0
  %4942 = vmatprep.subr.mxu0 0.0
  %4943 = vmatpush1.msra.mxu0 0.0
  %4944 = vmatprep.subr.mxu0 0.0
  %4945 = vmatpush1.msra.mxu0 0.0
  %4946 = vmatprep.subr.mxu0 0.0
  %4947 = vmatpush1.msra.mxu0 0.0
  %4948 = vmatprep.subr.mxu0 0.0
  %4949 = vmatpush1.msra.mxu0 0.0
  %4950 = vmatprep.subr.mxu0 0.0
  %4951 = vmatpush1.msra.mxu0 0.0
  %4952 = vmatprep.subr.mxu0 0.0
  %4953 = vmatpush1.msra.mxu0 0.0
  %4954 = vmatprep.subr.mxu0 0.0
  %4955 = vmatpush1.msra.mxu0 0.0
  %4956 = vmatprep.subr.mxu0 0.0
  %4957 = vmatpush1.msra.mxu0 0.0
  %4958 = vmatprep.subr.mxu0 0.0
  %4959 = vmatpush1.msra.mxu0 0.0
  %4960 = vmatprep.subr.mxu0 0.0
  %4961 = vmatpush1.msra.mxu0 0.0
  %4962 = vmatprep.subr.mxu0 0.0
  %4963 = vmatpush1.msra.mxu0 0.0
  %4964 = vmatprep.subr.mxu0 0.0
  %4965 = vmatpush1.msra.mxu0 0.0
  %4966 = vmatprep.subr.mxu0 0.0
  %4967 = vmatpush1.msra.mxu0 0.0
  %4968 = vmatprep.subr.mxu0 0.0
  %4969 = vmatpush1.msra.mxu0 0.0
  %4970 = vmatprep.subr.mxu0 0.0
  %4971 = vmatpush1.msra.mxu0 0.0
  %4972 = vmatprep.subr.mxu0 0.0
  %4973 = vmatpush1.msra.mxu0 0.0
  %4974 = vmatprep.subr.mxu0 0.0
  %4975 = vmatpush1.msra.mxu0 0.0
  %4976 = vmatprep.subr.mxu0 0.0
  %4977 = vmatpush1.msra.mxu0 0.0
  %4978 = vmatprep.subr.mxu0 0.0
  %4979 = vmatpush1.msra.mxu0 0.0
  %4980 = vmatprep.subr.mxu0 0.0
  %4981 = vmatpush1.msra.mxu0 0.0
  %4982 = vmatprep.subr.mxu0 0.0
  %4983 = vmatpush1.msra.mxu0 0.0
  %4984 = vmatprep.subr.mxu0 0.0
  %4985 = vmatpush1.msra.mxu0 0.0
  %4986 = vmatprep.subr.mxu0 0.0
  %4987 = vmatpush1.msra.mxu0 0.0
  %4988 = vmatprep.subr.mxu0 0.0
  %4989 = vmatpush1.msra.mxu0 0.0
  %4990 = vmatprep.mubr.f32.mxu0 0.0
  %4991 = vmatmul.mubr.f32.gmra.mrb[0].mxu0 %v4836
  %v4992 = vpop.f32.mrb[0].mxu0
  %v4993 = vadd.f32 %v4922, %v4992
  %v4994 = vpop.f32.mrb[0].mxu0
  %4995 = vmatprep.mubr.f32.mxu0 0.0
  %4996 = vmatmul.mubr.f32.gmra.mrb[0].mxu0 %v4839
  %v4997 = vpop.f32.mrb[0].mxu0
  %v4998 = vadd.f32 %v4922, %v4997
  %v4999 = vpop.f32.mrb[0].mxu0
  %5000 = vdwg.mxu0
  %v5001 = vlaneseq
  %v5002 = vshrl.u32 %v5001, 7
  %v5003 = vsub.s32 0, %v5002
  %v5004 = vrot.slane %v4822, %v5003
  %v5006 = vsel %vm72, %v4807, 0
  %5008 = vmatprep.subr.mxu0 0.0
  %5009 = vmatpush1.msra.mxu0 %v4806
  %5010 = vmatprep.subr.mxu0 0.0
  %5011 = vmatpush1.msra.mxu0 %v5006
  %5012 = vmatprep.subr.mxu0 0.0
  %5013 = vmatpush1.msra.mxu0 0.0
  %5014 = vmatprep.subr.mxu0 0.0
  %5015 = vmatpush1.msra.mxu0 0.0
  %5016 = vmatprep.subr.mxu0 0.0
  %5017 = vmatpush1.msra.mxu0 0.0
  %5018 = vmatprep.subr.mxu0 0.0
  %5019 = vmatpush1.msra.mxu0 0.0
  %5020 = vmatprep.subr.mxu0 0.0
  %5021 = vmatpush1.msra.mxu0 0.0
  %5022 = vmatprep.subr.mxu0 0.0
  %5023 = vmatpush1.msra.mxu0 0.0
  %5024 = vmatprep.subr.mxu0 0.0
  %5025 = vmatpush1.msra.mxu0 0.0
  %5026 = vmatprep.subr.mxu0 0.0
  %5027 = vmatpush1.msra.mxu0 0.0
  %5028 = vmatprep.subr.mxu0 0.0
  %5029 = vmatpush1.msra.mxu0 0.0
  %5030 = vmatprep.subr.mxu0 0.0
  %5031 = vmatpush1.msra.mxu0 0.0
  %5032 = vmatprep.subr.mxu0 0.0
  %5033 = vmatpush1.msra.mxu0 0.0
  %5034 = vmatprep.subr.mxu0 0.0
  %5035 = vmatpush1.msra.mxu0 0.0
  %5036 = vmatprep.subr.mxu0 0.0
  %5037 = vmatpush1.msra.mxu0 0.0
  %5038 = vmatprep.subr.mxu0 0.0
  %5039 = vmatpush1.msra.mxu0 0.0
  %5040 = vmatprep.subr.mxu0 0.0
  %5041 = vmatpush1.msra.mxu0 0.0
  %5042 = vmatprep.subr.mxu0 0.0
  %5043 = vmatpush1.msra.mxu0 0.0
  %5044 = vmatprep.subr.mxu0 0.0
  %5045 = vmatpush1.msra.mxu0 0.0
  %5046 = vmatprep.subr.mxu0 0.0
  %5047 = vmatpush1.msra.mxu0 0.0
  %5048 = vmatprep.subr.mxu0 0.0
  %5049 = vmatpush1.msra.mxu0 0.0
  %5050 = vmatprep.subr.mxu0 0.0
  %5051 = vmatpush1.msra.mxu0 0.0
  %5052 = vmatprep.subr.mxu0 0.0
  %5053 = vmatpush1.msra.mxu0 0.0
  %5054 = vmatprep.subr.mxu0 0.0
  %5055 = vmatpush1.msra.mxu0 0.0
  %5056 = vmatprep.subr.mxu0 0.0
  %5057 = vmatpush1.msra.mxu0 0.0
  %5058 = vmatprep.subr.mxu0 0.0
  %5059 = vmatpush1.msra.mxu0 0.0
  %5060 = vmatprep.subr.mxu0 0.0
  %5061 = vmatpush1.msra.mxu0 0.0
  %5062 = vmatprep.subr.mxu0 0.0
  %5063 = vmatpush1.msra.mxu0 0.0
  %5064 = vmatprep.subr.mxu0 0.0
  %5065 = vmatpush1.msra.mxu0 0.0
  %5066 = vmatprep.subr.mxu0 0.0
  %5067 = vmatpush1.msra.mxu0 0.0
  %5068 = vmatprep.subr.mxu0 0.0
  %5069 = vmatpush1.msra.mxu0 0.0
  %5070 = vmatprep.subr.mxu0 0.0
  %5071 = vmatpush1.msra.mxu0 0.0
  %5072 = vmatprep.mubr.f32.mxu0 0.0
  %5073 = vmatmul.mubr.f32.gmra.mrb[0].mxu0 %v4836
  %v5074 = vpop.f32.mrb[0].mxu0
  %v5075 = vadd.f32 %v5004, %v5074
  %v5076 = vpop.f32.mrb[0].mxu0
  %5077 = vmatprep.mubr.f32.mxu0 0.0
  %5078 = vmatmul.mubr.f32.gmra.mrb[0].mxu0 %v4839
  %v5079 = vpop.f32.mrb[0].mxu0
  %v5080 = vadd.f32 %v5004, %v5079
  %v5081 = vpop.f32.mrb[0].mxu0
  %5082 = vdwg.mxu0
  %v5084 = vsel %vm65, %v4911, 0
  %v5087 = vsel %vm65, %v4916, 0
  %v5090 = vsel %vm65, %v4993, 0
  %v5093 = vsel %vm65, %v4998, 0
  %5095 = vmatprep.subr.mxu0 0.0
  %5096 = vmatpush1.xpose.msra.mxu0 %v5090
  %5097 = vmatprep.subr.mxu0 0.0
  %5098 = vmatpush1.xpose.msra.mxu0 %v5093
  %5099 = vmatprep.subr.mxu0 0.0
  %5100 = vmatpush1.xpose.msra.mxu0 0.0
  %5101 = vmatprep.subr.mxu0 0.0
  %5102 = vmatpush1.xpose.msra.mxu0 0.0
  %5103 = vmatprep.subr.mxu0 0.0
  %5104 = vmatpush1.xpose.msra.mxu0 0.0
  %5105 = vmatprep.subr.mxu0 0.0
  %5106 = vmatpush1.xpose.msra.mxu0 0.0
  %5107 = vmatprep.subr.mxu0 0.0
  %5108 = vmatpush1.xpose.msra.mxu0 0.0
  %5109 = vmatprep.subr.mxu0 0.0
  %5110 = vmatpush1.xpose.msra.mxu0 0.0
  %5111 = vmatprep.subr.mxu0 0.0
  %5112 = vmatpush1.xpose.msra.mxu0 0.0
  %5113 = vmatprep.subr.mxu0 0.0
  %5114 = vmatpush1.xpose.msra.mxu0 0.0
  %5115 = vmatprep.subr.mxu0 0.0
  %5116 = vmatpush1.xpose.msra.mxu0 0.0
  %5117 = vmatprep.subr.mxu0 0.0
  %5118 = vmatpush1.xpose.msra.mxu0 0.0
  %5119 = vmatprep.subr.mxu0 0.0
  %5120 = vmatpush1.xpose.msra.mxu0 0.0
  %5121 = vmatprep.subr.mxu0 0.0
  %5122 = vmatpush1.xpose.msra.mxu0 0.0
  %5123 = vmatprep.subr.mxu0 0.0
  %5124 = vmatpush1.xpose.msra.mxu0 0.0
  %5125 = vmatprep.subr.mxu0 0.0
  %5126 = vmatpush1.xpose.msra.mxu0 0.0
  %5127 = vmatprep.subr.mxu0 0.0
  %5128 = vmatpush1.xpose.msra.mxu0 0.0
  %5129 = vmatprep.subr.mxu0 0.0
  %5130 = vmatpush1.xpose.msra.mxu0 0.0
  %5131 = vmatprep.subr.mxu0 0.0
  %5132 = vmatpush1.xpose.msra.mxu0 0.0
  %5133 = vmatprep.subr.mxu0 0.0
  %5134 = vmatpush1.xpose.msra.mxu0 0.0
  %5135 = vmatprep.subr.mxu0 0.0
  %5136 = vmatpush1.xpose.msra.mxu0 0.0
  %5137 = vmatprep.subr.mxu0 0.0
  %5138 = vmatpush1.xpose.msra.mxu0 0.0
  %5139 = vmatprep.subr.mxu0 0.0
  %5140 = vmatpush1.xpose.msra.mxu0 0.0
  %5141 = vmatprep.subr.mxu0 0.0
  %5142 = vmatpush1.xpose.msra.mxu0 0.0
  %5143 = vmatprep.subr.mxu0 0.0
  %5144 = vmatpush1.xpose.msra.mxu0 0.0
  %5145 = vmatprep.subr.mxu0 0.0
  %5146 = vmatpush1.xpose.msra.mxu0 0.0
  %5147 = vmatprep.subr.mxu0 0.0
  %5148 = vmatpush1.xpose.msra.mxu0 0.0
  %5149 = vmatprep.subr.mxu0 0.0
  %5150 = vmatpush1.xpose.msra.mxu0 0.0
  %5151 = vmatprep.subr.mxu0 0.0
  %5152 = vmatpush1.xpose.msra.mxu0 0.0
  %5153 = vmatprep.subr.mxu0 0.0
  %5154 = vmatpush1.xpose.msra.mxu0 0.0
  %5155 = vmatprep.subr.mxu0 0.0
  %5156 = vmatpush1.xpose.msra.mxu0 0.0
  %5157 = vmatprep.subr.mxu0 0.0
  %5158 = vmatpush1.xpose.msra.mxu0 0.0
  %5159 = vmatprep.mubr.f32.mxu0 0.0
  %5160 = vmatmul.mubr.f32.gmra.mrb[0].mxu0 %v5084
  %v5161 = vpop.f32.mrb[0].mxu0
  %v5162 = vadd.f32 %v21, %v5161
  %v5163 = vpop.f32.mrb[0].mxu0
  %5164 = vmatprep.mubr.f32.mxu0 0.0
  %5165 = vmatmul.mubr.f32.gmra.mrb[0].mxu0 %v5087
  %v5166 = vpop.f32.mrb[0].mxu0
  %v5167 = vadd.f32 %v22, %v5166
  %v5168 = vpop.f32.mrb[0].mxu0
  %5169 = vdwg.mxu0
  %v5170 = vsel %vm402, %v5162, -inf
  %5171 = vmax.xlane.f32.xlu0 %v5170
  %v5172 = vpop.xlane.xlu0 %5171
  %v5173 = vsel %vm402, %v5167, -inf
  %5174 = vmax.xlane.f32.xlu0 %v5173
  %v5175 = vpop.xlane.xlu0 %5174
  %v5176 = vsub.f32 %v5162, %v5172
  %v5177 = vsub.f32 %v5167, %v5175
  %v5178 = vmul.f32 %v5176, 1.442695
  %v5179 = vpow.pop %v5178
  %v5180 = vmul.f32 %v5177, 1.442695
  %v5181 = vpow.pop %v5180
  %v5182 = vsel %vm402, %v5179, 0.0
  %5183 = vadd.xlane.f32.xlu0 %v5182
  %v5184 = vpop.xlane.xlu0 %5183
  %v5185 = vsel %vm402, %v5181, 0.0
  %5186 = vadd.xlane.f32.xlu0 %v5185
  %v5187 = vpop.xlane.xlu0 %5186
  %v5188 = vrcp.pop %v5184
  %v5189 = vmul.f32 %v5179, %v5188
  %v5190 = vrcp.pop %v5187
  %v5191 = vmul.f32 %v5181, %v5190
  %v5193 = vsel %vm402, %v5189, 0
  %v5196 = vsel %vm402, %v5191, 0
  %5198 = vmatprep.subr.mxu0 0.0
  %5199 = vmatpush1.msra.mxu0 %v5075
  %5200 = vmatprep.subr.mxu0 0.0
  %5201 = vmatpush1.msra.mxu0 %v5080
  %5202 = vmatprep.subr.mxu0 0.0
  %5203 = vmatpush1.msra.mxu0 0.0
  %5204 = vmatprep.subr.mxu0 0.0
  %5205 = vmatpush1.msra.mxu0 0.0
  %5206 = vmatprep.subr.mxu0 0.0
  %5207 = vmatpush1.msra.mxu0 0.0
  %5208 = vmatprep.subr.mxu0 0.0
  %5209 = vmatpush1.msra.mxu0 0.0
  %5210 = vmatprep.subr.mxu0 0.0
  %5211 = vmatpush1.msra.mxu0 0.0
  %5212 = vmatprep.subr.mxu0 0.0
  %5213 = vmatpush1.msra.mxu0 0.0
  %5214 = vmatprep.subr.mxu0 0.0
  %5215 = vmatpush1.msra.mxu0 0.0
  %5216 = vmatprep.subr.mxu0 0.0
  %5217 = vmatpush1.msra.mxu0 0.0
  %5218 = vmatprep.subr.mxu0 0.0
  %5219 = vmatpush1.msra.mxu0 0.0
  %5220 = vmatprep.subr.mxu0 0.0
  %5221 = vmatpush1.msra.mxu0 0.0
  %5222 = vmatprep.subr.mxu0 0.0
  %5223 = vmatpush1.msra.mxu0 0.0
  %5224 = vmatprep.subr.mxu0 0.0
  %5225 = vmatpush1.msra.mxu0 0.0
  %5226 = vmatprep.subr.mxu0 0.0
  %5227 = vmatpush1.msra.mxu0 0.0
  %5228 = vmatprep.subr.mxu0 0.0
  %5229 = vmatpush1.msra.mxu0 0.0
  %5230 = vmatprep.subr.mxu0 0.0
  %5231 = vmatpush1.msra.mxu0 0.0
  %5232 = vmatprep.subr.mxu0 0.0
  %5233 = vmatpush1.msra.mxu0 0.0
  %5234 = vmatprep.subr.mxu0 0.0
  %5235 = vmatpush1.msra.mxu0 0.0
  %5236 = vmatprep.subr.mxu0 0.0
  %5237 = vmatpush1.msra.mxu0 0.0
  %5238 = vmatprep.subr.mxu0 0.0
  %5239 = vmatpush1.msra.mxu0 0.0
  %5240 = vmatprep.subr.mxu0 0.0
  %5241 = vmatpush1.msra.mxu0 0.0
  %5242 = vmatprep.subr.mxu0 0.0
  %5243 = vmatpush1.msra.mxu0 0.0
  %5244 = vmatprep.subr.mxu0 0.0
  %5245 = vmatpush1.msra.mxu0 0.0
  %5246 = vmatprep.subr.mxu0 0.0
  %5247 = vmatpush1.msra.mxu0 0.0
  %5248 = vmatprep.subr.mxu0 0.0
  %5249 = vmatpush1.msra.mxu0 0.0
  %5250 = vmatprep.subr.mxu0 0.0
  %5251 = vmatpush1.msra.mxu0 0.0
  %5252 = vmatprep.subr.mxu0 0.0
  %5253 = vmatpush1.msra.mxu0 0.0
  %5254 = vmatprep.subr.mxu0 0.0
  %5255 = vmatpush1.msra.mxu0 0.0
  %5256 = vmatprep.subr.mxu0 0.0
  %5257 = vmatpush1.msra.mxu0 0.0
  %5258 = vmatprep.subr.mxu0 0.0
  %5259 = vmatpush1.msra.mxu0 0.0
  %5260 = vmatprep.subr.mxu0 0.0
  %5261 = vmatpush1.msra.mxu0 0.0
  %5262 = vmatprep.mubr.f32.mxu0 0.0
  %5263 = vmatmul.mubr.f32.gmra.mrb[0].mxu0 %v5193
  %v5264 = vpop.f32.mrb[0].mxu0
  %v5265 = vadd.f32 0.0, %v5264
  %v5266 = vpop.f32.mrb[0].mxu0
  %5267 = vmatprep.mubr.f32.mxu0 0.0
  %5268 = vmatmul.mubr.f32.gmra.mrb[0].mxu0 %v5196
  %v5269 = vpop.f32.mrb[0].mxu0
  %v5270 = vadd.f32 0.0, %v5269
  %v5271 = vpop.f32.mrb[0].mxu0
  %5272 = vdwg.mxu0
  %v5273 = vlaneseq
  %v5274 = vshrl.u32 %v5273, 7
  %v5275 = vsub.s32 0, %v5274
  %v5276 = vrot.slane %v4823, %v5275
  %v5278 = vsel %vm65, %v5265, 0
  %v5281 = vsel %vm65, %v5270, 0
  %v5284 = vsel %vm72, %v4809, 0
  %5286 = vmatprep.subr.mxu0 0.0
  %5287 = vmatpush1.msra.mxu0 %v4808
  %5288 = vmatprep.subr.mxu0 0.0
  %5289 = vmatpush1.msra.mxu0 %v5284
  %5290 = vmatprep.subr.mxu0 0.0
  %5291 = vmatpush1.msra.mxu0 0.0
  %5292 = vmatprep.subr.mxu0 0.0
  %5293 = vmatpush1.msra.mxu0 0.0
  %5294 = vmatprep.subr.mxu0 0.0
  %5295 = vmatpush1.msra.mxu0 0.0
  %5296 = vmatprep.subr.mxu0 0.0
  %5297 = vmatpush1.msra.mxu0 0.0
  %5298 = vmatprep.subr.mxu0 0.0
  %5299 = vmatpush1.msra.mxu0 0.0
  %5300 = vmatprep.subr.mxu0 0.0
  %5301 = vmatpush1.msra.mxu0 0.0
  %5302 = vmatprep.subr.mxu0 0.0
  %5303 = vmatpush1.msra.mxu0 0.0
  %5304 = vmatprep.subr.mxu0 0.0
  %5305 = vmatpush1.msra.mxu0 0.0
  %5306 = vmatprep.subr.mxu0 0.0
  %5307 = vmatpush1.msra.mxu0 0.0
  %5308 = vmatprep.subr.mxu0 0.0
  %5309 = vmatpush1.msra.mxu0 0.0
  %5310 = vmatprep.subr.mxu0 0.0
  %5311 = vmatpush1.msra.mxu0 0.0
  %5312 = vmatprep.subr.mxu0 0.0
  %5313 = vmatpush1.msra.mxu0 0.0
  %5314 = vmatprep.subr.mxu0 0.0
  %5315 = vmatpush1.msra.mxu0 0.0
  %5316 = vmatprep.subr.mxu0 0.0
  %5317 = vmatpush1.msra.mxu0 0.0
  %5318 = vmatprep.subr.mxu0 0.0
  %5319 = vmatpush1.msra.mxu0 0.0
  %5320 = vmatprep.subr.mxu0 0.0
  %5321 = vmatpush1.msra.mxu0 0.0
  %5322 = vmatprep.subr.mxu0 0.0
  %5323 = vmatpush1.msra.mxu0 0.0
  %5324 = vmatprep.subr.mxu0 0.0
  %5325 = vmatpush1.msra.mxu0 0.0
  %5326 = vmatprep.subr.mxu0 0.0
  %5327 = vmatpush1.msra.mxu0 0.0
  %5328 = vmatprep.subr.mxu0 0.0
  %5329 = vmatpush1.msra.mxu0 0.0
  %5330 = vmatprep.subr.mxu0 0.0
  %5331 = vmatpush1.msra.mxu0 0.0
  %5332 = vmatprep.subr.mxu0 0.0
  %5333 = vmatpush1.msra.mxu0 0.0
  %5334 = vmatprep.subr.mxu0 0.0
  %5335 = vmatpush1.msra.mxu0 0.0
  %5336 = vmatprep.subr.mxu0 0.0
  %5337 = vmatpush1.msra.mxu0 0.0
  %5338 = vmatprep.subr.mxu0 0.0
  %5339 = vmatpush1.msra.mxu0 0.0
  %5340 = vmatprep.subr.mxu0 0.0
  %5341 = vmatpush1.msra.mxu0 0.0
  %5342 = vmatprep.subr.mxu0 0.0
  %5343 = vmatpush1.msra.mxu0 0.0
  %5344 = vmatprep.subr.mxu0 0.0
  %5345 = vmatpush1.msra.mxu0 0.0
  %5346 = vmatprep.subr.mxu0 0.0
  %5347 = vmatpush1.msra.mxu0 0.0
  %5348 = vmatprep.subr.mxu0 0.0
  %5349 = vmatpush1.msra.mxu0 0.0
  %5350 = vmatprep.mubr.f32.mxu0 0.0
  %5351 = vmatmul.mubr.f32.gmra.mrb[0].mxu0 %v5278
  %v5352 = vpop.f32.mrb[0].mxu0
  %v5353 = vadd.f32 %v5276, %v5352
  %v5354 = vpop.f32.mrb[0].mxu0
  %5355 = vmatprep.mubr.f32.mxu0 0.0
  %5356 = vmatmul.mubr.f32.gmra.mrb[0].mxu0 %v5281
  %v5357 = vpop.f32.mrb[0].mxu0
  %v5358 = vadd.f32 %v5276, %v5357
  %v5359 = vpop.f32.mrb[0].mxu0
  %5360 = vdwg.mxu0
  %v5361 = vadd.f32 %v4799, %v5353
  %v5362 = vadd.f32 %v4800, %v5358
  %v5363 = vsel %vm65, %v5361, 0.0
  %5364 = vadd.xlane.f32.xlu0 %v5363
  %v5365 = vpop.xlane.xlu0 %5364
  %v5366 = vsel %vm65, %v5362, 0.0
  %5367 = vadd.xlane.f32.xlu0 %v5366
  %v5368 = vpop.xlane.xlu0 %5367
  %v5369 = vmul.f32 %v5365, %v602
  %v5370 = vmul.f32 %v5368, %v602
  %v5371 = vsub.f32 %v5361, %v5369
  %v5372 = vsub.f32 %v5362, %v5370
  %v5373 = vmul.f32 %v5371, %v5371
  %v5374 = vmul.f32 %v5372, %v5372
  %v5375 = vsel %vm65, %v5373, 0.0
  %5376 = vadd.xlane.f32.xlu0 %v5375
  %v5377 = vpop.xlane.xlu0 %5376
  %v5378 = vsel %vm65, %v5374, 0.0
  %5379 = vadd.xlane.f32.xlu0 %v5378
  %v5380 = vpop.xlane.xlu0 %5379
  %v5381 = vmul.f32 %v5377, %v602
  %v5382 = vmul.f32 %v5380, %v602
  %v5383 = vadd.f32 %v5381, 1e-05
  %v5384 = vadd.f32 %v5382, 1e-05
  %v5385 = vrsqrt.pop %v5383
  %v5386 = vrsqrt.pop %v5384
  %v5387 = vmul.f32 %v5371, %v5385
  %v5388 = vmul.f32 %v5372, %v5386
  %v5389 = vlaneseq
  %v5390 = vshrl.u32 %v5389, 7
  %v5391 = vsub.s32 0, %v5390
  %v5392 = vrot.slane %v4824, %v5391
  %v5393 = vmul.f32 %v5387, %v5392
  %v5394 = vmul.f32 %v5388, %v5392
  %v5395 = vlaneseq
  %v5396 = vshrl.u32 %v5395, 7
  %v5397 = vsub.s32 0, %v5396
  %v5398 = vrot.slane %v4825, %v5397
  %v5399 = vadd.f32 %v5393, %v5398
  %v5400 = vadd.f32 %v5394, %v5398
  %v5401 = vlaneseq
  %v5402 = vshrl.u32 %v5401, 7
  %v5403 = vsub.s32 0, %v5402
  %v5404 = vrot.slane %v4826, %v5403
  %v5406 = vsel %vm65, %v5399, 0
  %v5409 = vsel %vm65, %v5400, 0
  %v5412 = vsel %vm72, %v4811, 0
  %5414 = vmatprep.subr.mxu0 0.0
  %5415 = vmatpush1.msra.mxu0 %v4810
  %5416 = vmatprep.subr.mxu0 0.0
  %5417 = vmatpush1.msra.mxu0 %v5412
  %5418 = vmatprep.subr.mxu0 0.0
  %5419 = vmatpush1.msra.mxu0 0.0
  %5420 = vmatprep.subr.mxu0 0.0
  %5421 = vmatpush1.msra.mxu0 0.0
  %5422 = vmatprep.subr.mxu0 0.0
  %5423 = vmatpush1.msra.mxu0 0.0
  %5424 = vmatprep.subr.mxu0 0.0
  %5425 = vmatpush1.msra.mxu0 0.0
  %5426 = vmatprep.subr.mxu0 0.0
  %5427 = vmatpush1.msra.mxu0 0.0
  %5428 = vmatprep.subr.mxu0 0.0
  %5429 = vmatpush1.msra.mxu0 0.0
  %5430 = vmatprep.subr.mxu0 0.0
  %5431 = vmatpush1.msra.mxu0 0.0
  %5432 = vmatprep.subr.mxu0 0.0
  %5433 = vmatpush1.msra.mxu0 0.0
  %5434 = vmatprep.subr.mxu0 0.0
  %5435 = vmatpush1.msra.mxu0 0.0
  %5436 = vmatprep.subr.mxu0 0.0
  %5437 = vmatpush1.msra.mxu0 0.0
  %5438 = vmatprep.subr.mxu0 0.0
  %5439 = vmatpush1.msra.mxu0 0.0
  %5440 = vmatprep.subr.mxu0 0.0
  %5441 = vmatpush1.msra.mxu0 0.0
  %5442 = vmatprep.subr.mxu0 0.0
  %5443 = vmatpush1.msra.mxu0 0.0
  %5444 = vmatprep.subr.mxu0 0.0
  %5445 = vmatpush1.msra.mxu0 0.0
  %5446 = vmatprep.subr.mxu0 0.0
  %5447 = vmatpush1.msra.mxu0 0.0
  %5448 = vmatprep.subr.mxu0 0.0
  %5449 = vmatpush1.msra.mxu0 0.0
  %5450 = vmatprep.subr.mxu0 0.0
  %5451 = vmatpush1.msra.mxu0 0.0
  %5452 = vmatprep.subr.mxu0 0.0
  %5453 = vmatpush1.msra.mxu0 0.0
  %5454 = vmatprep.subr.mxu0 0.0
  %5455 = vmatpush1.msra.mxu0 0.0
  %5456 = vmatprep.subr.mxu0 0.0
  %5457 = vmatpush1.msra.mxu0 0.0
  %5458 = vmatprep.subr.mxu0 0.0
  %5459 = vmatpush1.msra.mxu0 0.0
  %5460 = vmatprep.subr.mxu0 0.0
  %5461 = vmatpush1.msra.mxu0 0.0
  %5462 = vmatprep.subr.mxu0 0.0
  %5463 = vmatpush1.msra.mxu0 0.0
  %5464 = vmatprep.subr.mxu0 0.0
  %5465 = vmatpush1.msra.mxu0 0.0
  %5466 = vmatprep.subr.mxu0 0.0
  %5467 = vmatpush1.msra.mxu0 0.0
  %5468 = vmatprep.subr.mxu0 0.0
  %5469 = vmatpush1.msra.mxu0 0.0
  %5470 = vmatprep.subr.mxu0 0.0
  %5471 = vmatpush1.msra.mxu0 0.0
  %5472 = vmatprep.subr.mxu0 0.0
  %5473 = vmatpush1.msra.mxu0 0.0
  %5474 = vmatprep.subr.mxu0 0.0
  %5475 = vmatpush1.msra.mxu0 0.0
  %5476 = vmatprep.subr.mxu0 0.0
  %5477 = vmatpush1.msra.mxu0 0.0
  %5478 = vmatprep.mubr.f32.mxu0 0.0
  %5479 = vmatmul.mubr.f32.gmra.mrb[0].mxu0 %v5406
  %v5480 = vpop.f32.mrb[0].mxu0
  %v5481 = vadd.f32 %v5404, %v5480
  %v5482 = vpop.f32.mrb[0].mxu0
  %5483 = vmatprep.mubr.f32.mxu0 0.0
  %5484 = vmatmul.mubr.f32.gmra.mrb[0].mxu0 %v5409
  %v5485 = vpop.f32.mrb[0].mxu0
  %v5486 = vadd.f32 %v5404, %v5485
  %v5487 = vpop.f32.mrb[0].mxu0
  %5488 = vdwg.mxu0
  %v5489 = vtanh.pop %v5481
  %v5490 = vtanh.pop %v5486
  %v5491 = vlaneseq
  %v5492 = vshrl.u32 %v5491, 7
  %v5493 = vsub.s32 0, %v5492
  %v5494 = vrot.slane %v4827, %v5493
  %v5496 = vsel %vm729, %v5489, 0
  %v5499 = vsel %vm729, %v5490, 0
  %5501 = vmatprep.subr.mxu0 0.0
  %5502 = vmatpush1.msra.mxu0 %v4812
  %5503 = vmatprep.subr.mxu0 0.0
  %5504 = vmatpush1.msra.mxu0 %v4813
  %5505 = vmatprep.subr.mxu0 0.0
  %5506 = vmatpush1.msra.mxu0 %v4814
  %5507 = vmatprep.subr.mxu0 0.0
  %5508 = vmatpush1.msra.mxu0 %v4815
  %5509 = vmatprep.subr.mxu0 0.0
  %5510 = vmatpush1.msra.mxu0 0.0
  %5511 = vmatprep.subr.mxu0 0.0
  %5512 = vmatpush1.msra.mxu0 0.0
  %5513 = vmatprep.subr.mxu0 0.0
  %5514 = vmatpush1.msra.mxu0 0.0
  %5515 = vmatprep.subr.mxu0 0.0
  %5516 = vmatpush1.msra.mxu0 0.0
  %5517 = vmatprep.subr.mxu0 0.0
  %5518 = vmatpush1.msra.mxu0 0.0
  %5519 = vmatprep.subr.mxu0 0.0
  %5520 = vmatpush1.msra.mxu0 0.0
  %5521 = vmatprep.subr.mxu0 0.0
  %5522 = vmatpush1.msra.mxu0 0.0
  %5523 = vmatprep.subr.mxu0 0.0
  %5524 = vmatpush1.msra.mxu0 0.0
  %5525 = vmatprep.subr.mxu0 0.0
  %5526 = vmatpush1.msra.mxu0 0.0
  %5527 = vmatprep.subr.mxu0 0.0
  %5528 = vmatpush1.msra.mxu0 0.0
  %5529 = vmatprep.subr.mxu0 0.0
  %5530 = vmatpush1.msra.mxu0 0.0
  %5531 = vmatprep.subr.mxu0 0.0
  %5532 = vmatpush1.msra.mxu0 0.0
  %5533 = vmatprep.subr.mxu0 0.0
  %5534 = vmatpush1.msra.mxu0 0.0
  %5535 = vmatprep.subr.mxu0 0.0
  %5536 = vmatpush1.msra.mxu0 0.0
  %5537 = vmatprep.subr.mxu0 0.0
  %5538 = vmatpush1.msra.mxu0 0.0
  %5539 = vmatprep.subr.mxu0 0.0
  %5540 = vmatpush1.msra.mxu0 0.0
  %5541 = vmatprep.subr.mxu0 0.0
  %5542 = vmatpush1.msra.mxu0 0.0
  %5543 = vmatprep.subr.mxu0 0.0
  %5544 = vmatpush1.msra.mxu0 0.0
  %5545 = vmatprep.subr.mxu0 0.0
  %5546 = vmatpush1.msra.mxu0 0.0
  %5547 = vmatprep.subr.mxu0 0.0
  %5548 = vmatpush1.msra.mxu0 0.0
  %5549 = vmatprep.subr.mxu0 0.0
  %5550 = vmatpush1.msra.mxu0 0.0
  %5551 = vmatprep.subr.mxu0 0.0
  %5552 = vmatpush1.msra.mxu0 0.0
  %5553 = vmatprep.subr.mxu0 0.0
  %5554 = vmatpush1.msra.mxu0 0.0
  %5555 = vmatprep.subr.mxu0 0.0
  %5556 = vmatpush1.msra.mxu0 0.0
  %5557 = vmatprep.subr.mxu0 0.0
  %5558 = vmatpush1.msra.mxu0 0.0
  %5559 = vmatprep.subr.mxu0 0.0
  %5560 = vmatpush1.msra.mxu0 0.0
  %5561 = vmatprep.subr.mxu0 0.0
  %5562 = vmatpush1.msra.mxu0 0.0
  %5563 = vmatprep.subr.mxu0 0.0
  %5564 = vmatpush1.msra.mxu0 0.0
  %5565 = vmatprep.mubr.f32.mxu0 0.0
  %5566 = vmatmul.mubr.f32.gmra.mrb[0].mxu0 %v5496
  %v5567 = vpop.f32.mrb[0].mxu0
  %v5568 = vadd.f32 %v5494, %v5567
  %v5569 = vpop.f32.mrb[0].mxu0
  %5570 = vmatprep.mubr.f32.mxu0 0.0
  %5571 = vmatmul.mubr.f32.gmra.mrb[0].mxu0 %v5499
  %v5572 = vpop.f32.mrb[0].mxu0
  %v5573 = vadd.f32 %v5494, %v5572
  %v5574 = vpop.f32.mrb[0].mxu0
  %5575 = vdwg.mxu0
  %v5576 = vtanh.pop %v5568
  %v5577 = vtanh.pop %v5573
  %v5578 = vlaneseq
  %v5579 = vshrl.u32 %v5578, 7
  %v5580 = vsub.s32 0, %v5579
  %v5581 = vrot.slane %v4828, %v5580
  %v5583 = vsel %vm729, %v5576, 0
  %v5586 = vsel %vm729, %v5577, 0
  %5588 = vmatprep.subr.mxu0 0.0
  %5589 = vmatpush1.msra.mxu0 %v4816
  %5590 = vmatprep.subr.mxu0 0.0
  %5591 = vmatpush1.msra.mxu0 %v4817
  %5592 = vmatprep.subr.mxu0 0.0
  %5593 = vmatpush1.msra.mxu0 %v4818
  %5594 = vmatprep.subr.mxu0 0.0
  %5595 = vmatpush1.msra.mxu0 %v4819
  %5596 = vmatprep.subr.mxu0 0.0
  %5597 = vmatpush1.msra.mxu0 0.0
  %5598 = vmatprep.subr.mxu0 0.0
  %5599 = vmatpush1.msra.mxu0 0.0
  %5600 = vmatprep.subr.mxu0 0.0
  %5601 = vmatpush1.msra.mxu0 0.0
  %5602 = vmatprep.subr.mxu0 0.0
  %5603 = vmatpush1.msra.mxu0 0.0
  %5604 = vmatprep.subr.mxu0 0.0
  %5605 = vmatpush1.msra.mxu0 0.0
  %5606 = vmatprep.subr.mxu0 0.0
  %5607 = vmatpush1.msra.mxu0 0.0
  %5608 = vmatprep.subr.mxu0 0.0
  %5609 = vmatpush1.msra.mxu0 0.0
  %5610 = vmatprep.subr.mxu0 0.0
  %5611 = vmatpush1.msra.mxu0 0.0
  %5612 = vmatprep.subr.mxu0 0.0
  %5613 = vmatpush1.msra.mxu0 0.0
  %5614 = vmatprep.subr.mxu0 0.0
  %5615 = vmatpush1.msra.mxu0 0.0
  %5616 = vmatprep.subr.mxu0 0.0
  %5617 = vmatpush1.msra.mxu0 0.0
  %5618 = vmatprep.subr.mxu0 0.0
  %5619 = vmatpush1.msra.mxu0 0.0
  %5620 = vmatprep.subr.mxu0 0.0
  %5621 = vmatpush1.msra.mxu0 0.0
  %5622 = vmatprep.subr.mxu0 0.0
  %5623 = vmatpush1.msra.mxu0 0.0
  %5624 = vmatprep.subr.mxu0 0.0
  %5625 = vmatpush1.msra.mxu0 0.0
  %5626 = vmatprep.subr.mxu0 0.0
  %5627 = vmatpush1.msra.mxu0 0.0
  %5628 = vmatprep.subr.mxu0 0.0
  %5629 = vmatpush1.msra.mxu0 0.0
  %5630 = vmatprep.subr.mxu0 0.0
  %5631 = vmatpush1.msra.mxu0 0.0
  %5632 = vmatprep.subr.mxu0 0.0
  %5633 = vmatpush1.msra.mxu0 0.0
  %5634 = vmatprep.subr.mxu0 0.0
  %5635 = vmatpush1.msra.mxu0 0.0
  %5636 = vmatprep.subr.mxu0 0.0
  %5637 = vmatpush1.msra.mxu0 0.0
  %5638 = vmatprep.subr.mxu0 0.0
  %5639 = vmatpush1.msra.mxu0 0.0
  %5640 = vmatprep.subr.mxu0 0.0
  %5641 = vmatpush1.msra.mxu0 0.0
  %5642 = vmatprep.subr.mxu0 0.0
  %5643 = vmatpush1.msra.mxu0 0.0
  %5644 = vmatprep.subr.mxu0 0.0
  %5645 = vmatpush1.msra.mxu0 0.0
  %5646 = vmatprep.subr.mxu0 0.0
  %5647 = vmatpush1.msra.mxu0 0.0
  %5648 = vmatprep.subr.mxu0 0.0
  %5649 = vmatpush1.msra.mxu0 0.0
  %5650 = vmatprep.subr.mxu0 0.0
  %5651 = vmatpush1.msra.mxu0 0.0
  %5652 = vmatprep.mubr.f32.mxu0 0.0
  %5653 = vmatmul.mubr.f32.gmra.mrb[0].mxu0 %v5583
  %v5654 = vpop.f32.mrb[0].mxu0
  %v5655 = vadd.f32 %v5581, %v5654
  %v5656 = vpop.f32.mrb[0].mxu0
  %5657 = vmatprep.mubr.f32.mxu0 0.0
  %5658 = vmatmul.mubr.f32.gmra.mrb[0].mxu0 %v5586
  %v5659 = vpop.f32.mrb[0].mxu0
  %v5660 = vadd.f32 %v5581, %v5659
  %v5661 = vpop.f32.mrb[0].mxu0
  %5662 = vdwg.mxu0
  %v5663 = vtanh.pop %v5655
  %v5664 = vtanh.pop %v5660
  %v5665 = vadd.f32 %v5399, %v5663
  %v5666 = vadd.f32 %v5400, %v5664
  %v5667 = vsel %vm65, %v5665, 0.0
  %5668 = vadd.xlane.f32.xlu0 %v5667
  %v5669 = vpop.xlane.xlu0 %5668
  %v5670 = vsel %vm65, %v5666, 0.0
  %5671 = vadd.xlane.f32.xlu0 %v5670
  %v5672 = vpop.xlane.xlu0 %5671
  %v5673 = vmul.f32 %v5669, %v602
  %v5674 = vmul.f32 %v5672, %v602
  %v5675 = vsub.f32 %v5665, %v5673
  %v5676 = vsub.f32 %v5666, %v5674
  %v5677 = vmul.f32 %v5675, %v5675
  %v5678 = vmul.f32 %v5676, %v5676
  %v5679 = vsel %vm65, %v5677, 0.0
  %5680 = vadd.xlane.f32.xlu0 %v5679
  %v5681 = vpop.xlane.xlu0 %5680
  %v5682 = vsel %vm65, %v5678, 0.0
  %5683 = vadd.xlane.f32.xlu0 %v5682
  %v5684 = vpop.xlane.xlu0 %5683
  %v5685 = vmul.f32 %v5681, %v602
  %v5686 = vmul.f32 %v5684, %v602
  %v5687 = vadd.f32 %v5685, 1e-05
  %v5688 = vadd.f32 %v5686, 1e-05
  %v5689 = vrsqrt.pop %v5687
  %v5690 = vrsqrt.pop %v5688
  %v5691 = vmul.f32 %v5675, %v5689
  %v5692 = vmul.f32 %v5676, %v5690
  %v5693 = vlaneseq
  %v5694 = vshrl.u32 %v5693, 7
  %v5695 = vsub.s32 0, %v5694
  %v5696 = vrot.slane %v4829, %v5695
  %v5697 = vmul.f32 %v5691, %v5696
  %v5698 = vmul.f32 %v5692, %v5696
  %v5699 = vlaneseq
  %v5700 = vshrl.u32 %v5699, 7
  %v5701 = vsub.s32 0, %v5700
  %v5702 = vrot.slane %v4830, %v5701
  %v5703 = vadd.f32 %v5697, %v5702
  %v5704 = vadd.f32 %v5698, %v5702
  %s5705 = scalar_lea.vmem %s2, 16
  %v5706 = vld [vmem:[%s5705] sm:$0xff]
  %v5707 = vld [vmem:[%s5705 + $0x8] sm:$0xf]
  %v5708 = vld [vmem:[%s5705 + $0xc] sm:$0x1]
  %v5710 = vsel %vm65, %v5703, 0
  %v5713 = vsel %vm65, %v5704, 0
  %v5716 = vsel %vm72, %v5707, 0
  %5718 = vmatprep.subr.mxu0 0.0
  %5719 = vmatpush1.msra.mxu0 %v5706
  %5720 = vmatprep.subr.mxu0 0.0
  %5721 = vmatpush1.msra.mxu0 %v5716
  %5722 = vmatprep.subr.mxu0 0.0
  %5723 = vmatpush1.msra.mxu0 0.0
  %5724 = vmatprep.subr.mxu0 0.0
  %5725 = vmatpush1.msra.mxu0 0.0
  %5726 = vmatprep.subr.mxu0 0.0
  %5727 = vmatpush1.msra.mxu0 0.0
  %5728 = vmatprep.subr.mxu0 0.0
  %5729 = vmatpush1.msra.mxu0 0.0
  %5730 = vmatprep.subr.mxu0 0.0
  %5731 = vmatpush1.msra.mxu0 0.0
  %5732 = vmatprep.subr.mxu0 0.0
  %5733 = vmatpush1.msra.mxu0 0.0
  %5734 = vmatprep.subr.mxu0 0.0
  %5735 = vmatpush1.msra.mxu0 0.0
  %5736 = vmatprep.subr.mxu0 0.0
  %5737 = vmatpush1.msra.mxu0 0.0
  %5738 = vmatprep.subr.mxu0 0.0
  %5739 = vmatpush1.msra.mxu0 0.0
  %5740 = vmatprep.subr.mxu0 0.0
  %5741 = vmatpush1.msra.mxu0 0.0
  %5742 = vmatprep.subr.mxu0 0.0
  %5743 = vmatpush1.msra.mxu0 0.0
  %5744 = vmatprep.subr.mxu0 0.0
  %5745 = vmatpush1.msra.mxu0 0.0
  %5746 = vmatprep.subr.mxu0 0.0
  %5747 = vmatpush1.msra.mxu0 0.0
  %5748 = vmatprep.subr.mxu0 0.0
  %5749 = vmatpush1.msra.mxu0 0.0
  %5750 = vmatprep.subr.mxu0 0.0
  %5751 = vmatpush1.msra.mxu0 0.0
  %5752 = vmatprep.subr.mxu0 0.0
  %5753 = vmatpush1.msra.mxu0 0.0
  %5754 = vmatprep.subr.mxu0 0.0
  %5755 = vmatpush1.msra.mxu0 0.0
  %5756 = vmatprep.subr.mxu0 0.0
  %5757 = vmatpush1.msra.mxu0 0.0
  %5758 = vmatprep.subr.mxu0 0.0
  %5759 = vmatpush1.msra.mxu0 0.0
  %5760 = vmatprep.subr.mxu0 0.0
  %5761 = vmatpush1.msra.mxu0 0.0
  %5762 = vmatprep.subr.mxu0 0.0
  %5763 = vmatpush1.msra.mxu0 0.0
  %5764 = vmatprep.subr.mxu0 0.0
  %5765 = vmatpush1.msra.mxu0 0.0
  %5766 = vmatprep.subr.mxu0 0.0
  %5767 = vmatpush1.msra.mxu0 0.0
  %5768 = vmatprep.subr.mxu0 0.0
  %5769 = vmatpush1.msra.mxu0 0.0
  %5770 = vmatprep.subr.mxu0 0.0
  %5771 = vmatpush1.msra.mxu0 0.0
  %5772 = vmatprep.subr.mxu0 0.0
  %5773 = vmatpush1.msra.mxu0 0.0
  %5774 = vmatprep.subr.mxu0 0.0
  %5775 = vmatpush1.msra.mxu0 0.0
  %5776 = vmatprep.subr.mxu0 0.0
  %5777 = vmatpush1.msra.mxu0 0.0
  %5778 = vmatprep.subr.mxu0 0.0
  %5779 = vmatpush1.msra.mxu0 0.0
  %5780 = vmatprep.subr.mxu0 0.0
  %5781 = vmatpush1.msra.mxu0 0.0
  %5782 = vmatprep.mubr.f32.mxu0 0.0
  %5783 = vmatmul.mubr.f32.gmra.mrb[0].mxu0 %v5710
  %v5784 = vpop.f32.mrb[0].mxu0
  %v5785 = vadd.f32 0.0, %v5784
  %v5786 = vpop.f32.mrb[0].mxu0
  %5787 = vmatprep.mubr.f32.mxu0 0.0
  %5788 = vmatmul.mubr.f32.gmra.mrb[0].mxu0 %v5713
  %v5789 = vpop.f32.mrb[0].mxu0
  %v5790 = vadd.f32 0.0, %v5789
  %v5791 = vpop.f32.mrb[0].mxu0
  %5792 = vdwg.mxu0
  %v5793 = vmul.f32 %v5785, %v19
  %v5794 = vmul.f32 %v5790, %v20
  %v5796 = vsel %vm2837, %v5793, 0
  %v5799 = vsel %vm2837, %v5794, 0
  %5801 = vmatprep.subr.mxu0 0.0
  %5802 = vmatpush1.msra.mxu0 %v23
  %5803 = vmatprep.subr.mxu0 0.0
  %5804 = vmatpush1.msra.mxu0 %v24
  %5805 = vmatprep.subr.mxu0 0.0
  %5806 = vmatpush1.msra.mxu0 %v25
  %5807 = vmatprep.subr.mxu0 0.0
  %5808 = vmatpush1.msra.mxu0 %v26
  %5809 = vmatprep.subr.mxu0 0.0
  %5810 = vmatpush1.msra.mxu0 %v27
  %5811 = vmatprep.subr.mxu0 0.0
  %5812 = vmatpush1.msra.mxu0 %v28
  %5813 = vmatprep.subr.mxu0 0.0
  %5814 = vmatpush1.msra.mxu0 %v29
  %5815 = vmatprep.subr.mxu0 0.0
  %5816 = vmatpush1.msra.mxu0 %v30
  %5817 = vmatprep.subr.mxu0 0.0
  %5818 = vmatpush1.msra.mxu0 0.0
  %5819 = vmatprep.subr.mxu0 0.0
  %5820 = vmatpush1.msra.mxu0 0.0
  %5821 = vmatprep.subr.mxu0 0.0
  %5822 = vmatpush1.msra.mxu0 0.0
  %5823 = vmatprep.subr.mxu0 0.0
  %5824 = vmatpush1.msra.mxu0 0.0
  %5825 = vmatprep.subr.mxu0 0.0
  %5826 = vmatpush1.msra.mxu0 0.0
  %5827 = vmatprep.subr.mxu0 0.0
  %5828 = vmatpush1.msra.mxu0 0.0
  %5829 = vmatprep.subr.mxu0 0.0
  %5830 = vmatpush1.msra.mxu0 0.0
  %5831 = vmatprep.subr.mxu0 0.0
  %5832 = vmatpush1.msra.mxu0 0.0
  %5833 = vmatprep.subr.mxu0 0.0
  %5834 = vmatpush1.msra.mxu0 0.0
  %5835 = vmatprep.subr.mxu0 0.0
  %5836 = vmatpush1.msra.mxu0 0.0
  %5837 = vmatprep.subr.mxu0 0.0
  %5838 = vmatpush1.msra.mxu0 0.0
  %5839 = vmatprep.subr.mxu0 0.0
  %5840 = vmatpush1.msra.mxu0 0.0
  %5841 = vmatprep.subr.mxu0 0.0
  %5842 = vmatpush1.msra.mxu0 0.0
  %5843 = vmatprep.subr.mxu0 0.0
  %5844 = vmatpush1.msra.mxu0 0.0
  %5845 = vmatprep.subr.mxu0 0.0
  %5846 = vmatpush1.msra.mxu0 0.0
  %5847 = vmatprep.subr.mxu0 0.0
  %5848 = vmatpush1.msra.mxu0 0.0
  %5849 = vmatprep.subr.mxu0 0.0
  %5850 = vmatpush1.msra.mxu0 0.0
  %5851 = vmatprep.subr.mxu0 0.0
  %5852 = vmatpush1.msra.mxu0 0.0
  %5853 = vmatprep.subr.mxu0 0.0
  %5854 = vmatpush1.msra.mxu0 0.0
  %5855 = vmatprep.subr.mxu0 0.0
  %5856 = vmatpush1.msra.mxu0 0.0
  %5857 = vmatprep.subr.mxu0 0.0
  %5858 = vmatpush1.msra.mxu0 0.0
  %5859 = vmatprep.subr.mxu0 0.0
  %5860 = vmatpush1.msra.mxu0 0.0
  %5861 = vmatprep.subr.mxu0 0.0
  %5862 = vmatpush1.msra.mxu0 0.0
  %5863 = vmatprep.subr.mxu0 0.0
  %5864 = vmatpush1.msra.mxu0 0.0
  %5865 = vmatprep.mubr.f32.mxu0 0.0
  %5866 = vmatmul.mubr.f32.gmra.mrb[0].mxu0 %v5796
  %v5867 = vpop.f32.mrb[0].mxu0
  %v5868 = vadd.f32 0.0, %v5867
  %v5869 = vpop.f32.mrb[0].mxu0
  %5870 = vmatprep.mubr.f32.mxu0 0.0
  %5871 = vmatmul.mubr.f32.gmra.mrb[0].mxu0 %v5799
  %v5872 = vpop.f32.mrb[0].mxu0
  %v5873 = vadd.f32 0.0, %v5872
  %v5874 = vpop.f32.mrb[0].mxu0
  %5875 = vdwg.mxu0
  %v5876 = vlaneseq
  %v5877 = vshrl.u32 %v5876, 7
  %v5878 = vsub.s32 0, %v5877
  %v5879 = vrot.slane %v5708, %v5878
  %5880 = vmatprep.subr.mxu0 0.0
  %5881 = vmatpush1.msra.mxu0 %v5868
  %5882 = vmatprep.subr.mxu0 0.0
  %5883 = vmatpush1.msra.mxu0 %v5873
  %5884 = vmatprep.subr.mxu0 0.0
  %5885 = vmatpush1.msra.mxu0 0.0
  %5886 = vmatprep.subr.mxu0 0.0
  %5887 = vmatpush1.msra.mxu0 0.0
  %5888 = vmatprep.subr.mxu0 0.0
  %5889 = vmatpush1.msra.mxu0 0.0
  %5890 = vmatprep.subr.mxu0 0.0
  %5891 = vmatpush1.msra.mxu0 0.0
  %5892 = vmatprep.subr.mxu0 0.0
  %5893 = vmatpush1.msra.mxu0 0.0
  %5894 = vmatprep.subr.mxu0 0.0
  %5895 = vmatpush1.msra.mxu0 0.0
  %5896 = vmatprep.subr.mxu0 0.0
  %5897 = vmatpush1.msra.mxu0 0.0
  %5898 = vmatprep.subr.mxu0 0.0
  %5899 = vmatpush1.msra.mxu0 0.0
  %5900 = vmatprep.subr.mxu0 0.0
  %5901 = vmatpush1.msra.mxu0 0.0
  %5902 = vmatprep.subr.mxu0 0.0
  %5903 = vmatpush1.msra.mxu0 0.0
  %5904 = vmatprep.subr.mxu0 0.0
  %5905 = vmatpush1.msra.mxu0 0.0
  %5906 = vmatprep.subr.mxu0 0.0
  %5907 = vmatpush1.msra.mxu0 0.0
  %5908 = vmatprep.subr.mxu0 0.0
  %5909 = vmatpush1.msra.mxu0 0.0
  %5910 = vmatprep.subr.mxu0 0.0
  %5911 = vmatpush1.msra.mxu0 0.0
  %5912 = vmatprep.subr.mxu0 0.0
  %5913 = vmatpush1.msra.mxu0 0.0
  %5914 = vmatprep.subr.mxu0 0.0
  %5915 = vmatpush1.msra.mxu0 0.0
  %5916 = vmatprep.subr.mxu0 0.0
  %5917 = vmatpush1.msra.mxu0 0.0
  %5918 = vmatprep.subr.mxu0 0.0
  %5919 = vmatpush1.msra.mxu0 0.0
  %5920 = vmatprep.subr.mxu0 0.0
  %5921 = vmatpush1.msra.mxu0 0.0
  %5922 = vmatprep.subr.mxu0 0.0
  %5923 = vmatpush1.msra.mxu0 0.0
  %5924 = vmatprep.subr.mxu0 0.0
  %5925 = vmatpush1.msra.mxu0 0.0
  %5926 = vmatprep.subr.mxu0 0.0
  %5927 = vmatpush1.msra.mxu0 0.0
  %5928 = vmatprep.subr.mxu0 0.0
  %5929 = vmatpush1.msra.mxu0 0.0
  %5930 = vmatprep.subr.mxu0 0.0
  %5931 = vmatpush1.msra.mxu0 0.0
  %5932 = vmatprep.subr.mxu0 0.0
  %5933 = vmatpush1.msra.mxu0 0.0
  %5934 = vmatprep.subr.mxu0 0.0
  %5935 = vmatpush1.msra.mxu0 0.0
  %5936 = vmatprep.subr.mxu0 0.0
  %5937 = vmatpush1.msra.mxu0 0.0
  %5938 = vmatprep.subr.mxu0 0.0
  %5939 = vmatpush1.msra.mxu0 0.0
  %5940 = vmatprep.subr.mxu0 0.0
  %5941 = vmatpush1.msra.mxu0 0.0
  %5942 = vmatprep.subr.mxu0 0.0
  %5943 = vmatpush1.msra.mxu0 0.0
  %5944 = vmatprep.mubr.f32.mxu0 0.0
  %5945 = vmatmul.mubr.f32.gmra.mrb[0].mxu0 %v2924
  %v5946 = vpop.f32.mrb[0].mxu0
  %v5947 = vadd.f32 %v5879, %v5946
  %v5948 = vpop.f32.mrb[0].mxu0
  %5949 = vdwg.mxu0
  %v5950 = vtanh.pop %v5947
  %s5951 = scalar_lea.vmem %s4, 2
  %5952 = vst.msk [vmem:[%s5951] sm:$0x3] %vm2997, %v5950
  // Predicated region
  $region18: #{self_attention_forward.1} parent=0 // pred_check
    _
  $region19: #{self_attention_forward.1} parent=0 // pred_check_branch
    %5954 = sbr.rel (0) target = $region21
  $region20: #{self_attention_forward.1} parent=0 // pred_region
    _
  $region21: #{self_attention_forward.1} parent=0 // pred_fallthru
    _
  // Predicated region
  $region22: #{self_attention_forward.1} parent=0 // pred_check
    _
  $region23: #{self_attention_forward.1} parent=0 // pred_check_branch
    %5956 = sbr.rel (0) target = $region25
  $region24: #{self_attention_forward.1} parent=0 // pred_region
    _
  $region25: #{self_attention_forward.1} parent=0 // pred_fallthru
    _

</llo_original>
